<compile_context>
chip_gen: v7x
topology: tpu7x:2x2x1
jax: 0.10.0
libtpu: 0.0.40
codegen_flags: <defaults>
</compile_context>

<pallas_src>
import functools

import jax
import jax.numpy as jnp
from jax.experimental import pallas as pl
from jax.experimental.pallas import tpu as pltpu

NUM_USERS = 48
NUM_ITEMS = 80
NUM_NODES = NUM_USERS + NUM_ITEMS   # 128
EMB_DIM = 64                        # nn.Embedding(num_nodes, 64)
NUM_LAYERS = 3
NUM_EDGES_EVAL = 16
LANE = 128


# ------------------------- Pallas kernel -------------------------

def _lightgcn_fused_kernel(num_layers, alpha_ref, idx_ref, adj_ref, x_ref, out_ref):
    """Fused LightGCN forward.

    alpha_ref: SMEM (num_layers+1,) f32
    idx_ref:   VMEM (2, E_pad) i32   row 0 = edge_label_index[0], row 1 = [1] (zero-padded)
    adj_ref:   VMEM (N, N) f32       normalized adjacency
    x_ref:     VMEM (N, D) f32       embedding table (layer-0 features)
    out_ref:   VMEM (1, E_pad) f32   lane-dense scores
    """
    n = adj_ref.shape[0]
    e_pad = idx_ref.shape[1]
    hi = jax.lax.Precision.HIGHEST

    # --- K-layer propagation fused with alpha-weighted layer combination (all f32) ---
    x = x_ref[...]                              # (N, D)
    acc = x * alpha_ref[0]
    adj = adj_ref[...]                          # (N, N)
    for i in range(num_layers):
        # LightGCNConv (aggr='add', gcn_norm) == spmm(A_norm, x)
        x = jnp.dot(adj, x, preferred_element_type=jnp.float32, precision=hi)
        acc = acc + x * alpha_ref[i + 1]

    # --- gram matrix: G[n, m] = <acc[n], acc[m]> ---
    gram = jax.lax.dot_general(acc, acc, (((1,), (1,)), ((), ())),
                               preferred_element_type=jnp.float32, precision=hi)  # (N, N)

    # --- one-hot column selectors from lane-dense indices (sublane iota compare) ---
    node_iota = jax.lax.broadcasted_iota(jnp.int32, (n, e_pad), 0)                # (N, E_pad)
    sel_src = (idx_ref[0:1, :] == node_iota).astype(jnp.float32)                  # (N, E_pad)
    sel_dst = (idx_ref[1:2, :] == node_iota).astype(jnp.float32)                  # (N, E_pad)

    # --- single gather matmul: H[n, e] = G[n, dst[e]] = <acc[n], acc[dst[e]]> ---
    h = jnp.dot(gram, sel_dst, preferred_element_type=jnp.float32, precision=hi)  # (N, E_pad)

    # --- scores[e] = H[src[e], e]: exact-f32 VPU mask + sublane reduce, lane-dense out ---
    out_ref[...] = jnp.sum(sel_src * h, axis=0, keepdims=True)                    # (1, E_pad)


# ------------------------- wrapper -------------------------

def pad_edge_label_index(edge_label_index, e_pad):
    """Stage the edge indices once in the padded lane-dense (2, E_pad) layout."""
    eli = jnp.asarray(edge_label_index, jnp.int32)
    e = eli.shape[1]
    return jnp.pad(eli, ((0, 0), (0, e_pad - e)))


@functools.partial(jax.jit, static_argnames=("num_edges",))
def lightgcn_forward(adj_norm, emb_weight, alpha, eli_padded, num_edges):
    n, d = emb_weight.shape
    num_layers = alpha.shape[0] - 1
    e_pad = eli_padded.shape[1]

    kernel = functools.partial(_lightgcn_fused_kernel, num_layers)

    flops = (2 * num_layers * n * n * d      # propagation
             + 2 * n * d * n                 # gram
             + 2 * n * n * e_pad             # dst selection matmul
             + 2 * n * e_pad)                # masked reduce
    bytes_accessed = (n * n * 4 + n * d * 4 + 2 * e_pad * 4
                      + (num_layers + 1) * 4 + e_pad * 4)

    scores_padded = pl.pallas_call(
        kernel,
        out_shape=jax.ShapeDtypeStruct((1, e_pad), jnp.float32),
        in_specs=[
            pl.BlockSpec(memory_space=pltpu.MemorySpace.SMEM),   # alpha
            pl.BlockSpec(memory_space=pltpu.MemorySpace.VMEM),   # padded edge indices (2, E_pad)
            pl.BlockSpec(memory_space=pltpu.MemorySpace.VMEM),   # adj_norm
            pl.BlockSpec(memory_space=pltpu.MemorySpace.VMEM),   # embedding weight
        ],
        out_specs=pl.BlockSpec(memory_space=pltpu.MemorySpace.VMEM),
        compiler_params=pltpu.CompilerParams(vmem_limit_bytes=4 * 1024 * 1024),
        cost_estimate=pl.CostEstimate(flops=flops, transcendentals=0,
                                      bytes_accessed=bytes_accessed),
    )(alpha, eli_padded, adj_norm, emb_weight)
    # Padded edge slots (e >= num_edges) select node 0 and are meaningless; slice them off.
    return scores_padded[0, :num_edges]


# ------------------------- deterministic setup -------------------------

def build_norm_adj(num_users, num_items):
    """Dense symmetric user-item bipartite adjacency, gcn_norm'd (no self loops)."""
    u = jnp.arange(num_users)
    items = (u[:, None] * 3 + jnp.arange(4)[None, :]) % num_items    # 4 items / user
    users = jnp.broadcast_to(u[:, None], items.shape)
    src = users.reshape(-1)
    dst = items.reshape(-1) + num_users
    n = num_users + num_items
    adj = jnp.zeros((n, n), jnp.float32)
    adj = adj.at[src, dst].set(1.0)
    adj = adj.at[dst, src].set(1.0)
    deg = adj.sum(axis=1)
    dinv = jnp.where(deg > 0.0, 1.0 / jnp.sqrt(jnp.maximum(deg, 1e-12)), 0.0)
    return adj * dinv[:, None] * dinv[None, :]


def xavier_uniform_embedding(key, num_nodes, dim):
    bound = (6.0 / (num_nodes + dim)) ** 0.5
    return jax.random.uniform(key, (num_nodes, dim), jnp.float32, -bound, bound)


def reference_forward_f32(adj_norm, emb_weight, alpha, edge_label_index):
    """Pure-JAX f32 reference of LightGCN.forward."""
    x = emb_weight
    out = x * alpha[0]
    for i in range(alpha.shape[0] - 1):
        x = jnp.dot(adj_norm, x, precision=jax.lax.Precision.HIGHEST)
        out = out + x * alpha[i + 1]
    s = out[edge_label_index[0]]
    d = out[edge_label_index[1]]
    return (s * d).sum(axis=-1)


if __name__ == "__main__":
    key = jax.random.PRNGKey(0)
    k_emb, k_u, k_i = jax.random.split(key, 3)

    emb_weight = xavier_uniform_embedding(k_emb, NUM_NODES, EMB_DIM)
    alpha = jnp.full((NUM_LAYERS + 1,), 1.0 / (NUM_LAYERS + 1), dtype=jnp.float32)
    adj_norm = build_norm_adj(NUM_USERS, NUM_ITEMS)

    users = jax.random.randint(k_u, (NUM_EDGES_EVAL,), 0, NUM_USERS, dtype=jnp.int32)
    items = jax.random.randint(k_i, (NUM_EDGES_EVAL,), 0, NUM_ITEMS, dtype=jnp.int32) + NUM_USERS
    edge_label_index = jnp.stack([users, items], axis=0)

    e_pad = ((NUM_EDGES_EVAL + LANE - 1) // LANE) * LANE
    eli_padded = pad_edge_label_index(edge_label_index, e_pad)   # staged once, outside hot path

    scores = lightgcn_forward(adj_norm, emb_weight, alpha, eli_padded, NUM_EDGES_EVAL)
    scores = jax.block_until_ready(scores)
    assert scores.shape == (NUM_EDGES_EVAL,)

    ref_f32 = reference_forward_f32(adj_norm, emb_weight, alpha, edge_label_index)
    assert jnp.allclose(scores, ref_f32, rtol=1e-2, atol=1e-2), (scores, ref_f32)

    print("KERNEL_OK")
</pallas_src>

<mosaic_0001>
module attributes {stable_mosaic.version = 11 : i64} {
  func.func @_lightgcn_fused_kernel(%arg0: memref<4xf32, #tpu.memory_space<smem>>, %arg1: memref<2x128xi32, #tpu.memory_space<vmem>>, %arg2: memref<128x128xf32, #tpu.memory_space<vmem>>, %arg3: memref<128x64xf32, #tpu.memory_space<vmem>>, %arg4: memref<1x128xf32, #tpu.memory_space<vmem>>) attributes {dimension_semantics = [], scalar_prefetch = 0 : i64, scratch_operands = 0 : i64, tpu.core_type = #tpu.core_type<tc>} {
    %c0 = arith.constant 0 : index
    %c0_0 = arith.constant 0 : index
    %0 = vector.load %arg3[%c0, %c0_0] : memref<128x64xf32, #tpu.memory_space<vmem>>, vector<128x64xf32>
    %c0_1 = arith.constant 0 : index
    %1 = memref.load %arg0[%c0_1] : memref<4xf32, #tpu.memory_space<smem>>
    %2 = vector.broadcast %1 : f32 to vector<128x64xf32>
    %3 = arith.mulf %0, %2 : vector<128x64xf32>
    %c0_2 = arith.constant 0 : index
    %c0_3 = arith.constant 0 : index
    %4 = vector.load %arg2[%c0_2, %c0_3] : memref<128x128xf32, #tpu.memory_space<vmem>>, vector<128x128xf32>
    %cst = arith.constant dense<0.000000e+00> : vector<128x64xf32>
    %5 = tpu.matmul %4, %0, %cst {dimension_numbers = #tpu.dot_dimension_numbers<[1], [0], [0], [1], [0, 0, 1, 1], [], []>, precision = #tpu.contract_precision<fp32>} : vector<128x128xf32>, vector<128x64xf32>, vector<128x64xf32> -> vector<128x64xf32>
    %c1 = arith.constant 1 : index
    %6 = memref.load %arg0[%c1] : memref<4xf32, #tpu.memory_space<smem>>
    %7 = vector.broadcast %6 : f32 to vector<128x64xf32>
    %8 = arith.mulf %5, %7 : vector<128x64xf32>
    %9 = arith.addf %3, %8 : vector<128x64xf32>
    %cst_4 = arith.constant dense<0.000000e+00> : vector<128x64xf32>
    %10 = tpu.matmul %4, %5, %cst_4 {dimension_numbers = #tpu.dot_dimension_numbers<[1], [0], [0], [1], [0, 0, 1, 1], [], []>, precision = #tpu.contract_precision<fp32>} : vector<128x128xf32>, vector<128x64xf32>, vector<128x64xf32> -> vector<128x64xf32>
    %c2 = arith.constant 2 : index
    %11 = memref.load %arg0[%c2] : memref<4xf32, #tpu.memory_space<smem>>
    %12 = vector.broadcast %11 : f32 to vector<128x64xf32>
    %13 = arith.mulf %10, %12 : vector<128x64xf32>
    %14 = arith.addf %9, %13 : vector<128x64xf32>
    %cst_5 = arith.constant dense<0.000000e+00> : vector<128x64xf32>
    %15 = tpu.matmul %4, %10, %cst_5 {dimension_numbers = #tpu.dot_dimension_numbers<[1], [0], [0], [1], [0, 0, 1, 1], [], []>, precision = #tpu.contract_precision<fp32>} : vector<128x128xf32>, vector<128x64xf32>, vector<128x64xf32> -> vector<128x64xf32>
    %c3 = arith.constant 3 : index
    %16 = memref.load %arg0[%c3] : memref<4xf32, #tpu.memory_space<smem>>
    %17 = vector.broadcast %16 : f32 to vector<128x64xf32>
    %18 = arith.mulf %15, %17 : vector<128x64xf32>
    %19 = arith.addf %14, %18 : vector<128x64xf32>
    %cst_6 = arith.constant dense<0.000000e+00> : vector<128x128xf32>
    %20 = tpu.matmul %19, %19, %cst_6 {dimension_numbers = #tpu.dot_dimension_numbers<[1], [1], [0], [0], [0, 0, 1, 0], [], []>, precision = #tpu.contract_precision<fp32>} : vector<128x64xf32>, vector<128x64xf32>, vector<128x128xf32> -> vector<128x128xf32>
    %21 = tpu.iota {dimensions = array<i32: 0>} : vector<128x128xi32>
    %c0_7 = arith.constant 0 : index
    %c0_8 = arith.constant 0 : index
    %22 = vector.load %arg1[%c0_7, %c0_8] : memref<2x128xi32, #tpu.memory_space<vmem>>, vector<1x128xi32>
    %23 = vector.broadcast %22 : vector<1x128xi32> to vector<128x128xi32>
    %24 = arith.cmpi eq, %23, %21 : vector<128x128xi32>
    %25 = arith.extui %24 : vector<128x128xi1> to vector<128x128xi32>
    %26 = arith.sitofp %25 : vector<128x128xi32> to vector<128x128xf32>
    %c1_9 = arith.constant 1 : index
    %c0_10 = arith.constant 0 : index
    %27 = vector.load %arg1[%c1_9, %c0_10] : memref<2x128xi32, #tpu.memory_space<vmem>>, vector<1x128xi32>
    %28 = vector.broadcast %27 : vector<1x128xi32> to vector<128x128xi32>
    %29 = arith.cmpi eq, %28, %21 : vector<128x128xi32>
    %30 = arith.extui %29 : vector<128x128xi1> to vector<128x128xi32>
    %31 = arith.sitofp %30 : vector<128x128xi32> to vector<128x128xf32>
    %cst_11 = arith.constant dense<0.000000e+00> : vector<128x128xf32>
    %32 = tpu.matmul %20, %31, %cst_11 {dimension_numbers = #tpu.dot_dimension_numbers<[1], [0], [0], [1], [0, 0, 1, 1], [], []>, precision = #tpu.contract_precision<fp32>} : vector<128x128xf32>, vector<128x128xf32>, vector<128x128xf32> -> vector<128x128xf32>
    %33 = arith.mulf %26, %32 : vector<128x128xf32>
    %cst_12 = arith.constant dense<0.000000e+00> : vector<128xf32>
    %34 = vector.multi_reduction <add>, %33, %cst_12 [0] : vector<128x128xf32> to vector<128xf32>
    %35 = vector.shape_cast %34 : vector<128xf32> to vector<1x128xf32>
    %c0_13 = arith.constant 0 : index
    %c0_14 = arith.constant 0 : index
    %36 = vector.load %arg4[%c0_13, %c0_14] : memref<1x128xf32, #tpu.memory_space<vmem>>, vector<1x128xf32>
    tpu.vector_store %arg4[%c0_13, %c0_14], %35 {strides = array<i32>} : memref<1x128xf32, #tpu.memory_space<vmem>>, vector<1x128xf32>,
    return
  }
}

</mosaic_0001>

<llo_original>
// kernel: lightgcn_forward.1
$region0: #{lightgcn_forward.1}
  #allocation0 [shape = 'u32[]', space=smem, size = 0x4, offset = 0x4, fixed_abs, tag = 'smem constant byte address 0x4 - core index']
  #allocation1 [shape = 'u32[144,128]{1,0:T(1,128)}', space=vmem, size = 0x12000, scoped, tag = 'internal scratch']
  %s0 = inlined_call_operand.vmem [shape: f32[4], index: 0, kind: input, shape index: {}]
  %s1 = inlined_call_operand.vmem [shape: s32[2,128], index: 1, kind: input, shape index: {}]
  %s2 = inlined_call_operand.vmem [shape: f32[128,128], index: 2, kind: input, shape index: {}]
  %s3 = inlined_call_operand.vmem [shape: f32[128,64], index: 3, kind: input, shape index: {}]
  %s4 = inlined_call_operand.vmem [shape: f32[1,128], index: 4, kind: output, shape index: {}]
  %s5 = sld [smem:[#allocation0]]
  $region30: #{lightgcn_forward.1} parent=0
    _
  %s7 = ssub.s32 1, %s5
  %s8 = scalar_select 0, %s7, %s5
  $region1: #{lightgcn_forward.1} parent=0
    #allocation2 [shape = 'u8[512]{0}', space=smem, size = 0x200, scoped, tag = 'input window, operand 0, single buffered']
    #allocation3 [shape = 's32[1]{0}', space=sflag, size = 0x4, scoped, tag = 'scoped memory for lightgcn_forward.1']
    %9 = vsyncpa [#allocation3], 0
    // Predicated region
    $region2: #{lightgcn_forward.1} parent=1 // pred_check
      _
    $region3: #{lightgcn_forward.1} parent=1 // pred_check_branch
      %11 = sbr.rel (0) target = $region5
    $region4: #{lightgcn_forward.1} parent=1 // pred_region
      %s13 = ssub.s32 16, 16
      %14 = vsyncadd [#allocation3], %s13
      %s16 = sshll.u32 %s0, 4
      %s17 = int_to_ptr.vmem [resolvable:$true] %s16
      %19 = dma.vmem_to_smem %s17, 16, [#allocation2], [#allocation3]
    $region5: #{lightgcn_forward.1} parent=1 // pred_fallthru
      _
    // Predicated region
    $region6: #{lightgcn_forward.1} parent=1 // pred_check
      _
    $region7: #{lightgcn_forward.1} parent=1 // pred_check_branch
      %21 = sbr.rel (0) target = $region9
    $region8: #{lightgcn_forward.1} parent=1 // pred_region
      _
    $region9: #{lightgcn_forward.1} parent=1 // pred_fallthru
      _
    // Predicated region
    $region10: #{lightgcn_forward.1} parent=1 // pred_check
      _
    $region11: #{lightgcn_forward.1} parent=1 // pred_check_branch
      %23 = sbr.rel (0) target = $region13
    $region12: #{lightgcn_forward.1} parent=1 // pred_region
      _
    $region13: #{lightgcn_forward.1} parent=1 // pred_fallthru
      _
    // Predicated region
    $region14: #{lightgcn_forward.1} parent=1 // pred_check
      _
    $region15: #{lightgcn_forward.1} parent=1 // pred_check_branch
      %25 = sbr.rel (0) target = $region17
    $region16: #{lightgcn_forward.1} parent=1 // pred_region
      _
    $region17: #{lightgcn_forward.1} parent=1 // pred_fallthru
      _
    // Predicated region
    $region18: #{lightgcn_forward.1} parent=1 // pred_check
      _
    $region19: #{lightgcn_forward.1} parent=1 // pred_check_branch
      %27 = sbr.rel (0) target = $region21
    $region20: #{lightgcn_forward.1} parent=1 // pred_region
      %28 = dma.done [#allocation3], 16
    $region21: #{lightgcn_forward.1} parent=1 // pred_fallthru
      _
    %29 = sfence
    %v30 = vld [vmem:[%s3] sm:$0xff]
    %v31 = vld [vmem:[%s3 + $0x8] sm:$0xff]
    %v32 = vld [vmem:[%s3 + $0x10] sm:$0xff]
    %v33 = vld [vmem:[%s3 + $0x18] sm:$0xff]
    %v34 = vld [vmem:[%s3 + $0x20] sm:$0xff]
    %v35 = vld [vmem:[%s3 + $0x28] sm:$0xff]
    %v36 = vld [vmem:[%s3 + $0x30] sm:$0xff]
    %v37 = vld [vmem:[%s3 + $0x38] sm:$0xff]
    %v38 = vld [vmem:[%s3 + $0x40] sm:$0xff]
    %v39 = vld [vmem:[%s3 + $0x48] sm:$0xff]
    %v40 = vld [vmem:[%s3 + $0x50] sm:$0xff]
    %v41 = vld [vmem:[%s3 + $0x58] sm:$0xff]
    %v42 = vld [vmem:[%s3 + $0x60] sm:$0xff]
    %v43 = vld [vmem:[%s3 + $0x68] sm:$0xff]
    %v44 = vld [vmem:[%s3 + $0x70] sm:$0xff]
    %v45 = vld [vmem:[%s3 + $0x78] sm:$0xff]
    %s46 = sld [smem:[#allocation2]]
    %v47 = vstv %s46
    %v48 = vmul.f32 %v30, %v47
    %v49 = vmul.f32 %v31, %v47
    %v50 = vmul.f32 %v32, %v47
    %v51 = vmul.f32 %v33, %v47
    %v52 = vmul.f32 %v34, %v47
    %v53 = vmul.f32 %v35, %v47
    %v54 = vmul.f32 %v36, %v47
    %v55 = vmul.f32 %v37, %v47
    %v56 = vmul.f32 %v38, %v47
    %v57 = vmul.f32 %v39, %v47
    %v58 = vmul.f32 %v40, %v47
    %v59 = vmul.f32 %v41, %v47
    %v60 = vmul.f32 %v42, %v47
    %v61 = vmul.f32 %v43, %v47
    %v62 = vmul.f32 %v44, %v47
    %v63 = vmul.f32 %v45, %v47
    %v64 = vld [vmem:[%s2] sm:$0xff]
    %v65 = vld [vmem:[%s2 + $0x8] sm:$0xff]
    %v66 = vld [vmem:[%s2 + $0x10] sm:$0xff]
    %v67 = vld [vmem:[%s2 + $0x18] sm:$0xff]
    %v68 = vld [vmem:[%s2 + $0x20] sm:$0xff]
    %v69 = vld [vmem:[%s2 + $0x28] sm:$0xff]
    %v70 = vld [vmem:[%s2 + $0x30] sm:$0xff]
    %v71 = vld [vmem:[%s2 + $0x38] sm:$0xff]
    %v72 = vld [vmem:[%s2 + $0x40] sm:$0xff]
    %v73 = vld [vmem:[%s2 + $0x48] sm:$0xff]
    %v74 = vld [vmem:[%s2 + $0x50] sm:$0xff]
    %v75 = vld [vmem:[%s2 + $0x58] sm:$0xff]
    %v76 = vld [vmem:[%s2 + $0x60] sm:$0xff]
    %v77 = vld [vmem:[%s2 + $0x68] sm:$0xff]
    %v78 = vld [vmem:[%s2 + $0x70] sm:$0xff]
    %v79 = vld [vmem:[%s2 + $0x78] sm:$0xff]
    %80 = vmatprep.subr.mxu0 0.0
    %v81 = vand.u32 %v30, 4294901760
    %82 = vmatpush1.msra.mxu0 %v81
    %83 = vmatprep.subr.mxu0 0.0
    %v84 = vand.u32 %v31, 4294901760
    %85 = vmatpush1.msra.mxu0 %v84
    %86 = vmatprep.subr.mxu0 0.0
    %v87 = vand.u32 %v32, 4294901760
    %88 = vmatpush1.msra.mxu0 %v87
    %89 = vmatprep.subr.mxu0 0.0
    %v90 = vand.u32 %v33, 4294901760
    %91 = vmatpush1.msra.mxu0 %v90
    %92 = vmatprep.subr.mxu0 0.0
    %v93 = vand.u32 %v34, 4294901760
    %94 = vmatpush1.msra.mxu0 %v93
    %95 = vmatprep.subr.mxu0 0.0
    %v96 = vand.u32 %v35, 4294901760
    %97 = vmatpush1.msra.mxu0 %v96
    %98 = vmatprep.subr.mxu0 0.0
    %v99 = vand.u32 %v36, 4294901760
    %100 = vmatpush1.msra.mxu0 %v99
    %101 = vmatprep.subr.mxu0 0.0
    %v102 = vand.u32 %v37, 4294901760
    %103 = vmatpush1.msra.mxu0 %v102
    %104 = vmatprep.subr.mxu0 0.0
    %v105 = vand.u32 %v38, 4294901760
    %106 = vmatpush1.msra.mxu0 %v105
    %107 = vmatprep.subr.mxu0 0.0
    %v108 = vand.u32 %v39, 4294901760
    %109 = vmatpush1.msra.mxu0 %v108
    %110 = vmatprep.subr.mxu0 0.0
    %v111 = vand.u32 %v40, 4294901760
    %112 = vmatpush1.msra.mxu0 %v111
    %113 = vmatprep.subr.mxu0 0.0
    %v114 = vand.u32 %v41, 4294901760
    %115 = vmatpush1.msra.mxu0 %v114
    %116 = vmatprep.subr.mxu0 0.0
    %v117 = vand.u32 %v42, 4294901760
    %118 = vmatpush1.msra.mxu0 %v117
    %119 = vmatprep.subr.mxu0 0.0
    %v120 = vand.u32 %v43, 4294901760
    %121 = vmatpush1.msra.mxu0 %v120
    %122 = vmatprep.subr.mxu0 0.0
    %v123 = vand.u32 %v44, 4294901760
    %124 = vmatpush1.msra.mxu0 %v123
    %125 = vmatprep.subr.mxu0 0.0
    %v126 = vand.u32 %v45, 4294901760
    %127 = vmatpush1.msra.mxu0 %v126
    %128 = vmatprep.subr.mxu0 0.0
    %129 = vmatpush1.msra.mxu0 0.0
    %130 = vmatprep.subr.mxu0 0.0
    %131 = vmatpush1.msra.mxu0 0.0
    %132 = vmatprep.subr.mxu0 0.0
    %133 = vmatpush1.msra.mxu0 0.0
    %134 = vmatprep.subr.mxu0 0.0
    %135 = vmatpush1.msra.mxu0 0.0
    %136 = vmatprep.subr.mxu0 0.0
    %137 = vmatpush1.msra.mxu0 0.0
    %138 = vmatprep.subr.mxu0 0.0
    %139 = vmatpush1.msra.mxu0 0.0
    %140 = vmatprep.subr.mxu0 0.0
    %141 = vmatpush1.msra.mxu0 0.0
    %142 = vmatprep.subr.mxu0 0.0
    %143 = vmatpush1.msra.mxu0 0.0
    %144 = vmatprep.subr.mxu0 0.0
    %145 = vmatpush1.msra.mxu0 0.0
    %146 = vmatprep.subr.mxu0 0.0
    %147 = vmatpush1.msra.mxu0 0.0
    %148 = vmatprep.subr.mxu0 0.0
    %149 = vmatpush1.msra.mxu0 0.0
    %150 = vmatprep.subr.mxu0 0.0
    %151 = vmatpush1.msra.mxu0 0.0
    %152 = vmatprep.subr.mxu0 0.0
    %153 = vmatpush1.msra.mxu0 0.0
    %154 = vmatprep.subr.mxu0 0.0
    %155 = vmatpush1.msra.mxu0 0.0
    %156 = vmatprep.subr.mxu0 0.0
    %157 = vmatpush1.msra.mxu0 0.0
    %158 = vmatprep.subr.mxu0 0.0
    %159 = vmatpush1.msra.mxu0 0.0
    %160 = vmatprep.mubr.f32.mxu0 0.0
    %v161 = vand.u32 %v64, 4294901760
    %v162 = vsub.f32 %v64, %v161
    %v163 = vand.u32 %v162, 4294901760
    %v164 = vsub.f32 %v162, %v163
    %v165 = vand.u32 %v164, 4294901760
    %166 = vmatmul.mubr.f32.gmra.mrb[0].mxu0 %v165
    %v167 = vpop.f32.mrb[0].mxu0
    %v168 = vadd.f32 0.0, %v167
    %v169 = vpop.f32.mrb[0].mxu0
    %170 = vmatprep.mubr.f32.mxu0 0.0
    %v171 = vand.u32 %v65, 4294901760
    %v172 = vsub.f32 %v65, %v171
    %v173 = vand.u32 %v172, 4294901760
    %v174 = vsub.f32 %v172, %v173
    %v175 = vand.u32 %v174, 4294901760
    %176 = vmatmul.mubr.f32.gmra.mrb[0].mxu0 %v175
    %v177 = vpop.f32.mrb[0].mxu0
    %v178 = vadd.f32 0.0, %v177
    %v179 = vpop.f32.mrb[0].mxu0
    %180 = vmatprep.mubr.f32.mxu0 0.0
    %v181 = vand.u32 %v66, 4294901760
    %v182 = vsub.f32 %v66, %v181
    %v183 = vand.u32 %v182, 4294901760
    %v184 = vsub.f32 %v182, %v183
    %v185 = vand.u32 %v184, 4294901760
    %186 = vmatmul.mubr.f32.gmra.mrb[0].mxu0 %v185
    %v187 = vpop.f32.mrb[0].mxu0
    %v188 = vadd.f32 0.0, %v187
    %v189 = vpop.f32.mrb[0].mxu0
    %190 = vmatprep.mubr.f32.mxu0 0.0
    %v191 = vand.u32 %v67, 4294901760
    %v192 = vsub.f32 %v67, %v191
    %v193 = vand.u32 %v192, 4294901760
    %v194 = vsub.f32 %v192, %v193
    %v195 = vand.u32 %v194, 4294901760
    %196 = vmatmul.mubr.f32.gmra.mrb[0].mxu0 %v195
    %v197 = vpop.f32.mrb[0].mxu0
    %v198 = vadd.f32 0.0, %v197
    %v199 = vpop.f32.mrb[0].mxu0
    %200 = vmatprep.mubr.f32.mxu0 0.0
    %v201 = vand.u32 %v68, 4294901760
    %v202 = vsub.f32 %v68, %v201
    %v203 = vand.u32 %v202, 4294901760
    %v204 = vsub.f32 %v202, %v203
    %v205 = vand.u32 %v204, 4294901760
    %206 = vmatmul.mubr.f32.gmra.mrb[0].mxu0 %v205
    %v207 = vpop.f32.mrb[0].mxu0
    %v208 = vadd.f32 0.0, %v207
    %v209 = vpop.f32.mrb[0].mxu0
    %210 = vmatprep.mubr.f32.mxu0 0.0
    %v211 = vand.u32 %v69, 4294901760
    %v212 = vsub.f32 %v69, %v211
    %v213 = vand.u32 %v212, 4294901760
    %v214 = vsub.f32 %v212, %v213
    %v215 = vand.u32 %v214, 4294901760
    %216 = vmatmul.mubr.f32.gmra.mrb[0].mxu0 %v215
    %v217 = vpop.f32.mrb[0].mxu0
    %v218 = vadd.f32 0.0, %v217
    %v219 = vpop.f32.mrb[0].mxu0
    %220 = vmatprep.mubr.f32.mxu0 0.0
    %v221 = vand.u32 %v70, 4294901760
    %v222 = vsub.f32 %v70, %v221
    %v223 = vand.u32 %v222, 4294901760
    %v224 = vsub.f32 %v222, %v223
    %v225 = vand.u32 %v224, 4294901760
    %226 = vmatmul.mubr.f32.gmra.mrb[0].mxu0 %v225
    %v227 = vpop.f32.mrb[0].mxu0
    %v228 = vadd.f32 0.0, %v227
    %v229 = vpop.f32.mrb[0].mxu0
    %230 = vmatprep.mubr.f32.mxu0 0.0
    %v231 = vand.u32 %v71, 4294901760
    %v232 = vsub.f32 %v71, %v231
    %v233 = vand.u32 %v232, 4294901760
    %v234 = vsub.f32 %v232, %v233
    %v235 = vand.u32 %v234, 4294901760
    %236 = vmatmul.mubr.f32.gmra.mrb[0].mxu0 %v235
    %v237 = vpop.f32.mrb[0].mxu0
    %v238 = vadd.f32 0.0, %v237
    %v239 = vpop.f32.mrb[0].mxu0
    %240 = vmatprep.mubr.f32.mxu0 0.0
    %v241 = vand.u32 %v72, 4294901760
    %v242 = vsub.f32 %v72, %v241
    %v243 = vand.u32 %v242, 4294901760
    %v244 = vsub.f32 %v242, %v243
    %v245 = vand.u32 %v244, 4294901760
    %246 = vmatmul.mubr.f32.gmra.mrb[0].mxu0 %v245
    %v247 = vpop.f32.mrb[0].mxu0
    %v248 = vadd.f32 0.0, %v247
    %v249 = vpop.f32.mrb[0].mxu0
    %250 = vmatprep.mubr.f32.mxu0 0.0
    %v251 = vand.u32 %v73, 4294901760
    %v252 = vsub.f32 %v73, %v251
    %v253 = vand.u32 %v252, 4294901760
    %v254 = vsub.f32 %v252, %v253
    %v255 = vand.u32 %v254, 4294901760
    %256 = vmatmul.mubr.f32.gmra.mrb[0].mxu0 %v255
    %v257 = vpop.f32.mrb[0].mxu0
    %v258 = vadd.f32 0.0, %v257
    %v259 = vpop.f32.mrb[0].mxu0
    %260 = vmatprep.mubr.f32.mxu0 0.0
    %v261 = vand.u32 %v74, 4294901760
    %v262 = vsub.f32 %v74, %v261
    %v263 = vand.u32 %v262, 4294901760
    %v264 = vsub.f32 %v262, %v263
    %v265 = vand.u32 %v264, 4294901760
    %266 = vmatmul.mubr.f32.gmra.mrb[0].mxu0 %v265
    %v267 = vpop.f32.mrb[0].mxu0
    %v268 = vadd.f32 0.0, %v267
    %v269 = vpop.f32.mrb[0].mxu0
    %270 = vmatprep.mubr.f32.mxu0 0.0
    %v271 = vand.u32 %v75, 4294901760
    %v272 = vsub.f32 %v75, %v271
    %v273 = vand.u32 %v272, 4294901760
    %v274 = vsub.f32 %v272, %v273
    %v275 = vand.u32 %v274, 4294901760
    %276 = vmatmul.mubr.f32.gmra.mrb[0].mxu0 %v275
    %v277 = vpop.f32.mrb[0].mxu0
    %v278 = vadd.f32 0.0, %v277
    %v279 = vpop.f32.mrb[0].mxu0
    %280 = vmatprep.mubr.f32.mxu0 0.0
    %v281 = vand.u32 %v76, 4294901760
    %v282 = vsub.f32 %v76, %v281
    %v283 = vand.u32 %v282, 4294901760
    %v284 = vsub.f32 %v282, %v283
    %v285 = vand.u32 %v284, 4294901760
    %286 = vmatmul.mubr.f32.gmra.mrb[0].mxu0 %v285
    %v287 = vpop.f32.mrb[0].mxu0
    %v288 = vadd.f32 0.0, %v287
    %v289 = vpop.f32.mrb[0].mxu0
    %290 = vmatprep.mubr.f32.mxu0 0.0
    %v291 = vand.u32 %v77, 4294901760
    %v292 = vsub.f32 %v77, %v291
    %v293 = vand.u32 %v292, 4294901760
    %v294 = vsub.f32 %v292, %v293
    %v295 = vand.u32 %v294, 4294901760
    %296 = vmatmul.mubr.f32.gmra.mrb[0].mxu0 %v295
    %v297 = vpop.f32.mrb[0].mxu0
    %v298 = vadd.f32 0.0, %v297
    %v299 = vpop.f32.mrb[0].mxu0
    %300 = vmatprep.mubr.f32.mxu0 0.0
    %v301 = vand.u32 %v78, 4294901760
    %v302 = vsub.f32 %v78, %v301
    %v303 = vand.u32 %v302, 4294901760
    %v304 = vsub.f32 %v302, %v303
    %v305 = vand.u32 %v304, 4294901760
    %306 = vmatmul.mubr.f32.gmra.mrb[0].mxu0 %v305
    %v307 = vpop.f32.mrb[0].mxu0
    %v308 = vadd.f32 0.0, %v307
    %v309 = vpop.f32.mrb[0].mxu0
    %310 = vmatprep.mubr.f32.mxu0 0.0
    %v311 = vand.u32 %v79, 4294901760
    %v312 = vsub.f32 %v79, %v311
    %v313 = vand.u32 %v312, 4294901760
    %v314 = vsub.f32 %v312, %v313
    %v315 = vand.u32 %v314, 4294901760
    %316 = vmatmul.mubr.f32.gmra.mrb[0].mxu0 %v315
    %v317 = vpop.f32.mrb[0].mxu0
    %v318 = vadd.f32 0.0, %v317
    %v319 = vpop.f32.mrb[0].mxu0
    %320 = vdwg.mxu0
    %321 = vmatprep.subr.mxu0 0.0
    %v322 = vand.u32 %v30, 4294901760
    %v323 = vsub.f32 %v30, %v322
    %v324 = vand.u32 %v323, 4294901760
    %v325 = vsub.f32 %v323, %v324
    %v326 = vand.u32 %v325, 4294901760
    %327 = vmatpush1.msra.mxu0 %v326
    %328 = vmatprep.subr.mxu0 0.0
    %v329 = vand.u32 %v31, 4294901760
    %v330 = vsub.f32 %v31, %v329
    %v331 = vand.u32 %v330, 4294901760
    %v332 = vsub.f32 %v330, %v331
    %v333 = vand.u32 %v332, 4294901760
    %334 = vmatpush1.msra.mxu0 %v333
    %335 = vmatprep.subr.mxu0 0.0
    %v336 = vand.u32 %v32, 4294901760
    %v337 = vsub.f32 %v32, %v336
    %v338 = vand.u32 %v337, 4294901760
    %v339 = vsub.f32 %v337, %v338
    %v340 = vand.u32 %v339, 4294901760
    %341 = vmatpush1.msra.mxu0 %v340
    %342 = vmatprep.subr.mxu0 0.0
    %v343 = vand.u32 %v33, 4294901760
    %v344 = vsub.f32 %v33, %v343
    %v345 = vand.u32 %v344, 4294901760
    %v346 = vsub.f32 %v344, %v345
    %v347 = vand.u32 %v346, 4294901760
    %348 = vmatpush1.msra.mxu0 %v347
    %349 = vmatprep.subr.mxu0 0.0
    %v350 = vand.u32 %v34, 4294901760
    %v351 = vsub.f32 %v34, %v350
    %v352 = vand.u32 %v351, 4294901760
    %v353 = vsub.f32 %v351, %v352
    %v354 = vand.u32 %v353, 4294901760
    %355 = vmatpush1.msra.mxu0 %v354
    %356 = vmatprep.subr.mxu0 0.0
    %v357 = vand.u32 %v35, 4294901760
    %v358 = vsub.f32 %v35, %v357
    %v359 = vand.u32 %v358, 4294901760
    %v360 = vsub.f32 %v358, %v359
    %v361 = vand.u32 %v360, 4294901760
    %362 = vmatpush1.msra.mxu0 %v361
    %363 = vmatprep.subr.mxu0 0.0
    %v364 = vand.u32 %v36, 4294901760
    %v365 = vsub.f32 %v36, %v364
    %v366 = vand.u32 %v365, 4294901760
    %v367 = vsub.f32 %v365, %v366
    %v368 = vand.u32 %v367, 4294901760
    %369 = vmatpush1.msra.mxu0 %v368
    %370 = vmatprep.subr.mxu0 0.0
    %v371 = vand.u32 %v37, 4294901760
    %v372 = vsub.f32 %v37, %v371
    %v373 = vand.u32 %v372, 4294901760
    %v374 = vsub.f32 %v372, %v373
    %v375 = vand.u32 %v374, 4294901760
    %376 = vmatpush1.msra.mxu0 %v375
    %377 = vmatprep.subr.mxu0 0.0
    %v378 = vand.u32 %v38, 4294901760
    %v379 = vsub.f32 %v38, %v378
    %v380 = vand.u32 %v379, 4294901760
    %v381 = vsub.f32 %v379, %v380
    %v382 = vand.u32 %v381, 4294901760
    %383 = vmatpush1.msra.mxu0 %v382
    %384 = vmatprep.subr.mxu0 0.0
    %v385 = vand.u32 %v39, 4294901760
    %v386 = vsub.f32 %v39, %v385
    %v387 = vand.u32 %v386, 4294901760
    %v388 = vsub.f32 %v386, %v387
    %v389 = vand.u32 %v388, 4294901760
    %390 = vmatpush1.msra.mxu0 %v389
    %391 = vmatprep.subr.mxu0 0.0
    %v392 = vand.u32 %v40, 4294901760
    %v393 = vsub.f32 %v40, %v392
    %v394 = vand.u32 %v393, 4294901760
    %v395 = vsub.f32 %v393, %v394
    %v396 = vand.u32 %v395, 4294901760
    %397 = vmatpush1.msra.mxu0 %v396
    %398 = vmatprep.subr.mxu0 0.0
    %v399 = vand.u32 %v41, 4294901760
    %v400 = vsub.f32 %v41, %v399
    %v401 = vand.u32 %v400, 4294901760
    %v402 = vsub.f32 %v400, %v401
    %v403 = vand.u32 %v402, 4294901760
    %404 = vmatpush1.msra.mxu0 %v403
    %405 = vmatprep.subr.mxu0 0.0
    %v406 = vand.u32 %v42, 4294901760
    %v407 = vsub.f32 %v42, %v406
    %v408 = vand.u32 %v407, 4294901760
    %v409 = vsub.f32 %v407, %v408
    %v410 = vand.u32 %v409, 4294901760
    %411 = vmatpush1.msra.mxu0 %v410
    %412 = vmatprep.subr.mxu0 0.0
    %v413 = vand.u32 %v43, 4294901760
    %v414 = vsub.f32 %v43, %v413
    %v415 = vand.u32 %v414, 4294901760
    %v416 = vsub.f32 %v414, %v415
    %v417 = vand.u32 %v416, 4294901760
    %418 = vmatpush1.msra.mxu0 %v417
    %419 = vmatprep.subr.mxu0 0.0
    %v420 = vand.u32 %v44, 4294901760
    %v421 = vsub.f32 %v44, %v420
    %v422 = vand.u32 %v421, 4294901760
    %v423 = vsub.f32 %v421, %v422
    %v424 = vand.u32 %v423, 4294901760
    %425 = vmatpush1.msra.mxu0 %v424
    %426 = vmatprep.subr.mxu0 0.0
    %v427 = vand.u32 %v45, 4294901760
    %v428 = vsub.f32 %v45, %v427
    %v429 = vand.u32 %v428, 4294901760
    %v430 = vsub.f32 %v428, %v429
    %v431 = vand.u32 %v430, 4294901760
    %432 = vmatpush1.msra.mxu0 %v431
    %433 = vmatprep.subr.mxu0 0.0
    %434 = vmatpush1.msra.mxu0 0.0
    %435 = vmatprep.subr.mxu0 0.0
    %436 = vmatpush1.msra.mxu0 0.0
    %437 = vmatprep.subr.mxu0 0.0
    %438 = vmatpush1.msra.mxu0 0.0
    %439 = vmatprep.subr.mxu0 0.0
    %440 = vmatpush1.msra.mxu0 0.0
    %441 = vmatprep.subr.mxu0 0.0
    %442 = vmatpush1.msra.mxu0 0.0
    %443 = vmatprep.subr.mxu0 0.0
    %444 = vmatpush1.msra.mxu0 0.0
    %445 = vmatprep.subr.mxu0 0.0
    %446 = vmatpush1.msra.mxu0 0.0
    %447 = vmatprep.subr.mxu0 0.0
    %448 = vmatpush1.msra.mxu0 0.0
    %449 = vmatprep.subr.mxu0 0.0
    %450 = vmatpush1.msra.mxu0 0.0
    %451 = vmatprep.subr.mxu0 0.0
    %452 = vmatpush1.msra.mxu0 0.0
    %453 = vmatprep.subr.mxu0 0.0
    %454 = vmatpush1.msra.mxu0 0.0
    %455 = vmatprep.subr.mxu0 0.0
    %456 = vmatpush1.msra.mxu0 0.0
    %457 = vmatprep.subr.mxu0 0.0
    %458 = vmatpush1.msra.mxu0 0.0
    %459 = vmatprep.subr.mxu0 0.0
    %460 = vmatpush1.msra.mxu0 0.0
    %461 = vmatprep.subr.mxu0 0.0
    %462 = vmatpush1.msra.mxu0 0.0
    %463 = vmatprep.subr.mxu0 0.0
    %464 = vmatpush1.msra.mxu0 0.0
    %465 = vmatprep.mubr.f32.mxu0 0.0
    %v466 = vand.u32 %v64, 4294901760
    %467 = vmatmul.mubr.f32.gmra.mrb[0].mxu0 %v466
    %v468 = vpop.f32.mrb[0].mxu0
    %v469 = vadd.f32 %v168, %v468
    %v470 = vpop.f32.mrb[0].mxu0
    %471 = vmatprep.mubr.f32.mxu0 0.0
    %v472 = vand.u32 %v65, 4294901760
    %473 = vmatmul.mubr.f32.gmra.mrb[0].mxu0 %v472
    %v474 = vpop.f32.mrb[0].mxu0
    %v475 = vadd.f32 %v178, %v474
    %v476 = vpop.f32.mrb[0].mxu0
    %477 = vmatprep.mubr.f32.mxu0 0.0
    %v478 = vand.u32 %v66, 4294901760
    %479 = vmatmul.mubr.f32.gmra.mrb[0].mxu0 %v478
    %v480 = vpop.f32.mrb[0].mxu0
    %v481 = vadd.f32 %v188, %v480
    %v482 = vpop.f32.mrb[0].mxu0
    %483 = vmatprep.mubr.f32.mxu0 0.0
    %v484 = vand.u32 %v67, 4294901760
    %485 = vmatmul.mubr.f32.gmra.mrb[0].mxu0 %v484
    %v486 = vpop.f32.mrb[0].mxu0
    %v487 = vadd.f32 %v198, %v486
    %v488 = vpop.f32.mrb[0].mxu0
    %489 = vmatprep.mubr.f32.mxu0 0.0
    %v490 = vand.u32 %v68, 4294901760
    %491 = vmatmul.mubr.f32.gmra.mrb[0].mxu0 %v490
    %v492 = vpop.f32.mrb[0].mxu0
    %v493 = vadd.f32 %v208, %v492
    %v494 = vpop.f32.mrb[0].mxu0
    %495 = vmatprep.mubr.f32.mxu0 0.0
    %v496 = vand.u32 %v69, 4294901760
    %497 = vmatmul.mubr.f32.gmra.mrb[0].mxu0 %v496
    %v498 = vpop.f32.mrb[0].mxu0
    %v499 = vadd.f32 %v218, %v498
    %v500 = vpop.f32.mrb[0].mxu0
    %501 = vmatprep.mubr.f32.mxu0 0.0
    %v502 = vand.u32 %v70, 4294901760
    %503 = vmatmul.mubr.f32.gmra.mrb[0].mxu0 %v502
    %v504 = vpop.f32.mrb[0].mxu0
    %v505 = vadd.f32 %v228, %v504
    %v506 = vpop.f32.mrb[0].mxu0
    %507 = vmatprep.mubr.f32.mxu0 0.0
    %v508 = vand.u32 %v71, 4294901760
    %509 = vmatmul.mubr.f32.gmra.mrb[0].mxu0 %v508
    %v510 = vpop.f32.mrb[0].mxu0
    %v511 = vadd.f32 %v238, %v510
    %v512 = vpop.f32.mrb[0].mxu0
    %513 = vmatprep.mubr.f32.mxu0 0.0
    %v514 = vand.u32 %v72, 4294901760
    %515 = vmatmul.mubr.f32.gmra.mrb[0].mxu0 %v514
    %v516 = vpop.f32.mrb[0].mxu0
    %v517 = vadd.f32 %v248, %v516
    %v518 = vpop.f32.mrb[0].mxu0
    %519 = vmatprep.mubr.f32.mxu0 0.0
    %v520 = vand.u32 %v73, 4294901760
    %521 = vmatmul.mubr.f32.gmra.mrb[0].mxu0 %v520
    %v522 = vpop.f32.mrb[0].mxu0
    %v523 = vadd.f32 %v258, %v522
    %v524 = vpop.f32.mrb[0].mxu0
    %525 = vmatprep.mubr.f32.mxu0 0.0
    %v526 = vand.u32 %v74, 4294901760
    %527 = vmatmul.mubr.f32.gmra.mrb[0].mxu0 %v526
    %v528 = vpop.f32.mrb[0].mxu0
    %v529 = vadd.f32 %v268, %v528
    %v530 = vpop.f32.mrb[0].mxu0
    %531 = vmatprep.mubr.f32.mxu0 0.0
    %v532 = vand.u32 %v75, 4294901760
    %533 = vmatmul.mubr.f32.gmra.mrb[0].mxu0 %v532
    %v534 = vpop.f32.mrb[0].mxu0
    %v535 = vadd.f32 %v278, %v534
    %v536 = vpop.f32.mrb[0].mxu0
    %537 = vmatprep.mubr.f32.mxu0 0.0
    %v538 = vand.u32 %v76, 4294901760
    %539 = vmatmul.mubr.f32.gmra.mrb[0].mxu0 %v538
    %v540 = vpop.f32.mrb[0].mxu0
    %v541 = vadd.f32 %v288, %v540
    %v542 = vpop.f32.mrb[0].mxu0
    %543 = vmatprep.mubr.f32.mxu0 0.0
    %v544 = vand.u32 %v77, 4294901760
    %545 = vmatmul.mubr.f32.gmra.mrb[0].mxu0 %v544
    %v546 = vpop.f32.mrb[0].mxu0
    %v547 = vadd.f32 %v298, %v546
    %v548 = vpop.f32.mrb[0].mxu0
    %549 = vmatprep.mubr.f32.mxu0 0.0
    %v550 = vand.u32 %v78, 4294901760
    %551 = vmatmul.mubr.f32.gmra.mrb[0].mxu0 %v550
    %v552 = vpop.f32.mrb[0].mxu0
    %v553 = vadd.f32 %v308, %v552
    %v554 = vpop.f32.mrb[0].mxu0
    %555 = vmatprep.mubr.f32.mxu0 0.0
    %v556 = vand.u32 %v79, 4294901760
    %557 = vmatmul.mubr.f32.gmra.mrb[0].mxu0 %v556
    %v558 = vpop.f32.mrb[0].mxu0
    %v559 = vadd.f32 %v318, %v558
    %v560 = vpop.f32.mrb[0].mxu0
    %561 = vdwg.mxu0
    %562 = vmatprep.subr.mxu0 0.0
    %v563 = vand.u32 %v30, 4294901760
    %v564 = vsub.f32 %v30, %v563
    %565 = vmatpush1.msra.mxu0 %v564
    %566 = vmatprep.subr.mxu0 0.0
    %v567 = vand.u32 %v31, 4294901760
    %v568 = vsub.f32 %v31, %v567
    %569 = vmatpush1.msra.mxu0 %v568
    %570 = vmatprep.subr.mxu0 0.0
    %v571 = vand.u32 %v32, 4294901760
    %v572 = vsub.f32 %v32, %v571
    %573 = vmatpush1.msra.mxu0 %v572
    %574 = vmatprep.subr.mxu0 0.0
    %v575 = vand.u32 %v33, 4294901760
    %v576 = vsub.f32 %v33, %v575
    %577 = vmatpush1.msra.mxu0 %v576
    %578 = vmatprep.subr.mxu0 0.0
    %v579 = vand.u32 %v34, 4294901760
    %v580 = vsub.f32 %v34, %v579
    %581 = vmatpush1.msra.mxu0 %v580
    %582 = vmatprep.subr.mxu0 0.0
    %v583 = vand.u32 %v35, 4294901760
    %v584 = vsub.f32 %v35, %v583
    %585 = vmatpush1.msra.mxu0 %v584
    %586 = vmatprep.subr.mxu0 0.0
    %v587 = vand.u32 %v36, 4294901760
    %v588 = vsub.f32 %v36, %v587
    %589 = vmatpush1.msra.mxu0 %v588
    %590 = vmatprep.subr.mxu0 0.0
    %v591 = vand.u32 %v37, 4294901760
    %v592 = vsub.f32 %v37, %v591
    %593 = vmatpush1.msra.mxu0 %v592
    %594 = vmatprep.subr.mxu0 0.0
    %v595 = vand.u32 %v38, 4294901760
    %v596 = vsub.f32 %v38, %v595
    %597 = vmatpush1.msra.mxu0 %v596
    %598 = vmatprep.subr.mxu0 0.0
    %v599 = vand.u32 %v39, 4294901760
    %v600 = vsub.f32 %v39, %v599
    %601 = vmatpush1.msra.mxu0 %v600
    %602 = vmatprep.subr.mxu0 0.0
    %v603 = vand.u32 %v40, 4294901760
    %v604 = vsub.f32 %v40, %v603
    %605 = vmatpush1.msra.mxu0 %v604
    %606 = vmatprep.subr.mxu0 0.0
    %v607 = vand.u32 %v41, 4294901760
    %v608 = vsub.f32 %v41, %v607
    %609 = vmatpush1.msra.mxu0 %v608
    %610 = vmatprep.subr.mxu0 0.0
    %v611 = vand.u32 %v42, 4294901760
    %v612 = vsub.f32 %v42, %v611
    %613 = vmatpush1.msra.mxu0 %v612
    %614 = vmatprep.subr.mxu0 0.0
    %v615 = vand.u32 %v43, 4294901760
    %v616 = vsub.f32 %v43, %v615
    %617 = vmatpush1.msra.mxu0 %v616
    %618 = vmatprep.subr.mxu0 0.0
    %v619 = vand.u32 %v44, 4294901760
    %v620 = vsub.f32 %v44, %v619
    %621 = vmatpush1.msra.mxu0 %v620
    %622 = vmatprep.subr.mxu0 0.0
    %v623 = vand.u32 %v45, 4294901760
    %v624 = vsub.f32 %v45, %v623
    %625 = vmatpush1.msra.mxu0 %v624
    %626 = vmatprep.subr.mxu0 0.0
    %627 = vmatpush1.msra.mxu0 0.0
    %628 = vmatprep.subr.mxu0 0.0
    %629 = vmatpush1.msra.mxu0 0.0
    %630 = vmatprep.subr.mxu0 0.0
    %631 = vmatpush1.msra.mxu0 0.0
    %632 = vmatprep.subr.mxu0 0.0
    %633 = vmatpush1.msra.mxu0 0.0
    %634 = vmatprep.subr.mxu0 0.0
    %635 = vmatpush1.msra.mxu0 0.0
    %636 = vmatprep.subr.mxu0 0.0
    %637 = vmatpush1.msra.mxu0 0.0
    %638 = vmatprep.subr.mxu0 0.0
    %639 = vmatpush1.msra.mxu0 0.0
    %640 = vmatprep.subr.mxu0 0.0
    %641 = vmatpush1.msra.mxu0 0.0
    %642 = vmatprep.subr.mxu0 0.0
    %643 = vmatpush1.msra.mxu0 0.0
    %644 = vmatprep.subr.mxu0 0.0
    %645 = vmatpush1.msra.mxu0 0.0
    %646 = vmatprep.subr.mxu0 0.0
    %647 = vmatpush1.msra.mxu0 0.0
    %648 = vmatprep.subr.mxu0 0.0
    %649 = vmatpush1.msra.mxu0 0.0
    %650 = vmatprep.subr.mxu0 0.0
    %651 = vmatpush1.msra.mxu0 0.0
    %652 = vmatprep.subr.mxu0 0.0
    %653 = vmatpush1.msra.mxu0 0.0
    %654 = vmatprep.subr.mxu0 0.0
    %655 = vmatpush1.msra.mxu0 0.0
    %656 = vmatprep.subr.mxu0 0.0
    %657 = vmatpush1.msra.mxu0 0.0
    %658 = vmatprep.mubr.f32.mxu0 0.0
    %v659 = vand.u32 %v64, 4294901760
    %v660 = vsub.f32 %v64, %v659
    %661 = vmatmul.mubr.f32.gmra.mrb[0].mxu0 %v660
    %v662 = vpop.f32.mrb[0].mxu0
    %v663 = vadd.f32 %v469, %v662
    %v664 = vpop.f32.mrb[0].mxu0
    %665 = vmatprep.mubr.f32.mxu0 0.0
    %v666 = vand.u32 %v65, 4294901760
    %v667 = vsub.f32 %v65, %v666
    %668 = vmatmul.mubr.f32.gmra.mrb[0].mxu0 %v667
    %v669 = vpop.f32.mrb[0].mxu0
    %v670 = vadd.f32 %v475, %v669
    %v671 = vpop.f32.mrb[0].mxu0
    %672 = vmatprep.mubr.f32.mxu0 0.0
    %v673 = vand.u32 %v66, 4294901760
    %v674 = vsub.f32 %v66, %v673
    %675 = vmatmul.mubr.f32.gmra.mrb[0].mxu0 %v674
    %v676 = vpop.f32.mrb[0].mxu0
    %v677 = vadd.f32 %v481, %v676
    %v678 = vpop.f32.mrb[0].mxu0
    %679 = vmatprep.mubr.f32.mxu0 0.0
    %v680 = vand.u32 %v67, 4294901760
    %v681 = vsub.f32 %v67, %v680
    %682 = vmatmul.mubr.f32.gmra.mrb[0].mxu0 %v681
    %v683 = vpop.f32.mrb[0].mxu0
    %v684 = vadd.f32 %v487, %v683
    %v685 = vpop.f32.mrb[0].mxu0
    %686 = vmatprep.mubr.f32.mxu0 0.0
    %v687 = vand.u32 %v68, 4294901760
    %v688 = vsub.f32 %v68, %v687
    %689 = vmatmul.mubr.f32.gmra.mrb[0].mxu0 %v688
    %v690 = vpop.f32.mrb[0].mxu0
    %v691 = vadd.f32 %v493, %v690
    %v692 = vpop.f32.mrb[0].mxu0
    %693 = vmatprep.mubr.f32.mxu0 0.0
    %v694 = vand.u32 %v69, 4294901760
    %v695 = vsub.f32 %v69, %v694
    %696 = vmatmul.mubr.f32.gmra.mrb[0].mxu0 %v695
    %v697 = vpop.f32.mrb[0].mxu0
    %v698 = vadd.f32 %v499, %v697
    %v699 = vpop.f32.mrb[0].mxu0
    %700 = vmatprep.mubr.f32.mxu0 0.0
    %v701 = vand.u32 %v70, 4294901760
    %v702 = vsub.f32 %v70, %v701
    %703 = vmatmul.mubr.f32.gmra.mrb[0].mxu0 %v702
    %v704 = vpop.f32.mrb[0].mxu0
    %v705 = vadd.f32 %v505, %v704
    %v706 = vpop.f32.mrb[0].mxu0
    %707 = vmatprep.mubr.f32.mxu0 0.0
    %v708 = vand.u32 %v71, 4294901760
    %v709 = vsub.f32 %v71, %v708
    %710 = vmatmul.mubr.f32.gmra.mrb[0].mxu0 %v709
    %v711 = vpop.f32.mrb[0].mxu0
    %v712 = vadd.f32 %v511, %v711
    %v713 = vpop.f32.mrb[0].mxu0
    %714 = vmatprep.mubr.f32.mxu0 0.0
    %v715 = vand.u32 %v72, 4294901760
    %v716 = vsub.f32 %v72, %v715
    %717 = vmatmul.mubr.f32.gmra.mrb[0].mxu0 %v716
    %v718 = vpop.f32.mrb[0].mxu0
    %v719 = vadd.f32 %v517, %v718
    %v720 = vpop.f32.mrb[0].mxu0
    %721 = vmatprep.mubr.f32.mxu0 0.0
    %v722 = vand.u32 %v73, 4294901760
    %v723 = vsub.f32 %v73, %v722
    %724 = vmatmul.mubr.f32.gmra.mrb[0].mxu0 %v723
    %v725 = vpop.f32.mrb[0].mxu0
    %v726 = vadd.f32 %v523, %v725
    %v727 = vpop.f32.mrb[0].mxu0
    %728 = vmatprep.mubr.f32.mxu0 0.0
    %v729 = vand.u32 %v74, 4294901760
    %v730 = vsub.f32 %v74, %v729
    %731 = vmatmul.mubr.f32.gmra.mrb[0].mxu0 %v730
    %v732 = vpop.f32.mrb[0].mxu0
    %v733 = vadd.f32 %v529, %v732
    %v734 = vpop.f32.mrb[0].mxu0
    %735 = vmatprep.mubr.f32.mxu0 0.0
    %v736 = vand.u32 %v75, 4294901760
    %v737 = vsub.f32 %v75, %v736
    %738 = vmatmul.mubr.f32.gmra.mrb[0].mxu0 %v737
    %v739 = vpop.f32.mrb[0].mxu0
    %v740 = vadd.f32 %v535, %v739
    %v741 = vpop.f32.mrb[0].mxu0
    %742 = vmatprep.mubr.f32.mxu0 0.0
    %v743 = vand.u32 %v76, 4294901760
    %v744 = vsub.f32 %v76, %v743
    %745 = vmatmul.mubr.f32.gmra.mrb[0].mxu0 %v744
    %v746 = vpop.f32.mrb[0].mxu0
    %v747 = vadd.f32 %v541, %v746
    %v748 = vpop.f32.mrb[0].mxu0
    %749 = vmatprep.mubr.f32.mxu0 0.0
    %v750 = vand.u32 %v77, 4294901760
    %v751 = vsub.f32 %v77, %v750
    %752 = vmatmul.mubr.f32.gmra.mrb[0].mxu0 %v751
    %v753 = vpop.f32.mrb[0].mxu0
    %v754 = vadd.f32 %v547, %v753
    %v755 = vpop.f32.mrb[0].mxu0
    %756 = vmatprep.mubr.f32.mxu0 0.0
    %v757 = vand.u32 %v78, 4294901760
    %v758 = vsub.f32 %v78, %v757
    %759 = vmatmul.mubr.f32.gmra.mrb[0].mxu0 %v758
    %v760 = vpop.f32.mrb[0].mxu0
    %v761 = vadd.f32 %v553, %v760
    %v762 = vpop.f32.mrb[0].mxu0
    %763 = vmatprep.mubr.f32.mxu0 0.0
    %v764 = vand.u32 %v79, 4294901760
    %v765 = vsub.f32 %v79, %v764
    %766 = vmatmul.mubr.f32.gmra.mrb[0].mxu0 %v765
    %v767 = vpop.f32.mrb[0].mxu0
    %v768 = vadd.f32 %v559, %v767
    %v769 = vpop.f32.mrb[0].mxu0
    %770 = vdwg.mxu0
    %771 = vmatprep.subr.mxu0 0.0
    %v772 = vand.u32 %v30, 4294901760
    %773 = vmatpush1.msra.mxu0 %v772
    %774 = vmatprep.subr.mxu0 0.0
    %v775 = vand.u32 %v31, 4294901760
    %776 = vmatpush1.msra.mxu0 %v775
    %777 = vmatprep.subr.mxu0 0.0
    %v778 = vand.u32 %v32, 4294901760
    %779 = vmatpush1.msra.mxu0 %v778
    %780 = vmatprep.subr.mxu0 0.0
    %v781 = vand.u32 %v33, 4294901760
    %782 = vmatpush1.msra.mxu0 %v781
    %783 = vmatprep.subr.mxu0 0.0
    %v784 = vand.u32 %v34, 4294901760
    %785 = vmatpush1.msra.mxu0 %v784
    %786 = vmatprep.subr.mxu0 0.0
    %v787 = vand.u32 %v35, 4294901760
    %788 = vmatpush1.msra.mxu0 %v787
    %789 = vmatprep.subr.mxu0 0.0
    %v790 = vand.u32 %v36, 4294901760
    %791 = vmatpush1.msra.mxu0 %v790
    %792 = vmatprep.subr.mxu0 0.0
    %v793 = vand.u32 %v37, 4294901760
    %794 = vmatpush1.msra.mxu0 %v793
    %795 = vmatprep.subr.mxu0 0.0
    %v796 = vand.u32 %v38, 4294901760
    %797 = vmatpush1.msra.mxu0 %v796
    %798 = vmatprep.subr.mxu0 0.0
    %v799 = vand.u32 %v39, 4294901760
    %800 = vmatpush1.msra.mxu0 %v799
    %801 = vmatprep.subr.mxu0 0.0
    %v802 = vand.u32 %v40, 4294901760
    %803 = vmatpush1.msra.mxu0 %v802
    %804 = vmatprep.subr.mxu0 0.0
    %v805 = vand.u32 %v41, 4294901760
    %806 = vmatpush1.msra.mxu0 %v805
    %807 = vmatprep.subr.mxu0 0.0
    %v808 = vand.u32 %v42, 4294901760
    %809 = vmatpush1.msra.mxu0 %v808
    %810 = vmatprep.subr.mxu0 0.0
    %v811 = vand.u32 %v43, 4294901760
    %812 = vmatpush1.msra.mxu0 %v811
    %813 = vmatprep.subr.mxu0 0.0
    %v814 = vand.u32 %v44, 4294901760
    %815 = vmatpush1.msra.mxu0 %v814
    %816 = vmatprep.subr.mxu0 0.0
    %v817 = vand.u32 %v45, 4294901760
    %818 = vmatpush1.msra.mxu0 %v817
    %819 = vmatprep.subr.mxu0 0.0
    %820 = vmatpush1.msra.mxu0 0.0
    %821 = vmatprep.subr.mxu0 0.0
    %822 = vmatpush1.msra.mxu0 0.0
    %823 = vmatprep.subr.mxu0 0.0
    %824 = vmatpush1.msra.mxu0 0.0
    %825 = vmatprep.subr.mxu0 0.0
    %826 = vmatpush1.msra.mxu0 0.0
    %827 = vmatprep.subr.mxu0 0.0
    %828 = vmatpush1.msra.mxu0 0.0
    %829 = vmatprep.subr.mxu0 0.0
    %830 = vmatpush1.msra.mxu0 0.0
    %831 = vmatprep.subr.mxu0 0.0
    %832 = vmatpush1.msra.mxu0 0.0
    %833 = vmatprep.subr.mxu0 0.0
    %834 = vmatpush1.msra.mxu0 0.0
    %835 = vmatprep.subr.mxu0 0.0
    %836 = vmatpush1.msra.mxu0 0.0
    %837 = vmatprep.subr.mxu0 0.0
    %838 = vmatpush1.msra.mxu0 0.0
    %839 = vmatprep.subr.mxu0 0.0
    %840 = vmatpush1.msra.mxu0 0.0
    %841 = vmatprep.subr.mxu0 0.0
    %842 = vmatpush1.msra.mxu0 0.0
    %843 = vmatprep.subr.mxu0 0.0
    %844 = vmatpush1.msra.mxu0 0.0
    %845 = vmatprep.subr.mxu0 0.0
    %846 = vmatpush1.msra.mxu0 0.0
    %847 = vmatprep.subr.mxu0 0.0
    %848 = vmatpush1.msra.mxu0 0.0
    %849 = vmatprep.subr.mxu0 0.0
    %850 = vmatpush1.msra.mxu0 0.0
    %851 = vmatprep.mubr.f32.mxu0 0.0
    %v852 = vand.u32 %v64, 4294901760
    %v853 = vsub.f32 %v64, %v852
    %v854 = vand.u32 %v853, 4294901760
    %855 = vmatmul.mubr.f32.gmra.mrb[0].mxu0 %v854
    %v856 = vpop.f32.mrb[0].mxu0
    %v857 = vadd.f32 %v663, %v856
    %v858 = vpop.f32.mrb[0].mxu0
    %859 = vmatprep.mubr.f32.mxu0 0.0
    %v860 = vand.u32 %v65, 4294901760
    %v861 = vsub.f32 %v65, %v860
    %v862 = vand.u32 %v861, 4294901760
    %863 = vmatmul.mubr.f32.gmra.mrb[0].mxu0 %v862
    %v864 = vpop.f32.mrb[0].mxu0
    %v865 = vadd.f32 %v670, %v864
    %v866 = vpop.f32.mrb[0].mxu0
    %867 = vmatprep.mubr.f32.mxu0 0.0
    %v868 = vand.u32 %v66, 4294901760
    %v869 = vsub.f32 %v66, %v868
    %v870 = vand.u32 %v869, 4294901760
    %871 = vmatmul.mubr.f32.gmra.mrb[0].mxu0 %v870
    %v872 = vpop.f32.mrb[0].mxu0
    %v873 = vadd.f32 %v677, %v872
    %v874 = vpop.f32.mrb[0].mxu0
    %875 = vmatprep.mubr.f32.mxu0 0.0
    %v876 = vand.u32 %v67, 4294901760
    %v877 = vsub.f32 %v67, %v876
    %v878 = vand.u32 %v877, 4294901760
    %879 = vmatmul.mubr.f32.gmra.mrb[0].mxu0 %v878
    %v880 = vpop.f32.mrb[0].mxu0
    %v881 = vadd.f32 %v684, %v880
    %v882 = vpop.f32.mrb[0].mxu0
    %883 = vmatprep.mubr.f32.mxu0 0.0
    %v884 = vand.u32 %v68, 4294901760
    %v885 = vsub.f32 %v68, %v884
    %v886 = vand.u32 %v885, 4294901760
    %887 = vmatmul.mubr.f32.gmra.mrb[0].mxu0 %v886
    %v888 = vpop.f32.mrb[0].mxu0
    %v889 = vadd.f32 %v691, %v888
    %v890 = vpop.f32.mrb[0].mxu0
    %891 = vmatprep.mubr.f32.mxu0 0.0
    %v892 = vand.u32 %v69, 4294901760
    %v893 = vsub.f32 %v69, %v892
    %v894 = vand.u32 %v893, 4294901760
    %895 = vmatmul.mubr.f32.gmra.mrb[0].mxu0 %v894
    %v896 = vpop.f32.mrb[0].mxu0
    %v897 = vadd.f32 %v698, %v896
    %v898 = vpop.f32.mrb[0].mxu0
    %899 = vmatprep.mubr.f32.mxu0 0.0
    %v900 = vand.u32 %v70, 4294901760
    %v901 = vsub.f32 %v70, %v900
    %v902 = vand.u32 %v901, 4294901760
    %903 = vmatmul.mubr.f32.gmra.mrb[0].mxu0 %v902
    %v904 = vpop.f32.mrb[0].mxu0
    %v905 = vadd.f32 %v705, %v904
    %v906 = vpop.f32.mrb[0].mxu0
    %907 = vmatprep.mubr.f32.mxu0 0.0
    %v908 = vand.u32 %v71, 4294901760
    %v909 = vsub.f32 %v71, %v908
    %v910 = vand.u32 %v909, 4294901760
    %911 = vmatmul.mubr.f32.gmra.mrb[0].mxu0 %v910
    %v912 = vpop.f32.mrb[0].mxu0
    %v913 = vadd.f32 %v712, %v912
    %v914 = vpop.f32.mrb[0].mxu0
    %915 = vmatprep.mubr.f32.mxu0 0.0
    %v916 = vand.u32 %v72, 4294901760
    %v917 = vsub.f32 %v72, %v916
    %v918 = vand.u32 %v917, 4294901760
    %919 = vmatmul.mubr.f32.gmra.mrb[0].mxu0 %v918
    %v920 = vpop.f32.mrb[0].mxu0
    %v921 = vadd.f32 %v719, %v920
    %v922 = vpop.f32.mrb[0].mxu0
    %923 = vmatprep.mubr.f32.mxu0 0.0
    %v924 = vand.u32 %v73, 4294901760
    %v925 = vsub.f32 %v73, %v924
    %v926 = vand.u32 %v925, 4294901760
    %927 = vmatmul.mubr.f32.gmra.mrb[0].mxu0 %v926
    %v928 = vpop.f32.mrb[0].mxu0
    %v929 = vadd.f32 %v726, %v928
    %v930 = vpop.f32.mrb[0].mxu0
    %931 = vmatprep.mubr.f32.mxu0 0.0
    %v932 = vand.u32 %v74, 4294901760
    %v933 = vsub.f32 %v74, %v932
    %v934 = vand.u32 %v933, 4294901760
    %935 = vmatmul.mubr.f32.gmra.mrb[0].mxu0 %v934
    %v936 = vpop.f32.mrb[0].mxu0
    %v937 = vadd.f32 %v733, %v936
    %v938 = vpop.f32.mrb[0].mxu0
    %939 = vmatprep.mubr.f32.mxu0 0.0
    %v940 = vand.u32 %v75, 4294901760
    %v941 = vsub.f32 %v75, %v940
    %v942 = vand.u32 %v941, 4294901760
    %943 = vmatmul.mubr.f32.gmra.mrb[0].mxu0 %v942
    %v944 = vpop.f32.mrb[0].mxu0
    %v945 = vadd.f32 %v740, %v944
    %v946 = vpop.f32.mrb[0].mxu0
    %947 = vmatprep.mubr.f32.mxu0 0.0
    %v948 = vand.u32 %v76, 4294901760
    %v949 = vsub.f32 %v76, %v948
    %v950 = vand.u32 %v949, 4294901760
    %951 = vmatmul.mubr.f32.gmra.mrb[0].mxu0 %v950
    %v952 = vpop.f32.mrb[0].mxu0
    %v953 = vadd.f32 %v747, %v952
    %v954 = vpop.f32.mrb[0].mxu0
    %955 = vmatprep.mubr.f32.mxu0 0.0
    %v956 = vand.u32 %v77, 4294901760
    %v957 = vsub.f32 %v77, %v956
    %v958 = vand.u32 %v957, 4294901760
    %959 = vmatmul.mubr.f32.gmra.mrb[0].mxu0 %v958
    %v960 = vpop.f32.mrb[0].mxu0
    %v961 = vadd.f32 %v754, %v960
    %v962 = vpop.f32.mrb[0].mxu0
    %963 = vmatprep.mubr.f32.mxu0 0.0
    %v964 = vand.u32 %v78, 4294901760
    %v965 = vsub.f32 %v78, %v964
    %v966 = vand.u32 %v965, 4294901760
    %967 = vmatmul.mubr.f32.gmra.mrb[0].mxu0 %v966
    %v968 = vpop.f32.mrb[0].mxu0
    %v969 = vadd.f32 %v761, %v968
    %v970 = vpop.f32.mrb[0].mxu0
    %971 = vmatprep.mubr.f32.mxu0 0.0
    %v972 = vand.u32 %v79, 4294901760
    %v973 = vsub.f32 %v79, %v972
    %v974 = vand.u32 %v973, 4294901760
    %975 = vmatmul.mubr.f32.gmra.mrb[0].mxu0 %v974
    %v976 = vpop.f32.mrb[0].mxu0
    %v977 = vadd.f32 %v768, %v976
    %v978 = vpop.f32.mrb[0].mxu0
    %979 = vdwg.mxu0
    %980 = vmatprep.subr.mxu0 0.0
    %v981 = vand.u32 %v30, 4294901760
    %v982 = vsub.f32 %v30, %v981
    %v983 = vand.u32 %v982, 4294901760
    %984 = vmatpush1.msra.mxu0 %v983
    %985 = vmatprep.subr.mxu0 0.0
    %v986 = vand.u32 %v31, 4294901760
    %v987 = vsub.f32 %v31, %v986
    %v988 = vand.u32 %v987, 4294901760
    %989 = vmatpush1.msra.mxu0 %v988
    %990 = vmatprep.subr.mxu0 0.0
    %v991 = vand.u32 %v32, 4294901760
    %v992 = vsub.f32 %v32, %v991
    %v993 = vand.u32 %v992, 4294901760
    %994 = vmatpush1.msra.mxu0 %v993
    %995 = vmatprep.subr.mxu0 0.0
    %v996 = vand.u32 %v33, 4294901760
    %v997 = vsub.f32 %v33, %v996
    %v998 = vand.u32 %v997, 4294901760
    %999 = vmatpush1.msra.mxu0 %v998
    %1000 = vmatprep.subr.mxu0 0.0
    %v1001 = vand.u32 %v34, 4294901760
    %v1002 = vsub.f32 %v34, %v1001
    %v1003 = vand.u32 %v1002, 4294901760
    %1004 = vmatpush1.msra.mxu0 %v1003
    %1005 = vmatprep.subr.mxu0 0.0
    %v1006 = vand.u32 %v35, 4294901760
    %v1007 = vsub.f32 %v35, %v1006
    %v1008 = vand.u32 %v1007, 4294901760
    %1009 = vmatpush1.msra.mxu0 %v1008
    %1010 = vmatprep.subr.mxu0 0.0
    %v1011 = vand.u32 %v36, 4294901760
    %v1012 = vsub.f32 %v36, %v1011
    %v1013 = vand.u32 %v1012, 4294901760
    %1014 = vmatpush1.msra.mxu0 %v1013
    %1015 = vmatprep.subr.mxu0 0.0
    %v1016 = vand.u32 %v37, 4294901760
    %v1017 = vsub.f32 %v37, %v1016
    %v1018 = vand.u32 %v1017, 4294901760
    %1019 = vmatpush1.msra.mxu0 %v1018
    %1020 = vmatprep.subr.mxu0 0.0
    %v1021 = vand.u32 %v38, 4294901760
    %v1022 = vsub.f32 %v38, %v1021
    %v1023 = vand.u32 %v1022, 4294901760
    %1024 = vmatpush1.msra.mxu0 %v1023
    %1025 = vmatprep.subr.mxu0 0.0
    %v1026 = vand.u32 %v39, 4294901760
    %v1027 = vsub.f32 %v39, %v1026
    %v1028 = vand.u32 %v1027, 4294901760
    %1029 = vmatpush1.msra.mxu0 %v1028
    %1030 = vmatprep.subr.mxu0 0.0
    %v1031 = vand.u32 %v40, 4294901760
    %v1032 = vsub.f32 %v40, %v1031
    %v1033 = vand.u32 %v1032, 4294901760
    %1034 = vmatpush1.msra.mxu0 %v1033
    %1035 = vmatprep.subr.mxu0 0.0
    %v1036 = vand.u32 %v41, 4294901760
    %v1037 = vsub.f32 %v41, %v1036
    %v1038 = vand.u32 %v1037, 4294901760
    %1039 = vmatpush1.msra.mxu0 %v1038
    %1040 = vmatprep.subr.mxu0 0.0
    %v1041 = vand.u32 %v42, 4294901760
    %v1042 = vsub.f32 %v42, %v1041
    %v1043 = vand.u32 %v1042, 4294901760
    %1044 = vmatpush1.msra.mxu0 %v1043
    %1045 = vmatprep.subr.mxu0 0.0
    %v1046 = vand.u32 %v43, 4294901760
    %v1047 = vsub.f32 %v43, %v1046
    %v1048 = vand.u32 %v1047, 4294901760
    %1049 = vmatpush1.msra.mxu0 %v1048
    %1050 = vmatprep.subr.mxu0 0.0
    %v1051 = vand.u32 %v44, 4294901760
    %v1052 = vsub.f32 %v44, %v1051
    %v1053 = vand.u32 %v1052, 4294901760
    %1054 = vmatpush1.msra.mxu0 %v1053
    %1055 = vmatprep.subr.mxu0 0.0
    %v1056 = vand.u32 %v45, 4294901760
    %v1057 = vsub.f32 %v45, %v1056
    %v1058 = vand.u32 %v1057, 4294901760
    %1059 = vmatpush1.msra.mxu0 %v1058
    %1060 = vmatprep.subr.mxu0 0.0
    %1061 = vmatpush1.msra.mxu0 0.0
    %1062 = vmatprep.subr.mxu0 0.0
    %1063 = vmatpush1.msra.mxu0 0.0
    %1064 = vmatprep.subr.mxu0 0.0
    %1065 = vmatpush1.msra.mxu0 0.0
    %1066 = vmatprep.subr.mxu0 0.0
    %1067 = vmatpush1.msra.mxu0 0.0
    %1068 = vmatprep.subr.mxu0 0.0
    %1069 = vmatpush1.msra.mxu0 0.0
    %1070 = vmatprep.subr.mxu0 0.0
    %1071 = vmatpush1.msra.mxu0 0.0
    %1072 = vmatprep.subr.mxu0 0.0
    %1073 = vmatpush1.msra.mxu0 0.0
    %1074 = vmatprep.subr.mxu0 0.0
    %1075 = vmatpush1.msra.mxu0 0.0
    %1076 = vmatprep.subr.mxu0 0.0
    %1077 = vmatpush1.msra.mxu0 0.0
    %1078 = vmatprep.subr.mxu0 0.0
    %1079 = vmatpush1.msra.mxu0 0.0
    %1080 = vmatprep.subr.mxu0 0.0
    %1081 = vmatpush1.msra.mxu0 0.0
    %1082 = vmatprep.subr.mxu0 0.0
    %1083 = vmatpush1.msra.mxu0 0.0
    %1084 = vmatprep.subr.mxu0 0.0
    %1085 = vmatpush1.msra.mxu0 0.0
    %1086 = vmatprep.subr.mxu0 0.0
    %1087 = vmatpush1.msra.mxu0 0.0
    %1088 = vmatprep.subr.mxu0 0.0
    %1089 = vmatpush1.msra.mxu0 0.0
    %1090 = vmatprep.subr.mxu0 0.0
    %1091 = vmatpush1.msra.mxu0 0.0
    %1092 = vmatprep.mubr.f32.mxu0 0.0
    %v1093 = vand.u32 %v64, 4294901760
    %1094 = vmatmul.mubr.f32.gmra.mrb[0].mxu0 %v1093
    %v1095 = vpop.f32.mrb[0].mxu0
    %v1096 = vadd.f32 %v857, %v1095
    %v1097 = vpop.f32.mrb[0].mxu0
    %1098 = vmatprep.mubr.f32.mxu0 0.0
    %v1099 = vand.u32 %v65, 4294901760
    %1100 = vmatmul.mubr.f32.gmra.mrb[0].mxu0 %v1099
    %v1101 = vpop.f32.mrb[0].mxu0
    %v1102 = vadd.f32 %v865, %v1101
    %v1103 = vpop.f32.mrb[0].mxu0
    %1104 = vmatprep.mubr.f32.mxu0 0.0
    %v1105 = vand.u32 %v66, 4294901760
    %1106 = vmatmul.mubr.f32.gmra.mrb[0].mxu0 %v1105
    %v1107 = vpop.f32.mrb[0].mxu0
    %v1108 = vadd.f32 %v873, %v1107
    %v1109 = vpop.f32.mrb[0].mxu0
    %1110 = vmatprep.mubr.f32.mxu0 0.0
    %v1111 = vand.u32 %v67, 4294901760
    %1112 = vmatmul.mubr.f32.gmra.mrb[0].mxu0 %v1111
    %v1113 = vpop.f32.mrb[0].mxu0
    %v1114 = vadd.f32 %v881, %v1113
    %v1115 = vpop.f32.mrb[0].mxu0
    %1116 = vmatprep.mubr.f32.mxu0 0.0
    %v1117 = vand.u32 %v68, 4294901760
    %1118 = vmatmul.mubr.f32.gmra.mrb[0].mxu0 %v1117
    %v1119 = vpop.f32.mrb[0].mxu0
    %v1120 = vadd.f32 %v889, %v1119
    %v1121 = vpop.f32.mrb[0].mxu0
    %1122 = vmatprep.mubr.f32.mxu0 0.0
    %v1123 = vand.u32 %v69, 4294901760
    %1124 = vmatmul.mubr.f32.gmra.mrb[0].mxu0 %v1123
    %v1125 = vpop.f32.mrb[0].mxu0
    %v1126 = vadd.f32 %v897, %v1125
    %v1127 = vpop.f32.mrb[0].mxu0
    %1128 = vmatprep.mubr.f32.mxu0 0.0
    %v1129 = vand.u32 %v70, 4294901760
    %1130 = vmatmul.mubr.f32.gmra.mrb[0].mxu0 %v1129
    %v1131 = vpop.f32.mrb[0].mxu0
    %v1132 = vadd.f32 %v905, %v1131
    %v1133 = vpop.f32.mrb[0].mxu0
    %1134 = vmatprep.mubr.f32.mxu0 0.0
    %v1135 = vand.u32 %v71, 4294901760
    %1136 = vmatmul.mubr.f32.gmra.mrb[0].mxu0 %v1135
    %v1137 = vpop.f32.mrb[0].mxu0
    %v1138 = vadd.f32 %v913, %v1137
    %v1139 = vpop.f32.mrb[0].mxu0
    %1140 = vmatprep.mubr.f32.mxu0 0.0
    %v1141 = vand.u32 %v72, 4294901760
    %1142 = vmatmul.mubr.f32.gmra.mrb[0].mxu0 %v1141
    %v1143 = vpop.f32.mrb[0].mxu0
    %v1144 = vadd.f32 %v921, %v1143
    %v1145 = vpop.f32.mrb[0].mxu0
    %1146 = vmatprep.mubr.f32.mxu0 0.0
    %v1147 = vand.u32 %v73, 4294901760
    %1148 = vmatmul.mubr.f32.gmra.mrb[0].mxu0 %v1147
    %v1149 = vpop.f32.mrb[0].mxu0
    %v1150 = vadd.f32 %v929, %v1149
    %v1151 = vpop.f32.mrb[0].mxu0
    %1152 = vmatprep.mubr.f32.mxu0 0.0
    %v1153 = vand.u32 %v74, 4294901760
    %1154 = vmatmul.mubr.f32.gmra.mrb[0].mxu0 %v1153
    %v1155 = vpop.f32.mrb[0].mxu0
    %v1156 = vadd.f32 %v937, %v1155
    %v1157 = vpop.f32.mrb[0].mxu0
    %1158 = vmatprep.mubr.f32.mxu0 0.0
    %v1159 = vand.u32 %v75, 4294901760
    %1160 = vmatmul.mubr.f32.gmra.mrb[0].mxu0 %v1159
    %v1161 = vpop.f32.mrb[0].mxu0
    %v1162 = vadd.f32 %v945, %v1161
    %v1163 = vpop.f32.mrb[0].mxu0
    %1164 = vmatprep.mubr.f32.mxu0 0.0
    %v1165 = vand.u32 %v76, 4294901760
    %1166 = vmatmul.mubr.f32.gmra.mrb[0].mxu0 %v1165
    %v1167 = vpop.f32.mrb[0].mxu0
    %v1168 = vadd.f32 %v953, %v1167
    %v1169 = vpop.f32.mrb[0].mxu0
    %1170 = vmatprep.mubr.f32.mxu0 0.0
    %v1171 = vand.u32 %v77, 4294901760
    %1172 = vmatmul.mubr.f32.gmra.mrb[0].mxu0 %v1171
    %v1173 = vpop.f32.mrb[0].mxu0
    %v1174 = vadd.f32 %v961, %v1173
    %v1175 = vpop.f32.mrb[0].mxu0
    %1176 = vmatprep.mubr.f32.mxu0 0.0
    %v1177 = vand.u32 %v78, 4294901760
    %1178 = vmatmul.mubr.f32.gmra.mrb[0].mxu0 %v1177
    %v1179 = vpop.f32.mrb[0].mxu0
    %v1180 = vadd.f32 %v969, %v1179
    %v1181 = vpop.f32.mrb[0].mxu0
    %1182 = vmatprep.mubr.f32.mxu0 0.0
    %v1183 = vand.u32 %v79, 4294901760
    %1184 = vmatmul.mubr.f32.gmra.mrb[0].mxu0 %v1183
    %v1185 = vpop.f32.mrb[0].mxu0
    %v1186 = vadd.f32 %v977, %v1185
    %v1187 = vpop.f32.mrb[0].mxu0
    %1188 = vdwg.mxu0
    %1189 = vmatprep.subr.mxu0 0.0
    %v1190 = vand.u32 %v30, 4294901760
    %1191 = vmatpush1.msra.mxu0 %v1190
    %1192 = vmatprep.subr.mxu0 0.0
    %v1193 = vand.u32 %v31, 4294901760
    %1194 = vmatpush1.msra.mxu0 %v1193
    %1195 = vmatprep.subr.mxu0 0.0
    %v1196 = vand.u32 %v32, 4294901760
    %1197 = vmatpush1.msra.mxu0 %v1196
    %1198 = vmatprep.subr.mxu0 0.0
    %v1199 = vand.u32 %v33, 4294901760
    %1200 = vmatpush1.msra.mxu0 %v1199
    %1201 = vmatprep.subr.mxu0 0.0
    %v1202 = vand.u32 %v34, 4294901760
    %1203 = vmatpush1.msra.mxu0 %v1202
    %1204 = vmatprep.subr.mxu0 0.0
    %v1205 = vand.u32 %v35, 4294901760
    %1206 = vmatpush1.msra.mxu0 %v1205
    %1207 = vmatprep.subr.mxu0 0.0
    %v1208 = vand.u32 %v36, 4294901760
    %1209 = vmatpush1.msra.mxu0 %v1208
    %1210 = vmatprep.subr.mxu0 0.0
    %v1211 = vand.u32 %v37, 4294901760
    %1212 = vmatpush1.msra.mxu0 %v1211
    %1213 = vmatprep.subr.mxu0 0.0
    %v1214 = vand.u32 %v38, 4294901760
    %1215 = vmatpush1.msra.mxu0 %v1214
    %1216 = vmatprep.subr.mxu0 0.0
    %v1217 = vand.u32 %v39, 4294901760
    %1218 = vmatpush1.msra.mxu0 %v1217
    %1219 = vmatprep.subr.mxu0 0.0
    %v1220 = vand.u32 %v40, 4294901760
    %1221 = vmatpush1.msra.mxu0 %v1220
    %1222 = vmatprep.subr.mxu0 0.0
    %v1223 = vand.u32 %v41, 4294901760
    %1224 = vmatpush1.msra.mxu0 %v1223
    %1225 = vmatprep.subr.mxu0 0.0
    %v1226 = vand.u32 %v42, 4294901760
    %1227 = vmatpush1.msra.mxu0 %v1226
    %1228 = vmatprep.subr.mxu0 0.0
    %v1229 = vand.u32 %v43, 4294901760
    %1230 = vmatpush1.msra.mxu0 %v1229
    %1231 = vmatprep.subr.mxu0 0.0
    %v1232 = vand.u32 %v44, 4294901760
    %1233 = vmatpush1.msra.mxu0 %v1232
    %1234 = vmatprep.subr.mxu0 0.0
    %v1235 = vand.u32 %v45, 4294901760
    %1236 = vmatpush1.msra.mxu0 %v1235
    %1237 = vmatprep.subr.mxu0 0.0
    %1238 = vmatpush1.msra.mxu0 0.0
    %1239 = vmatprep.subr.mxu0 0.0
    %1240 = vmatpush1.msra.mxu0 0.0
    %1241 = vmatprep.subr.mxu0 0.0
    %1242 = vmatpush1.msra.mxu0 0.0
    %1243 = vmatprep.subr.mxu0 0.0
    %1244 = vmatpush1.msra.mxu0 0.0
    %1245 = vmatprep.subr.mxu0 0.0
    %1246 = vmatpush1.msra.mxu0 0.0
    %1247 = vmatprep.subr.mxu0 0.0
    %1248 = vmatpush1.msra.mxu0 0.0
    %1249 = vmatprep.subr.mxu0 0.0
    %1250 = vmatpush1.msra.mxu0 0.0
    %1251 = vmatprep.subr.mxu0 0.0
    %1252 = vmatpush1.msra.mxu0 0.0
    %1253 = vmatprep.subr.mxu0 0.0
    %1254 = vmatpush1.msra.mxu0 0.0
    %1255 = vmatprep.subr.mxu0 0.0
    %1256 = vmatpush1.msra.mxu0 0.0
    %1257 = vmatprep.subr.mxu0 0.0
    %1258 = vmatpush1.msra.mxu0 0.0
    %1259 = vmatprep.subr.mxu0 0.0
    %1260 = vmatpush1.msra.mxu0 0.0
    %1261 = vmatprep.subr.mxu0 0.0
    %1262 = vmatpush1.msra.mxu0 0.0
    %1263 = vmatprep.subr.mxu0 0.0
    %1264 = vmatpush1.msra.mxu0 0.0
    %1265 = vmatprep.subr.mxu0 0.0
    %1266 = vmatpush1.msra.mxu0 0.0
    %1267 = vmatprep.subr.mxu0 0.0
    %1268 = vmatpush1.msra.mxu0 0.0
    %1269 = vmatprep.mubr.f32.mxu0 0.0
    %v1270 = vand.u32 %v64, 4294901760
    %1271 = vmatmul.mubr.f32.gmra.mrb[0].mxu0 %v1270
    %v1272 = vpop.f32.mrb[0].mxu0
    %v1273 = vadd.f32 %v1096, %v1272
    %v1274 = vpop.f32.mrb[0].mxu0
    %1275 = vmatprep.mubr.f32.mxu0 0.0
    %v1276 = vand.u32 %v65, 4294901760
    %1277 = vmatmul.mubr.f32.gmra.mrb[0].mxu0 %v1276
    %v1278 = vpop.f32.mrb[0].mxu0
    %v1279 = vadd.f32 %v1102, %v1278
    %v1280 = vpop.f32.mrb[0].mxu0
    %1281 = vmatprep.mubr.f32.mxu0 0.0
    %v1282 = vand.u32 %v66, 4294901760
    %1283 = vmatmul.mubr.f32.gmra.mrb[0].mxu0 %v1282
    %v1284 = vpop.f32.mrb[0].mxu0
    %v1285 = vadd.f32 %v1108, %v1284
    %v1286 = vpop.f32.mrb[0].mxu0
    %1287 = vmatprep.mubr.f32.mxu0 0.0
    %v1288 = vand.u32 %v67, 4294901760
    %1289 = vmatmul.mubr.f32.gmra.mrb[0].mxu0 %v1288
    %v1290 = vpop.f32.mrb[0].mxu0
    %v1291 = vadd.f32 %v1114, %v1290
    %v1292 = vpop.f32.mrb[0].mxu0
    %1293 = vmatprep.mubr.f32.mxu0 0.0
    %v1294 = vand.u32 %v68, 4294901760
    %1295 = vmatmul.mubr.f32.gmra.mrb[0].mxu0 %v1294
    %v1296 = vpop.f32.mrb[0].mxu0
    %v1297 = vadd.f32 %v1120, %v1296
    %v1298 = vpop.f32.mrb[0].mxu0
    %1299 = vmatprep.mubr.f32.mxu0 0.0
    %v1300 = vand.u32 %v69, 4294901760
    %1301 = vmatmul.mubr.f32.gmra.mrb[0].mxu0 %v1300
    %v1302 = vpop.f32.mrb[0].mxu0
    %v1303 = vadd.f32 %v1126, %v1302
    %v1304 = vpop.f32.mrb[0].mxu0
    %1305 = vmatprep.mubr.f32.mxu0 0.0
    %v1306 = vand.u32 %v70, 4294901760
    %1307 = vmatmul.mubr.f32.gmra.mrb[0].mxu0 %v1306
    %v1308 = vpop.f32.mrb[0].mxu0
    %v1309 = vadd.f32 %v1132, %v1308
    %v1310 = vpop.f32.mrb[0].mxu0
    %1311 = vmatprep.mubr.f32.mxu0 0.0
    %v1312 = vand.u32 %v71, 4294901760
    %1313 = vmatmul.mubr.f32.gmra.mrb[0].mxu0 %v1312
    %v1314 = vpop.f32.mrb[0].mxu0
    %v1315 = vadd.f32 %v1138, %v1314
    %v1316 = vpop.f32.mrb[0].mxu0
    %1317 = vmatprep.mubr.f32.mxu0 0.0
    %v1318 = vand.u32 %v72, 4294901760
    %1319 = vmatmul.mubr.f32.gmra.mrb[0].mxu0 %v1318
    %v1320 = vpop.f32.mrb[0].mxu0
    %v1321 = vadd.f32 %v1144, %v1320
    %v1322 = vpop.f32.mrb[0].mxu0
    %1323 = vmatprep.mubr.f32.mxu0 0.0
    %v1324 = vand.u32 %v73, 4294901760
    %1325 = vmatmul.mubr.f32.gmra.mrb[0].mxu0 %v1324
    %v1326 = vpop.f32.mrb[0].mxu0
    %v1327 = vadd.f32 %v1150, %v1326
    %v1328 = vpop.f32.mrb[0].mxu0
    %1329 = vmatprep.mubr.f32.mxu0 0.0
    %v1330 = vand.u32 %v74, 4294901760
    %1331 = vmatmul.mubr.f32.gmra.mrb[0].mxu0 %v1330
    %v1332 = vpop.f32.mrb[0].mxu0
    %v1333 = vadd.f32 %v1156, %v1332
    %v1334 = vpop.f32.mrb[0].mxu0
    %1335 = vmatprep.mubr.f32.mxu0 0.0
    %v1336 = vand.u32 %v75, 4294901760
    %1337 = vmatmul.mubr.f32.gmra.mrb[0].mxu0 %v1336
    %v1338 = vpop.f32.mrb[0].mxu0
    %v1339 = vadd.f32 %v1162, %v1338
    %v1340 = vpop.f32.mrb[0].mxu0
    %1341 = vmatprep.mubr.f32.mxu0 0.0
    %v1342 = vand.u32 %v76, 4294901760
    %1343 = vmatmul.mubr.f32.gmra.mrb[0].mxu0 %v1342
    %v1344 = vpop.f32.mrb[0].mxu0
    %v1345 = vadd.f32 %v1168, %v1344
    %v1346 = vpop.f32.mrb[0].mxu0
    %1347 = vmatprep.mubr.f32.mxu0 0.0
    %v1348 = vand.u32 %v77, 4294901760
    %1349 = vmatmul.mubr.f32.gmra.mrb[0].mxu0 %v1348
    %v1350 = vpop.f32.mrb[0].mxu0
    %v1351 = vadd.f32 %v1174, %v1350
    %v1352 = vpop.f32.mrb[0].mxu0
    %1353 = vmatprep.mubr.f32.mxu0 0.0
    %v1354 = vand.u32 %v78, 4294901760
    %1355 = vmatmul.mubr.f32.gmra.mrb[0].mxu0 %v1354
    %v1356 = vpop.f32.mrb[0].mxu0
    %v1357 = vadd.f32 %v1180, %v1356
    %v1358 = vpop.f32.mrb[0].mxu0
    %1359 = vmatprep.mubr.f32.mxu0 0.0
    %v1360 = vand.u32 %v79, 4294901760
    %1361 = vmatmul.mubr.f32.gmra.mrb[0].mxu0 %v1360
    %v1362 = vpop.f32.mrb[0].mxu0
    %v1363 = vadd.f32 %v1186, %v1362
    %v1364 = vpop.f32.mrb[0].mxu0
    %1365 = vdwg.mxu0
    %s1366 = sld [smem:[#allocation2 + $0x1]]
    %v1367 = vstv %s1366
    %v1368 = vmul.f32 %v1273, %v1367
    %v1369 = vmul.f32 %v1279, %v1367
    %v1370 = vmul.f32 %v1285, %v1367
    %v1371 = vmul.f32 %v1291, %v1367
    %v1372 = vmul.f32 %v1297, %v1367
    %v1373 = vmul.f32 %v1303, %v1367
    %v1374 = vmul.f32 %v1309, %v1367
    %v1375 = vmul.f32 %v1315, %v1367
    %v1376 = vmul.f32 %v1321, %v1367
    %v1377 = vmul.f32 %v1327, %v1367
    %v1378 = vmul.f32 %v1333, %v1367
    %v1379 = vmul.f32 %v1339, %v1367
    %v1380 = vmul.f32 %v1345, %v1367
    %v1381 = vmul.f32 %v1351, %v1367
    %v1382 = vmul.f32 %v1357, %v1367
    %v1383 = vmul.f32 %v1363, %v1367
    %v1384 = vadd.f32 %v48, %v1368
    %v1385 = vadd.f32 %v49, %v1369
    %v1386 = vadd.f32 %v50, %v1370
    %v1387 = vadd.f32 %v51, %v1371
    %v1388 = vadd.f32 %v52, %v1372
    %v1389 = vadd.f32 %v53, %v1373
    %v1390 = vadd.f32 %v54, %v1374
    %v1391 = vadd.f32 %v55, %v1375
    %v1392 = vadd.f32 %v56, %v1376
    %v1393 = vadd.f32 %v57, %v1377
    %v1394 = vadd.f32 %v58, %v1378
    %v1395 = vadd.f32 %v59, %v1379
    %v1396 = vadd.f32 %v60, %v1380
    %v1397 = vadd.f32 %v61, %v1381
    %v1398 = vadd.f32 %v62, %v1382
    %v1399 = vadd.f32 %v63, %v1383
    %1400 = vmatprep.subr.mxu0 0.0
    %v1401 = vand.u32 %v1273, 4294901760
    %1402 = vmatpush1.msra.mxu0 %v1401
    %1403 = vmatprep.subr.mxu0 0.0
    %v1404 = vand.u32 %v1279, 4294901760
    %1405 = vmatpush1.msra.mxu0 %v1404
    %1406 = vmatprep.subr.mxu0 0.0
    %v1407 = vand.u32 %v1285, 4294901760
    %1408 = vmatpush1.msra.mxu0 %v1407
    %1409 = vmatprep.subr.mxu0 0.0
    %v1410 = vand.u32 %v1291, 4294901760
    %1411 = vmatpush1.msra.mxu0 %v1410
    %1412 = vmatprep.subr.mxu0 0.0
    %v1413 = vand.u32 %v1297, 4294901760
    %1414 = vmatpush1.msra.mxu0 %v1413
    %1415 = vmatprep.subr.mxu0 0.0
    %v1416 = vand.u32 %v1303, 4294901760
    %1417 = vmatpush1.msra.mxu0 %v1416
    %1418 = vmatprep.subr.mxu0 0.0
    %v1419 = vand.u32 %v1309, 4294901760
    %1420 = vmatpush1.msra.mxu0 %v1419
    %1421 = vmatprep.subr.mxu0 0.0
    %v1422 = vand.u32 %v1315, 4294901760
    %1423 = vmatpush1.msra.mxu0 %v1422
    %1424 = vmatprep.subr.mxu0 0.0
    %v1425 = vand.u32 %v1321, 4294901760
    %1426 = vmatpush1.msra.mxu0 %v1425
    %1427 = vmatprep.subr.mxu0 0.0
    %v1428 = vand.u32 %v1327, 4294901760
    %1429 = vmatpush1.msra.mxu0 %v1428
    %1430 = vmatprep.subr.mxu0 0.0
    %v1431 = vand.u32 %v1333, 4294901760
    %1432 = vmatpush1.msra.mxu0 %v1431
    %1433 = vmatprep.subr.mxu0 0.0
    %v1434 = vand.u32 %v1339, 4294901760
    %1435 = vmatpush1.msra.mxu0 %v1434
    %1436 = vmatprep.subr.mxu0 0.0
    %v1437 = vand.u32 %v1345, 4294901760
    %1438 = vmatpush1.msra.mxu0 %v1437
    %1439 = vmatprep.subr.mxu0 0.0
    %v1440 = vand.u32 %v1351, 4294901760
    %1441 = vmatpush1.msra.mxu0 %v1440
    %1442 = vmatprep.subr.mxu0 0.0
    %v1443 = vand.u32 %v1357, 4294901760
    %1444 = vmatpush1.msra.mxu0 %v1443
    %1445 = vmatprep.subr.mxu0 0.0
    %v1446 = vand.u32 %v1363, 4294901760
    %1447 = vmatpush1.msra.mxu0 %v1446
    %1448 = vmatprep.subr.mxu0 0.0
    %1449 = vmatpush1.msra.mxu0 0.0
    %1450 = vmatprep.subr.mxu0 0.0
    %1451 = vmatpush1.msra.mxu0 0.0
    %1452 = vmatprep.subr.mxu0 0.0
    %1453 = vmatpush1.msra.mxu0 0.0
    %1454 = vmatprep.subr.mxu0 0.0
    %1455 = vmatpush1.msra.mxu0 0.0
    %1456 = vmatprep.subr.mxu0 0.0
    %1457 = vmatpush1.msra.mxu0 0.0
    %1458 = vmatprep.subr.mxu0 0.0
    %1459 = vmatpush1.msra.mxu0 0.0
    %1460 = vmatprep.subr.mxu0 0.0
    %1461 = vmatpush1.msra.mxu0 0.0
    %1462 = vmatprep.subr.mxu0 0.0
    %1463 = vmatpush1.msra.mxu0 0.0
    %1464 = vmatprep.subr.mxu0 0.0
    %1465 = vmatpush1.msra.mxu0 0.0
    %1466 = vmatprep.subr.mxu0 0.0
    %1467 = vmatpush1.msra.mxu0 0.0
    %1468 = vmatprep.subr.mxu0 0.0
    %1469 = vmatpush1.msra.mxu0 0.0
    %1470 = vmatprep.subr.mxu0 0.0
    %1471 = vmatpush1.msra.mxu0 0.0
    %1472 = vmatprep.subr.mxu0 0.0
    %1473 = vmatpush1.msra.mxu0 0.0
    %1474 = vmatprep.subr.mxu0 0.0
    %1475 = vmatpush1.msra.mxu0 0.0
    %1476 = vmatprep.subr.mxu0 0.0
    %1477 = vmatpush1.msra.mxu0 0.0
    %1478 = vmatprep.subr.mxu0 0.0
    %1479 = vmatpush1.msra.mxu0 0.0
    %1480 = vmatprep.mubr.f32.mxu0 0.0
    %v1481 = vand.u32 %v64, 4294901760
    %v1482 = vsub.f32 %v64, %v1481
    %v1483 = vand.u32 %v1482, 4294901760
    %v1484 = vsub.f32 %v1482, %v1483
    %v1485 = vand.u32 %v1484, 4294901760
    %1486 = vmatmul.mubr.f32.gmra.mrb[0].mxu0 %v1485
    %v1487 = vpop.f32.mrb[0].mxu0
    %v1488 = vadd.f32 0.0, %v1487
    %v1489 = vpop.f32.mrb[0].mxu0
    %1490 = vmatprep.mubr.f32.mxu0 0.0
    %v1491 = vand.u32 %v65, 4294901760
    %v1492 = vsub.f32 %v65, %v1491
    %v1493 = vand.u32 %v1492, 4294901760
    %v1494 = vsub.f32 %v1492, %v1493
    %v1495 = vand.u32 %v1494, 4294901760
    %1496 = vmatmul.mubr.f32.gmra.mrb[0].mxu0 %v1495
    %v1497 = vpop.f32.mrb[0].mxu0
    %v1498 = vadd.f32 0.0, %v1497
    %v1499 = vpop.f32.mrb[0].mxu0
    %1500 = vmatprep.mubr.f32.mxu0 0.0
    %v1501 = vand.u32 %v66, 4294901760
    %v1502 = vsub.f32 %v66, %v1501
    %v1503 = vand.u32 %v1502, 4294901760
    %v1504 = vsub.f32 %v1502, %v1503
    %v1505 = vand.u32 %v1504, 4294901760
    %1506 = vmatmul.mubr.f32.gmra.mrb[0].mxu0 %v1505
    %v1507 = vpop.f32.mrb[0].mxu0
    %v1508 = vadd.f32 0.0, %v1507
    %v1509 = vpop.f32.mrb[0].mxu0
    %1510 = vmatprep.mubr.f32.mxu0 0.0
    %v1511 = vand.u32 %v67, 4294901760
    %v1512 = vsub.f32 %v67, %v1511
    %v1513 = vand.u32 %v1512, 4294901760
    %v1514 = vsub.f32 %v1512, %v1513
    %v1515 = vand.u32 %v1514, 4294901760
    %1516 = vmatmul.mubr.f32.gmra.mrb[0].mxu0 %v1515
    %v1517 = vpop.f32.mrb[0].mxu0
    %v1518 = vadd.f32 0.0, %v1517
    %v1519 = vpop.f32.mrb[0].mxu0
    %1520 = vmatprep.mubr.f32.mxu0 0.0
    %v1521 = vand.u32 %v68, 4294901760
    %v1522 = vsub.f32 %v68, %v1521
    %v1523 = vand.u32 %v1522, 4294901760
    %v1524 = vsub.f32 %v1522, %v1523
    %v1525 = vand.u32 %v1524, 4294901760
    %1526 = vmatmul.mubr.f32.gmra.mrb[0].mxu0 %v1525
    %v1527 = vpop.f32.mrb[0].mxu0
    %v1528 = vadd.f32 0.0, %v1527
    %v1529 = vpop.f32.mrb[0].mxu0
    %1530 = vmatprep.mubr.f32.mxu0 0.0
    %v1531 = vand.u32 %v69, 4294901760
    %v1532 = vsub.f32 %v69, %v1531
    %v1533 = vand.u32 %v1532, 4294901760
    %v1534 = vsub.f32 %v1532, %v1533
    %v1535 = vand.u32 %v1534, 4294901760
    %1536 = vmatmul.mubr.f32.gmra.mrb[0].mxu0 %v1535
    %v1537 = vpop.f32.mrb[0].mxu0
    %v1538 = vadd.f32 0.0, %v1537
    %v1539 = vpop.f32.mrb[0].mxu0
    %1540 = vmatprep.mubr.f32.mxu0 0.0
    %v1541 = vand.u32 %v70, 4294901760
    %v1542 = vsub.f32 %v70, %v1541
    %v1543 = vand.u32 %v1542, 4294901760
    %v1544 = vsub.f32 %v1542, %v1543
    %v1545 = vand.u32 %v1544, 4294901760
    %1546 = vmatmul.mubr.f32.gmra.mrb[0].mxu0 %v1545
    %v1547 = vpop.f32.mrb[0].mxu0
    %v1548 = vadd.f32 0.0, %v1547
    %v1549 = vpop.f32.mrb[0].mxu0
    %1550 = vmatprep.mubr.f32.mxu0 0.0
    %v1551 = vand.u32 %v71, 4294901760
    %v1552 = vsub.f32 %v71, %v1551
    %v1553 = vand.u32 %v1552, 4294901760
    %v1554 = vsub.f32 %v1552, %v1553
    %v1555 = vand.u32 %v1554, 4294901760
    %1556 = vmatmul.mubr.f32.gmra.mrb[0].mxu0 %v1555
    %v1557 = vpop.f32.mrb[0].mxu0
    %v1558 = vadd.f32 0.0, %v1557
    %v1559 = vpop.f32.mrb[0].mxu0
    %1560 = vmatprep.mubr.f32.mxu0 0.0
    %v1561 = vand.u32 %v72, 4294901760
    %v1562 = vsub.f32 %v72, %v1561
    %v1563 = vand.u32 %v1562, 4294901760
    %v1564 = vsub.f32 %v1562, %v1563
    %v1565 = vand.u32 %v1564, 4294901760
    %1566 = vmatmul.mubr.f32.gmra.mrb[0].mxu0 %v1565
    %v1567 = vpop.f32.mrb[0].mxu0
    %v1568 = vadd.f32 0.0, %v1567
    %v1569 = vpop.f32.mrb[0].mxu0
    %1570 = vmatprep.mubr.f32.mxu0 0.0
    %v1571 = vand.u32 %v73, 4294901760
    %v1572 = vsub.f32 %v73, %v1571
    %v1573 = vand.u32 %v1572, 4294901760
    %v1574 = vsub.f32 %v1572, %v1573
    %v1575 = vand.u32 %v1574, 4294901760
    %1576 = vmatmul.mubr.f32.gmra.mrb[0].mxu0 %v1575
    %v1577 = vpop.f32.mrb[0].mxu0
    %v1578 = vadd.f32 0.0, %v1577
    %v1579 = vpop.f32.mrb[0].mxu0
    %1580 = vmatprep.mubr.f32.mxu0 0.0
    %v1581 = vand.u32 %v74, 4294901760
    %v1582 = vsub.f32 %v74, %v1581
    %v1583 = vand.u32 %v1582, 4294901760
    %v1584 = vsub.f32 %v1582, %v1583
    %v1585 = vand.u32 %v1584, 4294901760
    %1586 = vmatmul.mubr.f32.gmra.mrb[0].mxu0 %v1585
    %v1587 = vpop.f32.mrb[0].mxu0
    %v1588 = vadd.f32 0.0, %v1587
    %v1589 = vpop.f32.mrb[0].mxu0
    %1590 = vmatprep.mubr.f32.mxu0 0.0
    %v1591 = vand.u32 %v75, 4294901760
    %v1592 = vsub.f32 %v75, %v1591
    %v1593 = vand.u32 %v1592, 4294901760
    %v1594 = vsub.f32 %v1592, %v1593
    %v1595 = vand.u32 %v1594, 4294901760
    %1596 = vmatmul.mubr.f32.gmra.mrb[0].mxu0 %v1595
    %v1597 = vpop.f32.mrb[0].mxu0
    %v1598 = vadd.f32 0.0, %v1597
    %v1599 = vpop.f32.mrb[0].mxu0
    %1600 = vmatprep.mubr.f32.mxu0 0.0
    %v1601 = vand.u32 %v76, 4294901760
    %v1602 = vsub.f32 %v76, %v1601
    %v1603 = vand.u32 %v1602, 4294901760
    %v1604 = vsub.f32 %v1602, %v1603
    %v1605 = vand.u32 %v1604, 4294901760
    %1606 = vmatmul.mubr.f32.gmra.mrb[0].mxu0 %v1605
    %v1607 = vpop.f32.mrb[0].mxu0
    %v1608 = vadd.f32 0.0, %v1607
    %v1609 = vpop.f32.mrb[0].mxu0
    %1610 = vmatprep.mubr.f32.mxu0 0.0
    %v1611 = vand.u32 %v77, 4294901760
    %v1612 = vsub.f32 %v77, %v1611
    %v1613 = vand.u32 %v1612, 4294901760
    %v1614 = vsub.f32 %v1612, %v1613
    %v1615 = vand.u32 %v1614, 4294901760
    %1616 = vmatmul.mubr.f32.gmra.mrb[0].mxu0 %v1615
    %v1617 = vpop.f32.mrb[0].mxu0
    %v1618 = vadd.f32 0.0, %v1617
    %v1619 = vpop.f32.mrb[0].mxu0
    %1620 = vmatprep.mubr.f32.mxu0 0.0
    %v1621 = vand.u32 %v78, 4294901760
    %v1622 = vsub.f32 %v78, %v1621
    %v1623 = vand.u32 %v1622, 4294901760
    %v1624 = vsub.f32 %v1622, %v1623
    %v1625 = vand.u32 %v1624, 4294901760
    %1626 = vmatmul.mubr.f32.gmra.mrb[0].mxu0 %v1625
    %v1627 = vpop.f32.mrb[0].mxu0
    %v1628 = vadd.f32 0.0, %v1627
    %v1629 = vpop.f32.mrb[0].mxu0
    %1630 = vmatprep.mubr.f32.mxu0 0.0
    %v1631 = vand.u32 %v79, 4294901760
    %v1632 = vsub.f32 %v79, %v1631
    %v1633 = vand.u32 %v1632, 4294901760
    %v1634 = vsub.f32 %v1632, %v1633
    %v1635 = vand.u32 %v1634, 4294901760
    %1636 = vmatmul.mubr.f32.gmra.mrb[0].mxu0 %v1635
    %v1637 = vpop.f32.mrb[0].mxu0
    %v1638 = vadd.f32 0.0, %v1637
    %v1639 = vpop.f32.mrb[0].mxu0
    %1640 = vdwg.mxu0
    %1641 = vmatprep.subr.mxu0 0.0
    %v1642 = vand.u32 %v1273, 4294901760
    %v1643 = vsub.f32 %v1273, %v1642
    %v1644 = vand.u32 %v1643, 4294901760
    %v1645 = vsub.f32 %v1643, %v1644
    %v1646 = vand.u32 %v1645, 4294901760
    %1647 = vmatpush1.msra.mxu0 %v1646
    %1648 = vmatprep.subr.mxu0 0.0
    %v1649 = vand.u32 %v1279, 4294901760
    %v1650 = vsub.f32 %v1279, %v1649
    %v1651 = vand.u32 %v1650, 4294901760
    %v1652 = vsub.f32 %v1650, %v1651
    %v1653 = vand.u32 %v1652, 4294901760
    %1654 = vmatpush1.msra.mxu0 %v1653
    %1655 = vmatprep.subr.mxu0 0.0
    %v1656 = vand.u32 %v1285, 4294901760
    %v1657 = vsub.f32 %v1285, %v1656
    %v1658 = vand.u32 %v1657, 4294901760
    %v1659 = vsub.f32 %v1657, %v1658
    %v1660 = vand.u32 %v1659, 4294901760
    %1661 = vmatpush1.msra.mxu0 %v1660
    %1662 = vmatprep.subr.mxu0 0.0
    %v1663 = vand.u32 %v1291, 4294901760
    %v1664 = vsub.f32 %v1291, %v1663
    %v1665 = vand.u32 %v1664, 4294901760
    %v1666 = vsub.f32 %v1664, %v1665
    %v1667 = vand.u32 %v1666, 4294901760
    %1668 = vmatpush1.msra.mxu0 %v1667
    %1669 = vmatprep.subr.mxu0 0.0
    %v1670 = vand.u32 %v1297, 4294901760
    %v1671 = vsub.f32 %v1297, %v1670
    %v1672 = vand.u32 %v1671, 4294901760
    %v1673 = vsub.f32 %v1671, %v1672
    %v1674 = vand.u32 %v1673, 4294901760
    %1675 = vmatpush1.msra.mxu0 %v1674
    %1676 = vmatprep.subr.mxu0 0.0
    %v1677 = vand.u32 %v1303, 4294901760
    %v1678 = vsub.f32 %v1303, %v1677
    %v1679 = vand.u32 %v1678, 4294901760
    %v1680 = vsub.f32 %v1678, %v1679
    %v1681 = vand.u32 %v1680, 4294901760
    %1682 = vmatpush1.msra.mxu0 %v1681
    %1683 = vmatprep.subr.mxu0 0.0
    %v1684 = vand.u32 %v1309, 4294901760
    %v1685 = vsub.f32 %v1309, %v1684
    %v1686 = vand.u32 %v1685, 4294901760
    %v1687 = vsub.f32 %v1685, %v1686
    %v1688 = vand.u32 %v1687, 4294901760
    %1689 = vmatpush1.msra.mxu0 %v1688
    %1690 = vmatprep.subr.mxu0 0.0
    %v1691 = vand.u32 %v1315, 4294901760
    %v1692 = vsub.f32 %v1315, %v1691
    %v1693 = vand.u32 %v1692, 4294901760
    %v1694 = vsub.f32 %v1692, %v1693
    %v1695 = vand.u32 %v1694, 4294901760
    %1696 = vmatpush1.msra.mxu0 %v1695
    %1697 = vmatprep.subr.mxu0 0.0
    %v1698 = vand.u32 %v1321, 4294901760
    %v1699 = vsub.f32 %v1321, %v1698
    %v1700 = vand.u32 %v1699, 4294901760
    %v1701 = vsub.f32 %v1699, %v1700
    %v1702 = vand.u32 %v1701, 4294901760
    %1703 = vmatpush1.msra.mxu0 %v1702
    %1704 = vmatprep.subr.mxu0 0.0
    %v1705 = vand.u32 %v1327, 4294901760
    %v1706 = vsub.f32 %v1327, %v1705
    %v1707 = vand.u32 %v1706, 4294901760
    %v1708 = vsub.f32 %v1706, %v1707
    %v1709 = vand.u32 %v1708, 4294901760
    %1710 = vmatpush1.msra.mxu0 %v1709
    %1711 = vmatprep.subr.mxu0 0.0
    %v1712 = vand.u32 %v1333, 4294901760
    %v1713 = vsub.f32 %v1333, %v1712
    %v1714 = vand.u32 %v1713, 4294901760
    %v1715 = vsub.f32 %v1713, %v1714
    %v1716 = vand.u32 %v1715, 4294901760
    %1717 = vmatpush1.msra.mxu0 %v1716
    %1718 = vmatprep.subr.mxu0 0.0
    %v1719 = vand.u32 %v1339, 4294901760
    %v1720 = vsub.f32 %v1339, %v1719
    %v1721 = vand.u32 %v1720, 4294901760
    %v1722 = vsub.f32 %v1720, %v1721
    %v1723 = vand.u32 %v1722, 4294901760
    %1724 = vmatpush1.msra.mxu0 %v1723
    %1725 = vmatprep.subr.mxu0 0.0
    %v1726 = vand.u32 %v1345, 4294901760
    %v1727 = vsub.f32 %v1345, %v1726
    %v1728 = vand.u32 %v1727, 4294901760
    %v1729 = vsub.f32 %v1727, %v1728
    %v1730 = vand.u32 %v1729, 4294901760
    %1731 = vmatpush1.msra.mxu0 %v1730
    %1732 = vmatprep.subr.mxu0 0.0
    %v1733 = vand.u32 %v1351, 4294901760
    %v1734 = vsub.f32 %v1351, %v1733
    %v1735 = vand.u32 %v1734, 4294901760
    %v1736 = vsub.f32 %v1734, %v1735
    %v1737 = vand.u32 %v1736, 4294901760
    %1738 = vmatpush1.msra.mxu0 %v1737
    %1739 = vmatprep.subr.mxu0 0.0
    %v1740 = vand.u32 %v1357, 4294901760
    %v1741 = vsub.f32 %v1357, %v1740
    %v1742 = vand.u32 %v1741, 4294901760
    %v1743 = vsub.f32 %v1741, %v1742
    %v1744 = vand.u32 %v1743, 4294901760
    %1745 = vmatpush1.msra.mxu0 %v1744
    %1746 = vmatprep.subr.mxu0 0.0
    %v1747 = vand.u32 %v1363, 4294901760
    %v1748 = vsub.f32 %v1363, %v1747
    %v1749 = vand.u32 %v1748, 4294901760
    %v1750 = vsub.f32 %v1748, %v1749
    %v1751 = vand.u32 %v1750, 4294901760
    %1752 = vmatpush1.msra.mxu0 %v1751
    %1753 = vmatprep.subr.mxu0 0.0
    %1754 = vmatpush1.msra.mxu0 0.0
    %1755 = vmatprep.subr.mxu0 0.0
    %1756 = vmatpush1.msra.mxu0 0.0
    %1757 = vmatprep.subr.mxu0 0.0
    %1758 = vmatpush1.msra.mxu0 0.0
    %1759 = vmatprep.subr.mxu0 0.0
    %1760 = vmatpush1.msra.mxu0 0.0
    %1761 = vmatprep.subr.mxu0 0.0
    %1762 = vmatpush1.msra.mxu0 0.0
    %1763 = vmatprep.subr.mxu0 0.0
    %1764 = vmatpush1.msra.mxu0 0.0
    %1765 = vmatprep.subr.mxu0 0.0
    %1766 = vmatpush1.msra.mxu0 0.0
    %1767 = vmatprep.subr.mxu0 0.0
    %1768 = vmatpush1.msra.mxu0 0.0
    %1769 = vmatprep.subr.mxu0 0.0
    %1770 = vmatpush1.msra.mxu0 0.0
    %1771 = vmatprep.subr.mxu0 0.0
    %1772 = vmatpush1.msra.mxu0 0.0
    %1773 = vmatprep.subr.mxu0 0.0
    %1774 = vmatpush1.msra.mxu0 0.0
    %1775 = vmatprep.subr.mxu0 0.0
    %1776 = vmatpush1.msra.mxu0 0.0
    %1777 = vmatprep.subr.mxu0 0.0
    %1778 = vmatpush1.msra.mxu0 0.0
    %1779 = vmatprep.subr.mxu0 0.0
    %1780 = vmatpush1.msra.mxu0 0.0
    %1781 = vmatprep.subr.mxu0 0.0
    %1782 = vmatpush1.msra.mxu0 0.0
    %1783 = vmatprep.subr.mxu0 0.0
    %1784 = vmatpush1.msra.mxu0 0.0
    %1785 = vmatprep.mubr.f32.mxu0 0.0
    %v1786 = vand.u32 %v64, 4294901760
    %1787 = vmatmul.mubr.f32.gmra.mrb[0].mxu0 %v1786
    %v1788 = vpop.f32.mrb[0].mxu0
    %v1789 = vadd.f32 %v1488, %v1788
    %v1790 = vpop.f32.mrb[0].mxu0
    %1791 = vmatprep.mubr.f32.mxu0 0.0
    %v1792 = vand.u32 %v65, 4294901760
    %1793 = vmatmul.mubr.f32.gmra.mrb[0].mxu0 %v1792
    %v1794 = vpop.f32.mrb[0].mxu0
    %v1795 = vadd.f32 %v1498, %v1794
    %v1796 = vpop.f32.mrb[0].mxu0
    %1797 = vmatprep.mubr.f32.mxu0 0.0
    %v1798 = vand.u32 %v66, 4294901760
    %1799 = vmatmul.mubr.f32.gmra.mrb[0].mxu0 %v1798
    %v1800 = vpop.f32.mrb[0].mxu0
    %v1801 = vadd.f32 %v1508, %v1800
    %v1802 = vpop.f32.mrb[0].mxu0
    %1803 = vmatprep.mubr.f32.mxu0 0.0
    %v1804 = vand.u32 %v67, 4294901760
    %1805 = vmatmul.mubr.f32.gmra.mrb[0].mxu0 %v1804
    %v1806 = vpop.f32.mrb[0].mxu0
    %v1807 = vadd.f32 %v1518, %v1806
    %v1808 = vpop.f32.mrb[0].mxu0
    %1809 = vmatprep.mubr.f32.mxu0 0.0
    %v1810 = vand.u32 %v68, 4294901760
    %1811 = vmatmul.mubr.f32.gmra.mrb[0].mxu0 %v1810
    %v1812 = vpop.f32.mrb[0].mxu0
    %v1813 = vadd.f32 %v1528, %v1812
    %v1814 = vpop.f32.mrb[0].mxu0
    %1815 = vmatprep.mubr.f32.mxu0 0.0
    %v1816 = vand.u32 %v69, 4294901760
    %1817 = vmatmul.mubr.f32.gmra.mrb[0].mxu0 %v1816
    %v1818 = vpop.f32.mrb[0].mxu0
    %v1819 = vadd.f32 %v1538, %v1818
    %v1820 = vpop.f32.mrb[0].mxu0
    %1821 = vmatprep.mubr.f32.mxu0 0.0
    %v1822 = vand.u32 %v70, 4294901760
    %1823 = vmatmul.mubr.f32.gmra.mrb[0].mxu0 %v1822
    %v1824 = vpop.f32.mrb[0].mxu0
    %v1825 = vadd.f32 %v1548, %v1824
    %v1826 = vpop.f32.mrb[0].mxu0
    %1827 = vmatprep.mubr.f32.mxu0 0.0
    %v1828 = vand.u32 %v71, 4294901760
    %1829 = vmatmul.mubr.f32.gmra.mrb[0].mxu0 %v1828
    %v1830 = vpop.f32.mrb[0].mxu0
    %v1831 = vadd.f32 %v1558, %v1830
    %v1832 = vpop.f32.mrb[0].mxu0
    %1833 = vmatprep.mubr.f32.mxu0 0.0
    %v1834 = vand.u32 %v72, 4294901760
    %1835 = vmatmul.mubr.f32.gmra.mrb[0].mxu0 %v1834
    %v1836 = vpop.f32.mrb[0].mxu0
    %v1837 = vadd.f32 %v1568, %v1836
    %v1838 = vpop.f32.mrb[0].mxu0
    %1839 = vmatprep.mubr.f32.mxu0 0.0
    %v1840 = vand.u32 %v73, 4294901760
    %1841 = vmatmul.mubr.f32.gmra.mrb[0].mxu0 %v1840
    %v1842 = vpop.f32.mrb[0].mxu0
    %v1843 = vadd.f32 %v1578, %v1842
    %v1844 = vpop.f32.mrb[0].mxu0
    %1845 = vmatprep.mubr.f32.mxu0 0.0
    %v1846 = vand.u32 %v74, 4294901760
    %1847 = vmatmul.mubr.f32.gmra.mrb[0].mxu0 %v1846
    %v1848 = vpop.f32.mrb[0].mxu0
    %v1849 = vadd.f32 %v1588, %v1848
    %v1850 = vpop.f32.mrb[0].mxu0
    %1851 = vmatprep.mubr.f32.mxu0 0.0
    %v1852 = vand.u32 %v75, 4294901760
    %1853 = vmatmul.mubr.f32.gmra.mrb[0].mxu0 %v1852
    %v1854 = vpop.f32.mrb[0].mxu0
    %v1855 = vadd.f32 %v1598, %v1854
    %v1856 = vpop.f32.mrb[0].mxu0
    %1857 = vmatprep.mubr.f32.mxu0 0.0
    %v1858 = vand.u32 %v76, 4294901760
    %1859 = vmatmul.mubr.f32.gmra.mrb[0].mxu0 %v1858
    %v1860 = vpop.f32.mrb[0].mxu0
    %v1861 = vadd.f32 %v1608, %v1860
    %v1862 = vpop.f32.mrb[0].mxu0
    %1863 = vmatprep.mubr.f32.mxu0 0.0
    %v1864 = vand.u32 %v77, 4294901760
    %1865 = vmatmul.mubr.f32.gmra.mrb[0].mxu0 %v1864
    %v1866 = vpop.f32.mrb[0].mxu0
    %v1867 = vadd.f32 %v1618, %v1866
    %v1868 = vpop.f32.mrb[0].mxu0
    %1869 = vmatprep.mubr.f32.mxu0 0.0
    %v1870 = vand.u32 %v78, 4294901760
    %1871 = vmatmul.mubr.f32.gmra.mrb[0].mxu0 %v1870
    %v1872 = vpop.f32.mrb[0].mxu0
    %v1873 = vadd.f32 %v1628, %v1872
    %v1874 = vpop.f32.mrb[0].mxu0
    %1875 = vmatprep.mubr.f32.mxu0 0.0
    %v1876 = vand.u32 %v79, 4294901760
    %1877 = vmatmul.mubr.f32.gmra.mrb[0].mxu0 %v1876
    %v1878 = vpop.f32.mrb[0].mxu0
    %v1879 = vadd.f32 %v1638, %v1878
    %v1880 = vpop.f32.mrb[0].mxu0
    %1881 = vdwg.mxu0
    %1882 = vmatprep.subr.mxu0 0.0
    %v1883 = vand.u32 %v1273, 4294901760
    %v1884 = vsub.f32 %v1273, %v1883
    %1885 = vmatpush1.msra.mxu0 %v1884
    %1886 = vmatprep.subr.mxu0 0.0
    %v1887 = vand.u32 %v1279, 4294901760
    %v1888 = vsub.f32 %v1279, %v1887
    %1889 = vmatpush1.msra.mxu0 %v1888
    %1890 = vmatprep.subr.mxu0 0.0
    %v1891 = vand.u32 %v1285, 4294901760
    %v1892 = vsub.f32 %v1285, %v1891
    %1893 = vmatpush1.msra.mxu0 %v1892
    %1894 = vmatprep.subr.mxu0 0.0
    %v1895 = vand.u32 %v1291, 4294901760
    %v1896 = vsub.f32 %v1291, %v1895
    %1897 = vmatpush1.msra.mxu0 %v1896
    %1898 = vmatprep.subr.mxu0 0.0
    %v1899 = vand.u32 %v1297, 4294901760
    %v1900 = vsub.f32 %v1297, %v1899
    %1901 = vmatpush1.msra.mxu0 %v1900
    %1902 = vmatprep.subr.mxu0 0.0
    %v1903 = vand.u32 %v1303, 4294901760
    %v1904 = vsub.f32 %v1303, %v1903
    %1905 = vmatpush1.msra.mxu0 %v1904
    %1906 = vmatprep.subr.mxu0 0.0
    %v1907 = vand.u32 %v1309, 4294901760
    %v1908 = vsub.f32 %v1309, %v1907
    %1909 = vmatpush1.msra.mxu0 %v1908
    %1910 = vmatprep.subr.mxu0 0.0
    %v1911 = vand.u32 %v1315, 4294901760
    %v1912 = vsub.f32 %v1315, %v1911
    %1913 = vmatpush1.msra.mxu0 %v1912
    %1914 = vmatprep.subr.mxu0 0.0
    %v1915 = vand.u32 %v1321, 4294901760
    %v1916 = vsub.f32 %v1321, %v1915
    %1917 = vmatpush1.msra.mxu0 %v1916
    %1918 = vmatprep.subr.mxu0 0.0
    %v1919 = vand.u32 %v1327, 4294901760
    %v1920 = vsub.f32 %v1327, %v1919
    %1921 = vmatpush1.msra.mxu0 %v1920
    %1922 = vmatprep.subr.mxu0 0.0
    %v1923 = vand.u32 %v1333, 4294901760
    %v1924 = vsub.f32 %v1333, %v1923
    %1925 = vmatpush1.msra.mxu0 %v1924
    %1926 = vmatprep.subr.mxu0 0.0
    %v1927 = vand.u32 %v1339, 4294901760
    %v1928 = vsub.f32 %v1339, %v1927
    %1929 = vmatpush1.msra.mxu0 %v1928
    %1930 = vmatprep.subr.mxu0 0.0
    %v1931 = vand.u32 %v1345, 4294901760
    %v1932 = vsub.f32 %v1345, %v1931
    %1933 = vmatpush1.msra.mxu0 %v1932
    %1934 = vmatprep.subr.mxu0 0.0
    %v1935 = vand.u32 %v1351, 4294901760
    %v1936 = vsub.f32 %v1351, %v1935
    %1937 = vmatpush1.msra.mxu0 %v1936
    %1938 = vmatprep.subr.mxu0 0.0
    %v1939 = vand.u32 %v1357, 4294901760
    %v1940 = vsub.f32 %v1357, %v1939
    %1941 = vmatpush1.msra.mxu0 %v1940
    %1942 = vmatprep.subr.mxu0 0.0
    %v1943 = vand.u32 %v1363, 4294901760
    %v1944 = vsub.f32 %v1363, %v1943
    %1945 = vmatpush1.msra.mxu0 %v1944
    %1946 = vmatprep.subr.mxu0 0.0
    %1947 = vmatpush1.msra.mxu0 0.0
    %1948 = vmatprep.subr.mxu0 0.0
    %1949 = vmatpush1.msra.mxu0 0.0
    %1950 = vmatprep.subr.mxu0 0.0
    %1951 = vmatpush1.msra.mxu0 0.0
    %1952 = vmatprep.subr.mxu0 0.0
    %1953 = vmatpush1.msra.mxu0 0.0
    %1954 = vmatprep.subr.mxu0 0.0
    %1955 = vmatpush1.msra.mxu0 0.0
    %1956 = vmatprep.subr.mxu0 0.0
    %1957 = vmatpush1.msra.mxu0 0.0
    %1958 = vmatprep.subr.mxu0 0.0
    %1959 = vmatpush1.msra.mxu0 0.0
    %1960 = vmatprep.subr.mxu0 0.0
    %1961 = vmatpush1.msra.mxu0 0.0
    %1962 = vmatprep.subr.mxu0 0.0
    %1963 = vmatpush1.msra.mxu0 0.0
    %1964 = vmatprep.subr.mxu0 0.0
    %1965 = vmatpush1.msra.mxu0 0.0
    %1966 = vmatprep.subr.mxu0 0.0
    %1967 = vmatpush1.msra.mxu0 0.0
    %1968 = vmatprep.subr.mxu0 0.0
    %1969 = vmatpush1.msra.mxu0 0.0
    %1970 = vmatprep.subr.mxu0 0.0
    %1971 = vmatpush1.msra.mxu0 0.0
    %1972 = vmatprep.subr.mxu0 0.0
    %1973 = vmatpush1.msra.mxu0 0.0
    %1974 = vmatprep.subr.mxu0 0.0
    %1975 = vmatpush1.msra.mxu0 0.0
    %1976 = vmatprep.subr.mxu0 0.0
    %1977 = vmatpush1.msra.mxu0 0.0
    %1978 = vmatprep.mubr.f32.mxu0 0.0
    %v1979 = vand.u32 %v64, 4294901760
    %v1980 = vsub.f32 %v64, %v1979
    %1981 = vmatmul.mubr.f32.gmra.mrb[0].mxu0 %v1980
    %v1982 = vpop.f32.mrb[0].mxu0
    %v1983 = vadd.f32 %v1789, %v1982
    %v1984 = vpop.f32.mrb[0].mxu0
    %1985 = vmatprep.mubr.f32.mxu0 0.0
    %v1986 = vand.u32 %v65, 4294901760
    %v1987 = vsub.f32 %v65, %v1986
    %1988 = vmatmul.mubr.f32.gmra.mrb[0].mxu0 %v1987
    %v1989 = vpop.f32.mrb[0].mxu0
    %v1990 = vadd.f32 %v1795, %v1989
    %v1991 = vpop.f32.mrb[0].mxu0
    %1992 = vmatprep.mubr.f32.mxu0 0.0
    %v1993 = vand.u32 %v66, 4294901760
    %v1994 = vsub.f32 %v66, %v1993
    %1995 = vmatmul.mubr.f32.gmra.mrb[0].mxu0 %v1994
    %v1996 = vpop.f32.mrb[0].mxu0
    %v1997 = vadd.f32 %v1801, %v1996
    %v1998 = vpop.f32.mrb[0].mxu0
    %1999 = vmatprep.mubr.f32.mxu0 0.0
    %v2000 = vand.u32 %v67, 4294901760
    %v2001 = vsub.f32 %v67, %v2000
    %2002 = vmatmul.mubr.f32.gmra.mrb[0].mxu0 %v2001
    %v2003 = vpop.f32.mrb[0].mxu0
    %v2004 = vadd.f32 %v1807, %v2003
    %v2005 = vpop.f32.mrb[0].mxu0
    %2006 = vmatprep.mubr.f32.mxu0 0.0
    %v2007 = vand.u32 %v68, 4294901760
    %v2008 = vsub.f32 %v68, %v2007
    %2009 = vmatmul.mubr.f32.gmra.mrb[0].mxu0 %v2008
    %v2010 = vpop.f32.mrb[0].mxu0
    %v2011 = vadd.f32 %v1813, %v2010
    %v2012 = vpop.f32.mrb[0].mxu0
    %2013 = vmatprep.mubr.f32.mxu0 0.0
    %v2014 = vand.u32 %v69, 4294901760
    %v2015 = vsub.f32 %v69, %v2014
    %2016 = vmatmul.mubr.f32.gmra.mrb[0].mxu0 %v2015
    %v2017 = vpop.f32.mrb[0].mxu0
    %v2018 = vadd.f32 %v1819, %v2017
    %v2019 = vpop.f32.mrb[0].mxu0
    %2020 = vmatprep.mubr.f32.mxu0 0.0
    %v2021 = vand.u32 %v70, 4294901760
    %v2022 = vsub.f32 %v70, %v2021
    %2023 = vmatmul.mubr.f32.gmra.mrb[0].mxu0 %v2022
    %v2024 = vpop.f32.mrb[0].mxu0
    %v2025 = vadd.f32 %v1825, %v2024
    %v2026 = vpop.f32.mrb[0].mxu0
    %2027 = vmatprep.mubr.f32.mxu0 0.0
    %v2028 = vand.u32 %v71, 4294901760
    %v2029 = vsub.f32 %v71, %v2028
    %2030 = vmatmul.mubr.f32.gmra.mrb[0].mxu0 %v2029
    %v2031 = vpop.f32.mrb[0].mxu0
    %v2032 = vadd.f32 %v1831, %v2031
    %v2033 = vpop.f32.mrb[0].mxu0
    %2034 = vmatprep.mubr.f32.mxu0 0.0
    %v2035 = vand.u32 %v72, 4294901760
    %v2036 = vsub.f32 %v72, %v2035
    %2037 = vmatmul.mubr.f32.gmra.mrb[0].mxu0 %v2036
    %v2038 = vpop.f32.mrb[0].mxu0
    %v2039 = vadd.f32 %v1837, %v2038
    %v2040 = vpop.f32.mrb[0].mxu0
    %2041 = vmatprep.mubr.f32.mxu0 0.0
    %v2042 = vand.u32 %v73, 4294901760
    %v2043 = vsub.f32 %v73, %v2042
    %2044 = vmatmul.mubr.f32.gmra.mrb[0].mxu0 %v2043
    %v2045 = vpop.f32.mrb[0].mxu0
    %v2046 = vadd.f32 %v1843, %v2045
    %v2047 = vpop.f32.mrb[0].mxu0
    %2048 = vmatprep.mubr.f32.mxu0 0.0
    %v2049 = vand.u32 %v74, 4294901760
    %v2050 = vsub.f32 %v74, %v2049
    %2051 = vmatmul.mubr.f32.gmra.mrb[0].mxu0 %v2050
    %v2052 = vpop.f32.mrb[0].mxu0
    %v2053 = vadd.f32 %v1849, %v2052
    %v2054 = vpop.f32.mrb[0].mxu0
    %2055 = vmatprep.mubr.f32.mxu0 0.0
    %v2056 = vand.u32 %v75, 4294901760
    %v2057 = vsub.f32 %v75, %v2056
    %2058 = vmatmul.mubr.f32.gmra.mrb[0].mxu0 %v2057
    %v2059 = vpop.f32.mrb[0].mxu0
    %v2060 = vadd.f32 %v1855, %v2059
    %v2061 = vpop.f32.mrb[0].mxu0
    %2062 = vmatprep.mubr.f32.mxu0 0.0
    %v2063 = vand.u32 %v76, 4294901760
    %v2064 = vsub.f32 %v76, %v2063
    %2065 = vmatmul.mubr.f32.gmra.mrb[0].mxu0 %v2064
    %v2066 = vpop.f32.mrb[0].mxu0
    %v2067 = vadd.f32 %v1861, %v2066
    %v2068 = vpop.f32.mrb[0].mxu0
    %2069 = vmatprep.mubr.f32.mxu0 0.0
    %v2070 = vand.u32 %v77, 4294901760
    %v2071 = vsub.f32 %v77, %v2070
    %2072 = vmatmul.mubr.f32.gmra.mrb[0].mxu0 %v2071
    %v2073 = vpop.f32.mrb[0].mxu0
    %v2074 = vadd.f32 %v1867, %v2073
    %v2075 = vpop.f32.mrb[0].mxu0
    %2076 = vmatprep.mubr.f32.mxu0 0.0
    %v2077 = vand.u32 %v78, 4294901760
    %v2078 = vsub.f32 %v78, %v2077
    %2079 = vmatmul.mubr.f32.gmra.mrb[0].mxu0 %v2078
    %v2080 = vpop.f32.mrb[0].mxu0
    %v2081 = vadd.f32 %v1873, %v2080
    %v2082 = vpop.f32.mrb[0].mxu0
    %2083 = vmatprep.mubr.f32.mxu0 0.0
    %v2084 = vand.u32 %v79, 4294901760
    %v2085 = vsub.f32 %v79, %v2084
    %2086 = vmatmul.mubr.f32.gmra.mrb[0].mxu0 %v2085
    %v2087 = vpop.f32.mrb[0].mxu0
    %v2088 = vadd.f32 %v1879, %v2087
    %v2089 = vpop.f32.mrb[0].mxu0
    %2090 = vdwg.mxu0
    %2091 = vmatprep.subr.mxu0 0.0
    %v2092 = vand.u32 %v1273, 4294901760
    %2093 = vmatpush1.msra.mxu0 %v2092
    %2094 = vmatprep.subr.mxu0 0.0
    %v2095 = vand.u32 %v1279, 4294901760
    %2096 = vmatpush1.msra.mxu0 %v2095
    %2097 = vmatprep.subr.mxu0 0.0
    %v2098 = vand.u32 %v1285, 4294901760
    %2099 = vmatpush1.msra.mxu0 %v2098
    %2100 = vmatprep.subr.mxu0 0.0
    %v2101 = vand.u32 %v1291, 4294901760
    %2102 = vmatpush1.msra.mxu0 %v2101
    %2103 = vmatprep.subr.mxu0 0.0
    %v2104 = vand.u32 %v1297, 4294901760
    %2105 = vmatpush1.msra.mxu0 %v2104
    %2106 = vmatprep.subr.mxu0 0.0
    %v2107 = vand.u32 %v1303, 4294901760
    %2108 = vmatpush1.msra.mxu0 %v2107
    %2109 = vmatprep.subr.mxu0 0.0
    %v2110 = vand.u32 %v1309, 4294901760
    %2111 = vmatpush1.msra.mxu0 %v2110
    %2112 = vmatprep.subr.mxu0 0.0
    %v2113 = vand.u32 %v1315, 4294901760
    %2114 = vmatpush1.msra.mxu0 %v2113
    %2115 = vmatprep.subr.mxu0 0.0
    %v2116 = vand.u32 %v1321, 4294901760
    %2117 = vmatpush1.msra.mxu0 %v2116
    %2118 = vmatprep.subr.mxu0 0.0
    %v2119 = vand.u32 %v1327, 4294901760
    %2120 = vmatpush1.msra.mxu0 %v2119
    %2121 = vmatprep.subr.mxu0 0.0
    %v2122 = vand.u32 %v1333, 4294901760
    %2123 = vmatpush1.msra.mxu0 %v2122
    %2124 = vmatprep.subr.mxu0 0.0
    %v2125 = vand.u32 %v1339, 4294901760
    %2126 = vmatpush1.msra.mxu0 %v2125
    %2127 = vmatprep.subr.mxu0 0.0
    %v2128 = vand.u32 %v1345, 4294901760
    %2129 = vmatpush1.msra.mxu0 %v2128
    %2130 = vmatprep.subr.mxu0 0.0
    %v2131 = vand.u32 %v1351, 4294901760
    %2132 = vmatpush1.msra.mxu0 %v2131
    %2133 = vmatprep.subr.mxu0 0.0
    %v2134 = vand.u32 %v1357, 4294901760
    %2135 = vmatpush1.msra.mxu0 %v2134
    %2136 = vmatprep.subr.mxu0 0.0
    %v2137 = vand.u32 %v1363, 4294901760
    %2138 = vmatpush1.msra.mxu0 %v2137
    %2139 = vmatprep.subr.mxu0 0.0
    %2140 = vmatpush1.msra.mxu0 0.0
    %2141 = vmatprep.subr.mxu0 0.0
    %2142 = vmatpush1.msra.mxu0 0.0
    %2143 = vmatprep.subr.mxu0 0.0
    %2144 = vmatpush1.msra.mxu0 0.0
    %2145 = vmatprep.subr.mxu0 0.0
    %2146 = vmatpush1.msra.mxu0 0.0
    %2147 = vmatprep.subr.mxu0 0.0
    %2148 = vmatpush1.msra.mxu0 0.0
    %2149 = vmatprep.subr.mxu0 0.0
    %2150 = vmatpush1.msra.mxu0 0.0
    %2151 = vmatprep.subr.mxu0 0.0
    %2152 = vmatpush1.msra.mxu0 0.0
    %2153 = vmatprep.subr.mxu0 0.0
    %2154 = vmatpush1.msra.mxu0 0.0
    %2155 = vmatprep.subr.mxu0 0.0
    %2156 = vmatpush1.msra.mxu0 0.0
    %2157 = vmatprep.subr.mxu0 0.0
    %2158 = vmatpush1.msra.mxu0 0.0
    %2159 = vmatprep.subr.mxu0 0.0
    %2160 = vmatpush1.msra.mxu0 0.0
    %2161 = vmatprep.subr.mxu0 0.0
    %2162 = vmatpush1.msra.mxu0 0.0
    %2163 = vmatprep.subr.mxu0 0.0
    %2164 = vmatpush1.msra.mxu0 0.0
    %2165 = vmatprep.subr.mxu0 0.0
    %2166 = vmatpush1.msra.mxu0 0.0
    %2167 = vmatprep.subr.mxu0 0.0
    %2168 = vmatpush1.msra.mxu0 0.0
    %2169 = vmatprep.subr.mxu0 0.0
    %2170 = vmatpush1.msra.mxu0 0.0
    %2171 = vmatprep.mubr.f32.mxu0 0.0
    %v2172 = vand.u32 %v64, 4294901760
    %v2173 = vsub.f32 %v64, %v2172
    %v2174 = vand.u32 %v2173, 4294901760
    %2175 = vmatmul.mubr.f32.gmra.mrb[0].mxu0 %v2174
    %v2176 = vpop.f32.mrb[0].mxu0
    %v2177 = vadd.f32 %v1983, %v2176
    %v2178 = vpop.f32.mrb[0].mxu0
    %2179 = vmatprep.mubr.f32.mxu0 0.0
    %v2180 = vand.u32 %v65, 4294901760
    %v2181 = vsub.f32 %v65, %v2180
    %v2182 = vand.u32 %v2181, 4294901760
    %2183 = vmatmul.mubr.f32.gmra.mrb[0].mxu0 %v2182
    %v2184 = vpop.f32.mrb[0].mxu0
    %v2185 = vadd.f32 %v1990, %v2184
    %v2186 = vpop.f32.mrb[0].mxu0
    %2187 = vmatprep.mubr.f32.mxu0 0.0
    %v2188 = vand.u32 %v66, 4294901760
    %v2189 = vsub.f32 %v66, %v2188
    %v2190 = vand.u32 %v2189, 4294901760
    %2191 = vmatmul.mubr.f32.gmra.mrb[0].mxu0 %v2190
    %v2192 = vpop.f32.mrb[0].mxu0
    %v2193 = vadd.f32 %v1997, %v2192
    %v2194 = vpop.f32.mrb[0].mxu0
    %2195 = vmatprep.mubr.f32.mxu0 0.0
    %v2196 = vand.u32 %v67, 4294901760
    %v2197 = vsub.f32 %v67, %v2196
    %v2198 = vand.u32 %v2197, 4294901760
    %2199 = vmatmul.mubr.f32.gmra.mrb[0].mxu0 %v2198
    %v2200 = vpop.f32.mrb[0].mxu0
    %v2201 = vadd.f32 %v2004, %v2200
    %v2202 = vpop.f32.mrb[0].mxu0
    %2203 = vmatprep.mubr.f32.mxu0 0.0
    %v2204 = vand.u32 %v68, 4294901760
    %v2205 = vsub.f32 %v68, %v2204
    %v2206 = vand.u32 %v2205, 4294901760
    %2207 = vmatmul.mubr.f32.gmra.mrb[0].mxu0 %v2206
    %v2208 = vpop.f32.mrb[0].mxu0
    %v2209 = vadd.f32 %v2011, %v2208
    %v2210 = vpop.f32.mrb[0].mxu0
    %2211 = vmatprep.mubr.f32.mxu0 0.0
    %v2212 = vand.u32 %v69, 4294901760
    %v2213 = vsub.f32 %v69, %v2212
    %v2214 = vand.u32 %v2213, 4294901760
    %2215 = vmatmul.mubr.f32.gmra.mrb[0].mxu0 %v2214
    %v2216 = vpop.f32.mrb[0].mxu0
    %v2217 = vadd.f32 %v2018, %v2216
    %v2218 = vpop.f32.mrb[0].mxu0
    %2219 = vmatprep.mubr.f32.mxu0 0.0
    %v2220 = vand.u32 %v70, 4294901760
    %v2221 = vsub.f32 %v70, %v2220
    %v2222 = vand.u32 %v2221, 4294901760
    %2223 = vmatmul.mubr.f32.gmra.mrb[0].mxu0 %v2222
    %v2224 = vpop.f32.mrb[0].mxu0
    %v2225 = vadd.f32 %v2025, %v2224
    %v2226 = vpop.f32.mrb[0].mxu0
    %2227 = vmatprep.mubr.f32.mxu0 0.0
    %v2228 = vand.u32 %v71, 4294901760
    %v2229 = vsub.f32 %v71, %v2228
    %v2230 = vand.u32 %v2229, 4294901760
    %2231 = vmatmul.mubr.f32.gmra.mrb[0].mxu0 %v2230
    %v2232 = vpop.f32.mrb[0].mxu0
    %v2233 = vadd.f32 %v2032, %v2232
    %v2234 = vpop.f32.mrb[0].mxu0
    %2235 = vmatprep.mubr.f32.mxu0 0.0
    %v2236 = vand.u32 %v72, 4294901760
    %v2237 = vsub.f32 %v72, %v2236
    %v2238 = vand.u32 %v2237, 4294901760
    %2239 = vmatmul.mubr.f32.gmra.mrb[0].mxu0 %v2238
    %v2240 = vpop.f32.mrb[0].mxu0
    %v2241 = vadd.f32 %v2039, %v2240
    %v2242 = vpop.f32.mrb[0].mxu0
    %2243 = vmatprep.mubr.f32.mxu0 0.0
    %v2244 = vand.u32 %v73, 4294901760
    %v2245 = vsub.f32 %v73, %v2244
    %v2246 = vand.u32 %v2245, 4294901760
    %2247 = vmatmul.mubr.f32.gmra.mrb[0].mxu0 %v2246
    %v2248 = vpop.f32.mrb[0].mxu0
    %v2249 = vadd.f32 %v2046, %v2248
    %v2250 = vpop.f32.mrb[0].mxu0
    %2251 = vmatprep.mubr.f32.mxu0 0.0
    %v2252 = vand.u32 %v74, 4294901760
    %v2253 = vsub.f32 %v74, %v2252
    %v2254 = vand.u32 %v2253, 4294901760
    %2255 = vmatmul.mubr.f32.gmra.mrb[0].mxu0 %v2254
    %v2256 = vpop.f32.mrb[0].mxu0
    %v2257 = vadd.f32 %v2053, %v2256
    %v2258 = vpop.f32.mrb[0].mxu0
    %2259 = vmatprep.mubr.f32.mxu0 0.0
    %v2260 = vand.u32 %v75, 4294901760
    %v2261 = vsub.f32 %v75, %v2260
    %v2262 = vand.u32 %v2261, 4294901760
    %2263 = vmatmul.mubr.f32.gmra.mrb[0].mxu0 %v2262
    %v2264 = vpop.f32.mrb[0].mxu0
    %v2265 = vadd.f32 %v2060, %v2264
    %v2266 = vpop.f32.mrb[0].mxu0
    %2267 = vmatprep.mubr.f32.mxu0 0.0
    %v2268 = vand.u32 %v76, 4294901760
    %v2269 = vsub.f32 %v76, %v2268
    %v2270 = vand.u32 %v2269, 4294901760
    %2271 = vmatmul.mubr.f32.gmra.mrb[0].mxu0 %v2270
    %v2272 = vpop.f32.mrb[0].mxu0
    %v2273 = vadd.f32 %v2067, %v2272
    %v2274 = vpop.f32.mrb[0].mxu0
    %2275 = vmatprep.mubr.f32.mxu0 0.0
    %v2276 = vand.u32 %v77, 4294901760
    %v2277 = vsub.f32 %v77, %v2276
    %v2278 = vand.u32 %v2277, 4294901760
    %2279 = vmatmul.mubr.f32.gmra.mrb[0].mxu0 %v2278
    %v2280 = vpop.f32.mrb[0].mxu0
    %v2281 = vadd.f32 %v2074, %v2280
    %v2282 = vpop.f32.mrb[0].mxu0
    %2283 = vmatprep.mubr.f32.mxu0 0.0
    %v2284 = vand.u32 %v78, 4294901760
    %v2285 = vsub.f32 %v78, %v2284
    %v2286 = vand.u32 %v2285, 4294901760
    %2287 = vmatmul.mubr.f32.gmra.mrb[0].mxu0 %v2286
    %v2288 = vpop.f32.mrb[0].mxu0
    %v2289 = vadd.f32 %v2081, %v2288
    %v2290 = vpop.f32.mrb[0].mxu0
    %2291 = vmatprep.mubr.f32.mxu0 0.0
    %v2292 = vand.u32 %v79, 4294901760
    %v2293 = vsub.f32 %v79, %v2292
    %v2294 = vand.u32 %v2293, 4294901760
    %2295 = vmatmul.mubr.f32.gmra.mrb[0].mxu0 %v2294
    %v2296 = vpop.f32.mrb[0].mxu0
    %v2297 = vadd.f32 %v2088, %v2296
    %v2298 = vpop.f32.mrb[0].mxu0
    %2299 = vdwg.mxu0
    %2300 = vmatprep.subr.mxu0 0.0
    %v2301 = vand.u32 %v1273, 4294901760
    %v2302 = vsub.f32 %v1273, %v2301
    %v2303 = vand.u32 %v2302, 4294901760
    %2304 = vmatpush1.msra.mxu0 %v2303
    %2305 = vmatprep.subr.mxu0 0.0
    %v2306 = vand.u32 %v1279, 4294901760
    %v2307 = vsub.f32 %v1279, %v2306
    %v2308 = vand.u32 %v2307, 4294901760
    %2309 = vmatpush1.msra.mxu0 %v2308
    %2310 = vmatprep.subr.mxu0 0.0
    %v2311 = vand.u32 %v1285, 4294901760
    %v2312 = vsub.f32 %v1285, %v2311
    %v2313 = vand.u32 %v2312, 4294901760
    %2314 = vmatpush1.msra.mxu0 %v2313
    %2315 = vmatprep.subr.mxu0 0.0
    %v2316 = vand.u32 %v1291, 4294901760
    %v2317 = vsub.f32 %v1291, %v2316
    %v2318 = vand.u32 %v2317, 4294901760
    %2319 = vmatpush1.msra.mxu0 %v2318
    %2320 = vmatprep.subr.mxu0 0.0
    %v2321 = vand.u32 %v1297, 4294901760
    %v2322 = vsub.f32 %v1297, %v2321
    %v2323 = vand.u32 %v2322, 4294901760
    %2324 = vmatpush1.msra.mxu0 %v2323
    %2325 = vmatprep.subr.mxu0 0.0
    %v2326 = vand.u32 %v1303, 4294901760
    %v2327 = vsub.f32 %v1303, %v2326
    %v2328 = vand.u32 %v2327, 4294901760
    %2329 = vmatpush1.msra.mxu0 %v2328
    %2330 = vmatprep.subr.mxu0 0.0
    %v2331 = vand.u32 %v1309, 4294901760
    %v2332 = vsub.f32 %v1309, %v2331
    %v2333 = vand.u32 %v2332, 4294901760
    %2334 = vmatpush1.msra.mxu0 %v2333
    %2335 = vmatprep.subr.mxu0 0.0
    %v2336 = vand.u32 %v1315, 4294901760
    %v2337 = vsub.f32 %v1315, %v2336
    %v2338 = vand.u32 %v2337, 4294901760
    %2339 = vmatpush1.msra.mxu0 %v2338
    %2340 = vmatprep.subr.mxu0 0.0
    %v2341 = vand.u32 %v1321, 4294901760
    %v2342 = vsub.f32 %v1321, %v2341
    %v2343 = vand.u32 %v2342, 4294901760
    %2344 = vmatpush1.msra.mxu0 %v2343
    %2345 = vmatprep.subr.mxu0 0.0
    %v2346 = vand.u32 %v1327, 4294901760
    %v2347 = vsub.f32 %v1327, %v2346
    %v2348 = vand.u32 %v2347, 4294901760
    %2349 = vmatpush1.msra.mxu0 %v2348
    %2350 = vmatprep.subr.mxu0 0.0
    %v2351 = vand.u32 %v1333, 4294901760
    %v2352 = vsub.f32 %v1333, %v2351
    %v2353 = vand.u32 %v2352, 4294901760
    %2354 = vmatpush1.msra.mxu0 %v2353
    %2355 = vmatprep.subr.mxu0 0.0
    %v2356 = vand.u32 %v1339, 4294901760
    %v2357 = vsub.f32 %v1339, %v2356
    %v2358 = vand.u32 %v2357, 4294901760
    %2359 = vmatpush1.msra.mxu0 %v2358
    %2360 = vmatprep.subr.mxu0 0.0
    %v2361 = vand.u32 %v1345, 4294901760
    %v2362 = vsub.f32 %v1345, %v2361
    %v2363 = vand.u32 %v2362, 4294901760
    %2364 = vmatpush1.msra.mxu0 %v2363
    %2365 = vmatprep.subr.mxu0 0.0
    %v2366 = vand.u32 %v1351, 4294901760
    %v2367 = vsub.f32 %v1351, %v2366
    %v2368 = vand.u32 %v2367, 4294901760
    %2369 = vmatpush1.msra.mxu0 %v2368
    %2370 = vmatprep.subr.mxu0 0.0
    %v2371 = vand.u32 %v1357, 4294901760
    %v2372 = vsub.f32 %v1357, %v2371
    %v2373 = vand.u32 %v2372, 4294901760
    %2374 = vmatpush1.msra.mxu0 %v2373
    %2375 = vmatprep.subr.mxu0 0.0
    %v2376 = vand.u32 %v1363, 4294901760
    %v2377 = vsub.f32 %v1363, %v2376
    %v2378 = vand.u32 %v2377, 4294901760
    %2379 = vmatpush1.msra.mxu0 %v2378
    %2380 = vmatprep.subr.mxu0 0.0
    %2381 = vmatpush1.msra.mxu0 0.0
    %2382 = vmatprep.subr.mxu0 0.0
    %2383 = vmatpush1.msra.mxu0 0.0
    %2384 = vmatprep.subr.mxu0 0.0
    %2385 = vmatpush1.msra.mxu0 0.0
    %2386 = vmatprep.subr.mxu0 0.0
    %2387 = vmatpush1.msra.mxu0 0.0
    %2388 = vmatprep.subr.mxu0 0.0
    %2389 = vmatpush1.msra.mxu0 0.0
    %2390 = vmatprep.subr.mxu0 0.0
    %2391 = vmatpush1.msra.mxu0 0.0
    %2392 = vmatprep.subr.mxu0 0.0
    %2393 = vmatpush1.msra.mxu0 0.0
    %2394 = vmatprep.subr.mxu0 0.0
    %2395 = vmatpush1.msra.mxu0 0.0
    %2396 = vmatprep.subr.mxu0 0.0
    %2397 = vmatpush1.msra.mxu0 0.0
    %2398 = vmatprep.subr.mxu0 0.0
    %2399 = vmatpush1.msra.mxu0 0.0
    %2400 = vmatprep.subr.mxu0 0.0
    %2401 = vmatpush1.msra.mxu0 0.0
    %2402 = vmatprep.subr.mxu0 0.0
    %2403 = vmatpush1.msra.mxu0 0.0
    %2404 = vmatprep.subr.mxu0 0.0
    %2405 = vmatpush1.msra.mxu0 0.0
    %2406 = vmatprep.subr.mxu0 0.0
    %2407 = vmatpush1.msra.mxu0 0.0
    %2408 = vmatprep.subr.mxu0 0.0
    %2409 = vmatpush1.msra.mxu0 0.0
    %2410 = vmatprep.subr.mxu0 0.0
    %2411 = vmatpush1.msra.mxu0 0.0
    %2412 = vmatprep.mubr.f32.mxu0 0.0
    %v2413 = vand.u32 %v64, 4294901760
    %2414 = vmatmul.mubr.f32.gmra.mrb[0].mxu0 %v2413
    %v2415 = vpop.f32.mrb[0].mxu0
    %v2416 = vadd.f32 %v2177, %v2415
    %v2417 = vpop.f32.mrb[0].mxu0
    %2418 = vmatprep.mubr.f32.mxu0 0.0
    %v2419 = vand.u32 %v65, 4294901760
    %2420 = vmatmul.mubr.f32.gmra.mrb[0].mxu0 %v2419
    %v2421 = vpop.f32.mrb[0].mxu0
    %v2422 = vadd.f32 %v2185, %v2421
    %v2423 = vpop.f32.mrb[0].mxu0
    %2424 = vmatprep.mubr.f32.mxu0 0.0
    %v2425 = vand.u32 %v66, 4294901760
    %2426 = vmatmul.mubr.f32.gmra.mrb[0].mxu0 %v2425
    %v2427 = vpop.f32.mrb[0].mxu0
    %v2428 = vadd.f32 %v2193, %v2427
    %v2429 = vpop.f32.mrb[0].mxu0
    %2430 = vmatprep.mubr.f32.mxu0 0.0
    %v2431 = vand.u32 %v67, 4294901760
    %2432 = vmatmul.mubr.f32.gmra.mrb[0].mxu0 %v2431
    %v2433 = vpop.f32.mrb[0].mxu0
    %v2434 = vadd.f32 %v2201, %v2433
    %v2435 = vpop.f32.mrb[0].mxu0
    %2436 = vmatprep.mubr.f32.mxu0 0.0
    %v2437 = vand.u32 %v68, 4294901760
    %2438 = vmatmul.mubr.f32.gmra.mrb[0].mxu0 %v2437
    %v2439 = vpop.f32.mrb[0].mxu0
    %v2440 = vadd.f32 %v2209, %v2439
    %v2441 = vpop.f32.mrb[0].mxu0
    %2442 = vmatprep.mubr.f32.mxu0 0.0
    %v2443 = vand.u32 %v69, 4294901760
    %2444 = vmatmul.mubr.f32.gmra.mrb[0].mxu0 %v2443
    %v2445 = vpop.f32.mrb[0].mxu0
    %v2446 = vadd.f32 %v2217, %v2445
    %v2447 = vpop.f32.mrb[0].mxu0
    %2448 = vmatprep.mubr.f32.mxu0 0.0
    %v2449 = vand.u32 %v70, 4294901760
    %2450 = vmatmul.mubr.f32.gmra.mrb[0].mxu0 %v2449
    %v2451 = vpop.f32.mrb[0].mxu0
    %v2452 = vadd.f32 %v2225, %v2451
    %v2453 = vpop.f32.mrb[0].mxu0
    %2454 = vmatprep.mubr.f32.mxu0 0.0
    %v2455 = vand.u32 %v71, 4294901760
    %2456 = vmatmul.mubr.f32.gmra.mrb[0].mxu0 %v2455
    %v2457 = vpop.f32.mrb[0].mxu0
    %v2458 = vadd.f32 %v2233, %v2457
    %v2459 = vpop.f32.mrb[0].mxu0
    %2460 = vmatprep.mubr.f32.mxu0 0.0
    %v2461 = vand.u32 %v72, 4294901760
    %2462 = vmatmul.mubr.f32.gmra.mrb[0].mxu0 %v2461
    %v2463 = vpop.f32.mrb[0].mxu0
    %v2464 = vadd.f32 %v2241, %v2463
    %v2465 = vpop.f32.mrb[0].mxu0
    %2466 = vmatprep.mubr.f32.mxu0 0.0
    %v2467 = vand.u32 %v73, 4294901760
    %2468 = vmatmul.mubr.f32.gmra.mrb[0].mxu0 %v2467
    %v2469 = vpop.f32.mrb[0].mxu0
    %v2470 = vadd.f32 %v2249, %v2469
    %v2471 = vpop.f32.mrb[0].mxu0
    %2472 = vmatprep.mubr.f32.mxu0 0.0
    %v2473 = vand.u32 %v74, 4294901760
    %2474 = vmatmul.mubr.f32.gmra.mrb[0].mxu0 %v2473
    %v2475 = vpop.f32.mrb[0].mxu0
    %v2476 = vadd.f32 %v2257, %v2475
    %v2477 = vpop.f32.mrb[0].mxu0
    %2478 = vmatprep.mubr.f32.mxu0 0.0
    %v2479 = vand.u32 %v75, 4294901760
    %2480 = vmatmul.mubr.f32.gmra.mrb[0].mxu0 %v2479
    %v2481 = vpop.f32.mrb[0].mxu0
    %v2482 = vadd.f32 %v2265, %v2481
    %v2483 = vpop.f32.mrb[0].mxu0
    %2484 = vmatprep.mubr.f32.mxu0 0.0
    %v2485 = vand.u32 %v76, 4294901760
    %2486 = vmatmul.mubr.f32.gmra.mrb[0].mxu0 %v2485
    %v2487 = vpop.f32.mrb[0].mxu0
    %v2488 = vadd.f32 %v2273, %v2487
    %v2489 = vpop.f32.mrb[0].mxu0
    %2490 = vmatprep.mubr.f32.mxu0 0.0
    %v2491 = vand.u32 %v77, 4294901760
    %2492 = vmatmul.mubr.f32.gmra.mrb[0].mxu0 %v2491
    %v2493 = vpop.f32.mrb[0].mxu0
    %v2494 = vadd.f32 %v2281, %v2493
    %v2495 = vpop.f32.mrb[0].mxu0
    %2496 = vmatprep.mubr.f32.mxu0 0.0
    %v2497 = vand.u32 %v78, 4294901760
    %2498 = vmatmul.mubr.f32.gmra.mrb[0].mxu0 %v2497
    %v2499 = vpop.f32.mrb[0].mxu0
    %v2500 = vadd.f32 %v2289, %v2499
    %v2501 = vpop.f32.mrb[0].mxu0
    %2502 = vmatprep.mubr.f32.mxu0 0.0
    %v2503 = vand.u32 %v79, 4294901760
    %2504 = vmatmul.mubr.f32.gmra.mrb[0].mxu0 %v2503
    %v2505 = vpop.f32.mrb[0].mxu0
    %v2506 = vadd.f32 %v2297, %v2505
    %v2507 = vpop.f32.mrb[0].mxu0
    %2508 = vdwg.mxu0
    %2509 = vmatprep.subr.mxu0 0.0
    %v2510 = vand.u32 %v1273, 4294901760
    %2511 = vmatpush1.msra.mxu0 %v2510
    %2512 = vmatprep.subr.mxu0 0.0
    %v2513 = vand.u32 %v1279, 4294901760
    %2514 = vmatpush1.msra.mxu0 %v2513
    %2515 = vmatprep.subr.mxu0 0.0
    %v2516 = vand.u32 %v1285, 4294901760
    %2517 = vmatpush1.msra.mxu0 %v2516
    %2518 = vmatprep.subr.mxu0 0.0
    %v2519 = vand.u32 %v1291, 4294901760
    %2520 = vmatpush1.msra.mxu0 %v2519
    %2521 = vmatprep.subr.mxu0 0.0
    %v2522 = vand.u32 %v1297, 4294901760
    %2523 = vmatpush1.msra.mxu0 %v2522
    %2524 = vmatprep.subr.mxu0 0.0
    %v2525 = vand.u32 %v1303, 4294901760
    %2526 = vmatpush1.msra.mxu0 %v2525
    %2527 = vmatprep.subr.mxu0 0.0
    %v2528 = vand.u32 %v1309, 4294901760
    %2529 = vmatpush1.msra.mxu0 %v2528
    %2530 = vmatprep.subr.mxu0 0.0
    %v2531 = vand.u32 %v1315, 4294901760
    %2532 = vmatpush1.msra.mxu0 %v2531
    %2533 = vmatprep.subr.mxu0 0.0
    %v2534 = vand.u32 %v1321, 4294901760
    %2535 = vmatpush1.msra.mxu0 %v2534
    %2536 = vmatprep.subr.mxu0 0.0
    %v2537 = vand.u32 %v1327, 4294901760
    %2538 = vmatpush1.msra.mxu0 %v2537
    %2539 = vmatprep.subr.mxu0 0.0
    %v2540 = vand.u32 %v1333, 4294901760
    %2541 = vmatpush1.msra.mxu0 %v2540
    %2542 = vmatprep.subr.mxu0 0.0
    %v2543 = vand.u32 %v1339, 4294901760
    %2544 = vmatpush1.msra.mxu0 %v2543
    %2545 = vmatprep.subr.mxu0 0.0
    %v2546 = vand.u32 %v1345, 4294901760
    %2547 = vmatpush1.msra.mxu0 %v2546
    %2548 = vmatprep.subr.mxu0 0.0
    %v2549 = vand.u32 %v1351, 4294901760
    %2550 = vmatpush1.msra.mxu0 %v2549
    %2551 = vmatprep.subr.mxu0 0.0
    %v2552 = vand.u32 %v1357, 4294901760
    %2553 = vmatpush1.msra.mxu0 %v2552
    %2554 = vmatprep.subr.mxu0 0.0
    %v2555 = vand.u32 %v1363, 4294901760
    %2556 = vmatpush1.msra.mxu0 %v2555
    %2557 = vmatprep.subr.mxu0 0.0
    %2558 = vmatpush1.msra.mxu0 0.0
    %2559 = vmatprep.subr.mxu0 0.0
    %2560 = vmatpush1.msra.mxu0 0.0
    %2561 = vmatprep.subr.mxu0 0.0
    %2562 = vmatpush1.msra.mxu0 0.0
    %2563 = vmatprep.subr.mxu0 0.0
    %2564 = vmatpush1.msra.mxu0 0.0
    %2565 = vmatprep.subr.mxu0 0.0
    %2566 = vmatpush1.msra.mxu0 0.0
    %2567 = vmatprep.subr.mxu0 0.0
    %2568 = vmatpush1.msra.mxu0 0.0
    %2569 = vmatprep.subr.mxu0 0.0
    %2570 = vmatpush1.msra.mxu0 0.0
    %2571 = vmatprep.subr.mxu0 0.0
    %2572 = vmatpush1.msra.mxu0 0.0
    %2573 = vmatprep.subr.mxu0 0.0
    %2574 = vmatpush1.msra.mxu0 0.0
    %2575 = vmatprep.subr.mxu0 0.0
    %2576 = vmatpush1.msra.mxu0 0.0
    %2577 = vmatprep.subr.mxu0 0.0
    %2578 = vmatpush1.msra.mxu0 0.0
    %2579 = vmatprep.subr.mxu0 0.0
    %2580 = vmatpush1.msra.mxu0 0.0
    %2581 = vmatprep.subr.mxu0 0.0
    %2582 = vmatpush1.msra.mxu0 0.0
    %2583 = vmatprep.subr.mxu0 0.0
    %2584 = vmatpush1.msra.mxu0 0.0
    %2585 = vmatprep.subr.mxu0 0.0
    %2586 = vmatpush1.msra.mxu0 0.0
    %2587 = vmatprep.subr.mxu0 0.0
    %2588 = vmatpush1.msra.mxu0 0.0
    %2589 = vmatprep.mubr.f32.mxu0 0.0
    %v2590 = vand.u32 %v64, 4294901760
    %2591 = vmatmul.mubr.f32.gmra.mrb[0].mxu0 %v2590
    %v2592 = vpop.f32.mrb[0].mxu0
    %v2593 = vadd.f32 %v2416, %v2592
    %v2594 = vpop.f32.mrb[0].mxu0
    %2595 = vmatprep.mubr.f32.mxu0 0.0
    %v2596 = vand.u32 %v65, 4294901760
    %2597 = vmatmul.mubr.f32.gmra.mrb[0].mxu0 %v2596
    %v2598 = vpop.f32.mrb[0].mxu0
    %v2599 = vadd.f32 %v2422, %v2598
    %v2600 = vpop.f32.mrb[0].mxu0
    %2601 = vmatprep.mubr.f32.mxu0 0.0
    %v2602 = vand.u32 %v66, 4294901760
    %2603 = vmatmul.mubr.f32.gmra.mrb[0].mxu0 %v2602
    %v2604 = vpop.f32.mrb[0].mxu0
    %v2605 = vadd.f32 %v2428, %v2604
    %v2606 = vpop.f32.mrb[0].mxu0
    %2607 = vmatprep.mubr.f32.mxu0 0.0
    %v2608 = vand.u32 %v67, 4294901760
    %2609 = vmatmul.mubr.f32.gmra.mrb[0].mxu0 %v2608
    %v2610 = vpop.f32.mrb[0].mxu0
    %v2611 = vadd.f32 %v2434, %v2610
    %v2612 = vpop.f32.mrb[0].mxu0
    %2613 = vmatprep.mubr.f32.mxu0 0.0
    %v2614 = vand.u32 %v68, 4294901760
    %2615 = vmatmul.mubr.f32.gmra.mrb[0].mxu0 %v2614
    %v2616 = vpop.f32.mrb[0].mxu0
    %v2617 = vadd.f32 %v2440, %v2616
    %v2618 = vpop.f32.mrb[0].mxu0
    %2619 = vmatprep.mubr.f32.mxu0 0.0
    %v2620 = vand.u32 %v69, 4294901760
    %2621 = vmatmul.mubr.f32.gmra.mrb[0].mxu0 %v2620
    %v2622 = vpop.f32.mrb[0].mxu0
    %v2623 = vadd.f32 %v2446, %v2622
    %v2624 = vpop.f32.mrb[0].mxu0
    %2625 = vmatprep.mubr.f32.mxu0 0.0
    %v2626 = vand.u32 %v70, 4294901760
    %2627 = vmatmul.mubr.f32.gmra.mrb[0].mxu0 %v2626
    %v2628 = vpop.f32.mrb[0].mxu0
    %v2629 = vadd.f32 %v2452, %v2628
    %v2630 = vpop.f32.mrb[0].mxu0
    %2631 = vmatprep.mubr.f32.mxu0 0.0
    %v2632 = vand.u32 %v71, 4294901760
    %2633 = vmatmul.mubr.f32.gmra.mrb[0].mxu0 %v2632
    %v2634 = vpop.f32.mrb[0].mxu0
    %v2635 = vadd.f32 %v2458, %v2634
    %v2636 = vpop.f32.mrb[0].mxu0
    %2637 = vmatprep.mubr.f32.mxu0 0.0
    %v2638 = vand.u32 %v72, 4294901760
    %2639 = vmatmul.mubr.f32.gmra.mrb[0].mxu0 %v2638
    %v2640 = vpop.f32.mrb[0].mxu0
    %v2641 = vadd.f32 %v2464, %v2640
    %v2642 = vpop.f32.mrb[0].mxu0
    %2643 = vmatprep.mubr.f32.mxu0 0.0
    %v2644 = vand.u32 %v73, 4294901760
    %2645 = vmatmul.mubr.f32.gmra.mrb[0].mxu0 %v2644
    %v2646 = vpop.f32.mrb[0].mxu0
    %v2647 = vadd.f32 %v2470, %v2646
    %v2648 = vpop.f32.mrb[0].mxu0
    %2649 = vmatprep.mubr.f32.mxu0 0.0
    %v2650 = vand.u32 %v74, 4294901760
    %2651 = vmatmul.mubr.f32.gmra.mrb[0].mxu0 %v2650
    %v2652 = vpop.f32.mrb[0].mxu0
    %v2653 = vadd.f32 %v2476, %v2652
    %v2654 = vpop.f32.mrb[0].mxu0
    %2655 = vmatprep.mubr.f32.mxu0 0.0
    %v2656 = vand.u32 %v75, 4294901760
    %2657 = vmatmul.mubr.f32.gmra.mrb[0].mxu0 %v2656
    %v2658 = vpop.f32.mrb[0].mxu0
    %v2659 = vadd.f32 %v2482, %v2658
    %v2660 = vpop.f32.mrb[0].mxu0
    %2661 = vmatprep.mubr.f32.mxu0 0.0
    %v2662 = vand.u32 %v76, 4294901760
    %2663 = vmatmul.mubr.f32.gmra.mrb[0].mxu0 %v2662
    %v2664 = vpop.f32.mrb[0].mxu0
    %v2665 = vadd.f32 %v2488, %v2664
    %v2666 = vpop.f32.mrb[0].mxu0
    %2667 = vmatprep.mubr.f32.mxu0 0.0
    %v2668 = vand.u32 %v77, 4294901760
    %2669 = vmatmul.mubr.f32.gmra.mrb[0].mxu0 %v2668
    %v2670 = vpop.f32.mrb[0].mxu0
    %v2671 = vadd.f32 %v2494, %v2670
    %v2672 = vpop.f32.mrb[0].mxu0
    %2673 = vmatprep.mubr.f32.mxu0 0.0
    %v2674 = vand.u32 %v78, 4294901760
    %2675 = vmatmul.mubr.f32.gmra.mrb[0].mxu0 %v2674
    %v2676 = vpop.f32.mrb[0].mxu0
    %v2677 = vadd.f32 %v2500, %v2676
    %v2678 = vpop.f32.mrb[0].mxu0
    %2679 = vmatprep.mubr.f32.mxu0 0.0
    %v2680 = vand.u32 %v79, 4294901760
    %2681 = vmatmul.mubr.f32.gmra.mrb[0].mxu0 %v2680
    %v2682 = vpop.f32.mrb[0].mxu0
    %v2683 = vadd.f32 %v2506, %v2682
    %v2684 = vpop.f32.mrb[0].mxu0
    %2685 = vdwg.mxu0
    %s2686 = sld [smem:[#allocation2 + $0x2]]
    %v2687 = vstv %s2686
    %v2688 = vmul.f32 %v2593, %v2687
    %v2689 = vmul.f32 %v2599, %v2687
    %v2690 = vmul.f32 %v2605, %v2687
    %v2691 = vmul.f32 %v2611, %v2687
    %v2692 = vmul.f32 %v2617, %v2687
    %v2693 = vmul.f32 %v2623, %v2687
    %v2694 = vmul.f32 %v2629, %v2687
    %v2695 = vmul.f32 %v2635, %v2687
    %v2696 = vmul.f32 %v2641, %v2687
    %v2697 = vmul.f32 %v2647, %v2687
    %v2698 = vmul.f32 %v2653, %v2687
    %v2699 = vmul.f32 %v2659, %v2687
    %v2700 = vmul.f32 %v2665, %v2687
    %v2701 = vmul.f32 %v2671, %v2687
    %v2702 = vmul.f32 %v2677, %v2687
    %v2703 = vmul.f32 %v2683, %v2687
    %v2704 = vadd.f32 %v1384, %v2688
    %v2705 = vadd.f32 %v1385, %v2689
    %v2706 = vadd.f32 %v1386, %v2690
    %v2707 = vadd.f32 %v1387, %v2691
    %v2708 = vadd.f32 %v1388, %v2692
    %v2709 = vadd.f32 %v1389, %v2693
    %v2710 = vadd.f32 %v1390, %v2694
    %v2711 = vadd.f32 %v1391, %v2695
    %v2712 = vadd.f32 %v1392, %v2696
    %v2713 = vadd.f32 %v1393, %v2697
    %v2714 = vadd.f32 %v1394, %v2698
    %v2715 = vadd.f32 %v1395, %v2699
    %v2716 = vadd.f32 %v1396, %v2700
    %v2717 = vadd.f32 %v1397, %v2701
    %v2718 = vadd.f32 %v1398, %v2702
    %v2719 = vadd.f32 %v1399, %v2703
    %2720 = vmatprep.subr.mxu0 0.0
    %v2721 = vand.u32 %v2593, 4294901760
    %2722 = vmatpush1.msra.mxu0 %v2721
    %2723 = vmatprep.subr.mxu0 0.0
    %v2724 = vand.u32 %v2599, 4294901760
    %2725 = vmatpush1.msra.mxu0 %v2724
    %2726 = vmatprep.subr.mxu0 0.0
    %v2727 = vand.u32 %v2605, 4294901760
    %2728 = vmatpush1.msra.mxu0 %v2727
    %2729 = vmatprep.subr.mxu0 0.0
    %v2730 = vand.u32 %v2611, 4294901760
    %2731 = vmatpush1.msra.mxu0 %v2730
    %2732 = vmatprep.subr.mxu0 0.0
    %v2733 = vand.u32 %v2617, 4294901760
    %2734 = vmatpush1.msra.mxu0 %v2733
    %2735 = vmatprep.subr.mxu0 0.0
    %v2736 = vand.u32 %v2623, 4294901760
    %2737 = vmatpush1.msra.mxu0 %v2736
    %2738 = vmatprep.subr.mxu0 0.0
    %v2739 = vand.u32 %v2629, 4294901760
    %2740 = vmatpush1.msra.mxu0 %v2739
    %2741 = vmatprep.subr.mxu0 0.0
    %v2742 = vand.u32 %v2635, 4294901760
    %2743 = vmatpush1.msra.mxu0 %v2742
    %2744 = vmatprep.subr.mxu0 0.0
    %v2745 = vand.u32 %v2641, 4294901760
    %2746 = vmatpush1.msra.mxu0 %v2745
    %2747 = vmatprep.subr.mxu0 0.0
    %v2748 = vand.u32 %v2647, 4294901760
    %2749 = vmatpush1.msra.mxu0 %v2748
    %2750 = vmatprep.subr.mxu0 0.0
    %v2751 = vand.u32 %v2653, 4294901760
    %2752 = vmatpush1.msra.mxu0 %v2751
    %2753 = vmatprep.subr.mxu0 0.0
    %v2754 = vand.u32 %v2659, 4294901760
    %2755 = vmatpush1.msra.mxu0 %v2754
    %2756 = vmatprep.subr.mxu0 0.0
    %v2757 = vand.u32 %v2665, 4294901760
    %2758 = vmatpush1.msra.mxu0 %v2757
    %2759 = vmatprep.subr.mxu0 0.0
    %v2760 = vand.u32 %v2671, 4294901760
    %2761 = vmatpush1.msra.mxu0 %v2760
    %2762 = vmatprep.subr.mxu0 0.0
    %v2763 = vand.u32 %v2677, 4294901760
    %2764 = vmatpush1.msra.mxu0 %v2763
    %2765 = vmatprep.subr.mxu0 0.0
    %v2766 = vand.u32 %v2683, 4294901760
    %2767 = vmatpush1.msra.mxu0 %v2766
    %2768 = vmatprep.subr.mxu0 0.0
    %2769 = vmatpush1.msra.mxu0 0.0
    %2770 = vmatprep.subr.mxu0 0.0
    %2771 = vmatpush1.msra.mxu0 0.0
    %2772 = vmatprep.subr.mxu0 0.0
    %2773 = vmatpush1.msra.mxu0 0.0
    %2774 = vmatprep.subr.mxu0 0.0
    %2775 = vmatpush1.msra.mxu0 0.0
    %2776 = vmatprep.subr.mxu0 0.0
    %2777 = vmatpush1.msra.mxu0 0.0
    %2778 = vmatprep.subr.mxu0 0.0
    %2779 = vmatpush1.msra.mxu0 0.0
    %2780 = vmatprep.subr.mxu0 0.0
    %2781 = vmatpush1.msra.mxu0 0.0
    %2782 = vmatprep.subr.mxu0 0.0
    %2783 = vmatpush1.msra.mxu0 0.0
    %2784 = vmatprep.subr.mxu0 0.0
    %2785 = vmatpush1.msra.mxu0 0.0
    %2786 = vmatprep.subr.mxu0 0.0
    %2787 = vmatpush1.msra.mxu0 0.0
    %2788 = vmatprep.subr.mxu0 0.0
    %2789 = vmatpush1.msra.mxu0 0.0
    %2790 = vmatprep.subr.mxu0 0.0
    %2791 = vmatpush1.msra.mxu0 0.0
    %2792 = vmatprep.subr.mxu0 0.0
    %2793 = vmatpush1.msra.mxu0 0.0
    %2794 = vmatprep.subr.mxu0 0.0
    %2795 = vmatpush1.msra.mxu0 0.0
    %2796 = vmatprep.subr.mxu0 0.0
    %2797 = vmatpush1.msra.mxu0 0.0
    %2798 = vmatprep.subr.mxu0 0.0
    %2799 = vmatpush1.msra.mxu0 0.0
    %2800 = vmatprep.mubr.f32.mxu0 0.0
    %v2801 = vand.u32 %v64, 4294901760
    %v2802 = vsub.f32 %v64, %v2801
    %v2803 = vand.u32 %v2802, 4294901760
    %v2804 = vsub.f32 %v2802, %v2803
    %v2805 = vand.u32 %v2804, 4294901760
    %2806 = vmatmul.mubr.f32.gmra.mrb[0].mxu0 %v2805
    %v2807 = vpop.f32.mrb[0].mxu0
    %v2808 = vadd.f32 0.0, %v2807
    %v2809 = vpop.f32.mrb[0].mxu0
    %2810 = vmatprep.mubr.f32.mxu0 0.0
    %v2811 = vand.u32 %v65, 4294901760
    %v2812 = vsub.f32 %v65, %v2811
    %v2813 = vand.u32 %v2812, 4294901760
    %v2814 = vsub.f32 %v2812, %v2813
    %v2815 = vand.u32 %v2814, 4294901760
    %2816 = vmatmul.mubr.f32.gmra.mrb[0].mxu0 %v2815
    %v2817 = vpop.f32.mrb[0].mxu0
    %v2818 = vadd.f32 0.0, %v2817
    %v2819 = vpop.f32.mrb[0].mxu0
    %2820 = vmatprep.mubr.f32.mxu0 0.0
    %v2821 = vand.u32 %v66, 4294901760
    %v2822 = vsub.f32 %v66, %v2821
    %v2823 = vand.u32 %v2822, 4294901760
    %v2824 = vsub.f32 %v2822, %v2823
    %v2825 = vand.u32 %v2824, 4294901760
    %2826 = vmatmul.mubr.f32.gmra.mrb[0].mxu0 %v2825
    %v2827 = vpop.f32.mrb[0].mxu0
    %v2828 = vadd.f32 0.0, %v2827
    %v2829 = vpop.f32.mrb[0].mxu0
    %2830 = vmatprep.mubr.f32.mxu0 0.0
    %v2831 = vand.u32 %v67, 4294901760
    %v2832 = vsub.f32 %v67, %v2831
    %v2833 = vand.u32 %v2832, 4294901760
    %v2834 = vsub.f32 %v2832, %v2833
    %v2835 = vand.u32 %v2834, 4294901760
    %2836 = vmatmul.mubr.f32.gmra.mrb[0].mxu0 %v2835
    %v2837 = vpop.f32.mrb[0].mxu0
    %v2838 = vadd.f32 0.0, %v2837
    %v2839 = vpop.f32.mrb[0].mxu0
    %2840 = vmatprep.mubr.f32.mxu0 0.0
    %v2841 = vand.u32 %v68, 4294901760
    %v2842 = vsub.f32 %v68, %v2841
    %v2843 = vand.u32 %v2842, 4294901760
    %v2844 = vsub.f32 %v2842, %v2843
    %v2845 = vand.u32 %v2844, 4294901760
    %2846 = vmatmul.mubr.f32.gmra.mrb[0].mxu0 %v2845
    %v2847 = vpop.f32.mrb[0].mxu0
    %v2848 = vadd.f32 0.0, %v2847
    %v2849 = vpop.f32.mrb[0].mxu0
    %2850 = vmatprep.mubr.f32.mxu0 0.0
    %v2851 = vand.u32 %v69, 4294901760
    %v2852 = vsub.f32 %v69, %v2851
    %v2853 = vand.u32 %v2852, 4294901760
    %v2854 = vsub.f32 %v2852, %v2853
    %v2855 = vand.u32 %v2854, 4294901760
    %2856 = vmatmul.mubr.f32.gmra.mrb[0].mxu0 %v2855
    %v2857 = vpop.f32.mrb[0].mxu0
    %v2858 = vadd.f32 0.0, %v2857
    %v2859 = vpop.f32.mrb[0].mxu0
    %2860 = vmatprep.mubr.f32.mxu0 0.0
    %v2861 = vand.u32 %v70, 4294901760
    %v2862 = vsub.f32 %v70, %v2861
    %v2863 = vand.u32 %v2862, 4294901760
    %v2864 = vsub.f32 %v2862, %v2863
    %v2865 = vand.u32 %v2864, 4294901760
    %2866 = vmatmul.mubr.f32.gmra.mrb[0].mxu0 %v2865
    %v2867 = vpop.f32.mrb[0].mxu0
    %v2868 = vadd.f32 0.0, %v2867
    %v2869 = vpop.f32.mrb[0].mxu0
    %2870 = vmatprep.mubr.f32.mxu0 0.0
    %v2871 = vand.u32 %v71, 4294901760
    %v2872 = vsub.f32 %v71, %v2871
    %v2873 = vand.u32 %v2872, 4294901760
    %v2874 = vsub.f32 %v2872, %v2873
    %v2875 = vand.u32 %v2874, 4294901760
    %2876 = vmatmul.mubr.f32.gmra.mrb[0].mxu0 %v2875
    %v2877 = vpop.f32.mrb[0].mxu0
    %v2878 = vadd.f32 0.0, %v2877
    %v2879 = vpop.f32.mrb[0].mxu0
    %2880 = vmatprep.mubr.f32.mxu0 0.0
    %v2881 = vand.u32 %v72, 4294901760
    %v2882 = vsub.f32 %v72, %v2881
    %v2883 = vand.u32 %v2882, 4294901760
    %v2884 = vsub.f32 %v2882, %v2883
    %v2885 = vand.u32 %v2884, 4294901760
    %2886 = vmatmul.mubr.f32.gmra.mrb[0].mxu0 %v2885
    %v2887 = vpop.f32.mrb[0].mxu0
    %v2888 = vadd.f32 0.0, %v2887
    %v2889 = vpop.f32.mrb[0].mxu0
    %2890 = vmatprep.mubr.f32.mxu0 0.0
    %v2891 = vand.u32 %v73, 4294901760
    %v2892 = vsub.f32 %v73, %v2891
    %v2893 = vand.u32 %v2892, 4294901760
    %v2894 = vsub.f32 %v2892, %v2893
    %v2895 = vand.u32 %v2894, 4294901760
    %2896 = vmatmul.mubr.f32.gmra.mrb[0].mxu0 %v2895
    %v2897 = vpop.f32.mrb[0].mxu0
    %v2898 = vadd.f32 0.0, %v2897
    %v2899 = vpop.f32.mrb[0].mxu0
    %2900 = vmatprep.mubr.f32.mxu0 0.0
    %v2901 = vand.u32 %v74, 4294901760
    %v2902 = vsub.f32 %v74, %v2901
    %v2903 = vand.u32 %v2902, 4294901760
    %v2904 = vsub.f32 %v2902, %v2903
    %v2905 = vand.u32 %v2904, 4294901760
    %2906 = vmatmul.mubr.f32.gmra.mrb[0].mxu0 %v2905
    %v2907 = vpop.f32.mrb[0].mxu0
    %v2908 = vadd.f32 0.0, %v2907
    %v2909 = vpop.f32.mrb[0].mxu0
    %2910 = vmatprep.mubr.f32.mxu0 0.0
    %v2911 = vand.u32 %v75, 4294901760
    %v2912 = vsub.f32 %v75, %v2911
    %v2913 = vand.u32 %v2912, 4294901760
    %v2914 = vsub.f32 %v2912, %v2913
    %v2915 = vand.u32 %v2914, 4294901760
    %2916 = vmatmul.mubr.f32.gmra.mrb[0].mxu0 %v2915
    %v2917 = vpop.f32.mrb[0].mxu0
    %v2918 = vadd.f32 0.0, %v2917
    %v2919 = vpop.f32.mrb[0].mxu0
    %2920 = vmatprep.mubr.f32.mxu0 0.0
    %v2921 = vand.u32 %v76, 4294901760
    %v2922 = vsub.f32 %v76, %v2921
    %v2923 = vand.u32 %v2922, 4294901760
    %v2924 = vsub.f32 %v2922, %v2923
    %v2925 = vand.u32 %v2924, 4294901760
    %2926 = vmatmul.mubr.f32.gmra.mrb[0].mxu0 %v2925
    %v2927 = vpop.f32.mrb[0].mxu0
    %v2928 = vadd.f32 0.0, %v2927
    %v2929 = vpop.f32.mrb[0].mxu0
    %2930 = vmatprep.mubr.f32.mxu0 0.0
    %v2931 = vand.u32 %v77, 4294901760
    %v2932 = vsub.f32 %v77, %v2931
    %v2933 = vand.u32 %v2932, 4294901760
    %v2934 = vsub.f32 %v2932, %v2933
    %v2935 = vand.u32 %v2934, 4294901760
    %2936 = vmatmul.mubr.f32.gmra.mrb[0].mxu0 %v2935
    %v2937 = vpop.f32.mrb[0].mxu0
    %v2938 = vadd.f32 0.0, %v2937
    %v2939 = vpop.f32.mrb[0].mxu0
    %2940 = vmatprep.mubr.f32.mxu0 0.0
    %v2941 = vand.u32 %v78, 4294901760
    %v2942 = vsub.f32 %v78, %v2941
    %v2943 = vand.u32 %v2942, 4294901760
    %v2944 = vsub.f32 %v2942, %v2943
    %v2945 = vand.u32 %v2944, 4294901760
    %2946 = vmatmul.mubr.f32.gmra.mrb[0].mxu0 %v2945
    %v2947 = vpop.f32.mrb[0].mxu0
    %v2948 = vadd.f32 0.0, %v2947
    %v2949 = vpop.f32.mrb[0].mxu0
    %2950 = vmatprep.mubr.f32.mxu0 0.0
    %v2951 = vand.u32 %v79, 4294901760
    %v2952 = vsub.f32 %v79, %v2951
    %v2953 = vand.u32 %v2952, 4294901760
    %v2954 = vsub.f32 %v2952, %v2953
    %v2955 = vand.u32 %v2954, 4294901760
    %2956 = vmatmul.mubr.f32.gmra.mrb[0].mxu0 %v2955
    %v2957 = vpop.f32.mrb[0].mxu0
    %v2958 = vadd.f32 0.0, %v2957
    %v2959 = vpop.f32.mrb[0].mxu0
    %2960 = vdwg.mxu0
    %2961 = vmatprep.subr.mxu0 0.0
    %v2962 = vand.u32 %v2593, 4294901760
    %v2963 = vsub.f32 %v2593, %v2962
    %v2964 = vand.u32 %v2963, 4294901760
    %v2965 = vsub.f32 %v2963, %v2964
    %v2966 = vand.u32 %v2965, 4294901760
    %2967 = vmatpush1.msra.mxu0 %v2966
    %2968 = vmatprep.subr.mxu0 0.0
    %v2969 = vand.u32 %v2599, 4294901760
    %v2970 = vsub.f32 %v2599, %v2969
    %v2971 = vand.u32 %v2970, 4294901760
    %v2972 = vsub.f32 %v2970, %v2971
    %v2973 = vand.u32 %v2972, 4294901760
    %2974 = vmatpush1.msra.mxu0 %v2973
    %2975 = vmatprep.subr.mxu0 0.0
    %v2976 = vand.u32 %v2605, 4294901760
    %v2977 = vsub.f32 %v2605, %v2976
    %v2978 = vand.u32 %v2977, 4294901760
    %v2979 = vsub.f32 %v2977, %v2978
    %v2980 = vand.u32 %v2979, 4294901760
    %2981 = vmatpush1.msra.mxu0 %v2980
    %2982 = vmatprep.subr.mxu0 0.0
    %v2983 = vand.u32 %v2611, 4294901760
    %v2984 = vsub.f32 %v2611, %v2983
    %v2985 = vand.u32 %v2984, 4294901760
    %v2986 = vsub.f32 %v2984, %v2985
    %v2987 = vand.u32 %v2986, 4294901760
    %2988 = vmatpush1.msra.mxu0 %v2987
    %2989 = vmatprep.subr.mxu0 0.0
    %v2990 = vand.u32 %v2617, 4294901760
    %v2991 = vsub.f32 %v2617, %v2990
    %v2992 = vand.u32 %v2991, 4294901760
    %v2993 = vsub.f32 %v2991, %v2992
    %v2994 = vand.u32 %v2993, 4294901760
    %2995 = vmatpush1.msra.mxu0 %v2994
    %2996 = vmatprep.subr.mxu0 0.0
    %v2997 = vand.u32 %v2623, 4294901760
    %v2998 = vsub.f32 %v2623, %v2997
    %v2999 = vand.u32 %v2998, 4294901760
    %v3000 = vsub.f32 %v2998, %v2999
    %v3001 = vand.u32 %v3000, 4294901760
    %3002 = vmatpush1.msra.mxu0 %v3001
    %3003 = vmatprep.subr.mxu0 0.0
    %v3004 = vand.u32 %v2629, 4294901760
    %v3005 = vsub.f32 %v2629, %v3004
    %v3006 = vand.u32 %v3005, 4294901760
    %v3007 = vsub.f32 %v3005, %v3006
    %v3008 = vand.u32 %v3007, 4294901760
    %3009 = vmatpush1.msra.mxu0 %v3008
    %3010 = vmatprep.subr.mxu0 0.0
    %v3011 = vand.u32 %v2635, 4294901760
    %v3012 = vsub.f32 %v2635, %v3011
    %v3013 = vand.u32 %v3012, 4294901760
    %v3014 = vsub.f32 %v3012, %v3013
    %v3015 = vand.u32 %v3014, 4294901760
    %3016 = vmatpush1.msra.mxu0 %v3015
    %3017 = vmatprep.subr.mxu0 0.0
    %v3018 = vand.u32 %v2641, 4294901760
    %v3019 = vsub.f32 %v2641, %v3018
    %v3020 = vand.u32 %v3019, 4294901760
    %v3021 = vsub.f32 %v3019, %v3020
    %v3022 = vand.u32 %v3021, 4294901760
    %3023 = vmatpush1.msra.mxu0 %v3022
    %3024 = vmatprep.subr.mxu0 0.0
    %v3025 = vand.u32 %v2647, 4294901760
    %v3026 = vsub.f32 %v2647, %v3025
    %v3027 = vand.u32 %v3026, 4294901760
    %v3028 = vsub.f32 %v3026, %v3027
    %v3029 = vand.u32 %v3028, 4294901760
    %3030 = vmatpush1.msra.mxu0 %v3029
    %3031 = vmatprep.subr.mxu0 0.0
    %v3032 = vand.u32 %v2653, 4294901760
    %v3033 = vsub.f32 %v2653, %v3032
    %v3034 = vand.u32 %v3033, 4294901760
    %v3035 = vsub.f32 %v3033, %v3034
    %v3036 = vand.u32 %v3035, 4294901760
    %3037 = vmatpush1.msra.mxu0 %v3036
    %3038 = vmatprep.subr.mxu0 0.0
    %v3039 = vand.u32 %v2659, 4294901760
    %v3040 = vsub.f32 %v2659, %v3039
    %v3041 = vand.u32 %v3040, 4294901760
    %v3042 = vsub.f32 %v3040, %v3041
    %v3043 = vand.u32 %v3042, 4294901760
    %3044 = vmatpush1.msra.mxu0 %v3043
    %3045 = vmatprep.subr.mxu0 0.0
    %v3046 = vand.u32 %v2665, 4294901760
    %v3047 = vsub.f32 %v2665, %v3046
    %v3048 = vand.u32 %v3047, 4294901760
    %v3049 = vsub.f32 %v3047, %v3048
    %v3050 = vand.u32 %v3049, 4294901760
    %3051 = vmatpush1.msra.mxu0 %v3050
    %3052 = vmatprep.subr.mxu0 0.0
    %v3053 = vand.u32 %v2671, 4294901760
    %v3054 = vsub.f32 %v2671, %v3053
    %v3055 = vand.u32 %v3054, 4294901760
    %v3056 = vsub.f32 %v3054, %v3055
    %v3057 = vand.u32 %v3056, 4294901760
    %3058 = vmatpush1.msra.mxu0 %v3057
    %3059 = vmatprep.subr.mxu0 0.0
    %v3060 = vand.u32 %v2677, 4294901760
    %v3061 = vsub.f32 %v2677, %v3060
    %v3062 = vand.u32 %v3061, 4294901760
    %v3063 = vsub.f32 %v3061, %v3062
    %v3064 = vand.u32 %v3063, 4294901760
    %3065 = vmatpush1.msra.mxu0 %v3064
    %3066 = vmatprep.subr.mxu0 0.0
    %v3067 = vand.u32 %v2683, 4294901760
    %v3068 = vsub.f32 %v2683, %v3067
    %v3069 = vand.u32 %v3068, 4294901760
    %v3070 = vsub.f32 %v3068, %v3069
    %v3071 = vand.u32 %v3070, 4294901760
    %3072 = vmatpush1.msra.mxu0 %v3071
    %3073 = vmatprep.subr.mxu0 0.0
    %3074 = vmatpush1.msra.mxu0 0.0
    %3075 = vmatprep.subr.mxu0 0.0
    %3076 = vmatpush1.msra.mxu0 0.0
    %3077 = vmatprep.subr.mxu0 0.0
    %3078 = vmatpush1.msra.mxu0 0.0
    %3079 = vmatprep.subr.mxu0 0.0
    %3080 = vmatpush1.msra.mxu0 0.0
    %3081 = vmatprep.subr.mxu0 0.0
    %3082 = vmatpush1.msra.mxu0 0.0
    %3083 = vmatprep.subr.mxu0 0.0
    %3084 = vmatpush1.msra.mxu0 0.0
    %3085 = vmatprep.subr.mxu0 0.0
    %3086 = vmatpush1.msra.mxu0 0.0
    %3087 = vmatprep.subr.mxu0 0.0
    %3088 = vmatpush1.msra.mxu0 0.0
    %3089 = vmatprep.subr.mxu0 0.0
    %3090 = vmatpush1.msra.mxu0 0.0
    %3091 = vmatprep.subr.mxu0 0.0
    %3092 = vmatpush1.msra.mxu0 0.0
    %3093 = vmatprep.subr.mxu0 0.0
    %3094 = vmatpush1.msra.mxu0 0.0
    %3095 = vmatprep.subr.mxu0 0.0
    %3096 = vmatpush1.msra.mxu0 0.0
    %3097 = vmatprep.subr.mxu0 0.0
    %3098 = vmatpush1.msra.mxu0 0.0
    %3099 = vmatprep.subr.mxu0 0.0
    %3100 = vmatpush1.msra.mxu0 0.0
    %3101 = vmatprep.subr.mxu0 0.0
    %3102 = vmatpush1.msra.mxu0 0.0
    %3103 = vmatprep.subr.mxu0 0.0
    %3104 = vmatpush1.msra.mxu0 0.0
    %3105 = vmatprep.mubr.f32.mxu0 0.0
    %v3106 = vand.u32 %v64, 4294901760
    %3107 = vmatmul.mubr.f32.gmra.mrb[0].mxu0 %v3106
    %v3108 = vpop.f32.mrb[0].mxu0
    %v3109 = vadd.f32 %v2808, %v3108
    %v3110 = vpop.f32.mrb[0].mxu0
    %3111 = vmatprep.mubr.f32.mxu0 0.0
    %v3112 = vand.u32 %v65, 4294901760
    %3113 = vmatmul.mubr.f32.gmra.mrb[0].mxu0 %v3112
    %v3114 = vpop.f32.mrb[0].mxu0
    %v3115 = vadd.f32 %v2818, %v3114
    %v3116 = vpop.f32.mrb[0].mxu0
    %3117 = vmatprep.mubr.f32.mxu0 0.0
    %v3118 = vand.u32 %v66, 4294901760
    %3119 = vmatmul.mubr.f32.gmra.mrb[0].mxu0 %v3118
    %v3120 = vpop.f32.mrb[0].mxu0
    %v3121 = vadd.f32 %v2828, %v3120
    %v3122 = vpop.f32.mrb[0].mxu0
    %3123 = vmatprep.mubr.f32.mxu0 0.0
    %v3124 = vand.u32 %v67, 4294901760
    %3125 = vmatmul.mubr.f32.gmra.mrb[0].mxu0 %v3124
    %v3126 = vpop.f32.mrb[0].mxu0
    %v3127 = vadd.f32 %v2838, %v3126
    %v3128 = vpop.f32.mrb[0].mxu0
    %3129 = vmatprep.mubr.f32.mxu0 0.0
    %v3130 = vand.u32 %v68, 4294901760
    %3131 = vmatmul.mubr.f32.gmra.mrb[0].mxu0 %v3130
    %v3132 = vpop.f32.mrb[0].mxu0
    %v3133 = vadd.f32 %v2848, %v3132
    %v3134 = vpop.f32.mrb[0].mxu0
    %3135 = vmatprep.mubr.f32.mxu0 0.0
    %v3136 = vand.u32 %v69, 4294901760
    %3137 = vmatmul.mubr.f32.gmra.mrb[0].mxu0 %v3136
    %v3138 = vpop.f32.mrb[0].mxu0
    %v3139 = vadd.f32 %v2858, %v3138
    %v3140 = vpop.f32.mrb[0].mxu0
    %3141 = vmatprep.mubr.f32.mxu0 0.0
    %v3142 = vand.u32 %v70, 4294901760
    %3143 = vmatmul.mubr.f32.gmra.mrb[0].mxu0 %v3142
    %v3144 = vpop.f32.mrb[0].mxu0
    %v3145 = vadd.f32 %v2868, %v3144
    %v3146 = vpop.f32.mrb[0].mxu0
    %3147 = vmatprep.mubr.f32.mxu0 0.0
    %v3148 = vand.u32 %v71, 4294901760
    %3149 = vmatmul.mubr.f32.gmra.mrb[0].mxu0 %v3148
    %v3150 = vpop.f32.mrb[0].mxu0
    %v3151 = vadd.f32 %v2878, %v3150
    %v3152 = vpop.f32.mrb[0].mxu0
    %3153 = vmatprep.mubr.f32.mxu0 0.0
    %v3154 = vand.u32 %v72, 4294901760
    %3155 = vmatmul.mubr.f32.gmra.mrb[0].mxu0 %v3154
    %v3156 = vpop.f32.mrb[0].mxu0
    %v3157 = vadd.f32 %v2888, %v3156
    %v3158 = vpop.f32.mrb[0].mxu0
    %3159 = vmatprep.mubr.f32.mxu0 0.0
    %v3160 = vand.u32 %v73, 4294901760
    %3161 = vmatmul.mubr.f32.gmra.mrb[0].mxu0 %v3160
    %v3162 = vpop.f32.mrb[0].mxu0
    %v3163 = vadd.f32 %v2898, %v3162
    %v3164 = vpop.f32.mrb[0].mxu0
    %3165 = vmatprep.mubr.f32.mxu0 0.0
    %v3166 = vand.u32 %v74, 4294901760
    %3167 = vmatmul.mubr.f32.gmra.mrb[0].mxu0 %v3166
    %v3168 = vpop.f32.mrb[0].mxu0
    %v3169 = vadd.f32 %v2908, %v3168
    %v3170 = vpop.f32.mrb[0].mxu0
    %3171 = vmatprep.mubr.f32.mxu0 0.0
    %v3172 = vand.u32 %v75, 4294901760
    %3173 = vmatmul.mubr.f32.gmra.mrb[0].mxu0 %v3172
    %v3174 = vpop.f32.mrb[0].mxu0
    %v3175 = vadd.f32 %v2918, %v3174
    %v3176 = vpop.f32.mrb[0].mxu0
    %3177 = vmatprep.mubr.f32.mxu0 0.0
    %v3178 = vand.u32 %v76, 4294901760
    %3179 = vmatmul.mubr.f32.gmra.mrb[0].mxu0 %v3178
    %v3180 = vpop.f32.mrb[0].mxu0
    %v3181 = vadd.f32 %v2928, %v3180
    %v3182 = vpop.f32.mrb[0].mxu0
    %3183 = vmatprep.mubr.f32.mxu0 0.0
    %v3184 = vand.u32 %v77, 4294901760
    %3185 = vmatmul.mubr.f32.gmra.mrb[0].mxu0 %v3184
    %v3186 = vpop.f32.mrb[0].mxu0
    %v3187 = vadd.f32 %v2938, %v3186
    %v3188 = vpop.f32.mrb[0].mxu0
    %3189 = vmatprep.mubr.f32.mxu0 0.0
    %v3190 = vand.u32 %v78, 4294901760
    %3191 = vmatmul.mubr.f32.gmra.mrb[0].mxu0 %v3190
    %v3192 = vpop.f32.mrb[0].mxu0
    %v3193 = vadd.f32 %v2948, %v3192
    %v3194 = vpop.f32.mrb[0].mxu0
    %3195 = vmatprep.mubr.f32.mxu0 0.0
    %v3196 = vand.u32 %v79, 4294901760
    %3197 = vmatmul.mubr.f32.gmra.mrb[0].mxu0 %v3196
    %v3198 = vpop.f32.mrb[0].mxu0
    %v3199 = vadd.f32 %v2958, %v3198
    %v3200 = vpop.f32.mrb[0].mxu0
    %3201 = vdwg.mxu0
    %3202 = vmatprep.subr.mxu0 0.0
    %v3203 = vand.u32 %v2593, 4294901760
    %v3204 = vsub.f32 %v2593, %v3203
    %3205 = vmatpush1.msra.mxu0 %v3204
    %3206 = vmatprep.subr.mxu0 0.0
    %v3207 = vand.u32 %v2599, 4294901760
    %v3208 = vsub.f32 %v2599, %v3207
    %3209 = vmatpush1.msra.mxu0 %v3208
    %3210 = vmatprep.subr.mxu0 0.0
    %v3211 = vand.u32 %v2605, 4294901760
    %v3212 = vsub.f32 %v2605, %v3211
    %3213 = vmatpush1.msra.mxu0 %v3212
    %3214 = vmatprep.subr.mxu0 0.0
    %v3215 = vand.u32 %v2611, 4294901760
    %v3216 = vsub.f32 %v2611, %v3215
    %3217 = vmatpush1.msra.mxu0 %v3216
    %3218 = vmatprep.subr.mxu0 0.0
    %v3219 = vand.u32 %v2617, 4294901760
    %v3220 = vsub.f32 %v2617, %v3219
    %3221 = vmatpush1.msra.mxu0 %v3220
    %3222 = vmatprep.subr.mxu0 0.0
    %v3223 = vand.u32 %v2623, 4294901760
    %v3224 = vsub.f32 %v2623, %v3223
    %3225 = vmatpush1.msra.mxu0 %v3224
    %3226 = vmatprep.subr.mxu0 0.0
    %v3227 = vand.u32 %v2629, 4294901760
    %v3228 = vsub.f32 %v2629, %v3227
    %3229 = vmatpush1.msra.mxu0 %v3228
    %3230 = vmatprep.subr.mxu0 0.0
    %v3231 = vand.u32 %v2635, 4294901760
    %v3232 = vsub.f32 %v2635, %v3231
    %3233 = vmatpush1.msra.mxu0 %v3232
    %3234 = vmatprep.subr.mxu0 0.0
    %v3235 = vand.u32 %v2641, 4294901760
    %v3236 = vsub.f32 %v2641, %v3235
    %3237 = vmatpush1.msra.mxu0 %v3236
    %3238 = vmatprep.subr.mxu0 0.0
    %v3239 = vand.u32 %v2647, 4294901760
    %v3240 = vsub.f32 %v2647, %v3239
    %3241 = vmatpush1.msra.mxu0 %v3240
    %3242 = vmatprep.subr.mxu0 0.0
    %v3243 = vand.u32 %v2653, 4294901760
    %v3244 = vsub.f32 %v2653, %v3243
    %3245 = vmatpush1.msra.mxu0 %v3244
    %3246 = vmatprep.subr.mxu0 0.0
    %v3247 = vand.u32 %v2659, 4294901760
    %v3248 = vsub.f32 %v2659, %v3247
    %3249 = vmatpush1.msra.mxu0 %v3248
    %3250 = vmatprep.subr.mxu0 0.0
    %v3251 = vand.u32 %v2665, 4294901760
    %v3252 = vsub.f32 %v2665, %v3251
    %3253 = vmatpush1.msra.mxu0 %v3252
    %3254 = vmatprep.subr.mxu0 0.0
    %v3255 = vand.u32 %v2671, 4294901760
    %v3256 = vsub.f32 %v2671, %v3255
    %3257 = vmatpush1.msra.mxu0 %v3256
    %3258 = vmatprep.subr.mxu0 0.0
    %v3259 = vand.u32 %v2677, 4294901760
    %v3260 = vsub.f32 %v2677, %v3259
    %3261 = vmatpush1.msra.mxu0 %v3260
    %3262 = vmatprep.subr.mxu0 0.0
    %v3263 = vand.u32 %v2683, 4294901760
    %v3264 = vsub.f32 %v2683, %v3263
    %3265 = vmatpush1.msra.mxu0 %v3264
    %3266 = vmatprep.subr.mxu0 0.0
    %3267 = vmatpush1.msra.mxu0 0.0
    %3268 = vmatprep.subr.mxu0 0.0
    %3269 = vmatpush1.msra.mxu0 0.0
    %3270 = vmatprep.subr.mxu0 0.0
    %3271 = vmatpush1.msra.mxu0 0.0
    %3272 = vmatprep.subr.mxu0 0.0
    %3273 = vmatpush1.msra.mxu0 0.0
    %3274 = vmatprep.subr.mxu0 0.0
    %3275 = vmatpush1.msra.mxu0 0.0
    %3276 = vmatprep.subr.mxu0 0.0
    %3277 = vmatpush1.msra.mxu0 0.0
    %3278 = vmatprep.subr.mxu0 0.0
    %3279 = vmatpush1.msra.mxu0 0.0
    %3280 = vmatprep.subr.mxu0 0.0
    %3281 = vmatpush1.msra.mxu0 0.0
    %3282 = vmatprep.subr.mxu0 0.0
    %3283 = vmatpush1.msra.mxu0 0.0
    %3284 = vmatprep.subr.mxu0 0.0
    %3285 = vmatpush1.msra.mxu0 0.0
    %3286 = vmatprep.subr.mxu0 0.0
    %3287 = vmatpush1.msra.mxu0 0.0
    %3288 = vmatprep.subr.mxu0 0.0
    %3289 = vmatpush1.msra.mxu0 0.0
    %3290 = vmatprep.subr.mxu0 0.0
    %3291 = vmatpush1.msra.mxu0 0.0
    %3292 = vmatprep.subr.mxu0 0.0
    %3293 = vmatpush1.msra.mxu0 0.0
    %3294 = vmatprep.subr.mxu0 0.0
    %3295 = vmatpush1.msra.mxu0 0.0
    %3296 = vmatprep.subr.mxu0 0.0
    %3297 = vmatpush1.msra.mxu0 0.0
    %3298 = vmatprep.mubr.f32.mxu0 0.0
    %v3299 = vand.u32 %v64, 4294901760
    %v3300 = vsub.f32 %v64, %v3299
    %3301 = vmatmul.mubr.f32.gmra.mrb[0].mxu0 %v3300
    %v3302 = vpop.f32.mrb[0].mxu0
    %v3303 = vadd.f32 %v3109, %v3302
    %v3304 = vpop.f32.mrb[0].mxu0
    %3305 = vmatprep.mubr.f32.mxu0 0.0
    %v3306 = vand.u32 %v65, 4294901760
    %v3307 = vsub.f32 %v65, %v3306
    %3308 = vmatmul.mubr.f32.gmra.mrb[0].mxu0 %v3307
    %v3309 = vpop.f32.mrb[0].mxu0
    %v3310 = vadd.f32 %v3115, %v3309
    %v3311 = vpop.f32.mrb[0].mxu0
    %3312 = vmatprep.mubr.f32.mxu0 0.0
    %v3313 = vand.u32 %v66, 4294901760
    %v3314 = vsub.f32 %v66, %v3313
    %3315 = vmatmul.mubr.f32.gmra.mrb[0].mxu0 %v3314
    %v3316 = vpop.f32.mrb[0].mxu0
    %v3317 = vadd.f32 %v3121, %v3316
    %v3318 = vpop.f32.mrb[0].mxu0
    %3319 = vmatprep.mubr.f32.mxu0 0.0
    %v3320 = vand.u32 %v67, 4294901760
    %v3321 = vsub.f32 %v67, %v3320
    %3322 = vmatmul.mubr.f32.gmra.mrb[0].mxu0 %v3321
    %v3323 = vpop.f32.mrb[0].mxu0
    %v3324 = vadd.f32 %v3127, %v3323
    %v3325 = vpop.f32.mrb[0].mxu0
    %3326 = vmatprep.mubr.f32.mxu0 0.0
    %v3327 = vand.u32 %v68, 4294901760
    %v3328 = vsub.f32 %v68, %v3327
    %3329 = vmatmul.mubr.f32.gmra.mrb[0].mxu0 %v3328
    %v3330 = vpop.f32.mrb[0].mxu0
    %v3331 = vadd.f32 %v3133, %v3330
    %v3332 = vpop.f32.mrb[0].mxu0
    %3333 = vmatprep.mubr.f32.mxu0 0.0
    %v3334 = vand.u32 %v69, 4294901760
    %v3335 = vsub.f32 %v69, %v3334
    %3336 = vmatmul.mubr.f32.gmra.mrb[0].mxu0 %v3335
    %v3337 = vpop.f32.mrb[0].mxu0
    %v3338 = vadd.f32 %v3139, %v3337
    %v3339 = vpop.f32.mrb[0].mxu0
    %3340 = vmatprep.mubr.f32.mxu0 0.0
    %v3341 = vand.u32 %v70, 4294901760
    %v3342 = vsub.f32 %v70, %v3341
    %3343 = vmatmul.mubr.f32.gmra.mrb[0].mxu0 %v3342
    %v3344 = vpop.f32.mrb[0].mxu0
    %v3345 = vadd.f32 %v3145, %v3344
    %v3346 = vpop.f32.mrb[0].mxu0
    %3347 = vmatprep.mubr.f32.mxu0 0.0
    %v3348 = vand.u32 %v71, 4294901760
    %v3349 = vsub.f32 %v71, %v3348
    %3350 = vmatmul.mubr.f32.gmra.mrb[0].mxu0 %v3349
    %v3351 = vpop.f32.mrb[0].mxu0
    %v3352 = vadd.f32 %v3151, %v3351
    %v3353 = vpop.f32.mrb[0].mxu0
    %3354 = vmatprep.mubr.f32.mxu0 0.0
    %v3355 = vand.u32 %v72, 4294901760
    %v3356 = vsub.f32 %v72, %v3355
    %3357 = vmatmul.mubr.f32.gmra.mrb[0].mxu0 %v3356
    %v3358 = vpop.f32.mrb[0].mxu0
    %v3359 = vadd.f32 %v3157, %v3358
    %v3360 = vpop.f32.mrb[0].mxu0
    %3361 = vmatprep.mubr.f32.mxu0 0.0
    %v3362 = vand.u32 %v73, 4294901760
    %v3363 = vsub.f32 %v73, %v3362
    %3364 = vmatmul.mubr.f32.gmra.mrb[0].mxu0 %v3363
    %v3365 = vpop.f32.mrb[0].mxu0
    %v3366 = vadd.f32 %v3163, %v3365
    %v3367 = vpop.f32.mrb[0].mxu0
    %3368 = vmatprep.mubr.f32.mxu0 0.0
    %v3369 = vand.u32 %v74, 4294901760
    %v3370 = vsub.f32 %v74, %v3369
    %3371 = vmatmul.mubr.f32.gmra.mrb[0].mxu0 %v3370
    %v3372 = vpop.f32.mrb[0].mxu0
    %v3373 = vadd.f32 %v3169, %v3372
    %v3374 = vpop.f32.mrb[0].mxu0
    %3375 = vmatprep.mubr.f32.mxu0 0.0
    %v3376 = vand.u32 %v75, 4294901760
    %v3377 = vsub.f32 %v75, %v3376
    %3378 = vmatmul.mubr.f32.gmra.mrb[0].mxu0 %v3377
    %v3379 = vpop.f32.mrb[0].mxu0
    %v3380 = vadd.f32 %v3175, %v3379
    %v3381 = vpop.f32.mrb[0].mxu0
    %3382 = vmatprep.mubr.f32.mxu0 0.0
    %v3383 = vand.u32 %v76, 4294901760
    %v3384 = vsub.f32 %v76, %v3383
    %3385 = vmatmul.mubr.f32.gmra.mrb[0].mxu0 %v3384
    %v3386 = vpop.f32.mrb[0].mxu0
    %v3387 = vadd.f32 %v3181, %v3386
    %v3388 = vpop.f32.mrb[0].mxu0
    %3389 = vmatprep.mubr.f32.mxu0 0.0
    %v3390 = vand.u32 %v77, 4294901760
    %v3391 = vsub.f32 %v77, %v3390
    %3392 = vmatmul.mubr.f32.gmra.mrb[0].mxu0 %v3391
    %v3393 = vpop.f32.mrb[0].mxu0
    %v3394 = vadd.f32 %v3187, %v3393
    %v3395 = vpop.f32.mrb[0].mxu0
    %3396 = vmatprep.mubr.f32.mxu0 0.0
    %v3397 = vand.u32 %v78, 4294901760
    %v3398 = vsub.f32 %v78, %v3397
    %3399 = vmatmul.mubr.f32.gmra.mrb[0].mxu0 %v3398
    %v3400 = vpop.f32.mrb[0].mxu0
    %v3401 = vadd.f32 %v3193, %v3400
    %v3402 = vpop.f32.mrb[0].mxu0
    %3403 = vmatprep.mubr.f32.mxu0 0.0
    %v3404 = vand.u32 %v79, 4294901760
    %v3405 = vsub.f32 %v79, %v3404
    %3406 = vmatmul.mubr.f32.gmra.mrb[0].mxu0 %v3405
    %v3407 = vpop.f32.mrb[0].mxu0
    %v3408 = vadd.f32 %v3199, %v3407
    %v3409 = vpop.f32.mrb[0].mxu0
    %3410 = vdwg.mxu0
    %3411 = vmatprep.subr.mxu0 0.0
    %v3412 = vand.u32 %v2593, 4294901760
    %3413 = vmatpush1.msra.mxu0 %v3412
    %3414 = vmatprep.subr.mxu0 0.0
    %v3415 = vand.u32 %v2599, 4294901760
    %3416 = vmatpush1.msra.mxu0 %v3415
    %3417 = vmatprep.subr.mxu0 0.0
    %v3418 = vand.u32 %v2605, 4294901760
    %3419 = vmatpush1.msra.mxu0 %v3418
    %3420 = vmatprep.subr.mxu0 0.0
    %v3421 = vand.u32 %v2611, 4294901760
    %3422 = vmatpush1.msra.mxu0 %v3421
    %3423 = vmatprep.subr.mxu0 0.0
    %v3424 = vand.u32 %v2617, 4294901760
    %3425 = vmatpush1.msra.mxu0 %v3424
    %3426 = vmatprep.subr.mxu0 0.0
    %v3427 = vand.u32 %v2623, 4294901760
    %3428 = vmatpush1.msra.mxu0 %v3427
    %3429 = vmatprep.subr.mxu0 0.0
    %v3430 = vand.u32 %v2629, 4294901760
    %3431 = vmatpush1.msra.mxu0 %v3430
    %3432 = vmatprep.subr.mxu0 0.0
    %v3433 = vand.u32 %v2635, 4294901760
    %3434 = vmatpush1.msra.mxu0 %v3433
    %3435 = vmatprep.subr.mxu0 0.0
    %v3436 = vand.u32 %v2641, 4294901760
    %3437 = vmatpush1.msra.mxu0 %v3436
    %3438 = vmatprep.subr.mxu0 0.0
    %v3439 = vand.u32 %v2647, 4294901760
    %3440 = vmatpush1.msra.mxu0 %v3439
    %3441 = vmatprep.subr.mxu0 0.0
    %v3442 = vand.u32 %v2653, 4294901760
    %3443 = vmatpush1.msra.mxu0 %v3442
    %3444 = vmatprep.subr.mxu0 0.0
    %v3445 = vand.u32 %v2659, 4294901760
    %3446 = vmatpush1.msra.mxu0 %v3445
    %3447 = vmatprep.subr.mxu0 0.0
    %v3448 = vand.u32 %v2665, 4294901760
    %3449 = vmatpush1.msra.mxu0 %v3448
    %3450 = vmatprep.subr.mxu0 0.0
    %v3451 = vand.u32 %v2671, 4294901760
    %3452 = vmatpush1.msra.mxu0 %v3451
    %3453 = vmatprep.subr.mxu0 0.0
    %v3454 = vand.u32 %v2677, 4294901760
    %3455 = vmatpush1.msra.mxu0 %v3454
    %3456 = vmatprep.subr.mxu0 0.0
    %v3457 = vand.u32 %v2683, 4294901760
    %3458 = vmatpush1.msra.mxu0 %v3457
    %3459 = vmatprep.subr.mxu0 0.0
    %3460 = vmatpush1.msra.mxu0 0.0
    %3461 = vmatprep.subr.mxu0 0.0
    %3462 = vmatpush1.msra.mxu0 0.0
    %3463 = vmatprep.subr.mxu0 0.0
    %3464 = vmatpush1.msra.mxu0 0.0
    %3465 = vmatprep.subr.mxu0 0.0
    %3466 = vmatpush1.msra.mxu0 0.0
    %3467 = vmatprep.subr.mxu0 0.0
    %3468 = vmatpush1.msra.mxu0 0.0
    %3469 = vmatprep.subr.mxu0 0.0
    %3470 = vmatpush1.msra.mxu0 0.0
    %3471 = vmatprep.subr.mxu0 0.0
    %3472 = vmatpush1.msra.mxu0 0.0
    %3473 = vmatprep.subr.mxu0 0.0
    %3474 = vmatpush1.msra.mxu0 0.0
    %3475 = vmatprep.subr.mxu0 0.0
    %3476 = vmatpush1.msra.mxu0 0.0
    %3477 = vmatprep.subr.mxu0 0.0
    %3478 = vmatpush1.msra.mxu0 0.0
    %3479 = vmatprep.subr.mxu0 0.0
    %3480 = vmatpush1.msra.mxu0 0.0
    %3481 = vmatprep.subr.mxu0 0.0
    %3482 = vmatpush1.msra.mxu0 0.0
    %3483 = vmatprep.subr.mxu0 0.0
    %3484 = vmatpush1.msra.mxu0 0.0
    %3485 = vmatprep.subr.mxu0 0.0
    %3486 = vmatpush1.msra.mxu0 0.0
    %3487 = vmatprep.subr.mxu0 0.0
    %3488 = vmatpush1.msra.mxu0 0.0
    %3489 = vmatprep.subr.mxu0 0.0
    %3490 = vmatpush1.msra.mxu0 0.0
    %3491 = vmatprep.mubr.f32.mxu0 0.0
    %v3492 = vand.u32 %v64, 4294901760
    %v3493 = vsub.f32 %v64, %v3492
    %v3494 = vand.u32 %v3493, 4294901760
    %3495 = vmatmul.mubr.f32.gmra.mrb[0].mxu0 %v3494
    %v3496 = vpop.f32.mrb[0].mxu0
    %v3497 = vadd.f32 %v3303, %v3496
    %v3498 = vpop.f32.mrb[0].mxu0
    %3499 = vmatprep.mubr.f32.mxu0 0.0
    %v3500 = vand.u32 %v65, 4294901760
    %v3501 = vsub.f32 %v65, %v3500
    %v3502 = vand.u32 %v3501, 4294901760
    %3503 = vmatmul.mubr.f32.gmra.mrb[0].mxu0 %v3502
    %v3504 = vpop.f32.mrb[0].mxu0
    %v3505 = vadd.f32 %v3310, %v3504
    %v3506 = vpop.f32.mrb[0].mxu0
    %3507 = vmatprep.mubr.f32.mxu0 0.0
    %v3508 = vand.u32 %v66, 4294901760
    %v3509 = vsub.f32 %v66, %v3508
    %v3510 = vand.u32 %v3509, 4294901760
    %3511 = vmatmul.mubr.f32.gmra.mrb[0].mxu0 %v3510
    %v3512 = vpop.f32.mrb[0].mxu0
    %v3513 = vadd.f32 %v3317, %v3512
    %v3514 = vpop.f32.mrb[0].mxu0
    %3515 = vmatprep.mubr.f32.mxu0 0.0
    %v3516 = vand.u32 %v67, 4294901760
    %v3517 = vsub.f32 %v67, %v3516
    %v3518 = vand.u32 %v3517, 4294901760
    %3519 = vmatmul.mubr.f32.gmra.mrb[0].mxu0 %v3518
    %v3520 = vpop.f32.mrb[0].mxu0
    %v3521 = vadd.f32 %v3324, %v3520
    %v3522 = vpop.f32.mrb[0].mxu0
    %3523 = vmatprep.mubr.f32.mxu0 0.0
    %v3524 = vand.u32 %v68, 4294901760
    %v3525 = vsub.f32 %v68, %v3524
    %v3526 = vand.u32 %v3525, 4294901760
    %3527 = vmatmul.mubr.f32.gmra.mrb[0].mxu0 %v3526
    %v3528 = vpop.f32.mrb[0].mxu0
    %v3529 = vadd.f32 %v3331, %v3528
    %v3530 = vpop.f32.mrb[0].mxu0
    %3531 = vmatprep.mubr.f32.mxu0 0.0
    %v3532 = vand.u32 %v69, 4294901760
    %v3533 = vsub.f32 %v69, %v3532
    %v3534 = vand.u32 %v3533, 4294901760
    %3535 = vmatmul.mubr.f32.gmra.mrb[0].mxu0 %v3534
    %v3536 = vpop.f32.mrb[0].mxu0
    %v3537 = vadd.f32 %v3338, %v3536
    %v3538 = vpop.f32.mrb[0].mxu0
    %3539 = vmatprep.mubr.f32.mxu0 0.0
    %v3540 = vand.u32 %v70, 4294901760
    %v3541 = vsub.f32 %v70, %v3540
    %v3542 = vand.u32 %v3541, 4294901760
    %3543 = vmatmul.mubr.f32.gmra.mrb[0].mxu0 %v3542
    %v3544 = vpop.f32.mrb[0].mxu0
    %v3545 = vadd.f32 %v3345, %v3544
    %v3546 = vpop.f32.mrb[0].mxu0
    %3547 = vmatprep.mubr.f32.mxu0 0.0
    %v3548 = vand.u32 %v71, 4294901760
    %v3549 = vsub.f32 %v71, %v3548
    %v3550 = vand.u32 %v3549, 4294901760
    %3551 = vmatmul.mubr.f32.gmra.mrb[0].mxu0 %v3550
    %v3552 = vpop.f32.mrb[0].mxu0
    %v3553 = vadd.f32 %v3352, %v3552
    %v3554 = vpop.f32.mrb[0].mxu0
    %3555 = vmatprep.mubr.f32.mxu0 0.0
    %v3556 = vand.u32 %v72, 4294901760
    %v3557 = vsub.f32 %v72, %v3556
    %v3558 = vand.u32 %v3557, 4294901760
    %3559 = vmatmul.mubr.f32.gmra.mrb[0].mxu0 %v3558
    %v3560 = vpop.f32.mrb[0].mxu0
    %v3561 = vadd.f32 %v3359, %v3560
    %v3562 = vpop.f32.mrb[0].mxu0
    %3563 = vmatprep.mubr.f32.mxu0 0.0
    %v3564 = vand.u32 %v73, 4294901760
    %v3565 = vsub.f32 %v73, %v3564
    %v3566 = vand.u32 %v3565, 4294901760
    %3567 = vmatmul.mubr.f32.gmra.mrb[0].mxu0 %v3566
    %v3568 = vpop.f32.mrb[0].mxu0
    %v3569 = vadd.f32 %v3366, %v3568
    %v3570 = vpop.f32.mrb[0].mxu0
    %3571 = vmatprep.mubr.f32.mxu0 0.0
    %v3572 = vand.u32 %v74, 4294901760
    %v3573 = vsub.f32 %v74, %v3572
    %v3574 = vand.u32 %v3573, 4294901760
    %3575 = vmatmul.mubr.f32.gmra.mrb[0].mxu0 %v3574
    %v3576 = vpop.f32.mrb[0].mxu0
    %v3577 = vadd.f32 %v3373, %v3576
    %v3578 = vpop.f32.mrb[0].mxu0
    %3579 = vmatprep.mubr.f32.mxu0 0.0
    %v3580 = vand.u32 %v75, 4294901760
    %v3581 = vsub.f32 %v75, %v3580
    %v3582 = vand.u32 %v3581, 4294901760
    %3583 = vmatmul.mubr.f32.gmra.mrb[0].mxu0 %v3582
    %v3584 = vpop.f32.mrb[0].mxu0
    %v3585 = vadd.f32 %v3380, %v3584
    %v3586 = vpop.f32.mrb[0].mxu0
    %3587 = vmatprep.mubr.f32.mxu0 0.0
    %v3588 = vand.u32 %v76, 4294901760
    %v3589 = vsub.f32 %v76, %v3588
    %v3590 = vand.u32 %v3589, 4294901760
    %3591 = vmatmul.mubr.f32.gmra.mrb[0].mxu0 %v3590
    %v3592 = vpop.f32.mrb[0].mxu0
    %v3593 = vadd.f32 %v3387, %v3592
    %v3594 = vpop.f32.mrb[0].mxu0
    %3595 = vmatprep.mubr.f32.mxu0 0.0
    %v3596 = vand.u32 %v77, 4294901760
    %v3597 = vsub.f32 %v77, %v3596
    %v3598 = vand.u32 %v3597, 4294901760
    %3599 = vmatmul.mubr.f32.gmra.mrb[0].mxu0 %v3598
    %v3600 = vpop.f32.mrb[0].mxu0
    %v3601 = vadd.f32 %v3394, %v3600
    %v3602 = vpop.f32.mrb[0].mxu0
    %3603 = vmatprep.mubr.f32.mxu0 0.0
    %v3604 = vand.u32 %v78, 4294901760
    %v3605 = vsub.f32 %v78, %v3604
    %v3606 = vand.u32 %v3605, 4294901760
    %3607 = vmatmul.mubr.f32.gmra.mrb[0].mxu0 %v3606
    %v3608 = vpop.f32.mrb[0].mxu0
    %v3609 = vadd.f32 %v3401, %v3608
    %v3610 = vpop.f32.mrb[0].mxu0
    %3611 = vmatprep.mubr.f32.mxu0 0.0
    %v3612 = vand.u32 %v79, 4294901760
    %v3613 = vsub.f32 %v79, %v3612
    %v3614 = vand.u32 %v3613, 4294901760
    %3615 = vmatmul.mubr.f32.gmra.mrb[0].mxu0 %v3614
    %v3616 = vpop.f32.mrb[0].mxu0
    %v3617 = vadd.f32 %v3408, %v3616
    %v3618 = vpop.f32.mrb[0].mxu0
    %3619 = vdwg.mxu0
    %3620 = vmatprep.subr.mxu0 0.0
    %v3621 = vand.u32 %v2593, 4294901760
    %v3622 = vsub.f32 %v2593, %v3621
    %v3623 = vand.u32 %v3622, 4294901760
    %3624 = vmatpush1.msra.mxu0 %v3623
    %3625 = vmatprep.subr.mxu0 0.0
    %v3626 = vand.u32 %v2599, 4294901760
    %v3627 = vsub.f32 %v2599, %v3626
    %v3628 = vand.u32 %v3627, 4294901760
    %3629 = vmatpush1.msra.mxu0 %v3628
    %3630 = vmatprep.subr.mxu0 0.0
    %v3631 = vand.u32 %v2605, 4294901760
    %v3632 = vsub.f32 %v2605, %v3631
    %v3633 = vand.u32 %v3632, 4294901760
    %3634 = vmatpush1.msra.mxu0 %v3633
    %3635 = vmatprep.subr.mxu0 0.0
    %v3636 = vand.u32 %v2611, 4294901760
    %v3637 = vsub.f32 %v2611, %v3636
    %v3638 = vand.u32 %v3637, 4294901760
    %3639 = vmatpush1.msra.mxu0 %v3638
    %3640 = vmatprep.subr.mxu0 0.0
    %v3641 = vand.u32 %v2617, 4294901760
    %v3642 = vsub.f32 %v2617, %v3641
    %v3643 = vand.u32 %v3642, 4294901760
    %3644 = vmatpush1.msra.mxu0 %v3643
    %3645 = vmatprep.subr.mxu0 0.0
    %v3646 = vand.u32 %v2623, 4294901760
    %v3647 = vsub.f32 %v2623, %v3646
    %v3648 = vand.u32 %v3647, 4294901760
    %3649 = vmatpush1.msra.mxu0 %v3648
    %3650 = vmatprep.subr.mxu0 0.0
    %v3651 = vand.u32 %v2629, 4294901760
    %v3652 = vsub.f32 %v2629, %v3651
    %v3653 = vand.u32 %v3652, 4294901760
    %3654 = vmatpush1.msra.mxu0 %v3653
    %3655 = vmatprep.subr.mxu0 0.0
    %v3656 = vand.u32 %v2635, 4294901760
    %v3657 = vsub.f32 %v2635, %v3656
    %v3658 = vand.u32 %v3657, 4294901760
    %3659 = vmatpush1.msra.mxu0 %v3658
    %3660 = vmatprep.subr.mxu0 0.0
    %v3661 = vand.u32 %v2641, 4294901760
    %v3662 = vsub.f32 %v2641, %v3661
    %v3663 = vand.u32 %v3662, 4294901760
    %3664 = vmatpush1.msra.mxu0 %v3663
    %3665 = vmatprep.subr.mxu0 0.0
    %v3666 = vand.u32 %v2647, 4294901760
    %v3667 = vsub.f32 %v2647, %v3666
    %v3668 = vand.u32 %v3667, 4294901760
    %3669 = vmatpush1.msra.mxu0 %v3668
    %3670 = vmatprep.subr.mxu0 0.0
    %v3671 = vand.u32 %v2653, 4294901760
    %v3672 = vsub.f32 %v2653, %v3671
    %v3673 = vand.u32 %v3672, 4294901760
    %3674 = vmatpush1.msra.mxu0 %v3673
    %3675 = vmatprep.subr.mxu0 0.0
    %v3676 = vand.u32 %v2659, 4294901760
    %v3677 = vsub.f32 %v2659, %v3676
    %v3678 = vand.u32 %v3677, 4294901760
    %3679 = vmatpush1.msra.mxu0 %v3678
    %3680 = vmatprep.subr.mxu0 0.0
    %v3681 = vand.u32 %v2665, 4294901760
    %v3682 = vsub.f32 %v2665, %v3681
    %v3683 = vand.u32 %v3682, 4294901760
    %3684 = vmatpush1.msra.mxu0 %v3683
    %3685 = vmatprep.subr.mxu0 0.0
    %v3686 = vand.u32 %v2671, 4294901760
    %v3687 = vsub.f32 %v2671, %v3686
    %v3688 = vand.u32 %v3687, 4294901760
    %3689 = vmatpush1.msra.mxu0 %v3688
    %3690 = vmatprep.subr.mxu0 0.0
    %v3691 = vand.u32 %v2677, 4294901760
    %v3692 = vsub.f32 %v2677, %v3691
    %v3693 = vand.u32 %v3692, 4294901760
    %3694 = vmatpush1.msra.mxu0 %v3693
    %3695 = vmatprep.subr.mxu0 0.0
    %v3696 = vand.u32 %v2683, 4294901760
    %v3697 = vsub.f32 %v2683, %v3696
    %v3698 = vand.u32 %v3697, 4294901760
    %3699 = vmatpush1.msra.mxu0 %v3698
    %3700 = vmatprep.subr.mxu0 0.0
    %3701 = vmatpush1.msra.mxu0 0.0
    %3702 = vmatprep.subr.mxu0 0.0
    %3703 = vmatpush1.msra.mxu0 0.0
    %3704 = vmatprep.subr.mxu0 0.0
    %3705 = vmatpush1.msra.mxu0 0.0
    %3706 = vmatprep.subr.mxu0 0.0
    %3707 = vmatpush1.msra.mxu0 0.0
    %3708 = vmatprep.subr.mxu0 0.0
    %3709 = vmatpush1.msra.mxu0 0.0
    %3710 = vmatprep.subr.mxu0 0.0
    %3711 = vmatpush1.msra.mxu0 0.0
    %3712 = vmatprep.subr.mxu0 0.0
    %3713 = vmatpush1.msra.mxu0 0.0
    %3714 = vmatprep.subr.mxu0 0.0
    %3715 = vmatpush1.msra.mxu0 0.0
    %3716 = vmatprep.subr.mxu0 0.0
    %3717 = vmatpush1.msra.mxu0 0.0
    %3718 = vmatprep.subr.mxu0 0.0
    %3719 = vmatpush1.msra.mxu0 0.0
    %3720 = vmatprep.subr.mxu0 0.0
    %3721 = vmatpush1.msra.mxu0 0.0
    %3722 = vmatprep.subr.mxu0 0.0
    %3723 = vmatpush1.msra.mxu0 0.0
    %3724 = vmatprep.subr.mxu0 0.0
    %3725 = vmatpush1.msra.mxu0 0.0
    %3726 = vmatprep.subr.mxu0 0.0
    %3727 = vmatpush1.msra.mxu0 0.0
    %3728 = vmatprep.subr.mxu0 0.0
    %3729 = vmatpush1.msra.mxu0 0.0
    %3730 = vmatprep.subr.mxu0 0.0
    %3731 = vmatpush1.msra.mxu0 0.0
    %3732 = vmatprep.mubr.f32.mxu0 0.0
    %v3733 = vand.u32 %v64, 4294901760
    %3734 = vmatmul.mubr.f32.gmra.mrb[0].mxu0 %v3733
    %v3735 = vpop.f32.mrb[0].mxu0
    %v3736 = vadd.f32 %v3497, %v3735
    %v3737 = vpop.f32.mrb[0].mxu0
    %3738 = vmatprep.mubr.f32.mxu0 0.0
    %v3739 = vand.u32 %v65, 4294901760
    %3740 = vmatmul.mubr.f32.gmra.mrb[0].mxu0 %v3739
    %v3741 = vpop.f32.mrb[0].mxu0
    %v3742 = vadd.f32 %v3505, %v3741
    %v3743 = vpop.f32.mrb[0].mxu0
    %3744 = vmatprep.mubr.f32.mxu0 0.0
    %v3745 = vand.u32 %v66, 4294901760
    %3746 = vmatmul.mubr.f32.gmra.mrb[0].mxu0 %v3745
    %v3747 = vpop.f32.mrb[0].mxu0
    %v3748 = vadd.f32 %v3513, %v3747
    %v3749 = vpop.f32.mrb[0].mxu0
    %3750 = vmatprep.mubr.f32.mxu0 0.0
    %v3751 = vand.u32 %v67, 4294901760
    %3752 = vmatmul.mubr.f32.gmra.mrb[0].mxu0 %v3751
    %v3753 = vpop.f32.mrb[0].mxu0
    %v3754 = vadd.f32 %v3521, %v3753
    %v3755 = vpop.f32.mrb[0].mxu0
    %3756 = vmatprep.mubr.f32.mxu0 0.0
    %v3757 = vand.u32 %v68, 4294901760
    %3758 = vmatmul.mubr.f32.gmra.mrb[0].mxu0 %v3757
    %v3759 = vpop.f32.mrb[0].mxu0
    %v3760 = vadd.f32 %v3529, %v3759
    %v3761 = vpop.f32.mrb[0].mxu0
    %3762 = vmatprep.mubr.f32.mxu0 0.0
    %v3763 = vand.u32 %v69, 4294901760
    %3764 = vmatmul.mubr.f32.gmra.mrb[0].mxu0 %v3763
    %v3765 = vpop.f32.mrb[0].mxu0
    %v3766 = vadd.f32 %v3537, %v3765
    %v3767 = vpop.f32.mrb[0].mxu0
    %3768 = vmatprep.mubr.f32.mxu0 0.0
    %v3769 = vand.u32 %v70, 4294901760
    %3770 = vmatmul.mubr.f32.gmra.mrb[0].mxu0 %v3769
    %v3771 = vpop.f32.mrb[0].mxu0
    %v3772 = vadd.f32 %v3545, %v3771
    %v3773 = vpop.f32.mrb[0].mxu0
    %3774 = vmatprep.mubr.f32.mxu0 0.0
    %v3775 = vand.u32 %v71, 4294901760
    %3776 = vmatmul.mubr.f32.gmra.mrb[0].mxu0 %v3775
    %v3777 = vpop.f32.mrb[0].mxu0
    %v3778 = vadd.f32 %v3553, %v3777
    %v3779 = vpop.f32.mrb[0].mxu0
    %3780 = vmatprep.mubr.f32.mxu0 0.0
    %v3781 = vand.u32 %v72, 4294901760
    %3782 = vmatmul.mubr.f32.gmra.mrb[0].mxu0 %v3781
    %v3783 = vpop.f32.mrb[0].mxu0
    %v3784 = vadd.f32 %v3561, %v3783
    %v3785 = vpop.f32.mrb[0].mxu0
    %3786 = vmatprep.mubr.f32.mxu0 0.0
    %v3787 = vand.u32 %v73, 4294901760
    %3788 = vmatmul.mubr.f32.gmra.mrb[0].mxu0 %v3787
    %v3789 = vpop.f32.mrb[0].mxu0
    %v3790 = vadd.f32 %v3569, %v3789
    %v3791 = vpop.f32.mrb[0].mxu0
    %3792 = vmatprep.mubr.f32.mxu0 0.0
    %v3793 = vand.u32 %v74, 4294901760
    %3794 = vmatmul.mubr.f32.gmra.mrb[0].mxu0 %v3793
    %v3795 = vpop.f32.mrb[0].mxu0
    %v3796 = vadd.f32 %v3577, %v3795
    %v3797 = vpop.f32.mrb[0].mxu0
    %3798 = vmatprep.mubr.f32.mxu0 0.0
    %v3799 = vand.u32 %v75, 4294901760
    %3800 = vmatmul.mubr.f32.gmra.mrb[0].mxu0 %v3799
    %v3801 = vpop.f32.mrb[0].mxu0
    %v3802 = vadd.f32 %v3585, %v3801
    %v3803 = vpop.f32.mrb[0].mxu0
    %3804 = vmatprep.mubr.f32.mxu0 0.0
    %v3805 = vand.u32 %v76, 4294901760
    %3806 = vmatmul.mubr.f32.gmra.mrb[0].mxu0 %v3805
    %v3807 = vpop.f32.mrb[0].mxu0
    %v3808 = vadd.f32 %v3593, %v3807
    %v3809 = vpop.f32.mrb[0].mxu0
    %3810 = vmatprep.mubr.f32.mxu0 0.0
    %v3811 = vand.u32 %v77, 4294901760
    %3812 = vmatmul.mubr.f32.gmra.mrb[0].mxu0 %v3811
    %v3813 = vpop.f32.mrb[0].mxu0
    %v3814 = vadd.f32 %v3601, %v3813
    %v3815 = vpop.f32.mrb[0].mxu0
    %3816 = vmatprep.mubr.f32.mxu0 0.0
    %v3817 = vand.u32 %v78, 4294901760
    %3818 = vmatmul.mubr.f32.gmra.mrb[0].mxu0 %v3817
    %v3819 = vpop.f32.mrb[0].mxu0
    %v3820 = vadd.f32 %v3609, %v3819
    %v3821 = vpop.f32.mrb[0].mxu0
    %3822 = vmatprep.mubr.f32.mxu0 0.0
    %v3823 = vand.u32 %v79, 4294901760
    %3824 = vmatmul.mubr.f32.gmra.mrb[0].mxu0 %v3823
    %v3825 = vpop.f32.mrb[0].mxu0
    %v3826 = vadd.f32 %v3617, %v3825
    %v3827 = vpop.f32.mrb[0].mxu0
    %3828 = vdwg.mxu0
    %3829 = vmatprep.subr.mxu0 0.0
    %v3830 = vand.u32 %v2593, 4294901760
    %3831 = vmatpush1.msra.mxu0 %v3830
    %3832 = vmatprep.subr.mxu0 0.0
    %v3833 = vand.u32 %v2599, 4294901760
    %3834 = vmatpush1.msra.mxu0 %v3833
    %3835 = vmatprep.subr.mxu0 0.0
    %v3836 = vand.u32 %v2605, 4294901760
    %3837 = vmatpush1.msra.mxu0 %v3836
    %3838 = vmatprep.subr.mxu0 0.0
    %v3839 = vand.u32 %v2611, 4294901760
    %3840 = vmatpush1.msra.mxu0 %v3839
    %3841 = vmatprep.subr.mxu0 0.0
    %v3842 = vand.u32 %v2617, 4294901760
    %3843 = vmatpush1.msra.mxu0 %v3842
    %3844 = vmatprep.subr.mxu0 0.0
    %v3845 = vand.u32 %v2623, 4294901760
    %3846 = vmatpush1.msra.mxu0 %v3845
    %3847 = vmatprep.subr.mxu0 0.0
    %v3848 = vand.u32 %v2629, 4294901760
    %3849 = vmatpush1.msra.mxu0 %v3848
    %3850 = vmatprep.subr.mxu0 0.0
    %v3851 = vand.u32 %v2635, 4294901760
    %3852 = vmatpush1.msra.mxu0 %v3851
    %3853 = vmatprep.subr.mxu0 0.0
    %v3854 = vand.u32 %v2641, 4294901760
    %3855 = vmatpush1.msra.mxu0 %v3854
    %3856 = vmatprep.subr.mxu0 0.0
    %v3857 = vand.u32 %v2647, 4294901760
    %3858 = vmatpush1.msra.mxu0 %v3857
    %3859 = vmatprep.subr.mxu0 0.0
    %v3860 = vand.u32 %v2653, 4294901760
    %3861 = vmatpush1.msra.mxu0 %v3860
    %3862 = vmatprep.subr.mxu0 0.0
    %v3863 = vand.u32 %v2659, 4294901760
    %3864 = vmatpush1.msra.mxu0 %v3863
    %3865 = vmatprep.subr.mxu0 0.0
    %v3866 = vand.u32 %v2665, 4294901760
    %3867 = vmatpush1.msra.mxu0 %v3866
    %3868 = vmatprep.subr.mxu0 0.0
    %v3869 = vand.u32 %v2671, 4294901760
    %3870 = vmatpush1.msra.mxu0 %v3869
    %3871 = vmatprep.subr.mxu0 0.0
    %v3872 = vand.u32 %v2677, 4294901760
    %3873 = vmatpush1.msra.mxu0 %v3872
    %3874 = vmatprep.subr.mxu0 0.0
    %v3875 = vand.u32 %v2683, 4294901760
    %3876 = vmatpush1.msra.mxu0 %v3875
    %3877 = vmatprep.subr.mxu0 0.0
    %3878 = vmatpush1.msra.mxu0 0.0
    %3879 = vmatprep.subr.mxu0 0.0
    %3880 = vmatpush1.msra.mxu0 0.0
    %3881 = vmatprep.subr.mxu0 0.0
    %3882 = vmatpush1.msra.mxu0 0.0
    %3883 = vmatprep.subr.mxu0 0.0
    %3884 = vmatpush1.msra.mxu0 0.0
    %3885 = vmatprep.subr.mxu0 0.0
    %3886 = vmatpush1.msra.mxu0 0.0
    %3887 = vmatprep.subr.mxu0 0.0
    %3888 = vmatpush1.msra.mxu0 0.0
    %3889 = vmatprep.subr.mxu0 0.0
    %3890 = vmatpush1.msra.mxu0 0.0
    %3891 = vmatprep.subr.mxu0 0.0
    %3892 = vmatpush1.msra.mxu0 0.0
    %3893 = vmatprep.subr.mxu0 0.0
    %3894 = vmatpush1.msra.mxu0 0.0
    %3895 = vmatprep.subr.mxu0 0.0
    %3896 = vmatpush1.msra.mxu0 0.0
    %3897 = vmatprep.subr.mxu0 0.0
    %3898 = vmatpush1.msra.mxu0 0.0
    %3899 = vmatprep.subr.mxu0 0.0
    %3900 = vmatpush1.msra.mxu0 0.0
    %3901 = vmatprep.subr.mxu0 0.0
    %3902 = vmatpush1.msra.mxu0 0.0
    %3903 = vmatprep.subr.mxu0 0.0
    %3904 = vmatpush1.msra.mxu0 0.0
    %3905 = vmatprep.subr.mxu0 0.0
    %3906 = vmatpush1.msra.mxu0 0.0
    %3907 = vmatprep.subr.mxu0 0.0
    %3908 = vmatpush1.msra.mxu0 0.0
    %3909 = vmatprep.mubr.f32.mxu0 0.0
    %v3910 = vand.u32 %v64, 4294901760
    %3911 = vmatmul.mubr.f32.gmra.mrb[0].mxu0 %v3910
    %v3912 = vpop.f32.mrb[0].mxu0
    %v3913 = vadd.f32 %v3736, %v3912
    %v3914 = vpop.f32.mrb[0].mxu0
    %3915 = vmatprep.mubr.f32.mxu0 0.0
    %v3916 = vand.u32 %v65, 4294901760
    %3917 = vmatmul.mubr.f32.gmra.mrb[0].mxu0 %v3916
    %v3918 = vpop.f32.mrb[0].mxu0
    %v3919 = vadd.f32 %v3742, %v3918
    %v3920 = vpop.f32.mrb[0].mxu0
    %3921 = vmatprep.mubr.f32.mxu0 0.0
    %v3922 = vand.u32 %v66, 4294901760
    %3923 = vmatmul.mubr.f32.gmra.mrb[0].mxu0 %v3922
    %v3924 = vpop.f32.mrb[0].mxu0
    %v3925 = vadd.f32 %v3748, %v3924
    %v3926 = vpop.f32.mrb[0].mxu0
    %3927 = vmatprep.mubr.f32.mxu0 0.0
    %v3928 = vand.u32 %v67, 4294901760
    %3929 = vmatmul.mubr.f32.gmra.mrb[0].mxu0 %v3928
    %v3930 = vpop.f32.mrb[0].mxu0
    %v3931 = vadd.f32 %v3754, %v3930
    %v3932 = vpop.f32.mrb[0].mxu0
    %3933 = vmatprep.mubr.f32.mxu0 0.0
    %v3934 = vand.u32 %v68, 4294901760
    %3935 = vmatmul.mubr.f32.gmra.mrb[0].mxu0 %v3934
    %v3936 = vpop.f32.mrb[0].mxu0
    %v3937 = vadd.f32 %v3760, %v3936
    %v3938 = vpop.f32.mrb[0].mxu0
    %3939 = vmatprep.mubr.f32.mxu0 0.0
    %v3940 = vand.u32 %v69, 4294901760
    %3941 = vmatmul.mubr.f32.gmra.mrb[0].mxu0 %v3940
    %v3942 = vpop.f32.mrb[0].mxu0
    %v3943 = vadd.f32 %v3766, %v3942
    %v3944 = vpop.f32.mrb[0].mxu0
    %3945 = vmatprep.mubr.f32.mxu0 0.0
    %v3946 = vand.u32 %v70, 4294901760
    %3947 = vmatmul.mubr.f32.gmra.mrb[0].mxu0 %v3946
    %v3948 = vpop.f32.mrb[0].mxu0
    %v3949 = vadd.f32 %v3772, %v3948
    %v3950 = vpop.f32.mrb[0].mxu0
    %3951 = vmatprep.mubr.f32.mxu0 0.0
    %v3952 = vand.u32 %v71, 4294901760
    %3953 = vmatmul.mubr.f32.gmra.mrb[0].mxu0 %v3952
    %v3954 = vpop.f32.mrb[0].mxu0
    %v3955 = vadd.f32 %v3778, %v3954
    %v3956 = vpop.f32.mrb[0].mxu0
    %3957 = vmatprep.mubr.f32.mxu0 0.0
    %v3958 = vand.u32 %v72, 4294901760
    %3959 = vmatmul.mubr.f32.gmra.mrb[0].mxu0 %v3958
    %v3960 = vpop.f32.mrb[0].mxu0
    %v3961 = vadd.f32 %v3784, %v3960
    %v3962 = vpop.f32.mrb[0].mxu0
    %3963 = vmatprep.mubr.f32.mxu0 0.0
    %v3964 = vand.u32 %v73, 4294901760
    %3965 = vmatmul.mubr.f32.gmra.mrb[0].mxu0 %v3964
    %v3966 = vpop.f32.mrb[0].mxu0
    %v3967 = vadd.f32 %v3790, %v3966
    %v3968 = vpop.f32.mrb[0].mxu0
    %3969 = vmatprep.mubr.f32.mxu0 0.0
    %v3970 = vand.u32 %v74, 4294901760
    %3971 = vmatmul.mubr.f32.gmra.mrb[0].mxu0 %v3970
    %v3972 = vpop.f32.mrb[0].mxu0
    %v3973 = vadd.f32 %v3796, %v3972
    %v3974 = vpop.f32.mrb[0].mxu0
    %3975 = vmatprep.mubr.f32.mxu0 0.0
    %v3976 = vand.u32 %v75, 4294901760
    %3977 = vmatmul.mubr.f32.gmra.mrb[0].mxu0 %v3976
    %v3978 = vpop.f32.mrb[0].mxu0
    %v3979 = vadd.f32 %v3802, %v3978
    %v3980 = vpop.f32.mrb[0].mxu0
    %3981 = vmatprep.mubr.f32.mxu0 0.0
    %v3982 = vand.u32 %v76, 4294901760
    %3983 = vmatmul.mubr.f32.gmra.mrb[0].mxu0 %v3982
    %v3984 = vpop.f32.mrb[0].mxu0
    %v3985 = vadd.f32 %v3808, %v3984
    %v3986 = vpop.f32.mrb[0].mxu0
    %3987 = vmatprep.mubr.f32.mxu0 0.0
    %v3988 = vand.u32 %v77, 4294901760
    %3989 = vmatmul.mubr.f32.gmra.mrb[0].mxu0 %v3988
    %v3990 = vpop.f32.mrb[0].mxu0
    %v3991 = vadd.f32 %v3814, %v3990
    %v3992 = vpop.f32.mrb[0].mxu0
    %3993 = vmatprep.mubr.f32.mxu0 0.0
    %v3994 = vand.u32 %v78, 4294901760
    %3995 = vmatmul.mubr.f32.gmra.mrb[0].mxu0 %v3994
    %v3996 = vpop.f32.mrb[0].mxu0
    %v3997 = vadd.f32 %v3820, %v3996
    %v3998 = vpop.f32.mrb[0].mxu0
    %3999 = vmatprep.mubr.f32.mxu0 0.0
    %v4000 = vand.u32 %v79, 4294901760
    %4001 = vmatmul.mubr.f32.gmra.mrb[0].mxu0 %v4000
    %v4002 = vpop.f32.mrb[0].mxu0
    %v4003 = vadd.f32 %v3826, %v4002
    %v4004 = vpop.f32.mrb[0].mxu0
    %4005 = vdwg.mxu0
    %s4006 = sld [smem:[#allocation2 + $0x3]]
    %v4007 = vstv %s4006
    %v4008 = vmul.f32 %v3913, %v4007
    %v4009 = vmul.f32 %v3919, %v4007
    %v4010 = vmul.f32 %v3925, %v4007
    %v4011 = vmul.f32 %v3931, %v4007
    %v4012 = vmul.f32 %v3937, %v4007
    %v4013 = vmul.f32 %v3943, %v4007
    %v4014 = vmul.f32 %v3949, %v4007
    %v4015 = vmul.f32 %v3955, %v4007
    %v4016 = vmul.f32 %v3961, %v4007
    %v4017 = vmul.f32 %v3967, %v4007
    %v4018 = vmul.f32 %v3973, %v4007
    %v4019 = vmul.f32 %v3979, %v4007
    %v4020 = vmul.f32 %v3985, %v4007
    %v4021 = vmul.f32 %v3991, %v4007
    %v4022 = vmul.f32 %v3997, %v4007
    %v4023 = vmul.f32 %v4003, %v4007
    %v4024 = vadd.f32 %v2704, %v4008
    %v4025 = vadd.f32 %v2705, %v4009
    %v4026 = vadd.f32 %v2706, %v4010
    %v4027 = vadd.f32 %v2707, %v4011
    %v4028 = vadd.f32 %v2708, %v4012
    %v4029 = vadd.f32 %v2709, %v4013
    %v4030 = vadd.f32 %v2710, %v4014
    %v4031 = vadd.f32 %v2711, %v4015
    %v4032 = vadd.f32 %v2712, %v4016
    %v4033 = vadd.f32 %v2713, %v4017
    %v4034 = vadd.f32 %v2714, %v4018
    %v4035 = vadd.f32 %v2715, %v4019
    %v4036 = vadd.f32 %v2716, %v4020
    %v4037 = vadd.f32 %v2717, %v4021
    %v4038 = vadd.f32 %v2718, %v4022
    %v4039 = vadd.f32 %v2719, %v4023
    %vm4040 = vcmask 523264
    %v4042 = vsel %vm4040, %v4024, 0
    %v4045 = vsel %vm4040, %v4025, 0
    %v4048 = vsel %vm4040, %v4026, 0
    %v4051 = vsel %vm4040, %v4027, 0
    %v4054 = vsel %vm4040, %v4028, 0
    %v4057 = vsel %vm4040, %v4029, 0
    %v4060 = vsel %vm4040, %v4030, 0
    %v4063 = vsel %vm4040, %v4031, 0
    %v4066 = vsel %vm4040, %v4032, 0
    %v4069 = vsel %vm4040, %v4033, 0
    %v4072 = vsel %vm4040, %v4034, 0
    %v4075 = vsel %vm4040, %v4035, 0
    %v4078 = vsel %vm4040, %v4036, 0
    %v4081 = vsel %vm4040, %v4037, 0
    %v4084 = vsel %vm4040, %v4038, 0
    %v4087 = vsel %vm4040, %v4039, 0
    %4089 = vmatprep.subr.mxu0 0.0
    %v4090 = vand.u32 %v4042, 4294901760
    %4091 = vmatpush1.xpose.msra.mxu0 %v4090
    %4092 = vmatprep.subr.mxu0 0.0
    %v4093 = vand.u32 %v4045, 4294901760
    %4094 = vmatpush1.xpose.msra.mxu0 %v4093
    %4095 = vmatprep.subr.mxu0 0.0
    %v4096 = vand.u32 %v4048, 4294901760
    %4097 = vmatpush1.xpose.msra.mxu0 %v4096
    %4098 = vmatprep.subr.mxu0 0.0
    %v4099 = vand.u32 %v4051, 4294901760
    %4100 = vmatpush1.xpose.msra.mxu0 %v4099
    %4101 = vmatprep.subr.mxu0 0.0
    %v4102 = vand.u32 %v4054, 4294901760
    %4103 = vmatpush1.xpose.msra.mxu0 %v4102
    %4104 = vmatprep.subr.mxu0 0.0
    %v4105 = vand.u32 %v4057, 4294901760
    %4106 = vmatpush1.xpose.msra.mxu0 %v4105
    %4107 = vmatprep.subr.mxu0 0.0
    %v4108 = vand.u32 %v4060, 4294901760
    %4109 = vmatpush1.xpose.msra.mxu0 %v4108
    %4110 = vmatprep.subr.mxu0 0.0
    %v4111 = vand.u32 %v4063, 4294901760
    %4112 = vmatpush1.xpose.msra.mxu0 %v4111
    %4113 = vmatprep.subr.mxu0 0.0
    %v4114 = vand.u32 %v4066, 4294901760
    %4115 = vmatpush1.xpose.msra.mxu0 %v4114
    %4116 = vmatprep.subr.mxu0 0.0
    %v4117 = vand.u32 %v4069, 4294901760
    %4118 = vmatpush1.xpose.msra.mxu0 %v4117
    %4119 = vmatprep.subr.mxu0 0.0
    %v4120 = vand.u32 %v4072, 4294901760
    %4121 = vmatpush1.xpose.msra.mxu0 %v4120
    %4122 = vmatprep.subr.mxu0 0.0
    %v4123 = vand.u32 %v4075, 4294901760
    %4124 = vmatpush1.xpose.msra.mxu0 %v4123
    %4125 = vmatprep.subr.mxu0 0.0
    %v4126 = vand.u32 %v4078, 4294901760
    %4127 = vmatpush1.xpose.msra.mxu0 %v4126
    %4128 = vmatprep.subr.mxu0 0.0
    %v4129 = vand.u32 %v4081, 4294901760
    %4130 = vmatpush1.xpose.msra.mxu0 %v4129
    %4131 = vmatprep.subr.mxu0 0.0
    %v4132 = vand.u32 %v4084, 4294901760
    %4133 = vmatpush1.xpose.msra.mxu0 %v4132
    %4134 = vmatprep.subr.mxu0 0.0
    %v4135 = vand.u32 %v4087, 4294901760
    %4136 = vmatpush1.xpose.msra.mxu0 %v4135
    %4137 = vmatprep.subr.mxu0 0.0
    %4138 = vmatpush1.xpose.msra.mxu0 0.0
    %4139 = vmatprep.subr.mxu0 0.0
    %4140 = vmatpush1.xpose.msra.mxu0 0.0
    %4141 = vmatprep.subr.mxu0 0.0
    %4142 = vmatpush1.xpose.msra.mxu0 0.0
    %4143 = vmatprep.subr.mxu0 0.0
    %4144 = vmatpush1.xpose.msra.mxu0 0.0
    %4145 = vmatprep.subr.mxu0 0.0
    %4146 = vmatpush1.xpose.msra.mxu0 0.0
    %4147 = vmatprep.subr.mxu0 0.0
    %4148 = vmatpush1.xpose.msra.mxu0 0.0
    %4149 = vmatprep.subr.mxu0 0.0
    %4150 = vmatpush1.xpose.msra.mxu0 0.0
    %4151 = vmatprep.subr.mxu0 0.0
    %4152 = vmatpush1.xpose.msra.mxu0 0.0
    %4153 = vmatprep.subr.mxu0 0.0
    %4154 = vmatpush1.xpose.msra.mxu0 0.0
    %4155 = vmatprep.subr.mxu0 0.0
    %4156 = vmatpush1.xpose.msra.mxu0 0.0
    %4157 = vmatprep.subr.mxu0 0.0
    %4158 = vmatpush1.xpose.msra.mxu0 0.0
    %4159 = vmatprep.subr.mxu0 0.0
    %4160 = vmatpush1.xpose.msra.mxu0 0.0
    %4161 = vmatprep.subr.mxu0 0.0
    %4162 = vmatpush1.xpose.msra.mxu0 0.0
    %4163 = vmatprep.subr.mxu0 0.0
    %4164 = vmatpush1.xpose.msra.mxu0 0.0
    %4165 = vmatprep.subr.mxu0 0.0
    %4166 = vmatpush1.xpose.msra.mxu0 0.0
    %4167 = vmatprep.subr.mxu0 0.0
    %4168 = vmatpush1.xpose.msra.mxu0 0.0
    %4169 = vmatprep.mubr.f32.mxu0 0.0
    %v4170 = vand.u32 %v4042, 4294901760
    %v4171 = vsub.f32 %v4042, %v4170
    %v4172 = vand.u32 %v4171, 4294901760
    %v4173 = vsub.f32 %v4171, %v4172
    %v4174 = vand.u32 %v4173, 4294901760
    %4175 = vmatmul.mubr.f32.gmra.mrb[0].mxu0 %v4174
    %v4176 = vpop.f32.mrb[0].mxu0
    %v4177 = vadd.f32 0.0, %v4176
    %v4178 = vpop.f32.mrb[0].mxu0
    %4179 = vmatprep.mubr.f32.mxu0 0.0
    %v4180 = vand.u32 %v4045, 4294901760
    %v4181 = vsub.f32 %v4045, %v4180
    %v4182 = vand.u32 %v4181, 4294901760
    %v4183 = vsub.f32 %v4181, %v4182
    %v4184 = vand.u32 %v4183, 4294901760
    %4185 = vmatmul.mubr.f32.gmra.mrb[0].mxu0 %v4184
    %v4186 = vpop.f32.mrb[0].mxu0
    %v4187 = vadd.f32 0.0, %v4186
    %v4188 = vpop.f32.mrb[0].mxu0
    %4189 = vmatprep.mubr.f32.mxu0 0.0
    %v4190 = vand.u32 %v4048, 4294901760
    %v4191 = vsub.f32 %v4048, %v4190
    %v4192 = vand.u32 %v4191, 4294901760
    %v4193 = vsub.f32 %v4191, %v4192
    %v4194 = vand.u32 %v4193, 4294901760
    %4195 = vmatmul.mubr.f32.gmra.mrb[0].mxu0 %v4194
    %v4196 = vpop.f32.mrb[0].mxu0
    %v4197 = vadd.f32 0.0, %v4196
    %v4198 = vpop.f32.mrb[0].mxu0
    %4199 = vmatprep.mubr.f32.mxu0 0.0
    %v4200 = vand.u32 %v4051, 4294901760
    %v4201 = vsub.f32 %v4051, %v4200
    %v4202 = vand.u32 %v4201, 4294901760
    %v4203 = vsub.f32 %v4201, %v4202
    %v4204 = vand.u32 %v4203, 4294901760
    %4205 = vmatmul.mubr.f32.gmra.mrb[0].mxu0 %v4204
    %v4206 = vpop.f32.mrb[0].mxu0
    %v4207 = vadd.f32 0.0, %v4206
    %v4208 = vpop.f32.mrb[0].mxu0
    %4209 = vmatprep.mubr.f32.mxu0 0.0
    %v4210 = vand.u32 %v4054, 4294901760
    %v4211 = vsub.f32 %v4054, %v4210
    %v4212 = vand.u32 %v4211, 4294901760
    %v4213 = vsub.f32 %v4211, %v4212
    %v4214 = vand.u32 %v4213, 4294901760
    %4215 = vmatmul.mubr.f32.gmra.mrb[0].mxu0 %v4214
    %v4216 = vpop.f32.mrb[0].mxu0
    %v4217 = vadd.f32 0.0, %v4216
    %v4218 = vpop.f32.mrb[0].mxu0
    %4219 = vmatprep.mubr.f32.mxu0 0.0
    %v4220 = vand.u32 %v4057, 4294901760
    %v4221 = vsub.f32 %v4057, %v4220
    %v4222 = vand.u32 %v4221, 4294901760
    %v4223 = vsub.f32 %v4221, %v4222
    %v4224 = vand.u32 %v4223, 4294901760
    %4225 = vmatmul.mubr.f32.gmra.mrb[0].mxu0 %v4224
    %v4226 = vpop.f32.mrb[0].mxu0
    %v4227 = vadd.f32 0.0, %v4226
    %v4228 = vpop.f32.mrb[0].mxu0
    %4229 = vmatprep.mubr.f32.mxu0 0.0
    %v4230 = vand.u32 %v4060, 4294901760
    %v4231 = vsub.f32 %v4060, %v4230
    %v4232 = vand.u32 %v4231, 4294901760
    %v4233 = vsub.f32 %v4231, %v4232
    %v4234 = vand.u32 %v4233, 4294901760
    %4235 = vmatmul.mubr.f32.gmra.mrb[0].mxu0 %v4234
    %v4236 = vpop.f32.mrb[0].mxu0
    %v4237 = vadd.f32 0.0, %v4236
    %v4238 = vpop.f32.mrb[0].mxu0
    %4239 = vmatprep.mubr.f32.mxu0 0.0
    %v4240 = vand.u32 %v4063, 4294901760
    %v4241 = vsub.f32 %v4063, %v4240
    %v4242 = vand.u32 %v4241, 4294901760
    %v4243 = vsub.f32 %v4241, %v4242
    %v4244 = vand.u32 %v4243, 4294901760
    %4245 = vmatmul.mubr.f32.gmra.mrb[0].mxu0 %v4244
    %v4246 = vpop.f32.mrb[0].mxu0
    %v4247 = vadd.f32 0.0, %v4246
    %v4248 = vpop.f32.mrb[0].mxu0
    %4249 = vmatprep.mubr.f32.mxu0 0.0
    %v4250 = vand.u32 %v4066, 4294901760
    %v4251 = vsub.f32 %v4066, %v4250
    %v4252 = vand.u32 %v4251, 4294901760
    %v4253 = vsub.f32 %v4251, %v4252
    %v4254 = vand.u32 %v4253, 4294901760
    %4255 = vmatmul.mubr.f32.gmra.mrb[0].mxu0 %v4254
    %v4256 = vpop.f32.mrb[0].mxu0
    %v4257 = vadd.f32 0.0, %v4256
    %v4258 = vpop.f32.mrb[0].mxu0
    %4259 = vmatprep.mubr.f32.mxu0 0.0
    %v4260 = vand.u32 %v4069, 4294901760
    %v4261 = vsub.f32 %v4069, %v4260
    %v4262 = vand.u32 %v4261, 4294901760
    %v4263 = vsub.f32 %v4261, %v4262
    %v4264 = vand.u32 %v4263, 4294901760
    %4265 = vmatmul.mubr.f32.gmra.mrb[0].mxu0 %v4264
    %v4266 = vpop.f32.mrb[0].mxu0
    %v4267 = vadd.f32 0.0, %v4266
    %v4268 = vpop.f32.mrb[0].mxu0
    %4269 = vmatprep.mubr.f32.mxu0 0.0
    %v4270 = vand.u32 %v4072, 4294901760
    %v4271 = vsub.f32 %v4072, %v4270
    %v4272 = vand.u32 %v4271, 4294901760
    %v4273 = vsub.f32 %v4271, %v4272
    %v4274 = vand.u32 %v4273, 4294901760
    %4275 = vmatmul.mubr.f32.gmra.mrb[0].mxu0 %v4274
    %v4276 = vpop.f32.mrb[0].mxu0
    %v4277 = vadd.f32 0.0, %v4276
    %v4278 = vpop.f32.mrb[0].mxu0
    %4279 = vmatprep.mubr.f32.mxu0 0.0
    %v4280 = vand.u32 %v4075, 4294901760
    %v4281 = vsub.f32 %v4075, %v4280
    %v4282 = vand.u32 %v4281, 4294901760
    %v4283 = vsub.f32 %v4281, %v4282
    %v4284 = vand.u32 %v4283, 4294901760
    %4285 = vmatmul.mubr.f32.gmra.mrb[0].mxu0 %v4284
    %v4286 = vpop.f32.mrb[0].mxu0
    %v4287 = vadd.f32 0.0, %v4286
    %v4288 = vpop.f32.mrb[0].mxu0
    %4289 = vmatprep.mubr.f32.mxu0 0.0
    %v4290 = vand.u32 %v4078, 4294901760
    %v4291 = vsub.f32 %v4078, %v4290
    %v4292 = vand.u32 %v4291, 4294901760
    %v4293 = vsub.f32 %v4291, %v4292
    %v4294 = vand.u32 %v4293, 4294901760
    %4295 = vmatmul.mubr.f32.gmra.mrb[0].mxu0 %v4294
    %v4296 = vpop.f32.mrb[0].mxu0
    %v4297 = vadd.f32 0.0, %v4296
    %v4298 = vpop.f32.mrb[0].mxu0
    %4299 = vmatprep.mubr.f32.mxu0 0.0
    %v4300 = vand.u32 %v4081, 4294901760
    %v4301 = vsub.f32 %v4081, %v4300
    %v4302 = vand.u32 %v4301, 4294901760
    %v4303 = vsub.f32 %v4301, %v4302
    %v4304 = vand.u32 %v4303, 4294901760
    %4305 = vmatmul.mubr.f32.gmra.mrb[0].mxu0 %v4304
    %v4306 = vpop.f32.mrb[0].mxu0
    %v4307 = vadd.f32 0.0, %v4306
    %v4308 = vpop.f32.mrb[0].mxu0
    %4309 = vmatprep.mubr.f32.mxu0 0.0
    %v4310 = vand.u32 %v4084, 4294901760
    %v4311 = vsub.f32 %v4084, %v4310
    %v4312 = vand.u32 %v4311, 4294901760
    %v4313 = vsub.f32 %v4311, %v4312
    %v4314 = vand.u32 %v4313, 4294901760
    %4315 = vmatmul.mubr.f32.gmra.mrb[0].mxu0 %v4314
    %v4316 = vpop.f32.mrb[0].mxu0
    %v4317 = vadd.f32 0.0, %v4316
    %v4318 = vpop.f32.mrb[0].mxu0
    %4319 = vmatprep.mubr.f32.mxu0 0.0
    %v4320 = vand.u32 %v4087, 4294901760
    %v4321 = vsub.f32 %v4087, %v4320
    %v4322 = vand.u32 %v4321, 4294901760
    %v4323 = vsub.f32 %v4321, %v4322
    %v4324 = vand.u32 %v4323, 4294901760
    %4325 = vmatmul.mubr.f32.gmra.mrb[0].mxu0 %v4324
    %v4326 = vpop.f32.mrb[0].mxu0
    %v4327 = vadd.f32 0.0, %v4326
    %v4328 = vpop.f32.mrb[0].mxu0
    %4329 = vdwg.mxu0
    %4330 = vmatprep.subr.mxu0 0.0
    %v4331 = vand.u32 %v4042, 4294901760
    %v4332 = vsub.f32 %v4042, %v4331
    %v4333 = vand.u32 %v4332, 4294901760
    %v4334 = vsub.f32 %v4332, %v4333
    %v4335 = vand.u32 %v4334, 4294901760
    %4336 = vmatpush1.xpose.msra.mxu0 %v4335
    %4337 = vmatprep.subr.mxu0 0.0
    %v4338 = vand.u32 %v4045, 4294901760
    %v4339 = vsub.f32 %v4045, %v4338
    %v4340 = vand.u32 %v4339, 4294901760
    %v4341 = vsub.f32 %v4339, %v4340
    %v4342 = vand.u32 %v4341, 4294901760
    %4343 = vmatpush1.xpose.msra.mxu0 %v4342
    %4344 = vmatprep.subr.mxu0 0.0
    %v4345 = vand.u32 %v4048, 4294901760
    %v4346 = vsub.f32 %v4048, %v4345
    %v4347 = vand.u32 %v4346, 4294901760
    %v4348 = vsub.f32 %v4346, %v4347
    %v4349 = vand.u32 %v4348, 4294901760
    %4350 = vmatpush1.xpose.msra.mxu0 %v4349
    %4351 = vmatprep.subr.mxu0 0.0
    %v4352 = vand.u32 %v4051, 4294901760
    %v4353 = vsub.f32 %v4051, %v4352
    %v4354 = vand.u32 %v4353, 4294901760
    %v4355 = vsub.f32 %v4353, %v4354
    %v4356 = vand.u32 %v4355, 4294901760
    %4357 = vmatpush1.xpose.msra.mxu0 %v4356
    %4358 = vmatprep.subr.mxu0 0.0
    %v4359 = vand.u32 %v4054, 4294901760
    %v4360 = vsub.f32 %v4054, %v4359
    %v4361 = vand.u32 %v4360, 4294901760
    %v4362 = vsub.f32 %v4360, %v4361
    %v4363 = vand.u32 %v4362, 4294901760
    %4364 = vmatpush1.xpose.msra.mxu0 %v4363
    %4365 = vmatprep.subr.mxu0 0.0
    %v4366 = vand.u32 %v4057, 4294901760
    %v4367 = vsub.f32 %v4057, %v4366
    %v4368 = vand.u32 %v4367, 4294901760
    %v4369 = vsub.f32 %v4367, %v4368
    %v4370 = vand.u32 %v4369, 4294901760
    %4371 = vmatpush1.xpose.msra.mxu0 %v4370
    %4372 = vmatprep.subr.mxu0 0.0
    %v4373 = vand.u32 %v4060, 4294901760
    %v4374 = vsub.f32 %v4060, %v4373
    %v4375 = vand.u32 %v4374, 4294901760
    %v4376 = vsub.f32 %v4374, %v4375
    %v4377 = vand.u32 %v4376, 4294901760
    %4378 = vmatpush1.xpose.msra.mxu0 %v4377
    %4379 = vmatprep.subr.mxu0 0.0
    %v4380 = vand.u32 %v4063, 4294901760
    %v4381 = vsub.f32 %v4063, %v4380
    %v4382 = vand.u32 %v4381, 4294901760
    %v4383 = vsub.f32 %v4381, %v4382
    %v4384 = vand.u32 %v4383, 4294901760
    %4385 = vmatpush1.xpose.msra.mxu0 %v4384
    %4386 = vmatprep.subr.mxu0 0.0
    %v4387 = vand.u32 %v4066, 4294901760
    %v4388 = vsub.f32 %v4066, %v4387
    %v4389 = vand.u32 %v4388, 4294901760
    %v4390 = vsub.f32 %v4388, %v4389
    %v4391 = vand.u32 %v4390, 4294901760
    %4392 = vmatpush1.xpose.msra.mxu0 %v4391
    %4393 = vmatprep.subr.mxu0 0.0
    %v4394 = vand.u32 %v4069, 4294901760
    %v4395 = vsub.f32 %v4069, %v4394
    %v4396 = vand.u32 %v4395, 4294901760
    %v4397 = vsub.f32 %v4395, %v4396
    %v4398 = vand.u32 %v4397, 4294901760
    %4399 = vmatpush1.xpose.msra.mxu0 %v4398
    %4400 = vmatprep.subr.mxu0 0.0
    %v4401 = vand.u32 %v4072, 4294901760
    %v4402 = vsub.f32 %v4072, %v4401
    %v4403 = vand.u32 %v4402, 4294901760
    %v4404 = vsub.f32 %v4402, %v4403
    %v4405 = vand.u32 %v4404, 4294901760
    %4406 = vmatpush1.xpose.msra.mxu0 %v4405
    %4407 = vmatprep.subr.mxu0 0.0
    %v4408 = vand.u32 %v4075, 4294901760
    %v4409 = vsub.f32 %v4075, %v4408
    %v4410 = vand.u32 %v4409, 4294901760
    %v4411 = vsub.f32 %v4409, %v4410
    %v4412 = vand.u32 %v4411, 4294901760
    %4413 = vmatpush1.xpose.msra.mxu0 %v4412
    %4414 = vmatprep.subr.mxu0 0.0
    %v4415 = vand.u32 %v4078, 4294901760
    %v4416 = vsub.f32 %v4078, %v4415
    %v4417 = vand.u32 %v4416, 4294901760
    %v4418 = vsub.f32 %v4416, %v4417
    %v4419 = vand.u32 %v4418, 4294901760
    %4420 = vmatpush1.xpose.msra.mxu0 %v4419
    %4421 = vmatprep.subr.mxu0 0.0
    %v4422 = vand.u32 %v4081, 4294901760
    %v4423 = vsub.f32 %v4081, %v4422
    %v4424 = vand.u32 %v4423, 4294901760
    %v4425 = vsub.f32 %v4423, %v4424
    %v4426 = vand.u32 %v4425, 4294901760
    %4427 = vmatpush1.xpose.msra.mxu0 %v4426
    %4428 = vmatprep.subr.mxu0 0.0
    %v4429 = vand.u32 %v4084, 4294901760
    %v4430 = vsub.f32 %v4084, %v4429
    %v4431 = vand.u32 %v4430, 4294901760
    %v4432 = vsub.f32 %v4430, %v4431
    %v4433 = vand.u32 %v4432, 4294901760
    %4434 = vmatpush1.xpose.msra.mxu0 %v4433
    %4435 = vmatprep.subr.mxu0 0.0
    %v4436 = vand.u32 %v4087, 4294901760
    %v4437 = vsub.f32 %v4087, %v4436
    %v4438 = vand.u32 %v4437, 4294901760
    %v4439 = vsub.f32 %v4437, %v4438
    %v4440 = vand.u32 %v4439, 4294901760
    %4441 = vmatpush1.xpose.msra.mxu0 %v4440
    %4442 = vmatprep.subr.mxu0 0.0
    %4443 = vmatpush1.xpose.msra.mxu0 0.0
    %4444 = vmatprep.subr.mxu0 0.0
    %4445 = vmatpush1.xpose.msra.mxu0 0.0
    %4446 = vmatprep.subr.mxu0 0.0
    %4447 = vmatpush1.xpose.msra.mxu0 0.0
    %4448 = vmatprep.subr.mxu0 0.0
    %4449 = vmatpush1.xpose.msra.mxu0 0.0
    %4450 = vmatprep.subr.mxu0 0.0
    %4451 = vmatpush1.xpose.msra.mxu0 0.0
    %4452 = vmatprep.subr.mxu0 0.0
    %4453 = vmatpush1.xpose.msra.mxu0 0.0
    %4454 = vmatprep.subr.mxu0 0.0
    %4455 = vmatpush1.xpose.msra.mxu0 0.0
    %4456 = vmatprep.subr.mxu0 0.0
    %4457 = vmatpush1.xpose.msra.mxu0 0.0
    %4458 = vmatprep.subr.mxu0 0.0
    %4459 = vmatpush1.xpose.msra.mxu0 0.0
    %4460 = vmatprep.subr.mxu0 0.0
    %4461 = vmatpush1.xpose.msra.mxu0 0.0
    %4462 = vmatprep.subr.mxu0 0.0
    %4463 = vmatpush1.xpose.msra.mxu0 0.0
    %4464 = vmatprep.subr.mxu0 0.0
    %4465 = vmatpush1.xpose.msra.mxu0 0.0
    %4466 = vmatprep.subr.mxu0 0.0
    %4467 = vmatpush1.xpose.msra.mxu0 0.0
    %4468 = vmatprep.subr.mxu0 0.0
    %4469 = vmatpush1.xpose.msra.mxu0 0.0
    %4470 = vmatprep.subr.mxu0 0.0
    %4471 = vmatpush1.xpose.msra.mxu0 0.0
    %4472 = vmatprep.subr.mxu0 0.0
    %4473 = vmatpush1.xpose.msra.mxu0 0.0
    %4474 = vmatprep.mubr.f32.mxu0 0.0
    %v4475 = vand.u32 %v4042, 4294901760
    %4476 = vmatmul.mubr.f32.gmra.mrb[0].mxu0 %v4475
    %v4477 = vpop.f32.mrb[0].mxu0
    %v4478 = vadd.f32 %v4177, %v4477
    %v4479 = vpop.f32.mrb[0].mxu0
    %4480 = vmatprep.mubr.f32.mxu0 0.0
    %v4481 = vand.u32 %v4045, 4294901760
    %4482 = vmatmul.mubr.f32.gmra.mrb[0].mxu0 %v4481
    %v4483 = vpop.f32.mrb[0].mxu0
    %v4484 = vadd.f32 %v4187, %v4483
    %v4485 = vpop.f32.mrb[0].mxu0
    %4486 = vmatprep.mubr.f32.mxu0 0.0
    %v4487 = vand.u32 %v4048, 4294901760
    %4488 = vmatmul.mubr.f32.gmra.mrb[0].mxu0 %v4487
    %v4489 = vpop.f32.mrb[0].mxu0
    %v4490 = vadd.f32 %v4197, %v4489
    %v4491 = vpop.f32.mrb[0].mxu0
    %4492 = vmatprep.mubr.f32.mxu0 0.0
    %v4493 = vand.u32 %v4051, 4294901760
    %4494 = vmatmul.mubr.f32.gmra.mrb[0].mxu0 %v4493
    %v4495 = vpop.f32.mrb[0].mxu0
    %v4496 = vadd.f32 %v4207, %v4495
    %v4497 = vpop.f32.mrb[0].mxu0
    %4498 = vmatprep.mubr.f32.mxu0 0.0
    %v4499 = vand.u32 %v4054, 4294901760
    %4500 = vmatmul.mubr.f32.gmra.mrb[0].mxu0 %v4499
    %v4501 = vpop.f32.mrb[0].mxu0
    %v4502 = vadd.f32 %v4217, %v4501
    %v4503 = vpop.f32.mrb[0].mxu0
    %4504 = vmatprep.mubr.f32.mxu0 0.0
    %v4505 = vand.u32 %v4057, 4294901760
    %4506 = vmatmul.mubr.f32.gmra.mrb[0].mxu0 %v4505
    %v4507 = vpop.f32.mrb[0].mxu0
    %v4508 = vadd.f32 %v4227, %v4507
    %v4509 = vpop.f32.mrb[0].mxu0
    %4510 = vmatprep.mubr.f32.mxu0 0.0
    %v4511 = vand.u32 %v4060, 4294901760
    %4512 = vmatmul.mubr.f32.gmra.mrb[0].mxu0 %v4511
    %v4513 = vpop.f32.mrb[0].mxu0
    %v4514 = vadd.f32 %v4237, %v4513
    %v4515 = vpop.f32.mrb[0].mxu0
    %4516 = vmatprep.mubr.f32.mxu0 0.0
    %v4517 = vand.u32 %v4063, 4294901760
    %4518 = vmatmul.mubr.f32.gmra.mrb[0].mxu0 %v4517
    %v4519 = vpop.f32.mrb[0].mxu0
    %v4520 = vadd.f32 %v4247, %v4519
    %v4521 = vpop.f32.mrb[0].mxu0
    %4522 = vmatprep.mubr.f32.mxu0 0.0
    %v4523 = vand.u32 %v4066, 4294901760
    %4524 = vmatmul.mubr.f32.gmra.mrb[0].mxu0 %v4523
    %v4525 = vpop.f32.mrb[0].mxu0
    %v4526 = vadd.f32 %v4257, %v4525
    %v4527 = vpop.f32.mrb[0].mxu0
    %4528 = vmatprep.mubr.f32.mxu0 0.0
    %v4529 = vand.u32 %v4069, 4294901760
    %4530 = vmatmul.mubr.f32.gmra.mrb[0].mxu0 %v4529
    %v4531 = vpop.f32.mrb[0].mxu0
    %v4532 = vadd.f32 %v4267, %v4531
    %v4533 = vpop.f32.mrb[0].mxu0
    %4534 = vmatprep.mubr.f32.mxu0 0.0
    %v4535 = vand.u32 %v4072, 4294901760
    %4536 = vmatmul.mubr.f32.gmra.mrb[0].mxu0 %v4535
    %v4537 = vpop.f32.mrb[0].mxu0
    %v4538 = vadd.f32 %v4277, %v4537
    %v4539 = vpop.f32.mrb[0].mxu0
    %4540 = vmatprep.mubr.f32.mxu0 0.0
    %v4541 = vand.u32 %v4075, 4294901760
    %4542 = vmatmul.mubr.f32.gmra.mrb[0].mxu0 %v4541
    %v4543 = vpop.f32.mrb[0].mxu0
    %v4544 = vadd.f32 %v4287, %v4543
    %v4545 = vpop.f32.mrb[0].mxu0
    %4546 = vmatprep.mubr.f32.mxu0 0.0
    %v4547 = vand.u32 %v4078, 4294901760
    %4548 = vmatmul.mubr.f32.gmra.mrb[0].mxu0 %v4547
    %v4549 = vpop.f32.mrb[0].mxu0
    %v4550 = vadd.f32 %v4297, %v4549
    %v4551 = vpop.f32.mrb[0].mxu0
    %4552 = vmatprep.mubr.f32.mxu0 0.0
    %v4553 = vand.u32 %v4081, 4294901760
    %4554 = vmatmul.mubr.f32.gmra.mrb[0].mxu0 %v4553
    %v4555 = vpop.f32.mrb[0].mxu0
    %v4556 = vadd.f32 %v4307, %v4555
    %v4557 = vpop.f32.mrb[0].mxu0
    %4558 = vmatprep.mubr.f32.mxu0 0.0
    %v4559 = vand.u32 %v4084, 4294901760
    %4560 = vmatmul.mubr.f32.gmra.mrb[0].mxu0 %v4559
    %v4561 = vpop.f32.mrb[0].mxu0
    %v4562 = vadd.f32 %v4317, %v4561
    %v4563 = vpop.f32.mrb[0].mxu0
    %4564 = vmatprep.mubr.f32.mxu0 0.0
    %v4565 = vand.u32 %v4087, 4294901760
    %4566 = vmatmul.mubr.f32.gmra.mrb[0].mxu0 %v4565
    %v4567 = vpop.f32.mrb[0].mxu0
    %v4568 = vadd.f32 %v4327, %v4567
    %v4569 = vpop.f32.mrb[0].mxu0
    %4570 = vdwg.mxu0
    %4571 = vmatprep.subr.mxu0 0.0
    %v4572 = vand.u32 %v4042, 4294901760
    %v4573 = vsub.f32 %v4042, %v4572
    %4574 = vmatpush1.xpose.msra.mxu0 %v4573
    %4575 = vmatprep.subr.mxu0 0.0
    %v4576 = vand.u32 %v4045, 4294901760
    %v4577 = vsub.f32 %v4045, %v4576
    %4578 = vmatpush1.xpose.msra.mxu0 %v4577
    %4579 = vmatprep.subr.mxu0 0.0
    %v4580 = vand.u32 %v4048, 4294901760
    %v4581 = vsub.f32 %v4048, %v4580
    %4582 = vmatpush1.xpose.msra.mxu0 %v4581
    %4583 = vmatprep.subr.mxu0 0.0
    %v4584 = vand.u32 %v4051, 4294901760
    %v4585 = vsub.f32 %v4051, %v4584
    %4586 = vmatpush1.xpose.msra.mxu0 %v4585
    %4587 = vmatprep.subr.mxu0 0.0
    %v4588 = vand.u32 %v4054, 4294901760
    %v4589 = vsub.f32 %v4054, %v4588
    %4590 = vmatpush1.xpose.msra.mxu0 %v4589
    %4591 = vmatprep.subr.mxu0 0.0
    %v4592 = vand.u32 %v4057, 4294901760
    %v4593 = vsub.f32 %v4057, %v4592
    %4594 = vmatpush1.xpose.msra.mxu0 %v4593
    %4595 = vmatprep.subr.mxu0 0.0
    %v4596 = vand.u32 %v4060, 4294901760
    %v4597 = vsub.f32 %v4060, %v4596
    %4598 = vmatpush1.xpose.msra.mxu0 %v4597
    %4599 = vmatprep.subr.mxu0 0.0
    %v4600 = vand.u32 %v4063, 4294901760
    %v4601 = vsub.f32 %v4063, %v4600
    %4602 = vmatpush1.xpose.msra.mxu0 %v4601
    %4603 = vmatprep.subr.mxu0 0.0
    %v4604 = vand.u32 %v4066, 4294901760
    %v4605 = vsub.f32 %v4066, %v4604
    %4606 = vmatpush1.xpose.msra.mxu0 %v4605
    %4607 = vmatprep.subr.mxu0 0.0
    %v4608 = vand.u32 %v4069, 4294901760
    %v4609 = vsub.f32 %v4069, %v4608
    %4610 = vmatpush1.xpose.msra.mxu0 %v4609
    %4611 = vmatprep.subr.mxu0 0.0
    %v4612 = vand.u32 %v4072, 4294901760
    %v4613 = vsub.f32 %v4072, %v4612
    %4614 = vmatpush1.xpose.msra.mxu0 %v4613
    %4615 = vmatprep.subr.mxu0 0.0
    %v4616 = vand.u32 %v4075, 4294901760
    %v4617 = vsub.f32 %v4075, %v4616
    %4618 = vmatpush1.xpose.msra.mxu0 %v4617
    %4619 = vmatprep.subr.mxu0 0.0
    %v4620 = vand.u32 %v4078, 4294901760
    %v4621 = vsub.f32 %v4078, %v4620
    %4622 = vmatpush1.xpose.msra.mxu0 %v4621
    %4623 = vmatprep.subr.mxu0 0.0
    %v4624 = vand.u32 %v4081, 4294901760
    %v4625 = vsub.f32 %v4081, %v4624
    %4626 = vmatpush1.xpose.msra.mxu0 %v4625
    %4627 = vmatprep.subr.mxu0 0.0
    %v4628 = vand.u32 %v4084, 4294901760
    %v4629 = vsub.f32 %v4084, %v4628
    %4630 = vmatpush1.xpose.msra.mxu0 %v4629
    %4631 = vmatprep.subr.mxu0 0.0
    %v4632 = vand.u32 %v4087, 4294901760
    %v4633 = vsub.f32 %v4087, %v4632
    %4634 = vmatpush1.xpose.msra.mxu0 %v4633
    %4635 = vmatprep.subr.mxu0 0.0
    %4636 = vmatpush1.xpose.msra.mxu0 0.0
    %4637 = vmatprep.subr.mxu0 0.0
    %4638 = vmatpush1.xpose.msra.mxu0 0.0
    %4639 = vmatprep.subr.mxu0 0.0
    %4640 = vmatpush1.xpose.msra.mxu0 0.0
    %4641 = vmatprep.subr.mxu0 0.0
    %4642 = vmatpush1.xpose.msra.mxu0 0.0
    %4643 = vmatprep.subr.mxu0 0.0
    %4644 = vmatpush1.xpose.msra.mxu0 0.0
    %4645 = vmatprep.subr.mxu0 0.0
    %4646 = vmatpush1.xpose.msra.mxu0 0.0
    %4647 = vmatprep.subr.mxu0 0.0
    %4648 = vmatpush1.xpose.msra.mxu0 0.0
    %4649 = vmatprep.subr.mxu0 0.0
    %4650 = vmatpush1.xpose.msra.mxu0 0.0
    %4651 = vmatprep.subr.mxu0 0.0
    %4652 = vmatpush1.xpose.msra.mxu0 0.0
    %4653 = vmatprep.subr.mxu0 0.0
    %4654 = vmatpush1.xpose.msra.mxu0 0.0
    %4655 = vmatprep.subr.mxu0 0.0
    %4656 = vmatpush1.xpose.msra.mxu0 0.0
    %4657 = vmatprep.subr.mxu0 0.0
    %4658 = vmatpush1.xpose.msra.mxu0 0.0
    %4659 = vmatprep.subr.mxu0 0.0
    %4660 = vmatpush1.xpose.msra.mxu0 0.0
    %4661 = vmatprep.subr.mxu0 0.0
    %4662 = vmatpush1.xpose.msra.mxu0 0.0
    %4663 = vmatprep.subr.mxu0 0.0
    %4664 = vmatpush1.xpose.msra.mxu0 0.0
    %4665 = vmatprep.subr.mxu0 0.0
    %4666 = vmatpush1.xpose.msra.mxu0 0.0
    %4667 = vmatprep.mubr.f32.mxu0 0.0
    %v4668 = vand.u32 %v4042, 4294901760
    %v4669 = vsub.f32 %v4042, %v4668
    %4670 = vmatmul.mubr.f32.gmra.mrb[0].mxu0 %v4669
    %v4671 = vpop.f32.mrb[0].mxu0
    %v4672 = vadd.f32 %v4478, %v4671
    %v4673 = vpop.f32.mrb[0].mxu0
    %4674 = vmatprep.mubr.f32.mxu0 0.0
    %v4675 = vand.u32 %v4045, 4294901760
    %v4676 = vsub.f32 %v4045, %v4675
    %4677 = vmatmul.mubr.f32.gmra.mrb[0].mxu0 %v4676
    %v4678 = vpop.f32.mrb[0].mxu0
    %v4679 = vadd.f32 %v4484, %v4678
    %v4680 = vpop.f32.mrb[0].mxu0
    %4681 = vmatprep.mubr.f32.mxu0 0.0
    %v4682 = vand.u32 %v4048, 4294901760
    %v4683 = vsub.f32 %v4048, %v4682
    %4684 = vmatmul.mubr.f32.gmra.mrb[0].mxu0 %v4683
    %v4685 = vpop.f32.mrb[0].mxu0
    %v4686 = vadd.f32 %v4490, %v4685
    %v4687 = vpop.f32.mrb[0].mxu0
    %4688 = vmatprep.mubr.f32.mxu0 0.0
    %v4689 = vand.u32 %v4051, 4294901760
    %v4690 = vsub.f32 %v4051, %v4689
    %4691 = vmatmul.mubr.f32.gmra.mrb[0].mxu0 %v4690
    %v4692 = vpop.f32.mrb[0].mxu0
    %v4693 = vadd.f32 %v4496, %v4692
    %v4694 = vpop.f32.mrb[0].mxu0
    %4695 = vmatprep.mubr.f32.mxu0 0.0
    %v4696 = vand.u32 %v4054, 4294901760
    %v4697 = vsub.f32 %v4054, %v4696
    %4698 = vmatmul.mubr.f32.gmra.mrb[0].mxu0 %v4697
    %v4699 = vpop.f32.mrb[0].mxu0
    %v4700 = vadd.f32 %v4502, %v4699
    %v4701 = vpop.f32.mrb[0].mxu0
    %4702 = vmatprep.mubr.f32.mxu0 0.0
    %v4703 = vand.u32 %v4057, 4294901760
    %v4704 = vsub.f32 %v4057, %v4703
    %4705 = vmatmul.mubr.f32.gmra.mrb[0].mxu0 %v4704
    %v4706 = vpop.f32.mrb[0].mxu0
    %v4707 = vadd.f32 %v4508, %v4706
    %v4708 = vpop.f32.mrb[0].mxu0
    %4709 = vmatprep.mubr.f32.mxu0 0.0
    %v4710 = vand.u32 %v4060, 4294901760
    %v4711 = vsub.f32 %v4060, %v4710
    %4712 = vmatmul.mubr.f32.gmra.mrb[0].mxu0 %v4711
    %v4713 = vpop.f32.mrb[0].mxu0
    %v4714 = vadd.f32 %v4514, %v4713
    %v4715 = vpop.f32.mrb[0].mxu0
    %4716 = vmatprep.mubr.f32.mxu0 0.0
    %v4717 = vand.u32 %v4063, 4294901760
    %v4718 = vsub.f32 %v4063, %v4717
    %4719 = vmatmul.mubr.f32.gmra.mrb[0].mxu0 %v4718
    %v4720 = vpop.f32.mrb[0].mxu0
    %v4721 = vadd.f32 %v4520, %v4720
    %v4722 = vpop.f32.mrb[0].mxu0
    %4723 = vmatprep.mubr.f32.mxu0 0.0
    %v4724 = vand.u32 %v4066, 4294901760
    %v4725 = vsub.f32 %v4066, %v4724
    %4726 = vmatmul.mubr.f32.gmra.mrb[0].mxu0 %v4725
    %v4727 = vpop.f32.mrb[0].mxu0
    %v4728 = vadd.f32 %v4526, %v4727
    %v4729 = vpop.f32.mrb[0].mxu0
    %4730 = vmatprep.mubr.f32.mxu0 0.0
    %v4731 = vand.u32 %v4069, 4294901760
    %v4732 = vsub.f32 %v4069, %v4731
    %4733 = vmatmul.mubr.f32.gmra.mrb[0].mxu0 %v4732
    %v4734 = vpop.f32.mrb[0].mxu0
    %v4735 = vadd.f32 %v4532, %v4734
    %v4736 = vpop.f32.mrb[0].mxu0
    %4737 = vmatprep.mubr.f32.mxu0 0.0
    %v4738 = vand.u32 %v4072, 4294901760
    %v4739 = vsub.f32 %v4072, %v4738
    %4740 = vmatmul.mubr.f32.gmra.mrb[0].mxu0 %v4739
    %v4741 = vpop.f32.mrb[0].mxu0
    %v4742 = vadd.f32 %v4538, %v4741
    %v4743 = vpop.f32.mrb[0].mxu0
    %4744 = vmatprep.mubr.f32.mxu0 0.0
    %v4745 = vand.u32 %v4075, 4294901760
    %v4746 = vsub.f32 %v4075, %v4745
    %4747 = vmatmul.mubr.f32.gmra.mrb[0].mxu0 %v4746
    %v4748 = vpop.f32.mrb[0].mxu0
    %v4749 = vadd.f32 %v4544, %v4748
    %v4750 = vpop.f32.mrb[0].mxu0
    %4751 = vmatprep.mubr.f32.mxu0 0.0
    %v4752 = vand.u32 %v4078, 4294901760
    %v4753 = vsub.f32 %v4078, %v4752
    %4754 = vmatmul.mubr.f32.gmra.mrb[0].mxu0 %v4753
    %v4755 = vpop.f32.mrb[0].mxu0
    %v4756 = vadd.f32 %v4550, %v4755
    %v4757 = vpop.f32.mrb[0].mxu0
    %4758 = vmatprep.mubr.f32.mxu0 0.0
    %v4759 = vand.u32 %v4081, 4294901760
    %v4760 = vsub.f32 %v4081, %v4759
    %4761 = vmatmul.mubr.f32.gmra.mrb[0].mxu0 %v4760
    %v4762 = vpop.f32.mrb[0].mxu0
    %v4763 = vadd.f32 %v4556, %v4762
    %v4764 = vpop.f32.mrb[0].mxu0
    %4765 = vmatprep.mubr.f32.mxu0 0.0
    %v4766 = vand.u32 %v4084, 4294901760
    %v4767 = vsub.f32 %v4084, %v4766
    %4768 = vmatmul.mubr.f32.gmra.mrb[0].mxu0 %v4767
    %v4769 = vpop.f32.mrb[0].mxu0
    %v4770 = vadd.f32 %v4562, %v4769
    %v4771 = vpop.f32.mrb[0].mxu0
    %4772 = vmatprep.mubr.f32.mxu0 0.0
    %v4773 = vand.u32 %v4087, 4294901760
    %v4774 = vsub.f32 %v4087, %v4773
    %4775 = vmatmul.mubr.f32.gmra.mrb[0].mxu0 %v4774
    %v4776 = vpop.f32.mrb[0].mxu0
    %v4777 = vadd.f32 %v4568, %v4776
    %v4778 = vpop.f32.mrb[0].mxu0
    %4779 = vdwg.mxu0
    %4780 = vmatprep.subr.mxu0 0.0
    %v4781 = vand.u32 %v4042, 4294901760
    %4782 = vmatpush1.xpose.msra.mxu0 %v4781
    %4783 = vmatprep.subr.mxu0 0.0
    %v4784 = vand.u32 %v4045, 4294901760
    %4785 = vmatpush1.xpose.msra.mxu0 %v4784
    %4786 = vmatprep.subr.mxu0 0.0
    %v4787 = vand.u32 %v4048, 4294901760
    %4788 = vmatpush1.xpose.msra.mxu0 %v4787
    %4789 = vmatprep.subr.mxu0 0.0
    %v4790 = vand.u32 %v4051, 4294901760
    %4791 = vmatpush1.xpose.msra.mxu0 %v4790
    %4792 = vmatprep.subr.mxu0 0.0
    %v4793 = vand.u32 %v4054, 4294901760
    %4794 = vmatpush1.xpose.msra.mxu0 %v4793
    %4795 = vmatprep.subr.mxu0 0.0
    %v4796 = vand.u32 %v4057, 4294901760
    %4797 = vmatpush1.xpose.msra.mxu0 %v4796
    %4798 = vmatprep.subr.mxu0 0.0
    %v4799 = vand.u32 %v4060, 4294901760
    %4800 = vmatpush1.xpose.msra.mxu0 %v4799
    %4801 = vmatprep.subr.mxu0 0.0
    %v4802 = vand.u32 %v4063, 4294901760
    %4803 = vmatpush1.xpose.msra.mxu0 %v4802
    %4804 = vmatprep.subr.mxu0 0.0
    %v4805 = vand.u32 %v4066, 4294901760
    %4806 = vmatpush1.xpose.msra.mxu0 %v4805
    %4807 = vmatprep.subr.mxu0 0.0
    %v4808 = vand.u32 %v4069, 4294901760
    %4809 = vmatpush1.xpose.msra.mxu0 %v4808
    %4810 = vmatprep.subr.mxu0 0.0
    %v4811 = vand.u32 %v4072, 4294901760
    %4812 = vmatpush1.xpose.msra.mxu0 %v4811
    %4813 = vmatprep.subr.mxu0 0.0
    %v4814 = vand.u32 %v4075, 4294901760
    %4815 = vmatpush1.xpose.msra.mxu0 %v4814
    %4816 = vmatprep.subr.mxu0 0.0
    %v4817 = vand.u32 %v4078, 4294901760
    %4818 = vmatpush1.xpose.msra.mxu0 %v4817
    %4819 = vmatprep.subr.mxu0 0.0
    %v4820 = vand.u32 %v4081, 4294901760
    %4821 = vmatpush1.xpose.msra.mxu0 %v4820
    %4822 = vmatprep.subr.mxu0 0.0
    %v4823 = vand.u32 %v4084, 4294901760
    %4824 = vmatpush1.xpose.msra.mxu0 %v4823
    %4825 = vmatprep.subr.mxu0 0.0
    %v4826 = vand.u32 %v4087, 4294901760
    %4827 = vmatpush1.xpose.msra.mxu0 %v4826
    %4828 = vmatprep.subr.mxu0 0.0
    %4829 = vmatpush1.xpose.msra.mxu0 0.0
    %4830 = vmatprep.subr.mxu0 0.0
    %4831 = vmatpush1.xpose.msra.mxu0 0.0
    %4832 = vmatprep.subr.mxu0 0.0
    %4833 = vmatpush1.xpose.msra.mxu0 0.0
    %4834 = vmatprep.subr.mxu0 0.0
    %4835 = vmatpush1.xpose.msra.mxu0 0.0
    %4836 = vmatprep.subr.mxu0 0.0
    %4837 = vmatpush1.xpose.msra.mxu0 0.0
    %4838 = vmatprep.subr.mxu0 0.0
    %4839 = vmatpush1.xpose.msra.mxu0 0.0
    %4840 = vmatprep.subr.mxu0 0.0
    %4841 = vmatpush1.xpose.msra.mxu0 0.0
    %4842 = vmatprep.subr.mxu0 0.0
    %4843 = vmatpush1.xpose.msra.mxu0 0.0
    %4844 = vmatprep.subr.mxu0 0.0
    %4845 = vmatpush1.xpose.msra.mxu0 0.0
    %4846 = vmatprep.subr.mxu0 0.0
    %4847 = vmatpush1.xpose.msra.mxu0 0.0
    %4848 = vmatprep.subr.mxu0 0.0
    %4849 = vmatpush1.xpose.msra.mxu0 0.0
    %4850 = vmatprep.subr.mxu0 0.0
    %4851 = vmatpush1.xpose.msra.mxu0 0.0
    %4852 = vmatprep.subr.mxu0 0.0
    %4853 = vmatpush1.xpose.msra.mxu0 0.0
    %4854 = vmatprep.subr.mxu0 0.0
    %4855 = vmatpush1.xpose.msra.mxu0 0.0
    %4856 = vmatprep.subr.mxu0 0.0
    %4857 = vmatpush1.xpose.msra.mxu0 0.0
    %4858 = vmatprep.subr.mxu0 0.0
    %4859 = vmatpush1.xpose.msra.mxu0 0.0
    %4860 = vmatprep.mubr.f32.mxu0 0.0
    %v4861 = vand.u32 %v4042, 4294901760
    %v4862 = vsub.f32 %v4042, %v4861
    %v4863 = vand.u32 %v4862, 4294901760
    %4864 = vmatmul.mubr.f32.gmra.mrb[0].mxu0 %v4863
    %v4865 = vpop.f32.mrb[0].mxu0
    %v4866 = vadd.f32 %v4672, %v4865
    %v4867 = vpop.f32.mrb[0].mxu0
    %4868 = vmatprep.mubr.f32.mxu0 0.0
    %v4869 = vand.u32 %v4045, 4294901760
    %v4870 = vsub.f32 %v4045, %v4869
    %v4871 = vand.u32 %v4870, 4294901760
    %4872 = vmatmul.mubr.f32.gmra.mrb[0].mxu0 %v4871
    %v4873 = vpop.f32.mrb[0].mxu0
    %v4874 = vadd.f32 %v4679, %v4873
    %v4875 = vpop.f32.mrb[0].mxu0
    %4876 = vmatprep.mubr.f32.mxu0 0.0
    %v4877 = vand.u32 %v4048, 4294901760
    %v4878 = vsub.f32 %v4048, %v4877
    %v4879 = vand.u32 %v4878, 4294901760
    %4880 = vmatmul.mubr.f32.gmra.mrb[0].mxu0 %v4879
    %v4881 = vpop.f32.mrb[0].mxu0
    %v4882 = vadd.f32 %v4686, %v4881
    %v4883 = vpop.f32.mrb[0].mxu0
    %4884 = vmatprep.mubr.f32.mxu0 0.0
    %v4885 = vand.u32 %v4051, 4294901760
    %v4886 = vsub.f32 %v4051, %v4885
    %v4887 = vand.u32 %v4886, 4294901760
    %4888 = vmatmul.mubr.f32.gmra.mrb[0].mxu0 %v4887
    %v4889 = vpop.f32.mrb[0].mxu0
    %v4890 = vadd.f32 %v4693, %v4889
    %v4891 = vpop.f32.mrb[0].mxu0
    %4892 = vmatprep.mubr.f32.mxu0 0.0
    %v4893 = vand.u32 %v4054, 4294901760
    %v4894 = vsub.f32 %v4054, %v4893
    %v4895 = vand.u32 %v4894, 4294901760
    %4896 = vmatmul.mubr.f32.gmra.mrb[0].mxu0 %v4895
    %v4897 = vpop.f32.mrb[0].mxu0
    %v4898 = vadd.f32 %v4700, %v4897
    %v4899 = vpop.f32.mrb[0].mxu0
    %4900 = vmatprep.mubr.f32.mxu0 0.0
    %v4901 = vand.u32 %v4057, 4294901760
    %v4902 = vsub.f32 %v4057, %v4901
    %v4903 = vand.u32 %v4902, 4294901760
    %4904 = vmatmul.mubr.f32.gmra.mrb[0].mxu0 %v4903
    %v4905 = vpop.f32.mrb[0].mxu0
    %v4906 = vadd.f32 %v4707, %v4905
    %v4907 = vpop.f32.mrb[0].mxu0
    %4908 = vmatprep.mubr.f32.mxu0 0.0
    %v4909 = vand.u32 %v4060, 4294901760
    %v4910 = vsub.f32 %v4060, %v4909
    %v4911 = vand.u32 %v4910, 4294901760
    %4912 = vmatmul.mubr.f32.gmra.mrb[0].mxu0 %v4911
    %v4913 = vpop.f32.mrb[0].mxu0
    %v4914 = vadd.f32 %v4714, %v4913
    %v4915 = vpop.f32.mrb[0].mxu0
    %4916 = vmatprep.mubr.f32.mxu0 0.0
    %v4917 = vand.u32 %v4063, 4294901760
    %v4918 = vsub.f32 %v4063, %v4917
    %v4919 = vand.u32 %v4918, 4294901760
    %4920 = vmatmul.mubr.f32.gmra.mrb[0].mxu0 %v4919
    %v4921 = vpop.f32.mrb[0].mxu0
    %v4922 = vadd.f32 %v4721, %v4921
    %v4923 = vpop.f32.mrb[0].mxu0
    %4924 = vmatprep.mubr.f32.mxu0 0.0
    %v4925 = vand.u32 %v4066, 4294901760
    %v4926 = vsub.f32 %v4066, %v4925
    %v4927 = vand.u32 %v4926, 4294901760
    %4928 = vmatmul.mubr.f32.gmra.mrb[0].mxu0 %v4927
    %v4929 = vpop.f32.mrb[0].mxu0
    %v4930 = vadd.f32 %v4728, %v4929
    %v4931 = vpop.f32.mrb[0].mxu0
    %4932 = vmatprep.mubr.f32.mxu0 0.0
    %v4933 = vand.u32 %v4069, 4294901760
    %v4934 = vsub.f32 %v4069, %v4933
    %v4935 = vand.u32 %v4934, 4294901760
    %4936 = vmatmul.mubr.f32.gmra.mrb[0].mxu0 %v4935
    %v4937 = vpop.f32.mrb[0].mxu0
    %v4938 = vadd.f32 %v4735, %v4937
    %v4939 = vpop.f32.mrb[0].mxu0
    %4940 = vmatprep.mubr.f32.mxu0 0.0
    %v4941 = vand.u32 %v4072, 4294901760
    %v4942 = vsub.f32 %v4072, %v4941
    %v4943 = vand.u32 %v4942, 4294901760
    %4944 = vmatmul.mubr.f32.gmra.mrb[0].mxu0 %v4943
    %v4945 = vpop.f32.mrb[0].mxu0
    %v4946 = vadd.f32 %v4742, %v4945
    %v4947 = vpop.f32.mrb[0].mxu0
    %4948 = vmatprep.mubr.f32.mxu0 0.0
    %v4949 = vand.u32 %v4075, 4294901760
    %v4950 = vsub.f32 %v4075, %v4949
    %v4951 = vand.u32 %v4950, 4294901760
    %4952 = vmatmul.mubr.f32.gmra.mrb[0].mxu0 %v4951
    %v4953 = vpop.f32.mrb[0].mxu0
    %v4954 = vadd.f32 %v4749, %v4953
    %v4955 = vpop.f32.mrb[0].mxu0
    %4956 = vmatprep.mubr.f32.mxu0 0.0
    %v4957 = vand.u32 %v4078, 4294901760
    %v4958 = vsub.f32 %v4078, %v4957
    %v4959 = vand.u32 %v4958, 4294901760
    %4960 = vmatmul.mubr.f32.gmra.mrb[0].mxu0 %v4959
    %v4961 = vpop.f32.mrb[0].mxu0
    %v4962 = vadd.f32 %v4756, %v4961
    %v4963 = vpop.f32.mrb[0].mxu0
    %4964 = vmatprep.mubr.f32.mxu0 0.0
    %v4965 = vand.u32 %v4081, 4294901760
    %v4966 = vsub.f32 %v4081, %v4965
    %v4967 = vand.u32 %v4966, 4294901760
    %4968 = vmatmul.mubr.f32.gmra.mrb[0].mxu0 %v4967
    %v4969 = vpop.f32.mrb[0].mxu0
    %v4970 = vadd.f32 %v4763, %v4969
    %v4971 = vpop.f32.mrb[0].mxu0
    %4972 = vmatprep.mubr.f32.mxu0 0.0
    %v4973 = vand.u32 %v4084, 4294901760
    %v4974 = vsub.f32 %v4084, %v4973
    %v4975 = vand.u32 %v4974, 4294901760
    %4976 = vmatmul.mubr.f32.gmra.mrb[0].mxu0 %v4975
    %v4977 = vpop.f32.mrb[0].mxu0
    %v4978 = vadd.f32 %v4770, %v4977
    %v4979 = vpop.f32.mrb[0].mxu0
    %4980 = vmatprep.mubr.f32.mxu0 0.0
    %v4981 = vand.u32 %v4087, 4294901760
    %v4982 = vsub.f32 %v4087, %v4981
    %v4983 = vand.u32 %v4982, 4294901760
    %4984 = vmatmul.mubr.f32.gmra.mrb[0].mxu0 %v4983
    %v4985 = vpop.f32.mrb[0].mxu0
    %v4986 = vadd.f32 %v4777, %v4985
    %v4987 = vpop.f32.mrb[0].mxu0
    %4988 = vdwg.mxu0
    %4989 = vmatprep.subr.mxu0 0.0
    %v4990 = vand.u32 %v4042, 4294901760
    %v4991 = vsub.f32 %v4042, %v4990
    %v4992 = vand.u32 %v4991, 4294901760
    %4993 = vmatpush1.xpose.msra.mxu0 %v4992
    %4994 = vmatprep.subr.mxu0 0.0
    %v4995 = vand.u32 %v4045, 4294901760
    %v4996 = vsub.f32 %v4045, %v4995
    %v4997 = vand.u32 %v4996, 4294901760
    %4998 = vmatpush1.xpose.msra.mxu0 %v4997
    %4999 = vmatprep.subr.mxu0 0.0
    %v5000 = vand.u32 %v4048, 4294901760
    %v5001 = vsub.f32 %v4048, %v5000
    %v5002 = vand.u32 %v5001, 4294901760
    %5003 = vmatpush1.xpose.msra.mxu0 %v5002
    %5004 = vmatprep.subr.mxu0 0.0
    %v5005 = vand.u32 %v4051, 4294901760
    %v5006 = vsub.f32 %v4051, %v5005
    %v5007 = vand.u32 %v5006, 4294901760
    %5008 = vmatpush1.xpose.msra.mxu0 %v5007
    %5009 = vmatprep.subr.mxu0 0.0
    %v5010 = vand.u32 %v4054, 4294901760
    %v5011 = vsub.f32 %v4054, %v5010
    %v5012 = vand.u32 %v5011, 4294901760
    %5013 = vmatpush1.xpose.msra.mxu0 %v5012
    %5014 = vmatprep.subr.mxu0 0.0
    %v5015 = vand.u32 %v4057, 4294901760
    %v5016 = vsub.f32 %v4057, %v5015
    %v5017 = vand.u32 %v5016, 4294901760
    %5018 = vmatpush1.xpose.msra.mxu0 %v5017
    %5019 = vmatprep.subr.mxu0 0.0
    %v5020 = vand.u32 %v4060, 4294901760
    %v5021 = vsub.f32 %v4060, %v5020
    %v5022 = vand.u32 %v5021, 4294901760
    %5023 = vmatpush1.xpose.msra.mxu0 %v5022
    %5024 = vmatprep.subr.mxu0 0.0
    %v5025 = vand.u32 %v4063, 4294901760
    %v5026 = vsub.f32 %v4063, %v5025
    %v5027 = vand.u32 %v5026, 4294901760
    %5028 = vmatpush1.xpose.msra.mxu0 %v5027
    %5029 = vmatprep.subr.mxu0 0.0
    %v5030 = vand.u32 %v4066, 4294901760
    %v5031 = vsub.f32 %v4066, %v5030
    %v5032 = vand.u32 %v5031, 4294901760
    %5033 = vmatpush1.xpose.msra.mxu0 %v5032
    %5034 = vmatprep.subr.mxu0 0.0
    %v5035 = vand.u32 %v4069, 4294901760
    %v5036 = vsub.f32 %v4069, %v5035
    %v5037 = vand.u32 %v5036, 4294901760
    %5038 = vmatpush1.xpose.msra.mxu0 %v5037
    %5039 = vmatprep.subr.mxu0 0.0
    %v5040 = vand.u32 %v4072, 4294901760
    %v5041 = vsub.f32 %v4072, %v5040
    %v5042 = vand.u32 %v5041, 4294901760
    %5043 = vmatpush1.xpose.msra.mxu0 %v5042
    %5044 = vmatprep.subr.mxu0 0.0
    %v5045 = vand.u32 %v4075, 4294901760
    %v5046 = vsub.f32 %v4075, %v5045
    %v5047 = vand.u32 %v5046, 4294901760
    %5048 = vmatpush1.xpose.msra.mxu0 %v5047
    %5049 = vmatprep.subr.mxu0 0.0
    %v5050 = vand.u32 %v4078, 4294901760
    %v5051 = vsub.f32 %v4078, %v5050
    %v5052 = vand.u32 %v5051, 4294901760
    %5053 = vmatpush1.xpose.msra.mxu0 %v5052
    %5054 = vmatprep.subr.mxu0 0.0
    %v5055 = vand.u32 %v4081, 4294901760
    %v5056 = vsub.f32 %v4081, %v5055
    %v5057 = vand.u32 %v5056, 4294901760
    %5058 = vmatpush1.xpose.msra.mxu0 %v5057
    %5059 = vmatprep.subr.mxu0 0.0
    %v5060 = vand.u32 %v4084, 4294901760
    %v5061 = vsub.f32 %v4084, %v5060
    %v5062 = vand.u32 %v5061, 4294901760
    %5063 = vmatpush1.xpose.msra.mxu0 %v5062
    %5064 = vmatprep.subr.mxu0 0.0
    %v5065 = vand.u32 %v4087, 4294901760
    %v5066 = vsub.f32 %v4087, %v5065
    %v5067 = vand.u32 %v5066, 4294901760
    %5068 = vmatpush1.xpose.msra.mxu0 %v5067
    %5069 = vmatprep.subr.mxu0 0.0
    %5070 = vmatpush1.xpose.msra.mxu0 0.0
    %5071 = vmatprep.subr.mxu0 0.0
    %5072 = vmatpush1.xpose.msra.mxu0 0.0
    %5073 = vmatprep.subr.mxu0 0.0
    %5074 = vmatpush1.xpose.msra.mxu0 0.0
    %5075 = vmatprep.subr.mxu0 0.0
    %5076 = vmatpush1.xpose.msra.mxu0 0.0
    %5077 = vmatprep.subr.mxu0 0.0
    %5078 = vmatpush1.xpose.msra.mxu0 0.0
    %5079 = vmatprep.subr.mxu0 0.0
    %5080 = vmatpush1.xpose.msra.mxu0 0.0
    %5081 = vmatprep.subr.mxu0 0.0
    %5082 = vmatpush1.xpose.msra.mxu0 0.0
    %5083 = vmatprep.subr.mxu0 0.0
    %5084 = vmatpush1.xpose.msra.mxu0 0.0
    %5085 = vmatprep.subr.mxu0 0.0
    %5086 = vmatpush1.xpose.msra.mxu0 0.0
    %5087 = vmatprep.subr.mxu0 0.0
    %5088 = vmatpush1.xpose.msra.mxu0 0.0
    %5089 = vmatprep.subr.mxu0 0.0
    %5090 = vmatpush1.xpose.msra.mxu0 0.0
    %5091 = vmatprep.subr.mxu0 0.0
    %5092 = vmatpush1.xpose.msra.mxu0 0.0
    %5093 = vmatprep.subr.mxu0 0.0
    %5094 = vmatpush1.xpose.msra.mxu0 0.0
    %5095 = vmatprep.subr.mxu0 0.0
    %5096 = vmatpush1.xpose.msra.mxu0 0.0
    %5097 = vmatprep.subr.mxu0 0.0
    %5098 = vmatpush1.xpose.msra.mxu0 0.0
    %5099 = vmatprep.subr.mxu0 0.0
    %5100 = vmatpush1.xpose.msra.mxu0 0.0
    %5101 = vmatprep.mubr.f32.mxu0 0.0
    %v5102 = vand.u32 %v4042, 4294901760
    %5103 = vmatmul.mubr.f32.gmra.mrb[0].mxu0 %v5102
    %v5104 = vpop.f32.mrb[0].mxu0
    %v5105 = vadd.f32 %v4866, %v5104
    %v5106 = vpop.f32.mrb[0].mxu0
    %5107 = vmatprep.mubr.f32.mxu0 0.0
    %v5108 = vand.u32 %v4045, 4294901760
    %5109 = vmatmul.mubr.f32.gmra.mrb[0].mxu0 %v5108
    %v5110 = vpop.f32.mrb[0].mxu0
    %v5111 = vadd.f32 %v4874, %v5110
    %v5112 = vpop.f32.mrb[0].mxu0
    %5113 = vmatprep.mubr.f32.mxu0 0.0
    %v5114 = vand.u32 %v4048, 4294901760
    %5115 = vmatmul.mubr.f32.gmra.mrb[0].mxu0 %v5114
    %v5116 = vpop.f32.mrb[0].mxu0
    %v5117 = vadd.f32 %v4882, %v5116
    %v5118 = vpop.f32.mrb[0].mxu0
    %5119 = vmatprep.mubr.f32.mxu0 0.0
    %v5120 = vand.u32 %v4051, 4294901760
    %5121 = vmatmul.mubr.f32.gmra.mrb[0].mxu0 %v5120
    %v5122 = vpop.f32.mrb[0].mxu0
    %v5123 = vadd.f32 %v4890, %v5122
    %v5124 = vpop.f32.mrb[0].mxu0
    %5125 = vmatprep.mubr.f32.mxu0 0.0
    %v5126 = vand.u32 %v4054, 4294901760
    %5127 = vmatmul.mubr.f32.gmra.mrb[0].mxu0 %v5126
    %v5128 = vpop.f32.mrb[0].mxu0
    %v5129 = vadd.f32 %v4898, %v5128
    %v5130 = vpop.f32.mrb[0].mxu0
    %5131 = vmatprep.mubr.f32.mxu0 0.0
    %v5132 = vand.u32 %v4057, 4294901760
    %5133 = vmatmul.mubr.f32.gmra.mrb[0].mxu0 %v5132
    %v5134 = vpop.f32.mrb[0].mxu0
    %v5135 = vadd.f32 %v4906, %v5134
    %v5136 = vpop.f32.mrb[0].mxu0
    %5137 = vmatprep.mubr.f32.mxu0 0.0
    %v5138 = vand.u32 %v4060, 4294901760
    %5139 = vmatmul.mubr.f32.gmra.mrb[0].mxu0 %v5138
    %v5140 = vpop.f32.mrb[0].mxu0
    %v5141 = vadd.f32 %v4914, %v5140
    %v5142 = vpop.f32.mrb[0].mxu0
    %5143 = vmatprep.mubr.f32.mxu0 0.0
    %v5144 = vand.u32 %v4063, 4294901760
    %5145 = vmatmul.mubr.f32.gmra.mrb[0].mxu0 %v5144
    %v5146 = vpop.f32.mrb[0].mxu0
    %v5147 = vadd.f32 %v4922, %v5146
    %v5148 = vpop.f32.mrb[0].mxu0
    %5149 = vmatprep.mubr.f32.mxu0 0.0
    %v5150 = vand.u32 %v4066, 4294901760
    %5151 = vmatmul.mubr.f32.gmra.mrb[0].mxu0 %v5150
    %v5152 = vpop.f32.mrb[0].mxu0
    %v5153 = vadd.f32 %v4930, %v5152
    %v5154 = vpop.f32.mrb[0].mxu0
    %5155 = vmatprep.mubr.f32.mxu0 0.0
    %v5156 = vand.u32 %v4069, 4294901760
    %5157 = vmatmul.mubr.f32.gmra.mrb[0].mxu0 %v5156
    %v5158 = vpop.f32.mrb[0].mxu0
    %v5159 = vadd.f32 %v4938, %v5158
    %v5160 = vpop.f32.mrb[0].mxu0
    %5161 = vmatprep.mubr.f32.mxu0 0.0
    %v5162 = vand.u32 %v4072, 4294901760
    %5163 = vmatmul.mubr.f32.gmra.mrb[0].mxu0 %v5162
    %v5164 = vpop.f32.mrb[0].mxu0
    %v5165 = vadd.f32 %v4946, %v5164
    %v5166 = vpop.f32.mrb[0].mxu0
    %5167 = vmatprep.mubr.f32.mxu0 0.0
    %v5168 = vand.u32 %v4075, 4294901760
    %5169 = vmatmul.mubr.f32.gmra.mrb[0].mxu0 %v5168
    %v5170 = vpop.f32.mrb[0].mxu0
    %v5171 = vadd.f32 %v4954, %v5170
    %v5172 = vpop.f32.mrb[0].mxu0
    %5173 = vmatprep.mubr.f32.mxu0 0.0
    %v5174 = vand.u32 %v4078, 4294901760
    %5175 = vmatmul.mubr.f32.gmra.mrb[0].mxu0 %v5174
    %v5176 = vpop.f32.mrb[0].mxu0
    %v5177 = vadd.f32 %v4962, %v5176
    %v5178 = vpop.f32.mrb[0].mxu0
    %5179 = vmatprep.mubr.f32.mxu0 0.0
    %v5180 = vand.u32 %v4081, 4294901760
    %5181 = vmatmul.mubr.f32.gmra.mrb[0].mxu0 %v5180
    %v5182 = vpop.f32.mrb[0].mxu0
    %v5183 = vadd.f32 %v4970, %v5182
    %v5184 = vpop.f32.mrb[0].mxu0
    %5185 = vmatprep.mubr.f32.mxu0 0.0
    %v5186 = vand.u32 %v4084, 4294901760
    %5187 = vmatmul.mubr.f32.gmra.mrb[0].mxu0 %v5186
    %v5188 = vpop.f32.mrb[0].mxu0
    %v5189 = vadd.f32 %v4978, %v5188
    %v5190 = vpop.f32.mrb[0].mxu0
    %5191 = vmatprep.mubr.f32.mxu0 0.0
    %v5192 = vand.u32 %v4087, 4294901760
    %5193 = vmatmul.mubr.f32.gmra.mrb[0].mxu0 %v5192
    %v5194 = vpop.f32.mrb[0].mxu0
    %v5195 = vadd.f32 %v4986, %v5194
    %v5196 = vpop.f32.mrb[0].mxu0
    %5197 = vdwg.mxu0
    %5198 = vmatprep.subr.mxu0 0.0
    %v5199 = vand.u32 %v4042, 4294901760
    %5200 = vmatpush1.xpose.msra.mxu0 %v5199
    %5201 = vmatprep.subr.mxu0 0.0
    %v5202 = vand.u32 %v4045, 4294901760
    %5203 = vmatpush1.xpose.msra.mxu0 %v5202
    %5204 = vmatprep.subr.mxu0 0.0
    %v5205 = vand.u32 %v4048, 4294901760
    %5206 = vmatpush1.xpose.msra.mxu0 %v5205
    %5207 = vmatprep.subr.mxu0 0.0
    %v5208 = vand.u32 %v4051, 4294901760
    %5209 = vmatpush1.xpose.msra.mxu0 %v5208
    %5210 = vmatprep.subr.mxu0 0.0
    %v5211 = vand.u32 %v4054, 4294901760
    %5212 = vmatpush1.xpose.msra.mxu0 %v5211
    %5213 = vmatprep.subr.mxu0 0.0
    %v5214 = vand.u32 %v4057, 4294901760
    %5215 = vmatpush1.xpose.msra.mxu0 %v5214
    %5216 = vmatprep.subr.mxu0 0.0
    %v5217 = vand.u32 %v4060, 4294901760
    %5218 = vmatpush1.xpose.msra.mxu0 %v5217
    %5219 = vmatprep.subr.mxu0 0.0
    %v5220 = vand.u32 %v4063, 4294901760
    %5221 = vmatpush1.xpose.msra.mxu0 %v5220
    %5222 = vmatprep.subr.mxu0 0.0
    %v5223 = vand.u32 %v4066, 4294901760
    %5224 = vmatpush1.xpose.msra.mxu0 %v5223
    %5225 = vmatprep.subr.mxu0 0.0
    %v5226 = vand.u32 %v4069, 4294901760
    %5227 = vmatpush1.xpose.msra.mxu0 %v5226
    %5228 = vmatprep.subr.mxu0 0.0
    %v5229 = vand.u32 %v4072, 4294901760
    %5230 = vmatpush1.xpose.msra.mxu0 %v5229
    %5231 = vmatprep.subr.mxu0 0.0
    %v5232 = vand.u32 %v4075, 4294901760
    %5233 = vmatpush1.xpose.msra.mxu0 %v5232
    %5234 = vmatprep.subr.mxu0 0.0
    %v5235 = vand.u32 %v4078, 4294901760
    %5236 = vmatpush1.xpose.msra.mxu0 %v5235
    %5237 = vmatprep.subr.mxu0 0.0
    %v5238 = vand.u32 %v4081, 4294901760
    %5239 = vmatpush1.xpose.msra.mxu0 %v5238
    %5240 = vmatprep.subr.mxu0 0.0
    %v5241 = vand.u32 %v4084, 4294901760
    %5242 = vmatpush1.xpose.msra.mxu0 %v5241
    %5243 = vmatprep.subr.mxu0 0.0
    %v5244 = vand.u32 %v4087, 4294901760
    %5245 = vmatpush1.xpose.msra.mxu0 %v5244
    %5246 = vmatprep.subr.mxu0 0.0
    %5247 = vmatpush1.xpose.msra.mxu0 0.0
    %5248 = vmatprep.subr.mxu0 0.0
    %5249 = vmatpush1.xpose.msra.mxu0 0.0
    %5250 = vmatprep.subr.mxu0 0.0
    %5251 = vmatpush1.xpose.msra.mxu0 0.0
    %5252 = vmatprep.subr.mxu0 0.0
    %5253 = vmatpush1.xpose.msra.mxu0 0.0
    %5254 = vmatprep.subr.mxu0 0.0
    %5255 = vmatpush1.xpose.msra.mxu0 0.0
    %5256 = vmatprep.subr.mxu0 0.0
    %5257 = vmatpush1.xpose.msra.mxu0 0.0
    %5258 = vmatprep.subr.mxu0 0.0
    %5259 = vmatpush1.xpose.msra.mxu0 0.0
    %5260 = vmatprep.subr.mxu0 0.0
    %5261 = vmatpush1.xpose.msra.mxu0 0.0
    %5262 = vmatprep.subr.mxu0 0.0
    %5263 = vmatpush1.xpose.msra.mxu0 0.0
    %5264 = vmatprep.subr.mxu0 0.0
    %5265 = vmatpush1.xpose.msra.mxu0 0.0
    %5266 = vmatprep.subr.mxu0 0.0
    %5267 = vmatpush1.xpose.msra.mxu0 0.0
    %5268 = vmatprep.subr.mxu0 0.0
    %5269 = vmatpush1.xpose.msra.mxu0 0.0
    %5270 = vmatprep.subr.mxu0 0.0
    %5271 = vmatpush1.xpose.msra.mxu0 0.0
    %5272 = vmatprep.subr.mxu0 0.0
    %5273 = vmatpush1.xpose.msra.mxu0 0.0
    %5274 = vmatprep.subr.mxu0 0.0
    %5275 = vmatpush1.xpose.msra.mxu0 0.0
    %5276 = vmatprep.subr.mxu0 0.0
    %5277 = vmatpush1.xpose.msra.mxu0 0.0
    %5278 = vmatprep.mubr.f32.mxu0 0.0
    %v5279 = vand.u32 %v4042, 4294901760
    %5280 = vmatmul.mubr.f32.gmra.mrb[0].mxu0 %v5279
    %v5281 = vpop.f32.mrb[0].mxu0
    %v5282 = vadd.f32 %v5105, %v5281
    %v5283 = vpop.f32.mrb[0].mxu0
    %5284 = vmatprep.mubr.f32.mxu0 0.0
    %v5285 = vand.u32 %v4045, 4294901760
    %5286 = vmatmul.mubr.f32.gmra.mrb[0].mxu0 %v5285
    %v5287 = vpop.f32.mrb[0].mxu0
    %v5288 = vadd.f32 %v5111, %v5287
    %v5289 = vpop.f32.mrb[0].mxu0
    %5290 = vmatprep.mubr.f32.mxu0 0.0
    %v5291 = vand.u32 %v4048, 4294901760
    %5292 = vmatmul.mubr.f32.gmra.mrb[0].mxu0 %v5291
    %v5293 = vpop.f32.mrb[0].mxu0
    %v5294 = vadd.f32 %v5117, %v5293
    %v5295 = vpop.f32.mrb[0].mxu0
    %5296 = vmatprep.mubr.f32.mxu0 0.0
    %v5297 = vand.u32 %v4051, 4294901760
    %5298 = vmatmul.mubr.f32.gmra.mrb[0].mxu0 %v5297
    %v5299 = vpop.f32.mrb[0].mxu0
    %v5300 = vadd.f32 %v5123, %v5299
    %v5301 = vpop.f32.mrb[0].mxu0
    %5302 = vmatprep.mubr.f32.mxu0 0.0
    %v5303 = vand.u32 %v4054, 4294901760
    %5304 = vmatmul.mubr.f32.gmra.mrb[0].mxu0 %v5303
    %v5305 = vpop.f32.mrb[0].mxu0
    %v5306 = vadd.f32 %v5129, %v5305
    %v5307 = vpop.f32.mrb[0].mxu0
    %5308 = vmatprep.mubr.f32.mxu0 0.0
    %v5309 = vand.u32 %v4057, 4294901760
    %5310 = vmatmul.mubr.f32.gmra.mrb[0].mxu0 %v5309
    %v5311 = vpop.f32.mrb[0].mxu0
    %v5312 = vadd.f32 %v5135, %v5311
    %v5313 = vpop.f32.mrb[0].mxu0
    %5314 = vmatprep.mubr.f32.mxu0 0.0
    %v5315 = vand.u32 %v4060, 4294901760
    %5316 = vmatmul.mubr.f32.gmra.mrb[0].mxu0 %v5315
    %v5317 = vpop.f32.mrb[0].mxu0
    %v5318 = vadd.f32 %v5141, %v5317
    %v5319 = vpop.f32.mrb[0].mxu0
    %5320 = vmatprep.mubr.f32.mxu0 0.0
    %v5321 = vand.u32 %v4063, 4294901760
    %5322 = vmatmul.mubr.f32.gmra.mrb[0].mxu0 %v5321
    %v5323 = vpop.f32.mrb[0].mxu0
    %v5324 = vadd.f32 %v5147, %v5323
    %v5325 = vpop.f32.mrb[0].mxu0
    %5326 = vmatprep.mubr.f32.mxu0 0.0
    %v5327 = vand.u32 %v4066, 4294901760
    %5328 = vmatmul.mubr.f32.gmra.mrb[0].mxu0 %v5327
    %v5329 = vpop.f32.mrb[0].mxu0
    %v5330 = vadd.f32 %v5153, %v5329
    %v5331 = vpop.f32.mrb[0].mxu0
    %5332 = vmatprep.mubr.f32.mxu0 0.0
    %v5333 = vand.u32 %v4069, 4294901760
    %5334 = vmatmul.mubr.f32.gmra.mrb[0].mxu0 %v5333
    %v5335 = vpop.f32.mrb[0].mxu0
    %v5336 = vadd.f32 %v5159, %v5335
    %v5337 = vpop.f32.mrb[0].mxu0
    %5338 = vmatprep.mubr.f32.mxu0 0.0
    %v5339 = vand.u32 %v4072, 4294901760
    %5340 = vmatmul.mubr.f32.gmra.mrb[0].mxu0 %v5339
    %v5341 = vpop.f32.mrb[0].mxu0
    %v5342 = vadd.f32 %v5165, %v5341
    %v5343 = vpop.f32.mrb[0].mxu0
    %5344 = vmatprep.mubr.f32.mxu0 0.0
    %v5345 = vand.u32 %v4075, 4294901760
    %5346 = vmatmul.mubr.f32.gmra.mrb[0].mxu0 %v5345
    %v5347 = vpop.f32.mrb[0].mxu0
    %v5348 = vadd.f32 %v5171, %v5347
    %v5349 = vpop.f32.mrb[0].mxu0
    %5350 = vmatprep.mubr.f32.mxu0 0.0
    %v5351 = vand.u32 %v4078, 4294901760
    %5352 = vmatmul.mubr.f32.gmra.mrb[0].mxu0 %v5351
    %v5353 = vpop.f32.mrb[0].mxu0
    %v5354 = vadd.f32 %v5177, %v5353
    %v5355 = vpop.f32.mrb[0].mxu0
    %5356 = vmatprep.mubr.f32.mxu0 0.0
    %v5357 = vand.u32 %v4081, 4294901760
    %5358 = vmatmul.mubr.f32.gmra.mrb[0].mxu0 %v5357
    %v5359 = vpop.f32.mrb[0].mxu0
    %v5360 = vadd.f32 %v5183, %v5359
    %v5361 = vpop.f32.mrb[0].mxu0
    %5362 = vmatprep.mubr.f32.mxu0 0.0
    %v5363 = vand.u32 %v4084, 4294901760
    %5364 = vmatmul.mubr.f32.gmra.mrb[0].mxu0 %v5363
    %v5365 = vpop.f32.mrb[0].mxu0
    %v5366 = vadd.f32 %v5189, %v5365
    %v5367 = vpop.f32.mrb[0].mxu0
    %5368 = vmatprep.mubr.f32.mxu0 0.0
    %v5369 = vand.u32 %v4087, 4294901760
    %5370 = vmatmul.mubr.f32.gmra.mrb[0].mxu0 %v5369
    %v5371 = vpop.f32.mrb[0].mxu0
    %v5372 = vadd.f32 %v5195, %v5371
    %v5373 = vpop.f32.mrb[0].mxu0
    %5374 = vdwg.mxu0
    %v5375 = vlaneseq
    %v5376 = vshrl.u32 %v5375, 7
    %v5377 = vadd.s32 %v5376, 8
    %v5378 = vadd.s32 %v5376, 16
    %v5379 = vadd.s32 %v5376, 24
    %v5380 = vadd.s32 %v5376, 32
    %v5381 = vadd.s32 %v5376, 40
    %v5382 = vadd.s32 %v5376, 48
    %v5383 = vadd.s32 %v5376, 56
    %v5384 = vadd.s32 %v5376, 64
    %v5385 = vadd.s32 %v5376, 72
    %v5386 = vadd.s32 %v5376, 80
    %v5387 = vadd.s32 %v5376, 88
    %v5388 = vadd.s32 %v5376, 96
    %v5389 = vadd.s32 %v5376, 104
    %v5390 = vadd.s32 %v5376, 112
    %v5391 = vadd.s32 %v5376, 120
    %v5392 = vld [vmem:[%s1] sm:$0x1]
    %v5393 = vlaneseq
    %v5394 = vshrl.u32 %v5393, 7
    %v5395 = vsub.s32 0, %v5394
    %v5396 = vrot.slane %v5392, %v5395
    %vm5397 = vcmp.eq.s32.totalorder %v5396, %v5376
    %vm5398 = vcmp.eq.s32.totalorder %v5396, %v5377
    %vm5399 = vcmp.eq.s32.totalorder %v5396, %v5378
    %vm5400 = vcmp.eq.s32.totalorder %v5396, %v5379
    %vm5401 = vcmp.eq.s32.totalorder %v5396, %v5380
    %vm5402 = vcmp.eq.s32.totalorder %v5396, %v5381
    %vm5403 = vcmp.eq.s32.totalorder %v5396, %v5382
    %vm5404 = vcmp.eq.s32.totalorder %v5396, %v5383
    %vm5405 = vcmp.eq.s32.totalorder %v5396, %v5384
    %vm5406 = vcmp.eq.s32.totalorder %v5396, %v5385
    %vm5407 = vcmp.eq.s32.totalorder %v5396, %v5386
    %vm5408 = vcmp.eq.s32.totalorder %v5396, %v5387
    %vm5409 = vcmp.eq.s32.totalorder %v5396, %v5388
    %vm5410 = vcmp.eq.s32.totalorder %v5396, %v5389
    %vm5411 = vcmp.eq.s32.totalorder %v5396, %v5390
    %vm5412 = vcmp.eq.s32.totalorder %v5396, %v5391
    %v5413 = vsel %vm5397, 1, 0
    %v5414 = vsel %vm5398, 1, 0
    %v5415 = vsel %vm5399, 1, 0
    %v5416 = vsel %vm5400, 1, 0
    %v5417 = vsel %vm5401, 1, 0
    %v5418 = vsel %vm5402, 1, 0
    %v5419 = vsel %vm5403, 1, 0
    %v5420 = vsel %vm5404, 1, 0
    %v5421 = vsel %vm5405, 1, 0
    %v5422 = vsel %vm5406, 1, 0
    %v5423 = vsel %vm5407, 1, 0
    %v5424 = vsel %vm5408, 1, 0
    %v5425 = vsel %vm5409, 1, 0
    %v5426 = vsel %vm5410, 1, 0
    %v5427 = vsel %vm5411, 1, 0
    %v5428 = vsel %vm5412, 1, 0
    %v5429 = vcvt.s32.f32 %v5413
    %v5430 = vcvt.s32.f32 %v5414
    %v5431 = vcvt.s32.f32 %v5415
    %v5432 = vcvt.s32.f32 %v5416
    %v5433 = vcvt.s32.f32 %v5417
    %v5434 = vcvt.s32.f32 %v5418
    %v5435 = vcvt.s32.f32 %v5419
    %v5436 = vcvt.s32.f32 %v5420
    %v5437 = vcvt.s32.f32 %v5421
    %v5438 = vcvt.s32.f32 %v5422
    %v5439 = vcvt.s32.f32 %v5423
    %v5440 = vcvt.s32.f32 %v5424
    %v5441 = vcvt.s32.f32 %v5425
    %v5442 = vcvt.s32.f32 %v5426
    %v5443 = vcvt.s32.f32 %v5427
    %v5444 = vcvt.s32.f32 %v5428
    %v5445 = vld [vmem:[%s1 + $0x1] sm:$0x1]
    %v5446 = vlaneseq
    %v5447 = vshrl.u32 %v5446, 7
    %v5448 = vsub.s32 0, %v5447
    %v5449 = vrot.slane %v5445, %v5448
    %vm5450 = vcmp.eq.s32.totalorder %v5449, %v5376
    %vm5451 = vcmp.eq.s32.totalorder %v5449, %v5377
    %vm5452 = vcmp.eq.s32.totalorder %v5449, %v5378
    %vm5453 = vcmp.eq.s32.totalorder %v5449, %v5379
    %vm5454 = vcmp.eq.s32.totalorder %v5449, %v5380
    %vm5455 = vcmp.eq.s32.totalorder %v5449, %v5381
    %vm5456 = vcmp.eq.s32.totalorder %v5449, %v5382
    %vm5457 = vcmp.eq.s32.totalorder %v5449, %v5383
    %vm5458 = vcmp.eq.s32.totalorder %v5449, %v5384
    %vm5459 = vcmp.eq.s32.totalorder %v5449, %v5385
    %vm5460 = vcmp.eq.s32.totalorder %v5449, %v5386
    %vm5461 = vcmp.eq.s32.totalorder %v5449, %v5387
    %vm5462 = vcmp.eq.s32.totalorder %v5449, %v5388
    %vm5463 = vcmp.eq.s32.totalorder %v5449, %v5389
    %vm5464 = vcmp.eq.s32.totalorder %v5449, %v5390
    %vm5465 = vcmp.eq.s32.totalorder %v5449, %v5391
    %v5466 = vsel %vm5450, 1, 0
    %v5467 = vsel %vm5451, 1, 0
    %v5468 = vsel %vm5452, 1, 0
    %v5469 = vsel %vm5453, 1, 0
    %v5470 = vsel %vm5454, 1, 0
    %v5471 = vsel %vm5455, 1, 0
    %v5472 = vsel %vm5456, 1, 0
    %v5473 = vsel %vm5457, 1, 0
    %v5474 = vsel %vm5458, 1, 0
    %v5475 = vsel %vm5459, 1, 0
    %v5476 = vsel %vm5460, 1, 0
    %v5477 = vsel %vm5461, 1, 0
    %v5478 = vsel %vm5462, 1, 0
    %v5479 = vsel %vm5463, 1, 0
    %v5480 = vsel %vm5464, 1, 0
    %v5481 = vsel %vm5465, 1, 0
    %v5482 = vcvt.s32.f32 %v5466
    %v5483 = vcvt.s32.f32 %v5467
    %v5484 = vcvt.s32.f32 %v5468
    %v5485 = vcvt.s32.f32 %v5469
    %v5486 = vcvt.s32.f32 %v5470
    %v5487 = vcvt.s32.f32 %v5471
    %v5488 = vcvt.s32.f32 %v5472
    %v5489 = vcvt.s32.f32 %v5473
    %v5490 = vcvt.s32.f32 %v5474
    %v5491 = vcvt.s32.f32 %v5475
    %v5492 = vcvt.s32.f32 %v5476
    %v5493 = vcvt.s32.f32 %v5477
    %v5494 = vcvt.s32.f32 %v5478
    %v5495 = vcvt.s32.f32 %v5479
    %v5496 = vcvt.s32.f32 %v5480
    %v5497 = vcvt.s32.f32 %v5481
    %5498 = vmatprep.subr.mxu0 0.0
    %v5499 = vand.u32 %v5482, 4294901760
    %5500 = vmatpush1.msra.mxu0 %v5499
    %5501 = vmatprep.subr.mxu0 0.0
    %v5502 = vand.u32 %v5483, 4294901760
    %5503 = vmatpush1.msra.mxu0 %v5502
    %5504 = vmatprep.subr.mxu0 0.0
    %v5505 = vand.u32 %v5484, 4294901760
    %5506 = vmatpush1.msra.mxu0 %v5505
    %5507 = vmatprep.subr.mxu0 0.0
    %v5508 = vand.u32 %v5485, 4294901760
    %5509 = vmatpush1.msra.mxu0 %v5508
    %5510 = vmatprep.subr.mxu0 0.0
    %v5511 = vand.u32 %v5486, 4294901760
    %5512 = vmatpush1.msra.mxu0 %v5511
    %5513 = vmatprep.subr.mxu0 0.0
    %v5514 = vand.u32 %v5487, 4294901760
    %5515 = vmatpush1.msra.mxu0 %v5514
    %5516 = vmatprep.subr.mxu0 0.0
    %v5517 = vand.u32 %v5488, 4294901760
    %5518 = vmatpush1.msra.mxu0 %v5517
    %5519 = vmatprep.subr.mxu0 0.0
    %v5520 = vand.u32 %v5489, 4294901760
    %5521 = vmatpush1.msra.mxu0 %v5520
    %5522 = vmatprep.subr.mxu0 0.0
    %v5523 = vand.u32 %v5490, 4294901760
    %5524 = vmatpush1.msra.mxu0 %v5523
    %5525 = vmatprep.subr.mxu0 0.0
    %v5526 = vand.u32 %v5491, 4294901760
    %5527 = vmatpush1.msra.mxu0 %v5526
    %5528 = vmatprep.subr.mxu0 0.0
    %v5529 = vand.u32 %v5492, 4294901760
    %5530 = vmatpush1.msra.mxu0 %v5529
    %5531 = vmatprep.subr.mxu0 0.0
    %v5532 = vand.u32 %v5493, 4294901760
    %5533 = vmatpush1.msra.mxu0 %v5532
    %5534 = vmatprep.subr.mxu0 0.0
    %v5535 = vand.u32 %v5494, 4294901760
    %5536 = vmatpush1.msra.mxu0 %v5535
    %5537 = vmatprep.subr.mxu0 0.0
    %v5538 = vand.u32 %v5495, 4294901760
    %5539 = vmatpush1.msra.mxu0 %v5538
    %5540 = vmatprep.subr.mxu0 0.0
    %v5541 = vand.u32 %v5496, 4294901760
    %5542 = vmatpush1.msra.mxu0 %v5541
    %5543 = vmatprep.subr.mxu0 0.0
    %v5544 = vand.u32 %v5497, 4294901760
    %5545 = vmatpush1.msra.mxu0 %v5544
    %5546 = vmatprep.subr.mxu0 0.0
    %5547 = vmatpush1.msra.mxu0 0.0
    %5548 = vmatprep.subr.mxu0 0.0
    %5549 = vmatpush1.msra.mxu0 0.0
    %5550 = vmatprep.subr.mxu0 0.0
    %5551 = vmatpush1.msra.mxu0 0.0
    %5552 = vmatprep.subr.mxu0 0.0
    %5553 = vmatpush1.msra.mxu0 0.0
    %5554 = vmatprep.subr.mxu0 0.0
    %5555 = vmatpush1.msra.mxu0 0.0
    %5556 = vmatprep.subr.mxu0 0.0
    %5557 = vmatpush1.msra.mxu0 0.0
    %5558 = vmatprep.subr.mxu0 0.0
    %5559 = vmatpush1.msra.mxu0 0.0
    %5560 = vmatprep.subr.mxu0 0.0
    %5561 = vmatpush1.msra.mxu0 0.0
    %5562 = vmatprep.subr.mxu0 0.0
    %5563 = vmatpush1.msra.mxu0 0.0
    %5564 = vmatprep.subr.mxu0 0.0
    %5565 = vmatpush1.msra.mxu0 0.0
    %5566 = vmatprep.subr.mxu0 0.0
    %5567 = vmatpush1.msra.mxu0 0.0
    %5568 = vmatprep.subr.mxu0 0.0
    %5569 = vmatpush1.msra.mxu0 0.0
    %5570 = vmatprep.subr.mxu0 0.0
    %5571 = vmatpush1.msra.mxu0 0.0
    %5572 = vmatprep.subr.mxu0 0.0
    %5573 = vmatpush1.msra.mxu0 0.0
    %5574 = vmatprep.subr.mxu0 0.0
    %5575 = vmatpush1.msra.mxu0 0.0
    %5576 = vmatprep.subr.mxu0 0.0
    %5577 = vmatpush1.msra.mxu0 0.0
    %5578 = vmatprep.mubr.f32.mxu0 0.0
    %v5579 = vand.u32 %v5282, 4294901760
    %v5580 = vsub.f32 %v5282, %v5579
    %v5581 = vand.u32 %v5580, 4294901760
    %v5582 = vsub.f32 %v5580, %v5581
    %v5583 = vand.u32 %v5582, 4294901760
    %5584 = vmatmul.mubr.f32.gmra.mrb[0].mxu0 %v5583
    %v5585 = vpop.f32.mrb[0].mxu0
    %v5586 = vadd.f32 0.0, %v5585
    %v5587 = vpop.f32.mrb[0].mxu0
    %5588 = vmatprep.mubr.f32.mxu0 0.0
    %v5589 = vand.u32 %v5288, 4294901760
    %v5590 = vsub.f32 %v5288, %v5589
    %v5591 = vand.u32 %v5590, 4294901760
    %v5592 = vsub.f32 %v5590, %v5591
    %v5593 = vand.u32 %v5592, 4294901760
    %5594 = vmatmul.mubr.f32.gmra.mrb[0].mxu0 %v5593
    %v5595 = vpop.f32.mrb[0].mxu0
    %v5596 = vadd.f32 0.0, %v5595
    %v5597 = vpop.f32.mrb[0].mxu0
    %5598 = vmatprep.mubr.f32.mxu0 0.0
    %v5599 = vand.u32 %v5294, 4294901760
    %v5600 = vsub.f32 %v5294, %v5599
    %v5601 = vand.u32 %v5600, 4294901760
    %v5602 = vsub.f32 %v5600, %v5601
    %v5603 = vand.u32 %v5602, 4294901760
    %5604 = vmatmul.mubr.f32.gmra.mrb[0].mxu0 %v5603
    %v5605 = vpop.f32.mrb[0].mxu0
    %v5606 = vadd.f32 0.0, %v5605
    %v5607 = vpop.f32.mrb[0].mxu0
    %5608 = vmatprep.mubr.f32.mxu0 0.0
    %v5609 = vand.u32 %v5300, 4294901760
    %v5610 = vsub.f32 %v5300, %v5609
    %v5611 = vand.u32 %v5610, 4294901760
    %v5612 = vsub.f32 %v5610, %v5611
    %v5613 = vand.u32 %v5612, 4294901760
    %5614 = vmatmul.mubr.f32.gmra.mrb[0].mxu0 %v5613
    %v5615 = vpop.f32.mrb[0].mxu0
    %v5616 = vadd.f32 0.0, %v5615
    %v5617 = vpop.f32.mrb[0].mxu0
    %5618 = vmatprep.mubr.f32.mxu0 0.0
    %v5619 = vand.u32 %v5306, 4294901760
    %v5620 = vsub.f32 %v5306, %v5619
    %v5621 = vand.u32 %v5620, 4294901760
    %v5622 = vsub.f32 %v5620, %v5621
    %v5623 = vand.u32 %v5622, 4294901760
    %5624 = vmatmul.mubr.f32.gmra.mrb[0].mxu0 %v5623
    %v5625 = vpop.f32.mrb[0].mxu0
    %v5626 = vadd.f32 0.0, %v5625
    %v5627 = vpop.f32.mrb[0].mxu0
    %5628 = vmatprep.mubr.f32.mxu0 0.0
    %v5629 = vand.u32 %v5312, 4294901760
    %v5630 = vsub.f32 %v5312, %v5629
    %v5631 = vand.u32 %v5630, 4294901760
    %v5632 = vsub.f32 %v5630, %v5631
    %v5633 = vand.u32 %v5632, 4294901760
    %5634 = vmatmul.mubr.f32.gmra.mrb[0].mxu0 %v5633
    %v5635 = vpop.f32.mrb[0].mxu0
    %v5636 = vadd.f32 0.0, %v5635
    %v5637 = vpop.f32.mrb[0].mxu0
    %5638 = vmatprep.mubr.f32.mxu0 0.0
    %v5639 = vand.u32 %v5318, 4294901760
    %v5640 = vsub.f32 %v5318, %v5639
    %v5641 = vand.u32 %v5640, 4294901760
    %v5642 = vsub.f32 %v5640, %v5641
    %v5643 = vand.u32 %v5642, 4294901760
    %5644 = vmatmul.mubr.f32.gmra.mrb[0].mxu0 %v5643
    %v5645 = vpop.f32.mrb[0].mxu0
    %v5646 = vadd.f32 0.0, %v5645
    %v5647 = vpop.f32.mrb[0].mxu0
    %5648 = vmatprep.mubr.f32.mxu0 0.0
    %v5649 = vand.u32 %v5324, 4294901760
    %v5650 = vsub.f32 %v5324, %v5649
    %v5651 = vand.u32 %v5650, 4294901760
    %v5652 = vsub.f32 %v5650, %v5651
    %v5653 = vand.u32 %v5652, 4294901760
    %5654 = vmatmul.mubr.f32.gmra.mrb[0].mxu0 %v5653
    %v5655 = vpop.f32.mrb[0].mxu0
    %v5656 = vadd.f32 0.0, %v5655
    %v5657 = vpop.f32.mrb[0].mxu0
    %5658 = vmatprep.mubr.f32.mxu0 0.0
    %v5659 = vand.u32 %v5330, 4294901760
    %v5660 = vsub.f32 %v5330, %v5659
    %v5661 = vand.u32 %v5660, 4294901760
    %v5662 = vsub.f32 %v5660, %v5661
    %v5663 = vand.u32 %v5662, 4294901760
    %5664 = vmatmul.mubr.f32.gmra.mrb[0].mxu0 %v5663
    %v5665 = vpop.f32.mrb[0].mxu0
    %v5666 = vadd.f32 0.0, %v5665
    %v5667 = vpop.f32.mrb[0].mxu0
    %5668 = vmatprep.mubr.f32.mxu0 0.0
    %v5669 = vand.u32 %v5336, 4294901760
    %v5670 = vsub.f32 %v5336, %v5669
    %v5671 = vand.u32 %v5670, 4294901760
    %v5672 = vsub.f32 %v5670, %v5671
    %v5673 = vand.u32 %v5672, 4294901760
    %5674 = vmatmul.mubr.f32.gmra.mrb[0].mxu0 %v5673
    %v5675 = vpop.f32.mrb[0].mxu0
    %v5676 = vadd.f32 0.0, %v5675
    %v5677 = vpop.f32.mrb[0].mxu0
    %5678 = vmatprep.mubr.f32.mxu0 0.0
    %v5679 = vand.u32 %v5342, 4294901760
    %v5680 = vsub.f32 %v5342, %v5679
    %v5681 = vand.u32 %v5680, 4294901760
    %v5682 = vsub.f32 %v5680, %v5681
    %v5683 = vand.u32 %v5682, 4294901760
    %5684 = vmatmul.mubr.f32.gmra.mrb[0].mxu0 %v5683
    %v5685 = vpop.f32.mrb[0].mxu0
    %v5686 = vadd.f32 0.0, %v5685
    %v5687 = vpop.f32.mrb[0].mxu0
    %5688 = vmatprep.mubr.f32.mxu0 0.0
    %v5689 = vand.u32 %v5348, 4294901760
    %v5690 = vsub.f32 %v5348, %v5689
    %v5691 = vand.u32 %v5690, 4294901760
    %v5692 = vsub.f32 %v5690, %v5691
    %v5693 = vand.u32 %v5692, 4294901760
    %5694 = vmatmul.mubr.f32.gmra.mrb[0].mxu0 %v5693
    %v5695 = vpop.f32.mrb[0].mxu0
    %v5696 = vadd.f32 0.0, %v5695
    %v5697 = vpop.f32.mrb[0].mxu0
    %5698 = vmatprep.mubr.f32.mxu0 0.0
    %v5699 = vand.u32 %v5354, 4294901760
    %v5700 = vsub.f32 %v5354, %v5699
    %v5701 = vand.u32 %v5700, 4294901760
    %v5702 = vsub.f32 %v5700, %v5701
    %v5703 = vand.u32 %v5702, 4294901760
    %5704 = vmatmul.mubr.f32.gmra.mrb[0].mxu0 %v5703
    %v5705 = vpop.f32.mrb[0].mxu0
    %v5706 = vadd.f32 0.0, %v5705
    %v5707 = vpop.f32.mrb[0].mxu0
    %5708 = vmatprep.mubr.f32.mxu0 0.0
    %v5709 = vand.u32 %v5360, 4294901760
    %v5710 = vsub.f32 %v5360, %v5709
    %v5711 = vand.u32 %v5710, 4294901760
    %v5712 = vsub.f32 %v5710, %v5711
    %v5713 = vand.u32 %v5712, 4294901760
    %5714 = vmatmul.mubr.f32.gmra.mrb[0].mxu0 %v5713
    %v5715 = vpop.f32.mrb[0].mxu0
    %v5716 = vadd.f32 0.0, %v5715
    %v5717 = vpop.f32.mrb[0].mxu0
    %5718 = vmatprep.mubr.f32.mxu0 0.0
    %v5719 = vand.u32 %v5366, 4294901760
    %v5720 = vsub.f32 %v5366, %v5719
    %v5721 = vand.u32 %v5720, 4294901760
    %v5722 = vsub.f32 %v5720, %v5721
    %v5723 = vand.u32 %v5722, 4294901760
    %5724 = vmatmul.mubr.f32.gmra.mrb[0].mxu0 %v5723
    %v5725 = vpop.f32.mrb[0].mxu0
    %v5726 = vadd.f32 0.0, %v5725
    %v5727 = vpop.f32.mrb[0].mxu0
    %5728 = vmatprep.mubr.f32.mxu0 0.0
    %v5729 = vand.u32 %v5372, 4294901760
    %v5730 = vsub.f32 %v5372, %v5729
    %v5731 = vand.u32 %v5730, 4294901760
    %v5732 = vsub.f32 %v5730, %v5731
    %v5733 = vand.u32 %v5732, 4294901760
    %5734 = vmatmul.mubr.f32.gmra.mrb[0].mxu0 %v5733
    %v5735 = vpop.f32.mrb[0].mxu0
    %v5736 = vadd.f32 0.0, %v5735
    %v5737 = vpop.f32.mrb[0].mxu0
    %5738 = vdwg.mxu0
    %5739 = vmatprep.subr.mxu0 0.0
    %v5740 = vand.u32 %v5482, 4294901760
    %v5741 = vsub.f32 %v5482, %v5740
    %v5742 = vand.u32 %v5741, 4294901760
    %v5743 = vsub.f32 %v5741, %v5742
    %v5744 = vand.u32 %v5743, 4294901760
    %5745 = vmatpush1.msra.mxu0 %v5744
    %5746 = vmatprep.subr.mxu0 0.0
    %v5747 = vand.u32 %v5483, 4294901760
    %v5748 = vsub.f32 %v5483, %v5747
    %v5749 = vand.u32 %v5748, 4294901760
    %v5750 = vsub.f32 %v5748, %v5749
    %v5751 = vand.u32 %v5750, 4294901760
    %5752 = vmatpush1.msra.mxu0 %v5751
    %5753 = vmatprep.subr.mxu0 0.0
    %v5754 = vand.u32 %v5484, 4294901760
    %v5755 = vsub.f32 %v5484, %v5754
    %v5756 = vand.u32 %v5755, 4294901760
    %v5757 = vsub.f32 %v5755, %v5756
    %v5758 = vand.u32 %v5757, 4294901760
    %5759 = vmatpush1.msra.mxu0 %v5758
    %5760 = vmatprep.subr.mxu0 0.0
    %v5761 = vand.u32 %v5485, 4294901760
    %v5762 = vsub.f32 %v5485, %v5761
    %v5763 = vand.u32 %v5762, 4294901760
    %v5764 = vsub.f32 %v5762, %v5763
    %v5765 = vand.u32 %v5764, 4294901760
    %5766 = vmatpush1.msra.mxu0 %v5765
    %5767 = vmatprep.subr.mxu0 0.0
    %v5768 = vand.u32 %v5486, 4294901760
    %v5769 = vsub.f32 %v5486, %v5768
    %v5770 = vand.u32 %v5769, 4294901760
    %v5771 = vsub.f32 %v5769, %v5770
    %v5772 = vand.u32 %v5771, 4294901760
    %5773 = vmatpush1.msra.mxu0 %v5772
    %5774 = vmatprep.subr.mxu0 0.0
    %v5775 = vand.u32 %v5487, 4294901760
    %v5776 = vsub.f32 %v5487, %v5775
    %v5777 = vand.u32 %v5776, 4294901760
    %v5778 = vsub.f32 %v5776, %v5777
    %v5779 = vand.u32 %v5778, 4294901760
    %5780 = vmatpush1.msra.mxu0 %v5779
    %5781 = vmatprep.subr.mxu0 0.0
    %v5782 = vand.u32 %v5488, 4294901760
    %v5783 = vsub.f32 %v5488, %v5782
    %v5784 = vand.u32 %v5783, 4294901760
    %v5785 = vsub.f32 %v5783, %v5784
    %v5786 = vand.u32 %v5785, 4294901760
    %5787 = vmatpush1.msra.mxu0 %v5786
    %5788 = vmatprep.subr.mxu0 0.0
    %v5789 = vand.u32 %v5489, 4294901760
    %v5790 = vsub.f32 %v5489, %v5789
    %v5791 = vand.u32 %v5790, 4294901760
    %v5792 = vsub.f32 %v5790, %v5791
    %v5793 = vand.u32 %v5792, 4294901760
    %5794 = vmatpush1.msra.mxu0 %v5793
    %5795 = vmatprep.subr.mxu0 0.0
    %v5796 = vand.u32 %v5490, 4294901760
    %v5797 = vsub.f32 %v5490, %v5796
    %v5798 = vand.u32 %v5797, 4294901760
    %v5799 = vsub.f32 %v5797, %v5798
    %v5800 = vand.u32 %v5799, 4294901760
    %5801 = vmatpush1.msra.mxu0 %v5800
    %5802 = vmatprep.subr.mxu0 0.0
    %v5803 = vand.u32 %v5491, 4294901760
    %v5804 = vsub.f32 %v5491, %v5803
    %v5805 = vand.u32 %v5804, 4294901760
    %v5806 = vsub.f32 %v5804, %v5805
    %v5807 = vand.u32 %v5806, 4294901760
    %5808 = vmatpush1.msra.mxu0 %v5807
    %5809 = vmatprep.subr.mxu0 0.0
    %v5810 = vand.u32 %v5492, 4294901760
    %v5811 = vsub.f32 %v5492, %v5810
    %v5812 = vand.u32 %v5811, 4294901760
    %v5813 = vsub.f32 %v5811, %v5812
    %v5814 = vand.u32 %v5813, 4294901760
    %5815 = vmatpush1.msra.mxu0 %v5814
    %5816 = vmatprep.subr.mxu0 0.0
    %v5817 = vand.u32 %v5493, 4294901760
    %v5818 = vsub.f32 %v5493, %v5817
    %v5819 = vand.u32 %v5818, 4294901760
    %v5820 = vsub.f32 %v5818, %v5819
    %v5821 = vand.u32 %v5820, 4294901760
    %5822 = vmatpush1.msra.mxu0 %v5821
    %5823 = vmatprep.subr.mxu0 0.0
    %v5824 = vand.u32 %v5494, 4294901760
    %v5825 = vsub.f32 %v5494, %v5824
    %v5826 = vand.u32 %v5825, 4294901760
    %v5827 = vsub.f32 %v5825, %v5826
    %v5828 = vand.u32 %v5827, 4294901760
    %5829 = vmatpush1.msra.mxu0 %v5828
    %5830 = vmatprep.subr.mxu0 0.0
    %v5831 = vand.u32 %v5495, 4294901760
    %v5832 = vsub.f32 %v5495, %v5831
    %v5833 = vand.u32 %v5832, 4294901760
    %v5834 = vsub.f32 %v5832, %v5833
    %v5835 = vand.u32 %v5834, 4294901760
    %5836 = vmatpush1.msra.mxu0 %v5835
    %5837 = vmatprep.subr.mxu0 0.0
    %v5838 = vand.u32 %v5496, 4294901760
    %v5839 = vsub.f32 %v5496, %v5838
    %v5840 = vand.u32 %v5839, 4294901760
    %v5841 = vsub.f32 %v5839, %v5840
    %v5842 = vand.u32 %v5841, 4294901760
    %5843 = vmatpush1.msra.mxu0 %v5842
    %5844 = vmatprep.subr.mxu0 0.0
    %v5845 = vand.u32 %v5497, 4294901760
    %v5846 = vsub.f32 %v5497, %v5845
    %v5847 = vand.u32 %v5846, 4294901760
    %v5848 = vsub.f32 %v5846, %v5847
    %v5849 = vand.u32 %v5848, 4294901760
    %5850 = vmatpush1.msra.mxu0 %v5849
    %5851 = vmatprep.subr.mxu0 0.0
    %5852 = vmatpush1.msra.mxu0 0.0
    %5853 = vmatprep.subr.mxu0 0.0
    %5854 = vmatpush1.msra.mxu0 0.0
    %5855 = vmatprep.subr.mxu0 0.0
    %5856 = vmatpush1.msra.mxu0 0.0
    %5857 = vmatprep.subr.mxu0 0.0
    %5858 = vmatpush1.msra.mxu0 0.0
    %5859 = vmatprep.subr.mxu0 0.0
    %5860 = vmatpush1.msra.mxu0 0.0
    %5861 = vmatprep.subr.mxu0 0.0
    %5862 = vmatpush1.msra.mxu0 0.0
    %5863 = vmatprep.subr.mxu0 0.0
    %5864 = vmatpush1.msra.mxu0 0.0
    %5865 = vmatprep.subr.mxu0 0.0
    %5866 = vmatpush1.msra.mxu0 0.0
    %5867 = vmatprep.subr.mxu0 0.0
    %5868 = vmatpush1.msra.mxu0 0.0
    %5869 = vmatprep.subr.mxu0 0.0
    %5870 = vmatpush1.msra.mxu0 0.0
    %5871 = vmatprep.subr.mxu0 0.0
    %5872 = vmatpush1.msra.mxu0 0.0
    %5873 = vmatprep.subr.mxu0 0.0
    %5874 = vmatpush1.msra.mxu0 0.0
    %5875 = vmatprep.subr.mxu0 0.0
    %5876 = vmatpush1.msra.mxu0 0.0
    %5877 = vmatprep.subr.mxu0 0.0
    %5878 = vmatpush1.msra.mxu0 0.0
    %5879 = vmatprep.subr.mxu0 0.0
    %5880 = vmatpush1.msra.mxu0 0.0
    %5881 = vmatprep.subr.mxu0 0.0
    %5882 = vmatpush1.msra.mxu0 0.0
    %5883 = vmatprep.mubr.f32.mxu0 0.0
    %v5884 = vand.u32 %v5282, 4294901760
    %5885 = vmatmul.mubr.f32.gmra.mrb[0].mxu0 %v5884
    %v5886 = vpop.f32.mrb[0].mxu0
    %v5887 = vadd.f32 %v5586, %v5886
    %v5888 = vpop.f32.mrb[0].mxu0
    %5889 = vmatprep.mubr.f32.mxu0 0.0
    %v5890 = vand.u32 %v5288, 4294901760
    %5891 = vmatmul.mubr.f32.gmra.mrb[0].mxu0 %v5890
    %v5892 = vpop.f32.mrb[0].mxu0
    %v5893 = vadd.f32 %v5596, %v5892
    %v5894 = vpop.f32.mrb[0].mxu0
    %5895 = vmatprep.mubr.f32.mxu0 0.0
    %v5896 = vand.u32 %v5294, 4294901760
    %5897 = vmatmul.mubr.f32.gmra.mrb[0].mxu0 %v5896
    %v5898 = vpop.f32.mrb[0].mxu0
    %v5899 = vadd.f32 %v5606, %v5898
    %v5900 = vpop.f32.mrb[0].mxu0
    %5901 = vmatprep.mubr.f32.mxu0 0.0
    %v5902 = vand.u32 %v5300, 4294901760
    %5903 = vmatmul.mubr.f32.gmra.mrb[0].mxu0 %v5902
    %v5904 = vpop.f32.mrb[0].mxu0
    %v5905 = vadd.f32 %v5616, %v5904
    %v5906 = vpop.f32.mrb[0].mxu0
    %5907 = vmatprep.mubr.f32.mxu0 0.0
    %v5908 = vand.u32 %v5306, 4294901760
    %5909 = vmatmul.mubr.f32.gmra.mrb[0].mxu0 %v5908
    %v5910 = vpop.f32.mrb[0].mxu0
    %v5911 = vadd.f32 %v5626, %v5910
    %v5912 = vpop.f32.mrb[0].mxu0
    %5913 = vmatprep.mubr.f32.mxu0 0.0
    %v5914 = vand.u32 %v5312, 4294901760
    %5915 = vmatmul.mubr.f32.gmra.mrb[0].mxu0 %v5914
    %v5916 = vpop.f32.mrb[0].mxu0
    %v5917 = vadd.f32 %v5636, %v5916
    %v5918 = vpop.f32.mrb[0].mxu0
    %5919 = vmatprep.mubr.f32.mxu0 0.0
    %v5920 = vand.u32 %v5318, 4294901760
    %5921 = vmatmul.mubr.f32.gmra.mrb[0].mxu0 %v5920
    %v5922 = vpop.f32.mrb[0].mxu0
    %v5923 = vadd.f32 %v5646, %v5922
    %v5924 = vpop.f32.mrb[0].mxu0
    %5925 = vmatprep.mubr.f32.mxu0 0.0
    %v5926 = vand.u32 %v5324, 4294901760
    %5927 = vmatmul.mubr.f32.gmra.mrb[0].mxu0 %v5926
    %v5928 = vpop.f32.mrb[0].mxu0
    %v5929 = vadd.f32 %v5656, %v5928
    %v5930 = vpop.f32.mrb[0].mxu0
    %5931 = vmatprep.mubr.f32.mxu0 0.0
    %v5932 = vand.u32 %v5330, 4294901760
    %5933 = vmatmul.mubr.f32.gmra.mrb[0].mxu0 %v5932
    %v5934 = vpop.f32.mrb[0].mxu0
    %v5935 = vadd.f32 %v5666, %v5934
    %v5936 = vpop.f32.mrb[0].mxu0
    %5937 = vmatprep.mubr.f32.mxu0 0.0
    %v5938 = vand.u32 %v5336, 4294901760
    %5939 = vmatmul.mubr.f32.gmra.mrb[0].mxu0 %v5938
    %v5940 = vpop.f32.mrb[0].mxu0
    %v5941 = vadd.f32 %v5676, %v5940
    %v5942 = vpop.f32.mrb[0].mxu0
    %5943 = vmatprep.mubr.f32.mxu0 0.0
    %v5944 = vand.u32 %v5342, 4294901760
    %5945 = vmatmul.mubr.f32.gmra.mrb[0].mxu0 %v5944
    %v5946 = vpop.f32.mrb[0].mxu0
    %v5947 = vadd.f32 %v5686, %v5946
    %v5948 = vpop.f32.mrb[0].mxu0
    %5949 = vmatprep.mubr.f32.mxu0 0.0
    %v5950 = vand.u32 %v5348, 4294901760
    %5951 = vmatmul.mubr.f32.gmra.mrb[0].mxu0 %v5950
    %v5952 = vpop.f32.mrb[0].mxu0
    %v5953 = vadd.f32 %v5696, %v5952
    %v5954 = vpop.f32.mrb[0].mxu0
    %5955 = vmatprep.mubr.f32.mxu0 0.0
    %v5956 = vand.u32 %v5354, 4294901760
    %5957 = vmatmul.mubr.f32.gmra.mrb[0].mxu0 %v5956
    %v5958 = vpop.f32.mrb[0].mxu0
    %v5959 = vadd.f32 %v5706, %v5958
    %v5960 = vpop.f32.mrb[0].mxu0
    %5961 = vmatprep.mubr.f32.mxu0 0.0
    %v5962 = vand.u32 %v5360, 4294901760
    %5963 = vmatmul.mubr.f32.gmra.mrb[0].mxu0 %v5962
    %v5964 = vpop.f32.mrb[0].mxu0
    %v5965 = vadd.f32 %v5716, %v5964
    %v5966 = vpop.f32.mrb[0].mxu0
    %5967 = vmatprep.mubr.f32.mxu0 0.0
    %v5968 = vand.u32 %v5366, 4294901760
    %5969 = vmatmul.mubr.f32.gmra.mrb[0].mxu0 %v5968
    %v5970 = vpop.f32.mrb[0].mxu0
    %v5971 = vadd.f32 %v5726, %v5970
    %v5972 = vpop.f32.mrb[0].mxu0
    %5973 = vmatprep.mubr.f32.mxu0 0.0
    %v5974 = vand.u32 %v5372, 4294901760
    %5975 = vmatmul.mubr.f32.gmra.mrb[0].mxu0 %v5974
    %v5976 = vpop.f32.mrb[0].mxu0
    %v5977 = vadd.f32 %v5736, %v5976
    %v5978 = vpop.f32.mrb[0].mxu0
    %5979 = vdwg.mxu0
    %5980 = vmatprep.subr.mxu0 0.0
    %v5981 = vand.u32 %v5482, 4294901760
    %v5982 = vsub.f32 %v5482, %v5981
    %5983 = vmatpush1.msra.mxu0 %v5982
    %5984 = vmatprep.subr.mxu0 0.0
    %v5985 = vand.u32 %v5483, 4294901760
    %v5986 = vsub.f32 %v5483, %v5985
    %5987 = vmatpush1.msra.mxu0 %v5986
    %5988 = vmatprep.subr.mxu0 0.0
    %v5989 = vand.u32 %v5484, 4294901760
    %v5990 = vsub.f32 %v5484, %v5989
    %5991 = vmatpush1.msra.mxu0 %v5990
    %5992 = vmatprep.subr.mxu0 0.0
    %v5993 = vand.u32 %v5485, 4294901760
    %v5994 = vsub.f32 %v5485, %v5993
    %5995 = vmatpush1.msra.mxu0 %v5994
    %5996 = vmatprep.subr.mxu0 0.0
    %v5997 = vand.u32 %v5486, 4294901760
    %v5998 = vsub.f32 %v5486, %v5997
    %5999 = vmatpush1.msra.mxu0 %v5998
    %6000 = vmatprep.subr.mxu0 0.0
    %v6001 = vand.u32 %v5487, 4294901760
    %v6002 = vsub.f32 %v5487, %v6001
    %6003 = vmatpush1.msra.mxu0 %v6002
    %6004 = vmatprep.subr.mxu0 0.0
    %v6005 = vand.u32 %v5488, 4294901760
    %v6006 = vsub.f32 %v5488, %v6005
    %6007 = vmatpush1.msra.mxu0 %v6006
    %6008 = vmatprep.subr.mxu0 0.0
    %v6009 = vand.u32 %v5489, 4294901760
    %v6010 = vsub.f32 %v5489, %v6009
    %6011 = vmatpush1.msra.mxu0 %v6010
    %6012 = vmatprep.subr.mxu0 0.0
    %v6013 = vand.u32 %v5490, 4294901760
    %v6014 = vsub.f32 %v5490, %v6013
    %6015 = vmatpush1.msra.mxu0 %v6014
    %6016 = vmatprep.subr.mxu0 0.0
    %v6017 = vand.u32 %v5491, 4294901760
    %v6018 = vsub.f32 %v5491, %v6017
    %6019 = vmatpush1.msra.mxu0 %v6018
    %6020 = vmatprep.subr.mxu0 0.0
    %v6021 = vand.u32 %v5492, 4294901760
    %v6022 = vsub.f32 %v5492, %v6021
    %6023 = vmatpush1.msra.mxu0 %v6022
    %6024 = vmatprep.subr.mxu0 0.0
    %v6025 = vand.u32 %v5493, 4294901760
    %v6026 = vsub.f32 %v5493, %v6025
    %6027 = vmatpush1.msra.mxu0 %v6026
    %6028 = vmatprep.subr.mxu0 0.0
    %v6029 = vand.u32 %v5494, 4294901760
    %v6030 = vsub.f32 %v5494, %v6029
    %6031 = vmatpush1.msra.mxu0 %v6030
    %6032 = vmatprep.subr.mxu0 0.0
    %v6033 = vand.u32 %v5495, 4294901760
    %v6034 = vsub.f32 %v5495, %v6033
    %6035 = vmatpush1.msra.mxu0 %v6034
    %6036 = vmatprep.subr.mxu0 0.0
    %v6037 = vand.u32 %v5496, 4294901760
    %v6038 = vsub.f32 %v5496, %v6037
    %6039 = vmatpush1.msra.mxu0 %v6038
    %6040 = vmatprep.subr.mxu0 0.0
    %v6041 = vand.u32 %v5497, 4294901760
    %v6042 = vsub.f32 %v5497, %v6041
    %6043 = vmatpush1.msra.mxu0 %v6042
    %6044 = vmatprep.subr.mxu0 0.0
    %6045 = vmatpush1.msra.mxu0 0.0
    %6046 = vmatprep.subr.mxu0 0.0
    %6047 = vmatpush1.msra.mxu0 0.0
    %6048 = vmatprep.subr.mxu0 0.0
    %6049 = vmatpush1.msra.mxu0 0.0
    %6050 = vmatprep.subr.mxu0 0.0
    %6051 = vmatpush1.msra.mxu0 0.0
    %6052 = vmatprep.subr.mxu0 0.0
    %6053 = vmatpush1.msra.mxu0 0.0
    %6054 = vmatprep.subr.mxu0 0.0
    %6055 = vmatpush1.msra.mxu0 0.0
    %6056 = vmatprep.subr.mxu0 0.0
    %6057 = vmatpush1.msra.mxu0 0.0
    %6058 = vmatprep.subr.mxu0 0.0
    %6059 = vmatpush1.msra.mxu0 0.0
    %6060 = vmatprep.subr.mxu0 0.0
    %6061 = vmatpush1.msra.mxu0 0.0
    %6062 = vmatprep.subr.mxu0 0.0
    %6063 = vmatpush1.msra.mxu0 0.0
    %6064 = vmatprep.subr.mxu0 0.0
    %6065 = vmatpush1.msra.mxu0 0.0
    %6066 = vmatprep.subr.mxu0 0.0
    %6067 = vmatpush1.msra.mxu0 0.0
    %6068 = vmatprep.subr.mxu0 0.0
    %6069 = vmatpush1.msra.mxu0 0.0
    %6070 = vmatprep.subr.mxu0 0.0
    %6071 = vmatpush1.msra.mxu0 0.0
    %6072 = vmatprep.subr.mxu0 0.0
    %6073 = vmatpush1.msra.mxu0 0.0
    %6074 = vmatprep.subr.mxu0 0.0
    %6075 = vmatpush1.msra.mxu0 0.0
    %6076 = vmatprep.mubr.f32.mxu0 0.0
    %v6077 = vand.u32 %v5282, 4294901760
    %v6078 = vsub.f32 %v5282, %v6077
    %6079 = vmatmul.mubr.f32.gmra.mrb[0].mxu0 %v6078
    %v6080 = vpop.f32.mrb[0].mxu0
    %v6081 = vadd.f32 %v5887, %v6080
    %v6082 = vpop.f32.mrb[0].mxu0
    %6083 = vmatprep.mubr.f32.mxu0 0.0
    %v6084 = vand.u32 %v5288, 4294901760
    %v6085 = vsub.f32 %v5288, %v6084
    %6086 = vmatmul.mubr.f32.gmra.mrb[0].mxu0 %v6085
    %v6087 = vpop.f32.mrb[0].mxu0
    %v6088 = vadd.f32 %v5893, %v6087
    %v6089 = vpop.f32.mrb[0].mxu0
    %6090 = vmatprep.mubr.f32.mxu0 0.0
    %v6091 = vand.u32 %v5294, 4294901760
    %v6092 = vsub.f32 %v5294, %v6091
    %6093 = vmatmul.mubr.f32.gmra.mrb[0].mxu0 %v6092
    %v6094 = vpop.f32.mrb[0].mxu0
    %v6095 = vadd.f32 %v5899, %v6094
    %v6096 = vpop.f32.mrb[0].mxu0
    %6097 = vmatprep.mubr.f32.mxu0 0.0
    %v6098 = vand.u32 %v5300, 4294901760
    %v6099 = vsub.f32 %v5300, %v6098
    %6100 = vmatmul.mubr.f32.gmra.mrb[0].mxu0 %v6099
    %v6101 = vpop.f32.mrb[0].mxu0
    %v6102 = vadd.f32 %v5905, %v6101
    %v6103 = vpop.f32.mrb[0].mxu0
    %6104 = vmatprep.mubr.f32.mxu0 0.0
    %v6105 = vand.u32 %v5306, 4294901760
    %v6106 = vsub.f32 %v5306, %v6105
    %6107 = vmatmul.mubr.f32.gmra.mrb[0].mxu0 %v6106
    %v6108 = vpop.f32.mrb[0].mxu0
    %v6109 = vadd.f32 %v5911, %v6108
    %v6110 = vpop.f32.mrb[0].mxu0
    %6111 = vmatprep.mubr.f32.mxu0 0.0
    %v6112 = vand.u32 %v5312, 4294901760
    %v6113 = vsub.f32 %v5312, %v6112
    %6114 = vmatmul.mubr.f32.gmra.mrb[0].mxu0 %v6113
    %v6115 = vpop.f32.mrb[0].mxu0
    %v6116 = vadd.f32 %v5917, %v6115
    %v6117 = vpop.f32.mrb[0].mxu0
    %6118 = vmatprep.mubr.f32.mxu0 0.0
    %v6119 = vand.u32 %v5318, 4294901760
    %v6120 = vsub.f32 %v5318, %v6119
    %6121 = vmatmul.mubr.f32.gmra.mrb[0].mxu0 %v6120
    %v6122 = vpop.f32.mrb[0].mxu0
    %v6123 = vadd.f32 %v5923, %v6122
    %v6124 = vpop.f32.mrb[0].mxu0
    %6125 = vmatprep.mubr.f32.mxu0 0.0
    %v6126 = vand.u32 %v5324, 4294901760
    %v6127 = vsub.f32 %v5324, %v6126
    %6128 = vmatmul.mubr.f32.gmra.mrb[0].mxu0 %v6127
    %v6129 = vpop.f32.mrb[0].mxu0
    %v6130 = vadd.f32 %v5929, %v6129
    %v6131 = vpop.f32.mrb[0].mxu0
    %6132 = vmatprep.mubr.f32.mxu0 0.0
    %v6133 = vand.u32 %v5330, 4294901760
    %v6134 = vsub.f32 %v5330, %v6133
    %6135 = vmatmul.mubr.f32.gmra.mrb[0].mxu0 %v6134
    %v6136 = vpop.f32.mrb[0].mxu0
    %v6137 = vadd.f32 %v5935, %v6136
    %v6138 = vpop.f32.mrb[0].mxu0
    %6139 = vmatprep.mubr.f32.mxu0 0.0
    %v6140 = vand.u32 %v5336, 4294901760
    %v6141 = vsub.f32 %v5336, %v6140
    %6142 = vmatmul.mubr.f32.gmra.mrb[0].mxu0 %v6141
    %v6143 = vpop.f32.mrb[0].mxu0
    %v6144 = vadd.f32 %v5941, %v6143
    %v6145 = vpop.f32.mrb[0].mxu0
    %6146 = vmatprep.mubr.f32.mxu0 0.0
    %v6147 = vand.u32 %v5342, 4294901760
    %v6148 = vsub.f32 %v5342, %v6147
    %6149 = vmatmul.mubr.f32.gmra.mrb[0].mxu0 %v6148
    %v6150 = vpop.f32.mrb[0].mxu0
    %v6151 = vadd.f32 %v5947, %v6150
    %v6152 = vpop.f32.mrb[0].mxu0
    %6153 = vmatprep.mubr.f32.mxu0 0.0
    %v6154 = vand.u32 %v5348, 4294901760
    %v6155 = vsub.f32 %v5348, %v6154
    %6156 = vmatmul.mubr.f32.gmra.mrb[0].mxu0 %v6155
    %v6157 = vpop.f32.mrb[0].mxu0
    %v6158 = vadd.f32 %v5953, %v6157
    %v6159 = vpop.f32.mrb[0].mxu0
    %6160 = vmatprep.mubr.f32.mxu0 0.0
    %v6161 = vand.u32 %v5354, 4294901760
    %v6162 = vsub.f32 %v5354, %v6161
    %6163 = vmatmul.mubr.f32.gmra.mrb[0].mxu0 %v6162
    %v6164 = vpop.f32.mrb[0].mxu0
    %v6165 = vadd.f32 %v5959, %v6164
    %v6166 = vpop.f32.mrb[0].mxu0
    %6167 = vmatprep.mubr.f32.mxu0 0.0
    %v6168 = vand.u32 %v5360, 4294901760
    %v6169 = vsub.f32 %v5360, %v6168
    %6170 = vmatmul.mubr.f32.gmra.mrb[0].mxu0 %v6169
    %v6171 = vpop.f32.mrb[0].mxu0
    %v6172 = vadd.f32 %v5965, %v6171
    %v6173 = vpop.f32.mrb[0].mxu0
    %6174 = vmatprep.mubr.f32.mxu0 0.0
    %v6175 = vand.u32 %v5366, 4294901760
    %v6176 = vsub.f32 %v5366, %v6175
    %6177 = vmatmul.mubr.f32.gmra.mrb[0].mxu0 %v6176
    %v6178 = vpop.f32.mrb[0].mxu0
    %v6179 = vadd.f32 %v5971, %v6178
    %v6180 = vpop.f32.mrb[0].mxu0
    %6181 = vmatprep.mubr.f32.mxu0 0.0
    %v6182 = vand.u32 %v5372, 4294901760
    %v6183 = vsub.f32 %v5372, %v6182
    %6184 = vmatmul.mubr.f32.gmra.mrb[0].mxu0 %v6183
    %v6185 = vpop.f32.mrb[0].mxu0
    %v6186 = vadd.f32 %v5977, %v6185
    %v6187 = vpop.f32.mrb[0].mxu0
    %6188 = vdwg.mxu0
    %6189 = vmatprep.subr.mxu0 0.0
    %v6190 = vand.u32 %v5482, 4294901760
    %6191 = vmatpush1.msra.mxu0 %v6190
    %6192 = vmatprep.subr.mxu0 0.0
    %v6193 = vand.u32 %v5483, 4294901760
    %6194 = vmatpush1.msra.mxu0 %v6193
    %6195 = vmatprep.subr.mxu0 0.0
    %v6196 = vand.u32 %v5484, 4294901760
    %6197 = vmatpush1.msra.mxu0 %v6196
    %6198 = vmatprep.subr.mxu0 0.0
    %v6199 = vand.u32 %v5485, 4294901760
    %6200 = vmatpush1.msra.mxu0 %v6199
    %6201 = vmatprep.subr.mxu0 0.0
    %v6202 = vand.u32 %v5486, 4294901760
    %6203 = vmatpush1.msra.mxu0 %v6202
    %6204 = vmatprep.subr.mxu0 0.0
    %v6205 = vand.u32 %v5487, 4294901760
    %6206 = vmatpush1.msra.mxu0 %v6205
    %6207 = vmatprep.subr.mxu0 0.0
    %v6208 = vand.u32 %v5488, 4294901760
    %6209 = vmatpush1.msra.mxu0 %v6208
    %6210 = vmatprep.subr.mxu0 0.0
    %v6211 = vand.u32 %v5489, 4294901760
    %6212 = vmatpush1.msra.mxu0 %v6211
    %6213 = vmatprep.subr.mxu0 0.0
    %v6214 = vand.u32 %v5490, 4294901760
    %6215 = vmatpush1.msra.mxu0 %v6214
    %6216 = vmatprep.subr.mxu0 0.0
    %v6217 = vand.u32 %v5491, 4294901760
    %6218 = vmatpush1.msra.mxu0 %v6217
    %6219 = vmatprep.subr.mxu0 0.0
    %v6220 = vand.u32 %v5492, 4294901760
    %6221 = vmatpush1.msra.mxu0 %v6220
    %6222 = vmatprep.subr.mxu0 0.0
    %v6223 = vand.u32 %v5493, 4294901760
    %6224 = vmatpush1.msra.mxu0 %v6223
    %6225 = vmatprep.subr.mxu0 0.0
    %v6226 = vand.u32 %v5494, 4294901760
    %6227 = vmatpush1.msra.mxu0 %v6226
    %6228 = vmatprep.subr.mxu0 0.0
    %v6229 = vand.u32 %v5495, 4294901760
    %6230 = vmatpush1.msra.mxu0 %v6229
    %6231 = vmatprep.subr.mxu0 0.0
    %v6232 = vand.u32 %v5496, 4294901760
    %6233 = vmatpush1.msra.mxu0 %v6232
    %6234 = vmatprep.subr.mxu0 0.0
    %v6235 = vand.u32 %v5497, 4294901760
    %6236 = vmatpush1.msra.mxu0 %v6235
    %6237 = vmatprep.subr.mxu0 0.0
    %6238 = vmatpush1.msra.mxu0 0.0
    %6239 = vmatprep.subr.mxu0 0.0
    %6240 = vmatpush1.msra.mxu0 0.0
    %6241 = vmatprep.subr.mxu0 0.0
    %6242 = vmatpush1.msra.mxu0 0.0
    %6243 = vmatprep.subr.mxu0 0.0
    %6244 = vmatpush1.msra.mxu0 0.0
    %6245 = vmatprep.subr.mxu0 0.0
    %6246 = vmatpush1.msra.mxu0 0.0
    %6247 = vmatprep.subr.mxu0 0.0
    %6248 = vmatpush1.msra.mxu0 0.0
    %6249 = vmatprep.subr.mxu0 0.0
    %6250 = vmatpush1.msra.mxu0 0.0
    %6251 = vmatprep.subr.mxu0 0.0
    %6252 = vmatpush1.msra.mxu0 0.0
    %6253 = vmatprep.subr.mxu0 0.0
    %6254 = vmatpush1.msra.mxu0 0.0
    %6255 = vmatprep.subr.mxu0 0.0
    %6256 = vmatpush1.msra.mxu0 0.0
    %6257 = vmatprep.subr.mxu0 0.0
    %6258 = vmatpush1.msra.mxu0 0.0
    %6259 = vmatprep.subr.mxu0 0.0
    %6260 = vmatpush1.msra.mxu0 0.0
    %6261 = vmatprep.subr.mxu0 0.0
    %6262 = vmatpush1.msra.mxu0 0.0
    %6263 = vmatprep.subr.mxu0 0.0
    %6264 = vmatpush1.msra.mxu0 0.0
    %6265 = vmatprep.subr.mxu0 0.0
    %6266 = vmatpush1.msra.mxu0 0.0
    %6267 = vmatprep.subr.mxu0 0.0
    %6268 = vmatpush1.msra.mxu0 0.0
    %6269 = vmatprep.mubr.f32.mxu0 0.0
    %v6270 = vand.u32 %v5282, 4294901760
    %v6271 = vsub.f32 %v5282, %v6270
    %v6272 = vand.u32 %v6271, 4294901760
    %6273 = vmatmul.mubr.f32.gmra.mrb[0].mxu0 %v6272
    %v6274 = vpop.f32.mrb[0].mxu0
    %v6275 = vadd.f32 %v6081, %v6274
    %v6276 = vpop.f32.mrb[0].mxu0
    %6277 = vmatprep.mubr.f32.mxu0 0.0
    %v6278 = vand.u32 %v5288, 4294901760
    %v6279 = vsub.f32 %v5288, %v6278
    %v6280 = vand.u32 %v6279, 4294901760
    %6281 = vmatmul.mubr.f32.gmra.mrb[0].mxu0 %v6280
    %v6282 = vpop.f32.mrb[0].mxu0
    %v6283 = vadd.f32 %v6088, %v6282
    %v6284 = vpop.f32.mrb[0].mxu0
    %6285 = vmatprep.mubr.f32.mxu0 0.0
    %v6286 = vand.u32 %v5294, 4294901760
    %v6287 = vsub.f32 %v5294, %v6286
    %v6288 = vand.u32 %v6287, 4294901760
    %6289 = vmatmul.mubr.f32.gmra.mrb[0].mxu0 %v6288
    %v6290 = vpop.f32.mrb[0].mxu0
    %v6291 = vadd.f32 %v6095, %v6290
    %v6292 = vpop.f32.mrb[0].mxu0
    %6293 = vmatprep.mubr.f32.mxu0 0.0
    %v6294 = vand.u32 %v5300, 4294901760
    %v6295 = vsub.f32 %v5300, %v6294
    %v6296 = vand.u32 %v6295, 4294901760
    %6297 = vmatmul.mubr.f32.gmra.mrb[0].mxu0 %v6296
    %v6298 = vpop.f32.mrb[0].mxu0
    %v6299 = vadd.f32 %v6102, %v6298
    %v6300 = vpop.f32.mrb[0].mxu0
    %6301 = vmatprep.mubr.f32.mxu0 0.0
    %v6302 = vand.u32 %v5306, 4294901760
    %v6303 = vsub.f32 %v5306, %v6302
    %v6304 = vand.u32 %v6303, 4294901760
    %6305 = vmatmul.mubr.f32.gmra.mrb[0].mxu0 %v6304
    %v6306 = vpop.f32.mrb[0].mxu0
    %v6307 = vadd.f32 %v6109, %v6306
    %v6308 = vpop.f32.mrb[0].mxu0
    %6309 = vmatprep.mubr.f32.mxu0 0.0
    %v6310 = vand.u32 %v5312, 4294901760
    %v6311 = vsub.f32 %v5312, %v6310
    %v6312 = vand.u32 %v6311, 4294901760
    %6313 = vmatmul.mubr.f32.gmra.mrb[0].mxu0 %v6312
    %v6314 = vpop.f32.mrb[0].mxu0
    %v6315 = vadd.f32 %v6116, %v6314
    %v6316 = vpop.f32.mrb[0].mxu0
    %6317 = vmatprep.mubr.f32.mxu0 0.0
    %v6318 = vand.u32 %v5318, 4294901760
    %v6319 = vsub.f32 %v5318, %v6318
    %v6320 = vand.u32 %v6319, 4294901760
    %6321 = vmatmul.mubr.f32.gmra.mrb[0].mxu0 %v6320
    %v6322 = vpop.f32.mrb[0].mxu0
    %v6323 = vadd.f32 %v6123, %v6322
    %v6324 = vpop.f32.mrb[0].mxu0
    %6325 = vmatprep.mubr.f32.mxu0 0.0
    %v6326 = vand.u32 %v5324, 4294901760
    %v6327 = vsub.f32 %v5324, %v6326
    %v6328 = vand.u32 %v6327, 4294901760
    %6329 = vmatmul.mubr.f32.gmra.mrb[0].mxu0 %v6328
    %v6330 = vpop.f32.mrb[0].mxu0
    %v6331 = vadd.f32 %v6130, %v6330
    %v6332 = vpop.f32.mrb[0].mxu0
    %6333 = vmatprep.mubr.f32.mxu0 0.0
    %v6334 = vand.u32 %v5330, 4294901760
    %v6335 = vsub.f32 %v5330, %v6334
    %v6336 = vand.u32 %v6335, 4294901760
    %6337 = vmatmul.mubr.f32.gmra.mrb[0].mxu0 %v6336
    %v6338 = vpop.f32.mrb[0].mxu0
    %v6339 = vadd.f32 %v6137, %v6338
    %v6340 = vpop.f32.mrb[0].mxu0
    %6341 = vmatprep.mubr.f32.mxu0 0.0
    %v6342 = vand.u32 %v5336, 4294901760
    %v6343 = vsub.f32 %v5336, %v6342
    %v6344 = vand.u32 %v6343, 4294901760
    %6345 = vmatmul.mubr.f32.gmra.mrb[0].mxu0 %v6344
    %v6346 = vpop.f32.mrb[0].mxu0
    %v6347 = vadd.f32 %v6144, %v6346
    %v6348 = vpop.f32.mrb[0].mxu0
    %6349 = vmatprep.mubr.f32.mxu0 0.0
    %v6350 = vand.u32 %v5342, 4294901760
    %v6351 = vsub.f32 %v5342, %v6350
    %v6352 = vand.u32 %v6351, 4294901760
    %6353 = vmatmul.mubr.f32.gmra.mrb[0].mxu0 %v6352
    %v6354 = vpop.f32.mrb[0].mxu0
    %v6355 = vadd.f32 %v6151, %v6354
    %v6356 = vpop.f32.mrb[0].mxu0
    %6357 = vmatprep.mubr.f32.mxu0 0.0
    %v6358 = vand.u32 %v5348, 4294901760
    %v6359 = vsub.f32 %v5348, %v6358
    %v6360 = vand.u32 %v6359, 4294901760
    %6361 = vmatmul.mubr.f32.gmra.mrb[0].mxu0 %v6360
    %v6362 = vpop.f32.mrb[0].mxu0
    %v6363 = vadd.f32 %v6158, %v6362
    %v6364 = vpop.f32.mrb[0].mxu0
    %6365 = vmatprep.mubr.f32.mxu0 0.0
    %v6366 = vand.u32 %v5354, 4294901760
    %v6367 = vsub.f32 %v5354, %v6366
    %v6368 = vand.u32 %v6367, 4294901760
    %6369 = vmatmul.mubr.f32.gmra.mrb[0].mxu0 %v6368
    %v6370 = vpop.f32.mrb[0].mxu0
    %v6371 = vadd.f32 %v6165, %v6370
    %v6372 = vpop.f32.mrb[0].mxu0
    %6373 = vmatprep.mubr.f32.mxu0 0.0
    %v6374 = vand.u32 %v5360, 4294901760
    %v6375 = vsub.f32 %v5360, %v6374
    %v6376 = vand.u32 %v6375, 4294901760
    %6377 = vmatmul.mubr.f32.gmra.mrb[0].mxu0 %v6376
    %v6378 = vpop.f32.mrb[0].mxu0
    %v6379 = vadd.f32 %v6172, %v6378
    %v6380 = vpop.f32.mrb[0].mxu0
    %6381 = vmatprep.mubr.f32.mxu0 0.0
    %v6382 = vand.u32 %v5366, 4294901760
    %v6383 = vsub.f32 %v5366, %v6382
    %v6384 = vand.u32 %v6383, 4294901760
    %6385 = vmatmul.mubr.f32.gmra.mrb[0].mxu0 %v6384
    %v6386 = vpop.f32.mrb[0].mxu0
    %v6387 = vadd.f32 %v6179, %v6386
    %v6388 = vpop.f32.mrb[0].mxu0
    %6389 = vmatprep.mubr.f32.mxu0 0.0
    %v6390 = vand.u32 %v5372, 4294901760
    %v6391 = vsub.f32 %v5372, %v6390
    %v6392 = vand.u32 %v6391, 4294901760
    %6393 = vmatmul.mubr.f32.gmra.mrb[0].mxu0 %v6392
    %v6394 = vpop.f32.mrb[0].mxu0
    %v6395 = vadd.f32 %v6186, %v6394
    %v6396 = vpop.f32.mrb[0].mxu0
    %6397 = vdwg.mxu0
    %6398 = vmatprep.subr.mxu0 0.0
    %v6399 = vand.u32 %v5482, 4294901760
    %v6400 = vsub.f32 %v5482, %v6399
    %v6401 = vand.u32 %v6400, 4294901760
    %6402 = vmatpush1.msra.mxu0 %v6401
    %6403 = vmatprep.subr.mxu0 0.0
    %v6404 = vand.u32 %v5483, 4294901760
    %v6405 = vsub.f32 %v5483, %v6404
    %v6406 = vand.u32 %v6405, 4294901760
    %6407 = vmatpush1.msra.mxu0 %v6406
    %6408 = vmatprep.subr.mxu0 0.0
    %v6409 = vand.u32 %v5484, 4294901760
    %v6410 = vsub.f32 %v5484, %v6409
    %v6411 = vand.u32 %v6410, 4294901760
    %6412 = vmatpush1.msra.mxu0 %v6411
    %6413 = vmatprep.subr.mxu0 0.0
    %v6414 = vand.u32 %v5485, 4294901760
    %v6415 = vsub.f32 %v5485, %v6414
    %v6416 = vand.u32 %v6415, 4294901760
    %6417 = vmatpush1.msra.mxu0 %v6416
    %6418 = vmatprep.subr.mxu0 0.0
    %v6419 = vand.u32 %v5486, 4294901760
    %v6420 = vsub.f32 %v5486, %v6419
    %v6421 = vand.u32 %v6420, 4294901760
    %6422 = vmatpush1.msra.mxu0 %v6421
    %6423 = vmatprep.subr.mxu0 0.0
    %v6424 = vand.u32 %v5487, 4294901760
    %v6425 = vsub.f32 %v5487, %v6424
    %v6426 = vand.u32 %v6425, 4294901760
    %6427 = vmatpush1.msra.mxu0 %v6426
    %6428 = vmatprep.subr.mxu0 0.0
    %v6429 = vand.u32 %v5488, 4294901760
    %v6430 = vsub.f32 %v5488, %v6429
    %v6431 = vand.u32 %v6430, 4294901760
    %6432 = vmatpush1.msra.mxu0 %v6431
    %6433 = vmatprep.subr.mxu0 0.0
    %v6434 = vand.u32 %v5489, 4294901760
    %v6435 = vsub.f32 %v5489, %v6434
    %v6436 = vand.u32 %v6435, 4294901760
    %6437 = vmatpush1.msra.mxu0 %v6436
    %6438 = vmatprep.subr.mxu0 0.0
    %v6439 = vand.u32 %v5490, 4294901760
    %v6440 = vsub.f32 %v5490, %v6439
    %v6441 = vand.u32 %v6440, 4294901760
    %6442 = vmatpush1.msra.mxu0 %v6441
    %6443 = vmatprep.subr.mxu0 0.0
    %v6444 = vand.u32 %v5491, 4294901760
    %v6445 = vsub.f32 %v5491, %v6444
    %v6446 = vand.u32 %v6445, 4294901760
    %6447 = vmatpush1.msra.mxu0 %v6446
    %6448 = vmatprep.subr.mxu0 0.0
    %v6449 = vand.u32 %v5492, 4294901760
    %v6450 = vsub.f32 %v5492, %v6449
    %v6451 = vand.u32 %v6450, 4294901760
    %6452 = vmatpush1.msra.mxu0 %v6451
    %6453 = vmatprep.subr.mxu0 0.0
    %v6454 = vand.u32 %v5493, 4294901760
    %v6455 = vsub.f32 %v5493, %v6454
    %v6456 = vand.u32 %v6455, 4294901760
    %6457 = vmatpush1.msra.mxu0 %v6456
    %6458 = vmatprep.subr.mxu0 0.0
    %v6459 = vand.u32 %v5494, 4294901760
    %v6460 = vsub.f32 %v5494, %v6459
    %v6461 = vand.u32 %v6460, 4294901760
    %6462 = vmatpush1.msra.mxu0 %v6461
    %6463 = vmatprep.subr.mxu0 0.0
    %v6464 = vand.u32 %v5495, 4294901760
    %v6465 = vsub.f32 %v5495, %v6464
    %v6466 = vand.u32 %v6465, 4294901760
    %6467 = vmatpush1.msra.mxu0 %v6466
    %6468 = vmatprep.subr.mxu0 0.0
    %v6469 = vand.u32 %v5496, 4294901760
    %v6470 = vsub.f32 %v5496, %v6469
    %v6471 = vand.u32 %v6470, 4294901760
    %6472 = vmatpush1.msra.mxu0 %v6471
    %6473 = vmatprep.subr.mxu0 0.0
    %v6474 = vand.u32 %v5497, 4294901760
    %v6475 = vsub.f32 %v5497, %v6474
    %v6476 = vand.u32 %v6475, 4294901760
    %6477 = vmatpush1.msra.mxu0 %v6476
    %6478 = vmatprep.subr.mxu0 0.0
    %6479 = vmatpush1.msra.mxu0 0.0
    %6480 = vmatprep.subr.mxu0 0.0
    %6481 = vmatpush1.msra.mxu0 0.0
    %6482 = vmatprep.subr.mxu0 0.0
    %6483 = vmatpush1.msra.mxu0 0.0
    %6484 = vmatprep.subr.mxu0 0.0
    %6485 = vmatpush1.msra.mxu0 0.0
    %6486 = vmatprep.subr.mxu0 0.0
    %6487 = vmatpush1.msra.mxu0 0.0
    %6488 = vmatprep.subr.mxu0 0.0
    %6489 = vmatpush1.msra.mxu0 0.0
    %6490 = vmatprep.subr.mxu0 0.0
    %6491 = vmatpush1.msra.mxu0 0.0
    %6492 = vmatprep.subr.mxu0 0.0
    %6493 = vmatpush1.msra.mxu0 0.0
    %6494 = vmatprep.subr.mxu0 0.0
    %6495 = vmatpush1.msra.mxu0 0.0
    %6496 = vmatprep.subr.mxu0 0.0
    %6497 = vmatpush1.msra.mxu0 0.0
    %6498 = vmatprep.subr.mxu0 0.0
    %6499 = vmatpush1.msra.mxu0 0.0
    %6500 = vmatprep.subr.mxu0 0.0
    %6501 = vmatpush1.msra.mxu0 0.0
    %6502 = vmatprep.subr.mxu0 0.0
    %6503 = vmatpush1.msra.mxu0 0.0
    %6504 = vmatprep.subr.mxu0 0.0
    %6505 = vmatpush1.msra.mxu0 0.0
    %6506 = vmatprep.subr.mxu0 0.0
    %6507 = vmatpush1.msra.mxu0 0.0
    %6508 = vmatprep.subr.mxu0 0.0
    %6509 = vmatpush1.msra.mxu0 0.0
    %6510 = vmatprep.mubr.f32.mxu0 0.0
    %v6511 = vand.u32 %v5282, 4294901760
    %6512 = vmatmul.mubr.f32.gmra.mrb[0].mxu0 %v6511
    %v6513 = vpop.f32.mrb[0].mxu0
    %v6514 = vadd.f32 %v6275, %v6513
    %v6515 = vpop.f32.mrb[0].mxu0
    %6516 = vmatprep.mubr.f32.mxu0 0.0
    %v6517 = vand.u32 %v5288, 4294901760
    %6518 = vmatmul.mubr.f32.gmra.mrb[0].mxu0 %v6517
    %v6519 = vpop.f32.mrb[0].mxu0
    %v6520 = vadd.f32 %v6283, %v6519
    %v6521 = vpop.f32.mrb[0].mxu0
    %6522 = vmatprep.mubr.f32.mxu0 0.0
    %v6523 = vand.u32 %v5294, 4294901760
    %6524 = vmatmul.mubr.f32.gmra.mrb[0].mxu0 %v6523
    %v6525 = vpop.f32.mrb[0].mxu0
    %v6526 = vadd.f32 %v6291, %v6525
    %v6527 = vpop.f32.mrb[0].mxu0
    %6528 = vmatprep.mubr.f32.mxu0 0.0
    %v6529 = vand.u32 %v5300, 4294901760
    %6530 = vmatmul.mubr.f32.gmra.mrb[0].mxu0 %v6529
    %v6531 = vpop.f32.mrb[0].mxu0
    %v6532 = vadd.f32 %v6299, %v6531
    %v6533 = vpop.f32.mrb[0].mxu0
    %6534 = vmatprep.mubr.f32.mxu0 0.0
    %v6535 = vand.u32 %v5306, 4294901760
    %6536 = vmatmul.mubr.f32.gmra.mrb[0].mxu0 %v6535
    %v6537 = vpop.f32.mrb[0].mxu0
    %v6538 = vadd.f32 %v6307, %v6537
    %v6539 = vpop.f32.mrb[0].mxu0
    %6540 = vmatprep.mubr.f32.mxu0 0.0
    %v6541 = vand.u32 %v5312, 4294901760
    %6542 = vmatmul.mubr.f32.gmra.mrb[0].mxu0 %v6541
    %v6543 = vpop.f32.mrb[0].mxu0
    %v6544 = vadd.f32 %v6315, %v6543
    %v6545 = vpop.f32.mrb[0].mxu0
    %6546 = vmatprep.mubr.f32.mxu0 0.0
    %v6547 = vand.u32 %v5318, 4294901760
    %6548 = vmatmul.mubr.f32.gmra.mrb[0].mxu0 %v6547
    %v6549 = vpop.f32.mrb[0].mxu0
    %v6550 = vadd.f32 %v6323, %v6549
    %v6551 = vpop.f32.mrb[0].mxu0
    %6552 = vmatprep.mubr.f32.mxu0 0.0
    %v6553 = vand.u32 %v5324, 4294901760
    %6554 = vmatmul.mubr.f32.gmra.mrb[0].mxu0 %v6553
    %v6555 = vpop.f32.mrb[0].mxu0
    %v6556 = vadd.f32 %v6331, %v6555
    %v6557 = vpop.f32.mrb[0].mxu0
    %6558 = vmatprep.mubr.f32.mxu0 0.0
    %v6559 = vand.u32 %v5330, 4294901760
    %6560 = vmatmul.mubr.f32.gmra.mrb[0].mxu0 %v6559
    %v6561 = vpop.f32.mrb[0].mxu0
    %v6562 = vadd.f32 %v6339, %v6561
    %v6563 = vpop.f32.mrb[0].mxu0
    %6564 = vmatprep.mubr.f32.mxu0 0.0
    %v6565 = vand.u32 %v5336, 4294901760
    %6566 = vmatmul.mubr.f32.gmra.mrb[0].mxu0 %v6565
    %v6567 = vpop.f32.mrb[0].mxu0
    %v6568 = vadd.f32 %v6347, %v6567
    %v6569 = vpop.f32.mrb[0].mxu0
    %6570 = vmatprep.mubr.f32.mxu0 0.0
    %v6571 = vand.u32 %v5342, 4294901760
    %6572 = vmatmul.mubr.f32.gmra.mrb[0].mxu0 %v6571
    %v6573 = vpop.f32.mrb[0].mxu0
    %v6574 = vadd.f32 %v6355, %v6573
    %v6575 = vpop.f32.mrb[0].mxu0
    %6576 = vmatprep.mubr.f32.mxu0 0.0
    %v6577 = vand.u32 %v5348, 4294901760
    %6578 = vmatmul.mubr.f32.gmra.mrb[0].mxu0 %v6577
    %v6579 = vpop.f32.mrb[0].mxu0
    %v6580 = vadd.f32 %v6363, %v6579
    %v6581 = vpop.f32.mrb[0].mxu0
    %6582 = vmatprep.mubr.f32.mxu0 0.0
    %v6583 = vand.u32 %v5354, 4294901760
    %6584 = vmatmul.mubr.f32.gmra.mrb[0].mxu0 %v6583
    %v6585 = vpop.f32.mrb[0].mxu0
    %v6586 = vadd.f32 %v6371, %v6585
    %v6587 = vpop.f32.mrb[0].mxu0
    %6588 = vmatprep.mubr.f32.mxu0 0.0
    %v6589 = vand.u32 %v5360, 4294901760
    %6590 = vmatmul.mubr.f32.gmra.mrb[0].mxu0 %v6589
    %v6591 = vpop.f32.mrb[0].mxu0
    %v6592 = vadd.f32 %v6379, %v6591
    %v6593 = vpop.f32.mrb[0].mxu0
    %6594 = vmatprep.mubr.f32.mxu0 0.0
    %v6595 = vand.u32 %v5366, 4294901760
    %6596 = vmatmul.mubr.f32.gmra.mrb[0].mxu0 %v6595
    %v6597 = vpop.f32.mrb[0].mxu0
    %v6598 = vadd.f32 %v6387, %v6597
    %v6599 = vpop.f32.mrb[0].mxu0
    %6600 = vmatprep.mubr.f32.mxu0 0.0
    %v6601 = vand.u32 %v5372, 4294901760
    %6602 = vmatmul.mubr.f32.gmra.mrb[0].mxu0 %v6601
    %v6603 = vpop.f32.mrb[0].mxu0
    %v6604 = vadd.f32 %v6395, %v6603
    %v6605 = vpop.f32.mrb[0].mxu0
    %6606 = vdwg.mxu0
    %6607 = vmatprep.subr.mxu0 0.0
    %v6608 = vand.u32 %v5482, 4294901760
    %6609 = vmatpush1.msra.mxu0 %v6608
    %6610 = vmatprep.subr.mxu0 0.0
    %v6611 = vand.u32 %v5483, 4294901760
    %6612 = vmatpush1.msra.mxu0 %v6611
    %6613 = vmatprep.subr.mxu0 0.0
    %v6614 = vand.u32 %v5484, 4294901760
    %6615 = vmatpush1.msra.mxu0 %v6614
    %6616 = vmatprep.subr.mxu0 0.0
    %v6617 = vand.u32 %v5485, 4294901760
    %6618 = vmatpush1.msra.mxu0 %v6617
    %6619 = vmatprep.subr.mxu0 0.0
    %v6620 = vand.u32 %v5486, 4294901760
    %6621 = vmatpush1.msra.mxu0 %v6620
    %6622 = vmatprep.subr.mxu0 0.0
    %v6623 = vand.u32 %v5487, 4294901760
    %6624 = vmatpush1.msra.mxu0 %v6623
    %6625 = vmatprep.subr.mxu0 0.0
    %v6626 = vand.u32 %v5488, 4294901760
    %6627 = vmatpush1.msra.mxu0 %v6626
    %6628 = vmatprep.subr.mxu0 0.0
    %v6629 = vand.u32 %v5489, 4294901760
    %6630 = vmatpush1.msra.mxu0 %v6629
    %6631 = vmatprep.subr.mxu0 0.0
    %v6632 = vand.u32 %v5490, 4294901760
    %6633 = vmatpush1.msra.mxu0 %v6632
    %6634 = vmatprep.subr.mxu0 0.0
    %v6635 = vand.u32 %v5491, 4294901760
    %6636 = vmatpush1.msra.mxu0 %v6635
    %6637 = vmatprep.subr.mxu0 0.0
    %v6638 = vand.u32 %v5492, 4294901760
    %6639 = vmatpush1.msra.mxu0 %v6638
    %6640 = vmatprep.subr.mxu0 0.0
    %v6641 = vand.u32 %v5493, 4294901760
    %6642 = vmatpush1.msra.mxu0 %v6641
    %6643 = vmatprep.subr.mxu0 0.0
    %v6644 = vand.u32 %v5494, 4294901760
    %6645 = vmatpush1.msra.mxu0 %v6644
    %6646 = vmatprep.subr.mxu0 0.0
    %v6647 = vand.u32 %v5495, 4294901760
    %6648 = vmatpush1.msra.mxu0 %v6647
    %6649 = vmatprep.subr.mxu0 0.0
    %v6650 = vand.u32 %v5496, 4294901760
    %6651 = vmatpush1.msra.mxu0 %v6650
    %6652 = vmatprep.subr.mxu0 0.0
    %v6653 = vand.u32 %v5497, 4294901760
    %6654 = vmatpush1.msra.mxu0 %v6653
    %6655 = vmatprep.subr.mxu0 0.0
    %6656 = vmatpush1.msra.mxu0 0.0
    %6657 = vmatprep.subr.mxu0 0.0
    %6658 = vmatpush1.msra.mxu0 0.0
    %6659 = vmatprep.subr.mxu0 0.0
    %6660 = vmatpush1.msra.mxu0 0.0
    %6661 = vmatprep.subr.mxu0 0.0
    %6662 = vmatpush1.msra.mxu0 0.0
    %6663 = vmatprep.subr.mxu0 0.0
    %6664 = vmatpush1.msra.mxu0 0.0
    %6665 = vmatprep.subr.mxu0 0.0
    %6666 = vmatpush1.msra.mxu0 0.0
    %6667 = vmatprep.subr.mxu0 0.0
    %6668 = vmatpush1.msra.mxu0 0.0
    %6669 = vmatprep.subr.mxu0 0.0
    %6670 = vmatpush1.msra.mxu0 0.0
    %6671 = vmatprep.subr.mxu0 0.0
    %6672 = vmatpush1.msra.mxu0 0.0
    %6673 = vmatprep.subr.mxu0 0.0
    %6674 = vmatpush1.msra.mxu0 0.0
    %6675 = vmatprep.subr.mxu0 0.0
    %6676 = vmatpush1.msra.mxu0 0.0
    %6677 = vmatprep.subr.mxu0 0.0
    %6678 = vmatpush1.msra.mxu0 0.0
    %6679 = vmatprep.subr.mxu0 0.0
    %6680 = vmatpush1.msra.mxu0 0.0
    %6681 = vmatprep.subr.mxu0 0.0
    %6682 = vmatpush1.msra.mxu0 0.0
    %6683 = vmatprep.subr.mxu0 0.0
    %6684 = vmatpush1.msra.mxu0 0.0
    %6685 = vmatprep.subr.mxu0 0.0
    %6686 = vmatpush1.msra.mxu0 0.0
    %6687 = vmatprep.mubr.f32.mxu0 0.0
    %v6688 = vand.u32 %v5282, 4294901760
    %6689 = vmatmul.mubr.f32.gmra.mrb[0].mxu0 %v6688
    %v6690 = vpop.f32.mrb[0].mxu0
    %v6691 = vadd.f32 %v6514, %v6690
    %v6692 = vpop.f32.mrb[0].mxu0
    %6693 = vmatprep.mubr.f32.mxu0 0.0
    %v6694 = vand.u32 %v5288, 4294901760
    %6695 = vmatmul.mubr.f32.gmra.mrb[0].mxu0 %v6694
    %v6696 = vpop.f32.mrb[0].mxu0
    %v6697 = vadd.f32 %v6520, %v6696
    %v6698 = vpop.f32.mrb[0].mxu0
    %6699 = vmatprep.mubr.f32.mxu0 0.0
    %v6700 = vand.u32 %v5294, 4294901760
    %6701 = vmatmul.mubr.f32.gmra.mrb[0].mxu0 %v6700
    %v6702 = vpop.f32.mrb[0].mxu0
    %v6703 = vadd.f32 %v6526, %v6702
    %v6704 = vpop.f32.mrb[0].mxu0
    %6705 = vmatprep.mubr.f32.mxu0 0.0
    %v6706 = vand.u32 %v5300, 4294901760
    %6707 = vmatmul.mubr.f32.gmra.mrb[0].mxu0 %v6706
    %v6708 = vpop.f32.mrb[0].mxu0
    %v6709 = vadd.f32 %v6532, %v6708
    %v6710 = vpop.f32.mrb[0].mxu0
    %6711 = vmatprep.mubr.f32.mxu0 0.0
    %v6712 = vand.u32 %v5306, 4294901760
    %6713 = vmatmul.mubr.f32.gmra.mrb[0].mxu0 %v6712
    %v6714 = vpop.f32.mrb[0].mxu0
    %v6715 = vadd.f32 %v6538, %v6714
    %v6716 = vpop.f32.mrb[0].mxu0
    %6717 = vmatprep.mubr.f32.mxu0 0.0
    %v6718 = vand.u32 %v5312, 4294901760
    %6719 = vmatmul.mubr.f32.gmra.mrb[0].mxu0 %v6718
    %v6720 = vpop.f32.mrb[0].mxu0
    %v6721 = vadd.f32 %v6544, %v6720
    %v6722 = vpop.f32.mrb[0].mxu0
    %6723 = vmatprep.mubr.f32.mxu0 0.0
    %v6724 = vand.u32 %v5318, 4294901760
    %6725 = vmatmul.mubr.f32.gmra.mrb[0].mxu0 %v6724
    %v6726 = vpop.f32.mrb[0].mxu0
    %v6727 = vadd.f32 %v6550, %v6726
    %v6728 = vpop.f32.mrb[0].mxu0
    %6729 = vmatprep.mubr.f32.mxu0 0.0
    %v6730 = vand.u32 %v5324, 4294901760
    %6731 = vmatmul.mubr.f32.gmra.mrb[0].mxu0 %v6730
    %v6732 = vpop.f32.mrb[0].mxu0
    %v6733 = vadd.f32 %v6556, %v6732
    %v6734 = vpop.f32.mrb[0].mxu0
    %6735 = vmatprep.mubr.f32.mxu0 0.0
    %v6736 = vand.u32 %v5330, 4294901760
    %6737 = vmatmul.mubr.f32.gmra.mrb[0].mxu0 %v6736
    %v6738 = vpop.f32.mrb[0].mxu0
    %v6739 = vadd.f32 %v6562, %v6738
    %v6740 = vpop.f32.mrb[0].mxu0
    %6741 = vmatprep.mubr.f32.mxu0 0.0
    %v6742 = vand.u32 %v5336, 4294901760
    %6743 = vmatmul.mubr.f32.gmra.mrb[0].mxu0 %v6742
    %v6744 = vpop.f32.mrb[0].mxu0
    %v6745 = vadd.f32 %v6568, %v6744
    %v6746 = vpop.f32.mrb[0].mxu0
    %6747 = vmatprep.mubr.f32.mxu0 0.0
    %v6748 = vand.u32 %v5342, 4294901760
    %6749 = vmatmul.mubr.f32.gmra.mrb[0].mxu0 %v6748
    %v6750 = vpop.f32.mrb[0].mxu0
    %v6751 = vadd.f32 %v6574, %v6750
    %v6752 = vpop.f32.mrb[0].mxu0
    %6753 = vmatprep.mubr.f32.mxu0 0.0
    %v6754 = vand.u32 %v5348, 4294901760
    %6755 = vmatmul.mubr.f32.gmra.mrb[0].mxu0 %v6754
    %v6756 = vpop.f32.mrb[0].mxu0
    %v6757 = vadd.f32 %v6580, %v6756
    %v6758 = vpop.f32.mrb[0].mxu0
    %6759 = vmatprep.mubr.f32.mxu0 0.0
    %v6760 = vand.u32 %v5354, 4294901760
    %6761 = vmatmul.mubr.f32.gmra.mrb[0].mxu0 %v6760
    %v6762 = vpop.f32.mrb[0].mxu0
    %v6763 = vadd.f32 %v6586, %v6762
    %v6764 = vpop.f32.mrb[0].mxu0
    %6765 = vmatprep.mubr.f32.mxu0 0.0
    %v6766 = vand.u32 %v5360, 4294901760
    %6767 = vmatmul.mubr.f32.gmra.mrb[0].mxu0 %v6766
    %v6768 = vpop.f32.mrb[0].mxu0
    %v6769 = vadd.f32 %v6592, %v6768
    %v6770 = vpop.f32.mrb[0].mxu0
    %6771 = vmatprep.mubr.f32.mxu0 0.0
    %v6772 = vand.u32 %v5366, 4294901760
    %6773 = vmatmul.mubr.f32.gmra.mrb[0].mxu0 %v6772
    %v6774 = vpop.f32.mrb[0].mxu0
    %v6775 = vadd.f32 %v6598, %v6774
    %v6776 = vpop.f32.mrb[0].mxu0
    %6777 = vmatprep.mubr.f32.mxu0 0.0
    %v6778 = vand.u32 %v5372, 4294901760
    %6779 = vmatmul.mubr.f32.gmra.mrb[0].mxu0 %v6778
    %v6780 = vpop.f32.mrb[0].mxu0
    %v6781 = vadd.f32 %v6604, %v6780
    %v6782 = vpop.f32.mrb[0].mxu0
    %6783 = vdwg.mxu0
    %v6784 = vmul.f32 %v5429, %v6691
    %v6785 = vmul.f32 %v5430, %v6697
    %v6786 = vmul.f32 %v5431, %v6703
    %v6787 = vmul.f32 %v5432, %v6709
    %v6788 = vmul.f32 %v5433, %v6715
    %v6789 = vmul.f32 %v5434, %v6721
    %v6790 = vmul.f32 %v5435, %v6727
    %v6791 = vmul.f32 %v5436, %v6733
    %v6792 = vmul.f32 %v5437, %v6739
    %v6793 = vmul.f32 %v5438, %v6745
    %v6794 = vmul.f32 %v5439, %v6751
    %v6795 = vmul.f32 %v5440, %v6757
    %v6796 = vmul.f32 %v5441, %v6763
    %v6797 = vmul.f32 %v5442, %v6769
    %v6798 = vmul.f32 %v5443, %v6775
    %v6799 = vmul.f32 %v5444, %v6781
    %v6800 = vadd.f32 %v6784, %v6785
    %v6801 = vadd.f32 %v6800, %v6786
    %v6802 = vadd.f32 %v6801, %v6787
    %v6803 = vadd.f32 %v6802, %v6788
    %v6804 = vadd.f32 %v6803, %v6789
    %v6805 = vadd.f32 %v6804, %v6790
    %v6806 = vadd.f32 %v6805, %v6791
    %v6807 = vadd.f32 %v6806, %v6792
    %v6808 = vadd.f32 %v6807, %v6793
    %v6809 = vadd.f32 %v6808, %v6794
    %v6810 = vadd.f32 %v6809, %v6795
    %v6811 = vadd.f32 %v6810, %v6796
    %v6812 = vadd.f32 %v6811, %v6797
    %v6813 = vadd.f32 %v6812, %v6798
    %v6814 = vadd.f32 %v6813, %v6799
    %v6815 = vrot.slane %v6814, 4
    %v6816 = vadd.f32 %v6814, %v6815
    %v6817 = vrot.slane %v6816, 2
    %v6818 = vadd.f32 %v6816, %v6817
    %v6819 = vrot.slane %v6818, 1
    %v6820 = vadd.f32 %v6818, %v6819
    %6821 = vst [vmem:[%s4] sm:$0x1] %v6820
    // Predicated region
    $region22: #{lightgcn_forward.1} parent=1 // pred_check
      _
    $region23: #{lightgcn_forward.1} parent=1 // pred_check_branch
      %6823 = sbr.rel (0) target = $region25
    $region24: #{lightgcn_forward.1} parent=1 // pred_region
      _
    $region25: #{lightgcn_forward.1} parent=1 // pred_fallthru
      _
    // Predicated region
    $region26: #{lightgcn_forward.1} parent=1 // pred_check
      _
    $region27: #{lightgcn_forward.1} parent=1 // pred_check_branch
      %6825 = sbr.rel (0) target = $region29
    $region28: #{lightgcn_forward.1} parent=1 // pred_region
      _
    $region29: #{lightgcn_forward.1} parent=1 // pred_fallthru
      _
    %6826 = vsyncpa [#allocation3], 1

</llo_original>
